<compile_context>
chip_gen: v5e
topology: v5e:2x2
jax: 0.10.0
libtpu: 0.0.40
codegen_flags: <defaults>
</compile_context>

<pallas_src>
import numpy as np
import jax
import jax.numpy as jnp
from jax import lax
from jax.experimental import pallas as pl
from jax.experimental.pallas import tpu as pltpu


# -----------------------------------------------------------------------------
# Pallas kernels
# -----------------------------------------------------------------------------
def conv_relu_pool_kernel(p_ref, w_ref, b_ref, o_ref):
    """Fused 3x3 conv (im2col matmul) + 2x2 max-pool + bias + ReLU, whole batch.

    p_ref : (4, M, K)  quadrant-major im2col patches (bf16), M = B*Ho*Wo,
                       K = 9*Cin.  Quadrant q holds the patch centered at
                       input position (2i+dy, 2j+dx) for pooled position (i,j).
    w_ref : (K, Cout)  flattened conv weights (bf16)
    b_ref : (1, Cout)  bias (f32)
    o_ref : (M, Cout)  pooled NHWC-flat output (bf16)
    """
    w = w_ref[...]
    # Running max over the four pooling quadrants -> only one (M, Cout) f32
    # accumulator is ever live; the un-pooled conv result is never stored.
    acc = jnp.dot(p_ref[0], w, preferred_element_type=jnp.float32)
    for q in range(1, 4):
        acc = jnp.maximum(
            acc, jnp.dot(p_ref[q], w, preferred_element_type=jnp.float32))
    # bias + ReLU after the pool (bias is constant over the 2x2 window and
    # relu(max(x)) == max(relu(x))).
    o_ref[...] = jnp.maximum(acc + b_ref[...], 0.0).astype(o_ref.dtype)


def mlp_kernel(x_ref, w1_ref, b1_ref, w2_ref, b2_ref, o_ref, acc_ref):
    """fc1 + ReLU + fc2, fc1 reduction tiled over the grid (K axis).

    x_ref  : (B, tk)   bf16 slice of the flattened activations
    w1_ref : (tk, H1)  bf16 slice of fc1 weights (rows in NHWC flatten order)
    b1_ref : (1, H1)   f32
    w2_ref : (H1, NC)  bf16, resident across all steps
    b2_ref : (1, NC)   f32
    o_ref  : (B, NC)   f32
    acc_ref: (B, H1)   f32 VMEM accumulator
    """
    k = pl.program_id(0)

    @pl.when(k == 0)
    def _():
        acc_ref[...] = jnp.zeros_like(acc_ref)

    acc_ref[...] += jnp.dot(x_ref[...], w1_ref[...],
                            preferred_element_type=jnp.float32)

    @pl.when(k == pl.num_programs(0) - 1)
    def _():
        h = jnp.maximum(acc_ref[...] + b1_ref[...], 0.0).astype(w2_ref.dtype)
        o = jnp.dot(h, w2_ref[...],
                    preferred_element_type=jnp.float32) + b2_ref[...]
        o_ref[...] = o.astype(o_ref.dtype)


# -----------------------------------------------------------------------------
# Wrappers around pallas_call
# -----------------------------------------------------------------------------
def conv_relu_pool(patches, w_mat, bias):
    """patches: (4, M, K) quadrant-major.  Returns (M, Cout) = (B*Ho*Wo, Cout)."""
    _, M, K = patches.shape
    Cout = w_mat.shape[1]
    return pl.pallas_call(
        conv_relu_pool_kernel,
        out_shape=jax.ShapeDtypeStruct((M, Cout), jnp.bfloat16),
        grid_spec=pltpu.PrefetchScalarGridSpec(
            num_scalar_prefetch=0,
            grid=(1,),                                   # single step: whole batch
            in_specs=[
                pl.BlockSpec((4, M, K), lambda i: (0, 0, 0)),
                pl.BlockSpec((K, Cout), lambda i: (0, 0)),   # resident weights
                pl.BlockSpec((1, Cout), lambda i: (0, 0)),   # resident bias
            ],
            out_specs=pl.BlockSpec((M, Cout), lambda i: (0, 0)),
        ),
        compiler_params=pltpu.CompilerParams(
            dimension_semantics=("arbitrary",)),
    )(patches, w_mat, bias)


def mlp(x, w1, b1, w2, b2, *, tk=2048):
    """x: (B, K) bf16; w1: (K, H1) bf16; w2: (H1, NC) bf16.  Returns (B, NC) f32."""
    B, K = x.shape
    H1 = w1.shape[1]
    NC = w2.shape[1]
    assert K % tk == 0
    return pl.pallas_call(
        mlp_kernel,
        out_shape=jax.ShapeDtypeStruct((B, NC), jnp.float32),
        grid_spec=pltpu.PrefetchScalarGridSpec(
            num_scalar_prefetch=0,
            grid=(K // tk,),
            in_specs=[
                pl.BlockSpec((B, tk), lambda k: (0, k)),
                pl.BlockSpec((tk, H1), lambda k: (k, 0)),    # streamed fc1 slab
                pl.BlockSpec((1, H1), lambda k: (0, 0)),
                pl.BlockSpec((H1, NC), lambda k: (0, 0)),    # resident fc2
                pl.BlockSpec((1, NC), lambda k: (0, 0)),
            ],
            out_specs=pl.BlockSpec((B, NC), lambda k: (0, 0)),
            scratch_shapes=[pltpu.VMEM((B, H1), jnp.float32)],
        ),
        compiler_params=pltpu.CompilerParams(
            dimension_semantics=("arbitrary",)),    # K is a reduction axis
    )(x, w1, b1, w2, b2)


# -----------------------------------------------------------------------------
# Glue (im2col) — plain JAX, runs inside the jitted forward
# -----------------------------------------------------------------------------
def im2col_quadrants(x_nhwc, dtype=jnp.bfloat16):
    """(B,H,W,Cin) NHWC -> (4, B*Ho*Wo, 9*Cin): SAME-padded 3x3 patches grouped
    by 2x2-pool quadrant (quadrant-major), rows per quadrant in NHWC pooled
    order (b, i, j)."""
    B, H, W, Cin = x_nhwc.shape
    assert H % 2 == 0 and W % 2 == 0, "pool quadrant layout needs even H, W"
    xp = jnp.pad(x_nhwc, ((0, 0), (1, 1), (1, 1), (0, 0)))
    cols = [xp[:, dy:dy + H, dx:dx + W, :] for dy in range(3) for dx in range(3)]
    patches = jnp.concatenate(cols, axis=-1)             # (B, H, W, 9*Cin)
    Ho, Wo = H // 2, W // 2
    quads = jnp.stack([patches[:, dy::2, dx::2, :]
                       for dy in (0, 1) for dx in (0, 1)], axis=0)
    return quads.reshape(4, B * Ho * Wo, 9 * Cin).astype(dtype)


# -----------------------------------------------------------------------------
# One-time parameter preparation (hoisted OUT of the jitted forward)
# -----------------------------------------------------------------------------
def conv_weight_to_matrix(w_oihw):
    """PyTorch (Cout, Cin, 3, 3) -> (9*Cin, Cout) matching im2col column order."""
    Cout, Cin, _, _ = w_oihw.shape
    return jnp.transpose(w_oihw, (2, 3, 1, 0)).reshape(9 * Cin, Cout)


def fc1_weight_nhwc(f1w, C, Ho, Wo):
    """torch fc1 weight (H1, C*Ho*Wo) in NCHW flatten order -> (C*Ho*Wo, H1)
    with rows reordered for an NHWC flatten of the conv2 output."""
    nchw_idx = np.transpose(
        np.arange(C * Ho * Wo).reshape(C, Ho, Wo), (1, 2, 0)).reshape(-1)
    return f1w.T[nchw_idx]


def prepare_params(params, compute_dtype=jnp.bfloat16):
    """Done once per model: flatten/permute/transpose weights, cast to bf16."""
    c1w, c1b, c2w, c2b, f1w, f1b, f2w, f2b = params
    w1 = conv_weight_to_matrix(c1w).astype(compute_dtype)        # (27, 32)
    w2 = conv_weight_to_matrix(c2w).astype(compute_dtype)        # (288, 64)
    w3 = fc1_weight_nhwc(f1w, 64, 8, 8).astype(compute_dtype)    # (4096, 512)
    w4 = jnp.asarray(f2w.T, compute_dtype)                       # (512, 10)
    b1 = c1b.reshape(1, -1).astype(jnp.float32)
    b2 = c2b.reshape(1, -1).astype(jnp.float32)
    b3 = f1b.reshape(1, -1).astype(jnp.float32)
    b4 = f2b.reshape(1, -1).astype(jnp.float32)
    return (w1, b1, w2, b2, w3, b3, w4, b4)


@jax.jit
def cnn_forward(x_nchw, prepped):
    w1, b1, w2, b2, w3, b3, w4, b4 = prepped
    B = x_nchw.shape[0]
    x = jnp.transpose(x_nchw, (0, 2, 3, 1))                       # NCHW -> NHWC

    # conv1 + relu + pool : (B,32,32,3) -> (B*256, 32)  [= (B,16,16,32) NHWC]
    y1 = conv_relu_pool(im2col_quadrants(x), w1, b1)
    y1 = y1.reshape(B, 16, 16, 32)

    # conv2 + relu + pool : (B,16,16,32) -> (B*64, 64)  [= (B,8,8,64) NHWC]
    y2 = conv_relu_pool(im2col_quadrants(y1), w2, b2)

    # Flatten directly in NHWC order; the NCHW (torch x.view) semantics are
    # absorbed into the one-time fc1 row permutation done in prepare_params.
    flat = y2.reshape(B, 64 * 8 * 8)

    # fc1 + relu + fc2
    return mlp(flat, w3, b3, w4, b4, tk=2048)


# -----------------------------------------------------------------------------
# Pure-JAX f32 reference (sanity check)
# -----------------------------------------------------------------------------
def reference_forward(x, params):
    (c1w, c1b, c2w, c2b, f1w, f1b, f2w, f2b) = params

    def conv(x, w, b):
        y = lax.conv_general_dilated(x, w, (1, 1), 'SAME',
                                     dimension_numbers=('NCHW', 'OIHW', 'NCHW'))
        return y + b[None, :, None, None]

    def pool(x):
        B, C, H, W = x.shape
        return x.reshape(B, C, H // 2, 2, W // 2, 2).max(axis=(3, 5))

    y = pool(jax.nn.relu(conv(x, c1w, c1b)))
    y = pool(jax.nn.relu(conv(y, c2w, c2b)))
    y = y.reshape(y.shape[0], -1)
    y = jax.nn.relu(y @ f1w.T + f1b)
    return y @ f2w.T + f2b


# -----------------------------------------------------------------------------
if __name__ == "__main__":
    num_classes = 10
    key = jax.random.PRNGKey(0)
    ks = jax.random.split(key, 9)

    # Deterministic synthetic parameters (shapes follow the torch module).
    c1w = jax.random.normal(ks[0], (32, 3, 3, 3), jnp.float32) * 0.1
    c1b = jax.random.normal(ks[1], (32,), jnp.float32) * 0.1
    c2w = jax.random.normal(ks[2], (64, 32, 3, 3), jnp.float32) * 0.05
    c2b = jax.random.normal(ks[3], (64,), jnp.float32) * 0.05
    f1w = jax.random.normal(ks[4], (512, 64 * 8 * 8), jnp.float32) * 0.02
    f1b = jax.random.normal(ks[5], (512,), jnp.float32) * 0.02
    f2w = jax.random.normal(ks[6], (num_classes, 512), jnp.float32) * 0.05
    f2b = jax.random.normal(ks[7], (num_classes,), jnp.float32) * 0.05
    params = (c1w, c1b, c2w, c2b, f1w, f1b, f2w, f2b)

    # One-time weight prep (flatten / permute / transpose / bf16 cast).
    prepped = jax.block_until_ready(prepare_params(params))

    # Input must be 32x32 spatial (fc1 expects 64*8*8 after two 2x2 pools).
    x = jax.random.normal(ks[8], (2, 3, 32, 32), jnp.float32)

    out = jax.block_until_ready(cnn_forward(x, prepped))
    assert out.shape == (2, num_classes) and out.dtype == jnp.float32

    ref = jax.block_until_ready(reference_forward(x, params))
    # bf16 weights/activations with f32 accumulation vs. f32 reference.
    np.testing.assert_allclose(np.asarray(out), np.asarray(ref),
                               rtol=5e-2, atol=2e-2)

    print("KERNEL_OK")
</pallas_src>

<mosaic_0001>
module attributes {stable_mosaic.version = 11 : i64} {
  func.func @conv_relu_pool_kernel(%arg0: i32, %arg1: memref<4x512x27xbf16, #tpu.memory_space<vmem>>, %arg2: memref<27x32xbf16, #tpu.memory_space<vmem>>, %arg3: memref<1x32xf32, #tpu.memory_space<vmem>>, %arg4: memref<512x32xbf16, #tpu.memory_space<vmem>>) attributes {dimension_semantics = [#tpu.dimension_semantics<arbitrary>], iteration_bounds = array<i64: 1>, scalar_prefetch = 0 : i64, scratch_operands = 0 : i64, tpu.core_type = #tpu.core_type<tc>, window_params = [{pipeline_mode = #tpu.pipeline_mode<synchronous>, transform_indices = @transform_0, window_bounds = array<i64: 4, 512, 27>}, {pipeline_mode = #tpu.pipeline_mode<synchronous>, transform_indices = @transform_1, window_bounds = array<i64: 27, 32>}, {pipeline_mode = #tpu.pipeline_mode<synchronous>, transform_indices = @transform_2, window_bounds = array<i64: 1, 32>}, {pipeline_mode = #tpu.pipeline_mode<synchronous>, transform_indices = @transform_3, window_bounds = array<i64: 512, 32>}]} {
    %c0 = arith.constant 0 : index
    %c0_0 = arith.constant 0 : index
    %0 = vector.load %arg2[%c0, %c0_0] : memref<27x32xbf16, #tpu.memory_space<vmem>>, vector<27x32xbf16>
    %c0_1 = arith.constant 0 : index
    %c0_2 = arith.constant 0 : index
    %c0_3 = arith.constant 0 : index
    %1 = vector.load %arg1[%c0_1, %c0_2, %c0_3] : memref<4x512x27xbf16, #tpu.memory_space<vmem>>, vector<1x512x27xbf16>
    %2 = vector.shape_cast %1 : vector<1x512x27xbf16> to vector<512x27xbf16>
    %cst = arith.constant dense<0.000000e+00> : vector<512x32xf32>
    %3 = tpu.matmul %2, %0, %cst {dimension_numbers = #tpu.dot_dimension_numbers<[1], [0], [0], [1], [0, 0, 1, 1], [], []>} : vector<512x27xbf16>, vector<27x32xbf16>, vector<512x32xf32> -> vector<512x32xf32>
    %c1 = arith.constant 1 : index
    %c0_4 = arith.constant 0 : index
    %c0_5 = arith.constant 0 : index
    %4 = vector.load %arg1[%c1, %c0_4, %c0_5] : memref<4x512x27xbf16, #tpu.memory_space<vmem>>, vector<1x512x27xbf16>
    %5 = vector.shape_cast %4 : vector<1x512x27xbf16> to vector<512x27xbf16>
    %cst_6 = arith.constant dense<0.000000e+00> : vector<512x32xf32>
    %6 = tpu.matmul %5, %0, %cst_6 {dimension_numbers = #tpu.dot_dimension_numbers<[1], [0], [0], [1], [0, 0, 1, 1], [], []>} : vector<512x27xbf16>, vector<27x32xbf16>, vector<512x32xf32> -> vector<512x32xf32>
    %7 = arith.maximumf %3, %6 : vector<512x32xf32>
    %c2 = arith.constant 2 : index
    %c0_7 = arith.constant 0 : index
    %c0_8 = arith.constant 0 : index
    %8 = vector.load %arg1[%c2, %c0_7, %c0_8] : memref<4x512x27xbf16, #tpu.memory_space<vmem>>, vector<1x512x27xbf16>
    %9 = vector.shape_cast %8 : vector<1x512x27xbf16> to vector<512x27xbf16>
    %cst_9 = arith.constant dense<0.000000e+00> : vector<512x32xf32>
    %10 = tpu.matmul %9, %0, %cst_9 {dimension_numbers = #tpu.dot_dimension_numbers<[1], [0], [0], [1], [0, 0, 1, 1], [], []>} : vector<512x27xbf16>, vector<27x32xbf16>, vector<512x32xf32> -> vector<512x32xf32>
    %11 = arith.maximumf %7, %10 : vector<512x32xf32>
    %c3 = arith.constant 3 : index
    %c0_10 = arith.constant 0 : index
    %c0_11 = arith.constant 0 : index
    %12 = vector.load %arg1[%c3, %c0_10, %c0_11] : memref<4x512x27xbf16, #tpu.memory_space<vmem>>, vector<1x512x27xbf16>
    %13 = vector.shape_cast %12 : vector<1x512x27xbf16> to vector<512x27xbf16>
    %cst_12 = arith.constant dense<0.000000e+00> : vector<512x32xf32>
    %14 = tpu.matmul %13, %0, %cst_12 {dimension_numbers = #tpu.dot_dimension_numbers<[1], [0], [0], [1], [0, 0, 1, 1], [], []>} : vector<512x27xbf16>, vector<27x32xbf16>, vector<512x32xf32> -> vector<512x32xf32>
    %15 = arith.maximumf %11, %14 : vector<512x32xf32>
    %c0_13 = arith.constant 0 : index
    %c0_14 = arith.constant 0 : index
    %16 = vector.load %arg3[%c0_13, %c0_14] : memref<1x32xf32, #tpu.memory_space<vmem>>, vector<1x32xf32>
    %17 = vector.broadcast %16 : vector<1x32xf32> to vector<512x32xf32>
    %18 = arith.addf %15, %17 : vector<512x32xf32>
    %cst_15 = arith.constant 0.000000e+00 : f32
    %19 = vector.broadcast %cst_15 : f32 to vector<512x32xf32>
    %20 = arith.maximumf %18, %19 : vector<512x32xf32>
    %21 = arith.truncf %20 : vector<512x32xf32> to vector<512x32xbf16>
    %c0_16 = arith.constant 0 : index
    %c0_17 = arith.constant 0 : index
    %22 = vector.load %arg4[%c0_16, %c0_17] : memref<512x32xbf16, #tpu.memory_space<vmem>>, vector<512x32xbf16>
    tpu.vector_store %arg4[%c0_16, %c0_17], %21 {strides = array<i32>} : memref<512x32xbf16, #tpu.memory_space<vmem>>, vector<512x32xbf16>,
    return
  }
  func.func @transform_0(%arg0: i32) -> (i32, i32, i32) {
    %c0_i32 = arith.constant 0 : i32
    %c0_i32_0 = arith.constant 0 : i32
    %c0_i32_1 = arith.constant 0 : i32
    %c0_i32_2 = arith.constant 0 : i32
    return %c0_i32, %c0_i32_0, %c0_i32_1 : i32, i32, i32
  }
  func.func @transform_1(%arg0: i32) -> (i32, i32) {
    %c0_i32 = arith.constant 0 : i32
    %c0_i32_0 = arith.constant 0 : i32
    %c0_i32_1 = arith.constant 0 : i32
    return %c0_i32, %c0_i32_0 : i32, i32
  }
  func.func @transform_2(%arg0: i32) -> (i32, i32) {
    %c0_i32 = arith.constant 0 : i32
    %c0_i32_0 = arith.constant 0 : i32
    %c0_i32_1 = arith.constant 0 : i32
    return %c0_i32, %c0_i32_0 : i32, i32
  }
  func.func @transform_3(%arg0: i32) -> (i32, i32) {
    %c0_i32 = arith.constant 0 : i32
    %c0_i32_0 = arith.constant 0 : i32
    %c0_i32_1 = arith.constant 0 : i32
    return %c0_i32, %c0_i32_0 : i32, i32
  }
}

module attributes {stable_mosaic.version = 11 : i64} {
  func.func @conv_relu_pool_kernel(%arg0: i32, %arg1: memref<4x128x288xbf16, #tpu.memory_space<vmem>>, %arg2: memref<288x64xbf16, #tpu.memory_space<vmem>>, %arg3: memref<1x64xf32, #tpu.memory_space<vmem>>, %arg4: memref<128x64xbf16, #tpu.memory_space<vmem>>) attributes {dimension_semantics = [#tpu.dimension_semantics<arbitrary>], iteration_bounds = array<i64: 1>, scalar_prefetch = 0 : i64, scratch_operands = 0 : i64, tpu.core_type = #tpu.core_type<tc>, window_params = [{pipeline_mode = #tpu.pipeline_mode<synchronous>, transform_indices = @transform_0, window_bounds = array<i64: 4, 128, 288>}, {pipeline_mode = #tpu.pipeline_mode<synchronous>, transform_indices = @transform_1, window_bounds = array<i64: 288, 64>}, {pipeline_mode = #tpu.pipeline_mode<synchronous>, transform_indices = @transform_2, window_bounds = array<i64: 1, 64>}, {pipeline_mode = #tpu.pipeline_mode<synchronous>, transform_indices = @transform_3, window_bounds = array<i64: 128, 64>}]} {
    %c0 = arith.constant 0 : index
    %c0_0 = arith.constant 0 : index
    %0 = vector.load %arg2[%c0, %c0_0] : memref<288x64xbf16, #tpu.memory_space<vmem>>, vector<288x64xbf16>
    %c0_1 = arith.constant 0 : index
    %c0_2 = arith.constant 0 : index
    %c0_3 = arith.constant 0 : index
    %1 = vector.load %arg1[%c0_1, %c0_2, %c0_3] : memref<4x128x288xbf16, #tpu.memory_space<vmem>>, vector<1x128x288xbf16>
    %2 = vector.shape_cast %1 : vector<1x128x288xbf16> to vector<128x288xbf16>
    %cst = arith.constant dense<0.000000e+00> : vector<128x64xf32>
    %3 = tpu.matmul %2, %0, %cst {dimension_numbers = #tpu.dot_dimension_numbers<[1], [0], [0], [1], [0, 0, 1, 1], [], []>} : vector<128x288xbf16>, vector<288x64xbf16>, vector<128x64xf32> -> vector<128x64xf32>
    %c1 = arith.constant 1 : index
    %c0_4 = arith.constant 0 : index
    %c0_5 = arith.constant 0 : index
    %4 = vector.load %arg1[%c1, %c0_4, %c0_5] : memref<4x128x288xbf16, #tpu.memory_space<vmem>>, vector<1x128x288xbf16>
    %5 = vector.shape_cast %4 : vector<1x128x288xbf16> to vector<128x288xbf16>
    %cst_6 = arith.constant dense<0.000000e+00> : vector<128x64xf32>
    %6 = tpu.matmul %5, %0, %cst_6 {dimension_numbers = #tpu.dot_dimension_numbers<[1], [0], [0], [1], [0, 0, 1, 1], [], []>} : vector<128x288xbf16>, vector<288x64xbf16>, vector<128x64xf32> -> vector<128x64xf32>
    %7 = arith.maximumf %3, %6 : vector<128x64xf32>
    %c2 = arith.constant 2 : index
    %c0_7 = arith.constant 0 : index
    %c0_8 = arith.constant 0 : index
    %8 = vector.load %arg1[%c2, %c0_7, %c0_8] : memref<4x128x288xbf16, #tpu.memory_space<vmem>>, vector<1x128x288xbf16>
    %9 = vector.shape_cast %8 : vector<1x128x288xbf16> to vector<128x288xbf16>
    %cst_9 = arith.constant dense<0.000000e+00> : vector<128x64xf32>
    %10 = tpu.matmul %9, %0, %cst_9 {dimension_numbers = #tpu.dot_dimension_numbers<[1], [0], [0], [1], [0, 0, 1, 1], [], []>} : vector<128x288xbf16>, vector<288x64xbf16>, vector<128x64xf32> -> vector<128x64xf32>
    %11 = arith.maximumf %7, %10 : vector<128x64xf32>
    %c3 = arith.constant 3 : index
    %c0_10 = arith.constant 0 : index
    %c0_11 = arith.constant 0 : index
    %12 = vector.load %arg1[%c3, %c0_10, %c0_11] : memref<4x128x288xbf16, #tpu.memory_space<vmem>>, vector<1x128x288xbf16>
    %13 = vector.shape_cast %12 : vector<1x128x288xbf16> to vector<128x288xbf16>
    %cst_12 = arith.constant dense<0.000000e+00> : vector<128x64xf32>
    %14 = tpu.matmul %13, %0, %cst_12 {dimension_numbers = #tpu.dot_dimension_numbers<[1], [0], [0], [1], [0, 0, 1, 1], [], []>} : vector<128x288xbf16>, vector<288x64xbf16>, vector<128x64xf32> -> vector<128x64xf32>
    %15 = arith.maximumf %11, %14 : vector<128x64xf32>
    %c0_13 = arith.constant 0 : index
    %c0_14 = arith.constant 0 : index
    %16 = vector.load %arg3[%c0_13, %c0_14] : memref<1x64xf32, #tpu.memory_space<vmem>>, vector<1x64xf32>
    %17 = vector.broadcast %16 : vector<1x64xf32> to vector<128x64xf32>
    %18 = arith.addf %15, %17 : vector<128x64xf32>
    %cst_15 = arith.constant 0.000000e+00 : f32
    %19 = vector.broadcast %cst_15 : f32 to vector<128x64xf32>
    %20 = arith.maximumf %18, %19 : vector<128x64xf32>
    %21 = arith.truncf %20 : vector<128x64xf32> to vector<128x64xbf16>
    %c0_16 = arith.constant 0 : index
    %c0_17 = arith.constant 0 : index
    %22 = vector.load %arg4[%c0_16, %c0_17] : memref<128x64xbf16, #tpu.memory_space<vmem>>, vector<128x64xbf16>
    tpu.vector_store %arg4[%c0_16, %c0_17], %21 {strides = array<i32>} : memref<128x64xbf16, #tpu.memory_space<vmem>>, vector<128x64xbf16>,
    return
  }
  func.func @transform_0(%arg0: i32) -> (i32, i32, i32) {
    %c0_i32 = arith.constant 0 : i32
    %c0_i32_0 = arith.constant 0 : i32
    %c0_i32_1 = arith.constant 0 : i32
    %c0_i32_2 = arith.constant 0 : i32
    return %c0_i32, %c0_i32_0, %c0_i32_1 : i32, i32, i32
  }
  func.func @transform_1(%arg0: i32) -> (i32, i32) {
    %c0_i32 = arith.constant 0 : i32
    %c0_i32_0 = arith.constant 0 : i32
    %c0_i32_1 = arith.constant 0 : i32
    return %c0_i32, %c0_i32_0 : i32, i32
  }
  func.func @transform_2(%arg0: i32) -> (i32, i32) {
    %c0_i32 = arith.constant 0 : i32
    %c0_i32_0 = arith.constant 0 : i32
    %c0_i32_1 = arith.constant 0 : i32
    return %c0_i32, %c0_i32_0 : i32, i32
  }
  func.func @transform_3(%arg0: i32) -> (i32, i32) {
    %c0_i32 = arith.constant 0 : i32
    %c0_i32_0 = arith.constant 0 : i32
    %c0_i32_1 = arith.constant 0 : i32
    return %c0_i32, %c0_i32_0 : i32, i32
  }
}

module attributes {stable_mosaic.version = 11 : i64} {
  func.func @mlp_kernel(%arg0: i32, %arg1: memref<2x2048xbf16, #tpu.memory_space<vmem>>, %arg2: memref<2048x512xbf16, #tpu.memory_space<vmem>>, %arg3: memref<1x512xf32, #tpu.memory_space<vmem>>, %arg4: memref<512x10xbf16, #tpu.memory_space<vmem>>, %arg5: memref<1x10xf32, #tpu.memory_space<vmem>>, %arg6: memref<2x10xf32, #tpu.memory_space<vmem>>, %arg7: memref<2x512xf32, #tpu.memory_space<vmem>>) attributes {dimension_semantics = [#tpu.dimension_semantics<arbitrary>], iteration_bounds = array<i64: 2>, scalar_prefetch = 0 : i64, scratch_operands = 1 : i64, tpu.core_type = #tpu.core_type<tc>, window_params = [{transform_indices = @transform_0, window_bounds = array<i64: 2, 2048>}, {transform_indices = @transform_1, window_bounds = array<i64: 2048, 512>}, {pipeline_mode = #tpu.pipeline_mode<synchronous>, transform_indices = @transform_2, window_bounds = array<i64: 1, 512>}, {pipeline_mode = #tpu.pipeline_mode<synchronous>, transform_indices = @transform_3, window_bounds = array<i64: 512, 10>}, {pipeline_mode = #tpu.pipeline_mode<synchronous>, transform_indices = @transform_4, window_bounds = array<i64: 1, 10>}, {pipeline_mode = #tpu.pipeline_mode<synchronous>, transform_indices = @transform_5, window_bounds = array<i64: 2, 10>}]} {
    %c0_i32 = arith.constant 0 : i32
    %0 = arith.cmpi eq, %arg0, %c0_i32 : i32
    %1 = arith.extui %0 : i1 to i32
    %c0_i32_0 = arith.constant 0 : i32
    %2 = arith.cmpi ne, %1, %c0_i32_0 : i32
    scf.if %2 {
      %cst_9 = arith.constant 0.000000e+00 : f32
      %12 = vector.broadcast %cst_9 : f32 to vector<2x512xf32>
      %c0_10 = arith.constant 0 : index
      %c0_11 = arith.constant 0 : index
      %13 = vector.load %arg7[%c0_10, %c0_11] : memref<2x512xf32, #tpu.memory_space<vmem>>, vector<2x512xf32>
      tpu.vector_store %arg7[%c0_10, %c0_11], %12 {strides = array<i32>} : memref<2x512xf32, #tpu.memory_space<vmem>>, vector<2x512xf32>,
    } else {
    }
    %c0 = arith.constant 0 : index
    %c0_1 = arith.constant 0 : index
    %3 = vector.load %arg7[%c0, %c0_1] : memref<2x512xf32, #tpu.memory_space<vmem>>, vector<2x512xf32>
    %c0_2 = arith.constant 0 : index
    %c0_3 = arith.constant 0 : index
    %4 = vector.load %arg1[%c0_2, %c0_3] : memref<2x2048xbf16, #tpu.memory_space<vmem>>, vector<2x2048xbf16>
    %c0_4 = arith.constant 0 : index
    %c0_5 = arith.constant 0 : index
    %5 = vector.load %arg2[%c0_4, %c0_5] : memref<2048x512xbf16, #tpu.memory_space<vmem>>, vector<2048x512xbf16>
    %cst = arith.constant dense<0.000000e+00> : vector<2x512xf32>
    %6 = tpu.matmul %4, %5, %cst {dimension_numbers = #tpu.dot_dimension_numbers<[1], [0], [0], [1], [0, 0, 1, 1], [], []>} : vector<2x2048xbf16>, vector<2048x512xbf16>, vector<2x512xf32> -> vector<2x512xf32>
    %7 = arith.addf %3, %6 : vector<2x512xf32>
    %c0_6 = arith.constant 0 : index
    %c0_7 = arith.constant 0 : index
    %8 = vector.load %arg7[%c0_6, %c0_7] : memref<2x512xf32, #tpu.memory_space<vmem>>, vector<2x512xf32>
    tpu.vector_store %arg7[%c0_6, %c0_7], %7 {strides = array<i32>} : memref<2x512xf32, #tpu.memory_space<vmem>>, vector<2x512xf32>,
    %c1_i32 = arith.constant 1 : i32
    %9 = arith.cmpi eq, %arg0, %c1_i32 : i32
    %10 = arith.extui %9 : i1 to i32
    %c0_i32_8 = arith.constant 0 : i32
    %11 = arith.cmpi ne, %10, %c0_i32_8 : i32
    scf.if %11 {
      %c0_9 = arith.constant 0 : index
      %c0_10 = arith.constant 0 : index
      %12 = vector.load %arg7[%c0_9, %c0_10] : memref<2x512xf32, #tpu.memory_space<vmem>>, vector<2x512xf32>
      %c0_11 = arith.constant 0 : index
      %c0_12 = arith.constant 0 : index
      %13 = vector.load %arg3[%c0_11, %c0_12] : memref<1x512xf32, #tpu.memory_space<vmem>>, vector<1x512xf32>
      %14 = vector.broadcast %13 : vector<1x512xf32> to vector<2x512xf32>
      %15 = arith.addf %12, %14 : vector<2x512xf32>
      %cst_13 = arith.constant 0.000000e+00 : f32
      %16 = vector.broadcast %cst_13 : f32 to vector<2x512xf32>
      %17 = arith.maximumf %15, %16 : vector<2x512xf32>
      %18 = arith.truncf %17 : vector<2x512xf32> to vector<2x512xbf16>
      %c0_14 = arith.constant 0 : index
      %c0_15 = arith.constant 0 : index
      %19 = vector.load %arg4[%c0_14, %c0_15] : memref<512x10xbf16, #tpu.memory_space<vmem>>, vector<512x10xbf16>
      %cst_16 = arith.constant dense<0.000000e+00> : vector<2x10xf32>
      %20 = tpu.matmul %18, %19, %cst_16 {dimension_numbers = #tpu.dot_dimension_numbers<[1], [0], [0], [1], [0, 0, 1, 1], [], []>} : vector<2x512xbf16>, vector<512x10xbf16>, vector<2x10xf32> -> vector<2x10xf32>
      %c0_17 = arith.constant 0 : index
      %c0_18 = arith.constant 0 : index
      %21 = vector.load %arg5[%c0_17, %c0_18] : memref<1x10xf32, #tpu.memory_space<vmem>>, vector<1x10xf32>
      %22 = vector.broadcast %21 : vector<1x10xf32> to vector<2x10xf32>
      %23 = arith.addf %20, %22 : vector<2x10xf32>
      %c0_19 = arith.constant 0 : index
      %c0_20 = arith.constant 0 : index
      %24 = vector.load %arg6[%c0_19, %c0_20] : memref<2x10xf32, #tpu.memory_space<vmem>>, vector<2x10xf32>
      tpu.vector_store %arg6[%c0_19, %c0_20], %23 {strides = array<i32>} : memref<2x10xf32, #tpu.memory_space<vmem>>, vector<2x10xf32>,
    } else {
    }
    return
  }
  func.func @transform_0(%arg0: i32) -> (i32, i32) {
    %c0_i32 = arith.constant 0 : i32
    %c0_i32_0 = arith.constant 0 : i32
    return %c0_i32, %arg0 : i32, i32
  }
  func.func @transform_1(%arg0: i32) -> (i32, i32) {
    %c0_i32 = arith.constant 0 : i32
    %c0_i32_0 = arith.constant 0 : i32
    return %arg0, %c0_i32 : i32, i32
  }
  func.func @transform_2(%arg0: i32) -> (i32, i32) {
    %c0_i32 = arith.constant 0 : i32
    %c0_i32_0 = arith.constant 0 : i32
    %c0_i32_1 = arith.constant 0 : i32
    return %c0_i32, %c0_i32_0 : i32, i32
  }
  func.func @transform_3(%arg0: i32) -> (i32, i32) {
    %c0_i32 = arith.constant 0 : i32
    %c0_i32_0 = arith.constant 0 : i32
    %c0_i32_1 = arith.constant 0 : i32
    return %c0_i32, %c0_i32_0 : i32, i32
  }
  func.func @transform_4(%arg0: i32) -> (i32, i32) {
    %c0_i32 = arith.constant 0 : i32
    %c0_i32_0 = arith.constant 0 : i32
    %c0_i32_1 = arith.constant 0 : i32
    return %c0_i32, %c0_i32_0 : i32, i32
  }
  func.func @transform_5(%arg0: i32) -> (i32, i32) {
    %c0_i32 = arith.constant 0 : i32
    %c0_i32_0 = arith.constant 0 : i32
    %c0_i32_1 = arith.constant 0 : i32
    return %c0_i32, %c0_i32_0 : i32, i32
  }
}

</mosaic_0001>

<llo_original>
// kernel: cnn_forward.3
$region0: #{cnn_forward.3}
  #allocation0 [shape = 'u32[]', space=smem, size = 0x4, offset = 0x4, fixed_abs, tag = 'smem constant byte address 0x4 - core index']
  #allocation1 [shape = 'u32[72,128]{1,0:T(1,128)}', space=vmem, size = 0x9000, scoped, tag = 'internal scratch']
  %s0 = inlined_call_operand.vmem [shape: bf16[4,512,27], index: 0, kind: input, shape index: {}]
  %s1 = inlined_call_operand.vmem [shape: bf16[27,32], index: 1, kind: input, shape index: {}]
  %s2 = inlined_call_operand.vmem [shape: f32[1,32], index: 2, kind: input, shape index: {}]
  %s3 = inlined_call_operand.vmem [shape: bf16[512,32], index: 3, kind: output, shape index: {}]
  %s4 = sld [smem:[#allocation0]]
  $region22: #{cnn_forward.3} parent=0
    _
  %s6 = ssub.s32 1, %s4
  %s7 = scalar_select 0, %s6, %s4
  // Predicated region
  $region2: #{cnn_forward.3} parent=0 // pred_check
    _
  $region3: #{cnn_forward.3} parent=0 // pred_check_branch
    %9 = sbr.rel (0) target = $region5
  $region4: #{cnn_forward.3} parent=0 // pred_region
    _
  $region5: #{cnn_forward.3} parent=0 // pred_fallthru
    _
  // Predicated region
  $region6: #{cnn_forward.3} parent=0 // pred_check
    _
  $region7: #{cnn_forward.3} parent=0 // pred_check_branch
    %11 = sbr.rel (0) target = $region9
  $region8: #{cnn_forward.3} parent=0 // pred_region
    _
  $region9: #{cnn_forward.3} parent=0 // pred_fallthru
    _
  // Predicated region
  $region10: #{cnn_forward.3} parent=0 // pred_check
    _
  $region11: #{cnn_forward.3} parent=0 // pred_check_branch
    %13 = sbr.rel (0) target = $region13
  $region12: #{cnn_forward.3} parent=0 // pred_region
    _
  $region13: #{cnn_forward.3} parent=0 // pred_fallthru
    _
  %v15 = vld [vmem:[%s1] sm:$0xf]
  %v16 = vld [vmem:[%s1 + $0x4] sm:$0xf]
  %v17 = vld [vmem:[%s1 + $0x8] sm:$0xf]
  %v18 = vld [vmem:[%s1 + $0xc] sm:$0x3]
  %v19 = vld [vmem:[%s0] sm:$0xf]
  %v20 = vld [vmem:[%s0 + $0x4] sm:$0xf]
  %v21 = vld [vmem:[%s0 + $0x8] sm:$0xf]
  %v22 = vld [vmem:[%s0 + $0xc] sm:$0xf]
  %v23 = vld [vmem:[%s0 + $0x10] sm:$0xf]
  %v24 = vld [vmem:[%s0 + $0x14] sm:$0xf]
  %v25 = vld [vmem:[%s0 + $0x18] sm:$0xf]
  %v26 = vld [vmem:[%s0 + $0x1c] sm:$0xf]
  %v27 = vld [vmem:[%s0 + $0x20] sm:$0xf]
  %v28 = vld [vmem:[%s0 + $0x24] sm:$0xf]
  %v29 = vld [vmem:[%s0 + $0x28] sm:$0xf]
  %v30 = vld [vmem:[%s0 + $0x2c] sm:$0xf]
  %v31 = vld [vmem:[%s0 + $0x30] sm:$0xf]
  %v32 = vld [vmem:[%s0 + $0x34] sm:$0xf]
  %v33 = vld [vmem:[%s0 + $0x38] sm:$0xf]
  %v34 = vld [vmem:[%s0 + $0x3c] sm:$0xf]
  %v35 = vld [vmem:[%s0 + $0x40] sm:$0xf]
  %v36 = vld [vmem:[%s0 + $0x44] sm:$0xf]
  %v37 = vld [vmem:[%s0 + $0x48] sm:$0xf]
  %v38 = vld [vmem:[%s0 + $0x4c] sm:$0xf]
  %v39 = vld [vmem:[%s0 + $0x50] sm:$0xf]
  %v40 = vld [vmem:[%s0 + $0x54] sm:$0xf]
  %v41 = vld [vmem:[%s0 + $0x58] sm:$0xf]
  %v42 = vld [vmem:[%s0 + $0x5c] sm:$0xf]
  %v43 = vld [vmem:[%s0 + $0x60] sm:$0xf]
  %v44 = vld [vmem:[%s0 + $0x64] sm:$0xf]
  %v45 = vld [vmem:[%s0 + $0x68] sm:$0xf]
  %v46 = vld [vmem:[%s0 + $0x6c] sm:$0xf]
  %v47 = vld [vmem:[%s0 + $0x70] sm:$0xf]
  %v48 = vld [vmem:[%s0 + $0x74] sm:$0xf]
  %v49 = vld [vmem:[%s0 + $0x78] sm:$0xf]
  %v50 = vld [vmem:[%s0 + $0x7c] sm:$0xf]
  %v51 = vld [vmem:[%s0 + $0x80] sm:$0xf]
  %v52 = vld [vmem:[%s0 + $0x84] sm:$0xf]
  %v53 = vld [vmem:[%s0 + $0x88] sm:$0xf]
  %v54 = vld [vmem:[%s0 + $0x8c] sm:$0xf]
  %v55 = vld [vmem:[%s0 + $0x90] sm:$0xf]
  %v56 = vld [vmem:[%s0 + $0x94] sm:$0xf]
  %v57 = vld [vmem:[%s0 + $0x98] sm:$0xf]
  %v58 = vld [vmem:[%s0 + $0x9c] sm:$0xf]
  %v59 = vld [vmem:[%s0 + $0xa0] sm:$0xf]
  %v60 = vld [vmem:[%s0 + $0xa4] sm:$0xf]
  %v61 = vld [vmem:[%s0 + $0xa8] sm:$0xf]
  %v62 = vld [vmem:[%s0 + $0xac] sm:$0xf]
  %v63 = vld [vmem:[%s0 + $0xb0] sm:$0xf]
  %v64 = vld [vmem:[%s0 + $0xb4] sm:$0xf]
  %v65 = vld [vmem:[%s0 + $0xb8] sm:$0xf]
  %v66 = vld [vmem:[%s0 + $0xbc] sm:$0xf]
  %v67 = vld [vmem:[%s0 + $0xc0] sm:$0xf]
  %v68 = vld [vmem:[%s0 + $0xc4] sm:$0xf]
  %v69 = vld [vmem:[%s0 + $0xc8] sm:$0xf]
  %v70 = vld [vmem:[%s0 + $0xcc] sm:$0xf]
  %v71 = vld [vmem:[%s0 + $0xd0] sm:$0xf]
  %v72 = vld [vmem:[%s0 + $0xd4] sm:$0xf]
  %v73 = vld [vmem:[%s0 + $0xd8] sm:$0xf]
  %v74 = vld [vmem:[%s0 + $0xdc] sm:$0xf]
  %v75 = vld [vmem:[%s0 + $0xe0] sm:$0xf]
  %v76 = vld [vmem:[%s0 + $0xe4] sm:$0xf]
  %v77 = vld [vmem:[%s0 + $0xe8] sm:$0xf]
  %v78 = vld [vmem:[%s0 + $0xec] sm:$0xf]
  %v79 = vld [vmem:[%s0 + $0xf0] sm:$0xf]
  %v80 = vld [vmem:[%s0 + $0xf4] sm:$0xf]
  %v81 = vld [vmem:[%s0 + $0xf8] sm:$0xf]
  %v82 = vld [vmem:[%s0 + $0xfc] sm:$0xf]
  %v147 = vunpack.c.l.b16 %v19
  %v148 = vunpack.c.l.b16 %v20
  %v149 = vunpack.c.l.b16 %v21
  %v150 = vunpack.c.l.b16 %v22
  %v151 = vunpack.c.l.b16 %v23
  %v152 = vunpack.c.l.b16 %v24
  %v153 = vunpack.c.l.b16 %v25
  %v154 = vunpack.c.l.b16 %v26
  %v155 = vunpack.c.l.b16 %v27
  %v156 = vunpack.c.l.b16 %v28
  %v157 = vunpack.c.l.b16 %v29
  %v158 = vunpack.c.l.b16 %v30
  %v159 = vunpack.c.l.b16 %v31
  %v160 = vunpack.c.l.b16 %v32
  %v161 = vunpack.c.l.b16 %v33
  %v162 = vunpack.c.l.b16 %v34
  %v163 = vunpack.c.l.b16 %v35
  %v164 = vunpack.c.l.b16 %v36
  %v165 = vunpack.c.l.b16 %v37
  %v166 = vunpack.c.l.b16 %v38
  %v167 = vunpack.c.l.b16 %v39
  %v168 = vunpack.c.l.b16 %v40
  %v169 = vunpack.c.l.b16 %v41
  %v170 = vunpack.c.l.b16 %v42
  %v171 = vunpack.c.l.b16 %v43
  %v172 = vunpack.c.l.b16 %v44
  %v173 = vunpack.c.l.b16 %v45
  %v174 = vunpack.c.l.b16 %v46
  %v175 = vunpack.c.l.b16 %v47
  %v176 = vunpack.c.l.b16 %v48
  %v177 = vunpack.c.l.b16 %v49
  %v178 = vunpack.c.l.b16 %v50
  %v179 = vunpack.c.l.b16 %v51
  %v180 = vunpack.c.l.b16 %v52
  %v181 = vunpack.c.l.b16 %v53
  %v182 = vunpack.c.l.b16 %v54
  %v183 = vunpack.c.l.b16 %v55
  %v184 = vunpack.c.l.b16 %v56
  %v185 = vunpack.c.l.b16 %v57
  %v186 = vunpack.c.l.b16 %v58
  %v187 = vunpack.c.l.b16 %v59
  %v188 = vunpack.c.l.b16 %v60
  %v189 = vunpack.c.l.b16 %v61
  %v190 = vunpack.c.l.b16 %v62
  %v191 = vunpack.c.l.b16 %v63
  %v192 = vunpack.c.l.b16 %v64
  %v193 = vunpack.c.l.b16 %v65
  %v194 = vunpack.c.l.b16 %v66
  %v195 = vunpack.c.l.b16 %v67
  %v196 = vunpack.c.l.b16 %v68
  %v197 = vunpack.c.l.b16 %v69
  %v198 = vunpack.c.l.b16 %v70
  %v199 = vunpack.c.l.b16 %v71
  %v200 = vunpack.c.l.b16 %v72
  %v201 = vunpack.c.l.b16 %v73
  %v202 = vunpack.c.l.b16 %v74
  %v203 = vunpack.c.l.b16 %v75
  %v204 = vunpack.c.l.b16 %v76
  %v205 = vunpack.c.l.b16 %v77
  %v206 = vunpack.c.l.b16 %v78
  %v207 = vunpack.c.l.b16 %v79
  %v208 = vunpack.c.l.b16 %v80
  %v209 = vunpack.c.l.b16 %v81
  %v210 = vunpack.c.l.b16 %v82
  %v211 = vpack.c.b16 %v148, %v147
  %v212 = vpack.c.b16 %v150, %v149
  %v213 = vpack.c.b16 %v152, %v151
  %v214 = vpack.c.b16 %v154, %v153
  %v215 = vpack.c.b16 %v156, %v155
  %v216 = vpack.c.b16 %v158, %v157
  %v217 = vpack.c.b16 %v160, %v159
  %v218 = vpack.c.b16 %v162, %v161
  %v219 = vpack.c.b16 %v164, %v163
  %v220 = vpack.c.b16 %v166, %v165
  %v221 = vpack.c.b16 %v168, %v167
  %v222 = vpack.c.b16 %v170, %v169
  %v223 = vpack.c.b16 %v172, %v171
  %v224 = vpack.c.b16 %v174, %v173
  %v225 = vpack.c.b16 %v176, %v175
  %v226 = vpack.c.b16 %v178, %v177
  %v227 = vpack.c.b16 %v180, %v179
  %v228 = vpack.c.b16 %v182, %v181
  %v229 = vpack.c.b16 %v184, %v183
  %v230 = vpack.c.b16 %v186, %v185
  %v231 = vpack.c.b16 %v188, %v187
  %v232 = vpack.c.b16 %v190, %v189
  %v233 = vpack.c.b16 %v192, %v191
  %v234 = vpack.c.b16 %v194, %v193
  %v235 = vpack.c.b16 %v196, %v195
  %v236 = vpack.c.b16 %v198, %v197
  %v237 = vpack.c.b16 %v200, %v199
  %v238 = vpack.c.b16 %v202, %v201
  %v239 = vpack.c.b16 %v204, %v203
  %v240 = vpack.c.b16 %v206, %v205
  %v241 = vpack.c.b16 %v208, %v207
  %v242 = vpack.c.b16 %v210, %v209
  %v247 = vunpack.c.l.b16 %v15
  %v248 = vunpack.c.l.b16 %v16
  %v249 = vunpack.c.l.b16 %v17
  %v250 = vunpack.c.l.b16 %v18
  %v251 = vpack.c.b16 %v248, %v247
  %v252 = vpack.c.b16 %v250, %v249
  %vm254 = vcmask 220160
  %v256 = vsel %vm254, %v211, 0
  %v259 = vsel %vm254, %v212, 0
  %v262 = vsel %vm254, %v213, 0
  %v265 = vsel %vm254, %v214, 0
  %v268 = vsel %vm254, %v215, 0
  %v271 = vsel %vm254, %v216, 0
  %v274 = vsel %vm254, %v217, 0
  %v277 = vsel %vm254, %v218, 0
  %v280 = vsel %vm254, %v219, 0
  %v283 = vsel %vm254, %v220, 0
  %v286 = vsel %vm254, %v221, 0
  %v289 = vsel %vm254, %v222, 0
  %v292 = vsel %vm254, %v223, 0
  %v295 = vsel %vm254, %v224, 0
  %v298 = vsel %vm254, %v225, 0
  %v301 = vsel %vm254, %v226, 0
  %v304 = vsel %vm254, %v227, 0
  %v307 = vsel %vm254, %v228, 0
  %v310 = vsel %vm254, %v229, 0
  %v313 = vsel %vm254, %v230, 0
  %v316 = vsel %vm254, %v231, 0
  %v319 = vsel %vm254, %v232, 0
  %v322 = vsel %vm254, %v233, 0
  %v325 = vsel %vm254, %v234, 0
  %v328 = vsel %vm254, %v235, 0
  %v331 = vsel %vm254, %v236, 0
  %v334 = vsel %vm254, %v237, 0
  %v337 = vsel %vm254, %v238, 0
  %v340 = vsel %vm254, %v239, 0
  %v343 = vsel %vm254, %v240, 0
  %v346 = vsel %vm254, %v241, 0
  %v349 = vsel %vm254, %v242, 0
  %vm351 = vcmask 1044480
  %vm352 = vcmask 1045504
  %v353 = vsel %vm351, 4294967295, 65535
  %v354 = vsel %vm352, %v353, 0
  %v356 = vand.u32 %v252, %v354
  %358 = vmatpush.bf16.msra.mxu0 0
  %359 = vmatpush.bf16.msra.mxu0 0
  %360 = vmatpush.bf16.msra.mxu0 0
  %361 = vmatpush.bf16.msra.mxu0 0
  %362 = vmatpush.bf16.msra.mxu0 0
  %363 = vmatpush.bf16.msra.mxu0 0
  %364 = vmatpush.bf16.msra.mxu0 %v356
  %365 = vmatpush.bf16.msra.mxu0 %v251
  %366 = vmatmul.bf16.gmra.mxu0 %v256
  %v367 = vpop.f32.mrf.mxu0
  %v368 = vadd.f32 0.0, %v367
  %v369 = vpop.f32.mrf.mxu0
  %v370 = vadd.f32 0.0, %v369
  %371 = vmatmul.bf16.gmra.mxu0 %v259
  %v372 = vpop.f32.mrf.mxu0
  %v373 = vadd.f32 0.0, %v372
  %v374 = vpop.f32.mrf.mxu0
  %v375 = vadd.f32 0.0, %v374
  %376 = vmatmul.bf16.gmra.mxu0 %v262
  %v377 = vpop.f32.mrf.mxu0
  %v378 = vadd.f32 0.0, %v377
  %v379 = vpop.f32.mrf.mxu0
  %v380 = vadd.f32 0.0, %v379
  %381 = vmatmul.bf16.gmra.mxu0 %v265
  %v382 = vpop.f32.mrf.mxu0
  %v383 = vadd.f32 0.0, %v382
  %v384 = vpop.f32.mrf.mxu0
  %v385 = vadd.f32 0.0, %v384
  %386 = vmatmul.bf16.gmra.mxu0 %v268
  %v387 = vpop.f32.mrf.mxu0
  %v388 = vadd.f32 0.0, %v387
  %v389 = vpop.f32.mrf.mxu0
  %v390 = vadd.f32 0.0, %v389
  %391 = vmatmul.bf16.gmra.mxu0 %v271
  %v392 = vpop.f32.mrf.mxu0
  %v393 = vadd.f32 0.0, %v392
  %v394 = vpop.f32.mrf.mxu0
  %v395 = vadd.f32 0.0, %v394
  %396 = vmatmul.bf16.gmra.mxu0 %v274
  %v397 = vpop.f32.mrf.mxu0
  %v398 = vadd.f32 0.0, %v397
  %v399 = vpop.f32.mrf.mxu0
  %v400 = vadd.f32 0.0, %v399
  %401 = vmatmul.bf16.gmra.mxu0 %v277
  %v402 = vpop.f32.mrf.mxu0
  %v403 = vadd.f32 0.0, %v402
  %v404 = vpop.f32.mrf.mxu0
  %v405 = vadd.f32 0.0, %v404
  %406 = vmatmul.bf16.gmra.mxu0 %v280
  %v407 = vpop.f32.mrf.mxu0
  %v408 = vadd.f32 0.0, %v407
  %v409 = vpop.f32.mrf.mxu0
  %v410 = vadd.f32 0.0, %v409
  %411 = vmatmul.bf16.gmra.mxu0 %v283
  %v412 = vpop.f32.mrf.mxu0
  %v413 = vadd.f32 0.0, %v412
  %v414 = vpop.f32.mrf.mxu0
  %v415 = vadd.f32 0.0, %v414
  %416 = vmatmul.bf16.gmra.mxu0 %v286
  %v417 = vpop.f32.mrf.mxu0
  %v418 = vadd.f32 0.0, %v417
  %v419 = vpop.f32.mrf.mxu0
  %v420 = vadd.f32 0.0, %v419
  %421 = vmatmul.bf16.gmra.mxu0 %v289
  %v422 = vpop.f32.mrf.mxu0
  %v423 = vadd.f32 0.0, %v422
  %v424 = vpop.f32.mrf.mxu0
  %v425 = vadd.f32 0.0, %v424
  %426 = vmatmul.bf16.gmra.mxu0 %v292
  %v427 = vpop.f32.mrf.mxu0
  %v428 = vadd.f32 0.0, %v427
  %v429 = vpop.f32.mrf.mxu0
  %v430 = vadd.f32 0.0, %v429
  %431 = vmatmul.bf16.gmra.mxu0 %v295
  %v432 = vpop.f32.mrf.mxu0
  %v433 = vadd.f32 0.0, %v432
  %v434 = vpop.f32.mrf.mxu0
  %v435 = vadd.f32 0.0, %v434
  %436 = vmatmul.bf16.gmra.mxu0 %v298
  %v437 = vpop.f32.mrf.mxu0
  %v438 = vadd.f32 0.0, %v437
  %v439 = vpop.f32.mrf.mxu0
  %v440 = vadd.f32 0.0, %v439
  %441 = vmatmul.bf16.gmra.mxu0 %v301
  %v442 = vpop.f32.mrf.mxu0
  %v443 = vadd.f32 0.0, %v442
  %v444 = vpop.f32.mrf.mxu0
  %v445 = vadd.f32 0.0, %v444
  %446 = vmatmul.bf16.gmra.mxu0 %v304
  %v447 = vpop.f32.mrf.mxu0
  %v448 = vadd.f32 0.0, %v447
  %v449 = vpop.f32.mrf.mxu0
  %v450 = vadd.f32 0.0, %v449
  %451 = vmatmul.bf16.gmra.mxu0 %v307
  %v452 = vpop.f32.mrf.mxu0
  %v453 = vadd.f32 0.0, %v452
  %v454 = vpop.f32.mrf.mxu0
  %v455 = vadd.f32 0.0, %v454
  %456 = vmatmul.bf16.gmra.mxu0 %v310
  %v457 = vpop.f32.mrf.mxu0
  %v458 = vadd.f32 0.0, %v457
  %v459 = vpop.f32.mrf.mxu0
  %v460 = vadd.f32 0.0, %v459
  %461 = vmatmul.bf16.gmra.mxu0 %v313
  %v462 = vpop.f32.mrf.mxu0
  %v463 = vadd.f32 0.0, %v462
  %v464 = vpop.f32.mrf.mxu0
  %v465 = vadd.f32 0.0, %v464
  %466 = vmatmul.bf16.gmra.mxu0 %v316
  %v467 = vpop.f32.mrf.mxu0
  %v468 = vadd.f32 0.0, %v467
  %v469 = vpop.f32.mrf.mxu0
  %v470 = vadd.f32 0.0, %v469
  %471 = vmatmul.bf16.gmra.mxu0 %v319
  %v472 = vpop.f32.mrf.mxu0
  %v473 = vadd.f32 0.0, %v472
  %v474 = vpop.f32.mrf.mxu0
  %v475 = vadd.f32 0.0, %v474
  %476 = vmatmul.bf16.gmra.mxu0 %v322
  %v477 = vpop.f32.mrf.mxu0
  %v478 = vadd.f32 0.0, %v477
  %v479 = vpop.f32.mrf.mxu0
  %v480 = vadd.f32 0.0, %v479
  %481 = vmatmul.bf16.gmra.mxu0 %v325
  %v482 = vpop.f32.mrf.mxu0
  %v483 = vadd.f32 0.0, %v482
  %v484 = vpop.f32.mrf.mxu0
  %v485 = vadd.f32 0.0, %v484
  %486 = vmatmul.bf16.gmra.mxu0 %v328
  %v487 = vpop.f32.mrf.mxu0
  %v488 = vadd.f32 0.0, %v487
  %v489 = vpop.f32.mrf.mxu0
  %v490 = vadd.f32 0.0, %v489
  %491 = vmatmul.bf16.gmra.mxu0 %v331
  %v492 = vpop.f32.mrf.mxu0
  %v493 = vadd.f32 0.0, %v492
  %v494 = vpop.f32.mrf.mxu0
  %v495 = vadd.f32 0.0, %v494
  %496 = vmatmul.bf16.gmra.mxu0 %v334
  %v497 = vpop.f32.mrf.mxu0
  %v498 = vadd.f32 0.0, %v497
  %v499 = vpop.f32.mrf.mxu0
  %v500 = vadd.f32 0.0, %v499
  %501 = vmatmul.bf16.gmra.mxu0 %v337
  %v502 = vpop.f32.mrf.mxu0
  %v503 = vadd.f32 0.0, %v502
  %v504 = vpop.f32.mrf.mxu0
  %v505 = vadd.f32 0.0, %v504
  %506 = vmatmul.bf16.gmra.mxu0 %v340
  %v507 = vpop.f32.mrf.mxu0
  %v508 = vadd.f32 0.0, %v507
  %v509 = vpop.f32.mrf.mxu0
  %v510 = vadd.f32 0.0, %v509
  %511 = vmatmul.bf16.gmra.mxu0 %v343
  %v512 = vpop.f32.mrf.mxu0
  %v513 = vadd.f32 0.0, %v512
  %v514 = vpop.f32.mrf.mxu0
  %v515 = vadd.f32 0.0, %v514
  %516 = vmatmul.bf16.gmra.mxu0 %v346
  %v517 = vpop.f32.mrf.mxu0
  %v518 = vadd.f32 0.0, %v517
  %v519 = vpop.f32.mrf.mxu0
  %v520 = vadd.f32 0.0, %v519
  %521 = vmatmul.bf16.gmra.mxu0 %v349
  %v522 = vpop.f32.mrf.mxu0
  %v523 = vadd.f32 0.0, %v522
  %v524 = vpop.f32.mrf.mxu0
  %v525 = vadd.f32 0.0, %v524
  %526 = vdwg.mxu0
  %s527 = scalar_lea.vmem %s0, 256
  %v528 = vld [vmem:[%s527] sm:$0xf]
  %v529 = vld [vmem:[%s527 + $0x4] sm:$0xf]
  %v530 = vld [vmem:[%s527 + $0x8] sm:$0xf]
  %v531 = vld [vmem:[%s527 + $0xc] sm:$0xf]
  %v532 = vld [vmem:[%s527 + $0x10] sm:$0xf]
  %v533 = vld [vmem:[%s527 + $0x14] sm:$0xf]
  %v534 = vld [vmem:[%s527 + $0x18] sm:$0xf]
  %v535 = vld [vmem:[%s527 + $0x1c] sm:$0xf]
  %v536 = vld [vmem:[%s527 + $0x20] sm:$0xf]
  %v537 = vld [vmem:[%s527 + $0x24] sm:$0xf]
  %v538 = vld [vmem:[%s527 + $0x28] sm:$0xf]
  %v539 = vld [vmem:[%s527 + $0x2c] sm:$0xf]
  %v540 = vld [vmem:[%s527 + $0x30] sm:$0xf]
  %v541 = vld [vmem:[%s527 + $0x34] sm:$0xf]
  %v542 = vld [vmem:[%s527 + $0x38] sm:$0xf]
  %v543 = vld [vmem:[%s527 + $0x3c] sm:$0xf]
  %v544 = vld [vmem:[%s527 + $0x40] sm:$0xf]
  %v545 = vld [vmem:[%s527 + $0x44] sm:$0xf]
  %v546 = vld [vmem:[%s527 + $0x48] sm:$0xf]
  %v547 = vld [vmem:[%s527 + $0x4c] sm:$0xf]
  %v548 = vld [vmem:[%s527 + $0x50] sm:$0xf]
  %v549 = vld [vmem:[%s527 + $0x54] sm:$0xf]
  %v550 = vld [vmem:[%s527 + $0x58] sm:$0xf]
  %v551 = vld [vmem:[%s527 + $0x5c] sm:$0xf]
  %v552 = vld [vmem:[%s527 + $0x60] sm:$0xf]
  %v553 = vld [vmem:[%s527 + $0x64] sm:$0xf]
  %v554 = vld [vmem:[%s527 + $0x68] sm:$0xf]
  %v555 = vld [vmem:[%s527 + $0x6c] sm:$0xf]
  %v556 = vld [vmem:[%s527 + $0x70] sm:$0xf]
  %v557 = vld [vmem:[%s527 + $0x74] sm:$0xf]
  %v558 = vld [vmem:[%s527 + $0x78] sm:$0xf]
  %v559 = vld [vmem:[%s527 + $0x7c] sm:$0xf]
  %v560 = vld [vmem:[%s527 + $0x80] sm:$0xf]
  %v561 = vld [vmem:[%s527 + $0x84] sm:$0xf]
  %v562 = vld [vmem:[%s527 + $0x88] sm:$0xf]
  %v563 = vld [vmem:[%s527 + $0x8c] sm:$0xf]
  %v564 = vld [vmem:[%s527 + $0x90] sm:$0xf]
  %v565 = vld [vmem:[%s527 + $0x94] sm:$0xf]
  %v566 = vld [vmem:[%s527 + $0x98] sm:$0xf]
  %v567 = vld [vmem:[%s527 + $0x9c] sm:$0xf]
  %v568 = vld [vmem:[%s527 + $0xa0] sm:$0xf]
  %v569 = vld [vmem:[%s527 + $0xa4] sm:$0xf]
  %v570 = vld [vmem:[%s527 + $0xa8] sm:$0xf]
  %v571 = vld [vmem:[%s527 + $0xac] sm:$0xf]
  %v572 = vld [vmem:[%s527 + $0xb0] sm:$0xf]
  %v573 = vld [vmem:[%s527 + $0xb4] sm:$0xf]
  %v574 = vld [vmem:[%s527 + $0xb8] sm:$0xf]
  %v575 = vld [vmem:[%s527 + $0xbc] sm:$0xf]
  %v576 = vld [vmem:[%s527 + $0xc0] sm:$0xf]
  %v577 = vld [vmem:[%s527 + $0xc4] sm:$0xf]
  %v578 = vld [vmem:[%s527 + $0xc8] sm:$0xf]
  %v579 = vld [vmem:[%s527 + $0xcc] sm:$0xf]
  %v580 = vld [vmem:[%s527 + $0xd0] sm:$0xf]
  %v581 = vld [vmem:[%s527 + $0xd4] sm:$0xf]
  %v582 = vld [vmem:[%s527 + $0xd8] sm:$0xf]
  %v583 = vld [vmem:[%s527 + $0xdc] sm:$0xf]
  %v584 = vld [vmem:[%s527 + $0xe0] sm:$0xf]
  %v585 = vld [vmem:[%s527 + $0xe4] sm:$0xf]
  %v586 = vld [vmem:[%s527 + $0xe8] sm:$0xf]
  %v587 = vld [vmem:[%s527 + $0xec] sm:$0xf]
  %v588 = vld [vmem:[%s527 + $0xf0] sm:$0xf]
  %v589 = vld [vmem:[%s527 + $0xf4] sm:$0xf]
  %v590 = vld [vmem:[%s527 + $0xf8] sm:$0xf]
  %v591 = vld [vmem:[%s527 + $0xfc] sm:$0xf]
  %v656 = vunpack.c.l.b16 %v528
  %v657 = vunpack.c.l.b16 %v529
  %v658 = vunpack.c.l.b16 %v530
  %v659 = vunpack.c.l.b16 %v531
  %v660 = vunpack.c.l.b16 %v532
  %v661 = vunpack.c.l.b16 %v533
  %v662 = vunpack.c.l.b16 %v534
  %v663 = vunpack.c.l.b16 %v535
  %v664 = vunpack.c.l.b16 %v536
  %v665 = vunpack.c.l.b16 %v537
  %v666 = vunpack.c.l.b16 %v538
  %v667 = vunpack.c.l.b16 %v539
  %v668 = vunpack.c.l.b16 %v540
  %v669 = vunpack.c.l.b16 %v541
  %v670 = vunpack.c.l.b16 %v542
  %v671 = vunpack.c.l.b16 %v543
  %v672 = vunpack.c.l.b16 %v544
  %v673 = vunpack.c.l.b16 %v545
  %v674 = vunpack.c.l.b16 %v546
  %v675 = vunpack.c.l.b16 %v547
  %v676 = vunpack.c.l.b16 %v548
  %v677 = vunpack.c.l.b16 %v549
  %v678 = vunpack.c.l.b16 %v550
  %v679 = vunpack.c.l.b16 %v551
  %v680 = vunpack.c.l.b16 %v552
  %v681 = vunpack.c.l.b16 %v553
  %v682 = vunpack.c.l.b16 %v554
  %v683 = vunpack.c.l.b16 %v555
  %v684 = vunpack.c.l.b16 %v556
  %v685 = vunpack.c.l.b16 %v557
  %v686 = vunpack.c.l.b16 %v558
  %v687 = vunpack.c.l.b16 %v559
  %v688 = vunpack.c.l.b16 %v560
  %v689 = vunpack.c.l.b16 %v561
  %v690 = vunpack.c.l.b16 %v562
  %v691 = vunpack.c.l.b16 %v563
  %v692 = vunpack.c.l.b16 %v564
  %v693 = vunpack.c.l.b16 %v565
  %v694 = vunpack.c.l.b16 %v566
  %v695 = vunpack.c.l.b16 %v567
  %v696 = vunpack.c.l.b16 %v568
  %v697 = vunpack.c.l.b16 %v569
  %v698 = vunpack.c.l.b16 %v570
  %v699 = vunpack.c.l.b16 %v571
  %v700 = vunpack.c.l.b16 %v572
  %v701 = vunpack.c.l.b16 %v573
  %v702 = vunpack.c.l.b16 %v574
  %v703 = vunpack.c.l.b16 %v575
  %v704 = vunpack.c.l.b16 %v576
  %v705 = vunpack.c.l.b16 %v577
  %v706 = vunpack.c.l.b16 %v578
  %v707 = vunpack.c.l.b16 %v579
  %v708 = vunpack.c.l.b16 %v580
  %v709 = vunpack.c.l.b16 %v581
  %v710 = vunpack.c.l.b16 %v582
  %v711 = vunpack.c.l.b16 %v583
  %v712 = vunpack.c.l.b16 %v584
  %v713 = vunpack.c.l.b16 %v585
  %v714 = vunpack.c.l.b16 %v586
  %v715 = vunpack.c.l.b16 %v587
  %v716 = vunpack.c.l.b16 %v588
  %v717 = vunpack.c.l.b16 %v589
  %v718 = vunpack.c.l.b16 %v590
  %v719 = vunpack.c.l.b16 %v591
  %v720 = vpack.c.b16 %v657, %v656
  %v721 = vpack.c.b16 %v659, %v658
  %v722 = vpack.c.b16 %v661, %v660
  %v723 = vpack.c.b16 %v663, %v662
  %v724 = vpack.c.b16 %v665, %v664
  %v725 = vpack.c.b16 %v667, %v666
  %v726 = vpack.c.b16 %v669, %v668
  %v727 = vpack.c.b16 %v671, %v670
  %v728 = vpack.c.b16 %v673, %v672
  %v729 = vpack.c.b16 %v675, %v674
  %v730 = vpack.c.b16 %v677, %v676
  %v731 = vpack.c.b16 %v679, %v678
  %v732 = vpack.c.b16 %v681, %v680
  %v733 = vpack.c.b16 %v683, %v682
  %v734 = vpack.c.b16 %v685, %v684
  %v735 = vpack.c.b16 %v687, %v686
  %v736 = vpack.c.b16 %v689, %v688
  %v737 = vpack.c.b16 %v691, %v690
  %v738 = vpack.c.b16 %v693, %v692
  %v739 = vpack.c.b16 %v695, %v694
  %v740 = vpack.c.b16 %v697, %v696
  %v741 = vpack.c.b16 %v699, %v698
  %v742 = vpack.c.b16 %v701, %v700
  %v743 = vpack.c.b16 %v703, %v702
  %v744 = vpack.c.b16 %v705, %v704
  %v745 = vpack.c.b16 %v707, %v706
  %v746 = vpack.c.b16 %v709, %v708
  %v747 = vpack.c.b16 %v711, %v710
  %v748 = vpack.c.b16 %v713, %v712
  %v749 = vpack.c.b16 %v715, %v714
  %v750 = vpack.c.b16 %v717, %v716
  %v751 = vpack.c.b16 %v719, %v718
  %v753 = vsel %vm254, %v720, 0
  %v756 = vsel %vm254, %v721, 0
  %v759 = vsel %vm254, %v722, 0
  %v762 = vsel %vm254, %v723, 0
  %v765 = vsel %vm254, %v724, 0
  %v768 = vsel %vm254, %v725, 0
  %v771 = vsel %vm254, %v726, 0
  %v774 = vsel %vm254, %v727, 0
  %v777 = vsel %vm254, %v728, 0
  %v780 = vsel %vm254, %v729, 0
  %v783 = vsel %vm254, %v730, 0
  %v786 = vsel %vm254, %v731, 0
  %v789 = vsel %vm254, %v732, 0
  %v792 = vsel %vm254, %v733, 0
  %v795 = vsel %vm254, %v734, 0
  %v798 = vsel %vm254, %v735, 0
  %v801 = vsel %vm254, %v736, 0
  %v804 = vsel %vm254, %v737, 0
  %v807 = vsel %vm254, %v738, 0
  %v810 = vsel %vm254, %v739, 0
  %v813 = vsel %vm254, %v740, 0
  %v816 = vsel %vm254, %v741, 0
  %v819 = vsel %vm254, %v742, 0
  %v822 = vsel %vm254, %v743, 0
  %v825 = vsel %vm254, %v744, 0
  %v828 = vsel %vm254, %v745, 0
  %v831 = vsel %vm254, %v746, 0
  %v834 = vsel %vm254, %v747, 0
  %v837 = vsel %vm254, %v748, 0
  %v840 = vsel %vm254, %v749, 0
  %v843 = vsel %vm254, %v750, 0
  %v846 = vsel %vm254, %v751, 0
  %848 = vmatpush.bf16.msra.mxu0 0
  %849 = vmatpush.bf16.msra.mxu0 0
  %850 = vmatpush.bf16.msra.mxu0 0
  %851 = vmatpush.bf16.msra.mxu0 0
  %852 = vmatpush.bf16.msra.mxu0 0
  %853 = vmatpush.bf16.msra.mxu0 0
  %854 = vmatpush.bf16.msra.mxu0 %v356
  %855 = vmatpush.bf16.msra.mxu0 %v251
  %856 = vmatmul.bf16.gmra.mxu0 %v753
  %v857 = vpop.f32.mrf.mxu0
  %v858 = vadd.f32 0.0, %v857
  %v859 = vpop.f32.mrf.mxu0
  %v860 = vadd.f32 0.0, %v859
  %861 = vmatmul.bf16.gmra.mxu0 %v756
  %v862 = vpop.f32.mrf.mxu0
  %v863 = vadd.f32 0.0, %v862
  %v864 = vpop.f32.mrf.mxu0
  %v865 = vadd.f32 0.0, %v864
  %866 = vmatmul.bf16.gmra.mxu0 %v759
  %v867 = vpop.f32.mrf.mxu0
  %v868 = vadd.f32 0.0, %v867
  %v869 = vpop.f32.mrf.mxu0
  %v870 = vadd.f32 0.0, %v869
  %871 = vmatmul.bf16.gmra.mxu0 %v762
  %v872 = vpop.f32.mrf.mxu0
  %v873 = vadd.f32 0.0, %v872
  %v874 = vpop.f32.mrf.mxu0
  %v875 = vadd.f32 0.0, %v874
  %876 = vmatmul.bf16.gmra.mxu0 %v765
  %v877 = vpop.f32.mrf.mxu0
  %v878 = vadd.f32 0.0, %v877
  %v879 = vpop.f32.mrf.mxu0
  %v880 = vadd.f32 0.0, %v879
  %881 = vmatmul.bf16.gmra.mxu0 %v768
  %v882 = vpop.f32.mrf.mxu0
  %v883 = vadd.f32 0.0, %v882
  %v884 = vpop.f32.mrf.mxu0
  %v885 = vadd.f32 0.0, %v884
  %886 = vmatmul.bf16.gmra.mxu0 %v771
  %v887 = vpop.f32.mrf.mxu0
  %v888 = vadd.f32 0.0, %v887
  %v889 = vpop.f32.mrf.mxu0
  %v890 = vadd.f32 0.0, %v889
  %891 = vmatmul.bf16.gmra.mxu0 %v774
  %v892 = vpop.f32.mrf.mxu0
  %v893 = vadd.f32 0.0, %v892
  %v894 = vpop.f32.mrf.mxu0
  %v895 = vadd.f32 0.0, %v894
  %896 = vmatmul.bf16.gmra.mxu0 %v777
  %v897 = vpop.f32.mrf.mxu0
  %v898 = vadd.f32 0.0, %v897
  %v899 = vpop.f32.mrf.mxu0
  %v900 = vadd.f32 0.0, %v899
  %901 = vmatmul.bf16.gmra.mxu0 %v780
  %v902 = vpop.f32.mrf.mxu0
  %v903 = vadd.f32 0.0, %v902
  %v904 = vpop.f32.mrf.mxu0
  %v905 = vadd.f32 0.0, %v904
  %906 = vmatmul.bf16.gmra.mxu0 %v783
  %v907 = vpop.f32.mrf.mxu0
  %v908 = vadd.f32 0.0, %v907
  %v909 = vpop.f32.mrf.mxu0
  %v910 = vadd.f32 0.0, %v909
  %911 = vmatmul.bf16.gmra.mxu0 %v786
  %v912 = vpop.f32.mrf.mxu0
  %v913 = vadd.f32 0.0, %v912
  %v914 = vpop.f32.mrf.mxu0
  %v915 = vadd.f32 0.0, %v914
  %916 = vmatmul.bf16.gmra.mxu0 %v789
  %v917 = vpop.f32.mrf.mxu0
  %v918 = vadd.f32 0.0, %v917
  %v919 = vpop.f32.mrf.mxu0
  %v920 = vadd.f32 0.0, %v919
  %921 = vmatmul.bf16.gmra.mxu0 %v792
  %v922 = vpop.f32.mrf.mxu0
  %v923 = vadd.f32 0.0, %v922
  %v924 = vpop.f32.mrf.mxu0
  %v925 = vadd.f32 0.0, %v924
  %926 = vmatmul.bf16.gmra.mxu0 %v795
  %v927 = vpop.f32.mrf.mxu0
  %v928 = vadd.f32 0.0, %v927
  %v929 = vpop.f32.mrf.mxu0
  %v930 = vadd.f32 0.0, %v929
  %931 = vmatmul.bf16.gmra.mxu0 %v798
  %v932 = vpop.f32.mrf.mxu0
  %v933 = vadd.f32 0.0, %v932
  %v934 = vpop.f32.mrf.mxu0
  %v935 = vadd.f32 0.0, %v934
  %936 = vmatmul.bf16.gmra.mxu0 %v801
  %v937 = vpop.f32.mrf.mxu0
  %v938 = vadd.f32 0.0, %v937
  %v939 = vpop.f32.mrf.mxu0
  %v940 = vadd.f32 0.0, %v939
  %941 = vmatmul.bf16.gmra.mxu0 %v804
  %v942 = vpop.f32.mrf.mxu0
  %v943 = vadd.f32 0.0, %v942
  %v944 = vpop.f32.mrf.mxu0
  %v945 = vadd.f32 0.0, %v944
  %946 = vmatmul.bf16.gmra.mxu0 %v807
  %v947 = vpop.f32.mrf.mxu0
  %v948 = vadd.f32 0.0, %v947
  %v949 = vpop.f32.mrf.mxu0
  %v950 = vadd.f32 0.0, %v949
  %951 = vmatmul.bf16.gmra.mxu0 %v810
  %v952 = vpop.f32.mrf.mxu0
  %v953 = vadd.f32 0.0, %v952
  %v954 = vpop.f32.mrf.mxu0
  %v955 = vadd.f32 0.0, %v954
  %956 = vmatmul.bf16.gmra.mxu0 %v813
  %v957 = vpop.f32.mrf.mxu0
  %v958 = vadd.f32 0.0, %v957
  %v959 = vpop.f32.mrf.mxu0
  %v960 = vadd.f32 0.0, %v959
  %961 = vmatmul.bf16.gmra.mxu0 %v816
  %v962 = vpop.f32.mrf.mxu0
  %v963 = vadd.f32 0.0, %v962
  %v964 = vpop.f32.mrf.mxu0
  %v965 = vadd.f32 0.0, %v964
  %966 = vmatmul.bf16.gmra.mxu0 %v819
  %v967 = vpop.f32.mrf.mxu0
  %v968 = vadd.f32 0.0, %v967
  %v969 = vpop.f32.mrf.mxu0
  %v970 = vadd.f32 0.0, %v969
  %971 = vmatmul.bf16.gmra.mxu0 %v822
  %v972 = vpop.f32.mrf.mxu0
  %v973 = vadd.f32 0.0, %v972
  %v974 = vpop.f32.mrf.mxu0
  %v975 = vadd.f32 0.0, %v974
  %976 = vmatmul.bf16.gmra.mxu0 %v825
  %v977 = vpop.f32.mrf.mxu0
  %v978 = vadd.f32 0.0, %v977
  %v979 = vpop.f32.mrf.mxu0
  %v980 = vadd.f32 0.0, %v979
  %981 = vmatmul.bf16.gmra.mxu0 %v828
  %v982 = vpop.f32.mrf.mxu0
  %v983 = vadd.f32 0.0, %v982
  %v984 = vpop.f32.mrf.mxu0
  %v985 = vadd.f32 0.0, %v984
  %986 = vmatmul.bf16.gmra.mxu0 %v831
  %v987 = vpop.f32.mrf.mxu0
  %v988 = vadd.f32 0.0, %v987
  %v989 = vpop.f32.mrf.mxu0
  %v990 = vadd.f32 0.0, %v989
  %991 = vmatmul.bf16.gmra.mxu0 %v834
  %v992 = vpop.f32.mrf.mxu0
  %v993 = vadd.f32 0.0, %v992
  %v994 = vpop.f32.mrf.mxu0
  %v995 = vadd.f32 0.0, %v994
  %996 = vmatmul.bf16.gmra.mxu0 %v837
  %v997 = vpop.f32.mrf.mxu0
  %v998 = vadd.f32 0.0, %v997
  %v999 = vpop.f32.mrf.mxu0
  %v1000 = vadd.f32 0.0, %v999
  %1001 = vmatmul.bf16.gmra.mxu0 %v840
  %v1002 = vpop.f32.mrf.mxu0
  %v1003 = vadd.f32 0.0, %v1002
  %v1004 = vpop.f32.mrf.mxu0
  %v1005 = vadd.f32 0.0, %v1004
  %1006 = vmatmul.bf16.gmra.mxu0 %v843
  %v1007 = vpop.f32.mrf.mxu0
  %v1008 = vadd.f32 0.0, %v1007
  %v1009 = vpop.f32.mrf.mxu0
  %v1010 = vadd.f32 0.0, %v1009
  %1011 = vmatmul.bf16.gmra.mxu0 %v846
  %v1012 = vpop.f32.mrf.mxu0
  %v1013 = vadd.f32 0.0, %v1012
  %v1014 = vpop.f32.mrf.mxu0
  %v1015 = vadd.f32 0.0, %v1014
  %1016 = vdwg.mxu0
  %v1017 = vmax.f32 %v368, %v858
  %v1018 = vmax.f32 %v370, %v860
  %v1019 = vmax.f32 %v373, %v863
  %v1020 = vmax.f32 %v375, %v865
  %v1021 = vmax.f32 %v378, %v868
  %v1022 = vmax.f32 %v380, %v870
  %v1023 = vmax.f32 %v383, %v873
  %v1024 = vmax.f32 %v385, %v875
  %v1025 = vmax.f32 %v388, %v878
  %v1026 = vmax.f32 %v390, %v880
  %v1027 = vmax.f32 %v393, %v883
  %v1028 = vmax.f32 %v395, %v885
  %v1029 = vmax.f32 %v398, %v888
  %v1030 = vmax.f32 %v400, %v890
  %v1031 = vmax.f32 %v403, %v893
  %v1032 = vmax.f32 %v405, %v895
  %v1033 = vmax.f32 %v408, %v898
  %v1034 = vmax.f32 %v410, %v900
  %v1035 = vmax.f32 %v413, %v903
  %v1036 = vmax.f32 %v415, %v905
  %v1037 = vmax.f32 %v418, %v908
  %v1038 = vmax.f32 %v420, %v910
  %v1039 = vmax.f32 %v423, %v913
  %v1040 = vmax.f32 %v425, %v915
  %v1041 = vmax.f32 %v428, %v918
  %v1042 = vmax.f32 %v430, %v920
  %v1043 = vmax.f32 %v433, %v923
  %v1044 = vmax.f32 %v435, %v925
  %v1045 = vmax.f32 %v438, %v928
  %v1046 = vmax.f32 %v440, %v930
  %v1047 = vmax.f32 %v443, %v933
  %v1048 = vmax.f32 %v445, %v935
  %v1049 = vmax.f32 %v448, %v938
  %v1050 = vmax.f32 %v450, %v940
  %v1051 = vmax.f32 %v453, %v943
  %v1052 = vmax.f32 %v455, %v945
  %v1053 = vmax.f32 %v458, %v948
  %v1054 = vmax.f32 %v460, %v950
  %v1055 = vmax.f32 %v463, %v953
  %v1056 = vmax.f32 %v465, %v955
  %v1057 = vmax.f32 %v468, %v958
  %v1058 = vmax.f32 %v470, %v960
  %v1059 = vmax.f32 %v473, %v963
  %v1060 = vmax.f32 %v475, %v965
  %v1061 = vmax.f32 %v478, %v968
  %v1062 = vmax.f32 %v480, %v970
  %v1063 = vmax.f32 %v483, %v973
  %v1064 = vmax.f32 %v485, %v975
  %v1065 = vmax.f32 %v488, %v978
  %v1066 = vmax.f32 %v490, %v980
  %v1067 = vmax.f32 %v493, %v983
  %v1068 = vmax.f32 %v495, %v985
  %v1069 = vmax.f32 %v498, %v988
  %v1070 = vmax.f32 %v500, %v990
  %v1071 = vmax.f32 %v503, %v993
  %v1072 = vmax.f32 %v505, %v995
  %v1073 = vmax.f32 %v508, %v998
  %v1074 = vmax.f32 %v510, %v1000
  %v1075 = vmax.f32 %v513, %v1003
  %v1076 = vmax.f32 %v515, %v1005
  %v1077 = vmax.f32 %v518, %v1008
  %v1078 = vmax.f32 %v520, %v1010
  %v1079 = vmax.f32 %v523, %v1013
  %v1080 = vmax.f32 %v525, %v1015
  %s1081 = scalar_lea.vmem %s0, 512
  %v1082 = vld [vmem:[%s1081] sm:$0xf]
  %v1083 = vld [vmem:[%s1081 + $0x4] sm:$0xf]
  %v1084 = vld [vmem:[%s1081 + $0x8] sm:$0xf]
  %v1085 = vld [vmem:[%s1081 + $0xc] sm:$0xf]
  %v1086 = vld [vmem:[%s1081 + $0x10] sm:$0xf]
  %v1087 = vld [vmem:[%s1081 + $0x14] sm:$0xf]
  %v1088 = vld [vmem:[%s1081 + $0x18] sm:$0xf]
  %v1089 = vld [vmem:[%s1081 + $0x1c] sm:$0xf]
  %v1090 = vld [vmem:[%s1081 + $0x20] sm:$0xf]
  %v1091 = vld [vmem:[%s1081 + $0x24] sm:$0xf]
  %v1092 = vld [vmem:[%s1081 + $0x28] sm:$0xf]
  %v1093 = vld [vmem:[%s1081 + $0x2c] sm:$0xf]
  %v1094 = vld [vmem:[%s1081 + $0x30] sm:$0xf]
  %v1095 = vld [vmem:[%s1081 + $0x34] sm:$0xf]
  %v1096 = vld [vmem:[%s1081 + $0x38] sm:$0xf]
  %v1097 = vld [vmem:[%s1081 + $0x3c] sm:$0xf]
  %v1098 = vld [vmem:[%s1081 + $0x40] sm:$0xf]
  %v1099 = vld [vmem:[%s1081 + $0x44] sm:$0xf]
  %v1100 = vld [vmem:[%s1081 + $0x48] sm:$0xf]
  %v1101 = vld [vmem:[%s1081 + $0x4c] sm:$0xf]
  %v1102 = vld [vmem:[%s1081 + $0x50] sm:$0xf]
  %v1103 = vld [vmem:[%s1081 + $0x54] sm:$0xf]
  %v1104 = vld [vmem:[%s1081 + $0x58] sm:$0xf]
  %v1105 = vld [vmem:[%s1081 + $0x5c] sm:$0xf]
  %v1106 = vld [vmem:[%s1081 + $0x60] sm:$0xf]
  %v1107 = vld [vmem:[%s1081 + $0x64] sm:$0xf]
  %v1108 = vld [vmem:[%s1081 + $0x68] sm:$0xf]
  %v1109 = vld [vmem:[%s1081 + $0x6c] sm:$0xf]
  %v1110 = vld [vmem:[%s1081 + $0x70] sm:$0xf]
  %v1111 = vld [vmem:[%s1081 + $0x74] sm:$0xf]
  %v1112 = vld [vmem:[%s1081 + $0x78] sm:$0xf]
  %v1113 = vld [vmem:[%s1081 + $0x7c] sm:$0xf]
  %v1114 = vld [vmem:[%s1081 + $0x80] sm:$0xf]
  %v1115 = vld [vmem:[%s1081 + $0x84] sm:$0xf]
  %v1116 = vld [vmem:[%s1081 + $0x88] sm:$0xf]
  %v1117 = vld [vmem:[%s1081 + $0x8c] sm:$0xf]
  %v1118 = vld [vmem:[%s1081 + $0x90] sm:$0xf]
  %v1119 = vld [vmem:[%s1081 + $0x94] sm:$0xf]
  %v1120 = vld [vmem:[%s1081 + $0x98] sm:$0xf]
  %v1121 = vld [vmem:[%s1081 + $0x9c] sm:$0xf]
  %v1122 = vld [vmem:[%s1081 + $0xa0] sm:$0xf]
  %v1123 = vld [vmem:[%s1081 + $0xa4] sm:$0xf]
  %v1124 = vld [vmem:[%s1081 + $0xa8] sm:$0xf]
  %v1125 = vld [vmem:[%s1081 + $0xac] sm:$0xf]
  %v1126 = vld [vmem:[%s1081 + $0xb0] sm:$0xf]
  %v1127 = vld [vmem:[%s1081 + $0xb4] sm:$0xf]
  %v1128 = vld [vmem:[%s1081 + $0xb8] sm:$0xf]
  %v1129 = vld [vmem:[%s1081 + $0xbc] sm:$0xf]
  %v1130 = vld [vmem:[%s1081 + $0xc0] sm:$0xf]
  %v1131 = vld [vmem:[%s1081 + $0xc4] sm:$0xf]
  %v1132 = vld [vmem:[%s1081 + $0xc8] sm:$0xf]
  %v1133 = vld [vmem:[%s1081 + $0xcc] sm:$0xf]
  %v1134 = vld [vmem:[%s1081 + $0xd0] sm:$0xf]
  %v1135 = vld [vmem:[%s1081 + $0xd4] sm:$0xf]
  %v1136 = vld [vmem:[%s1081 + $0xd8] sm:$0xf]
  %v1137 = vld [vmem:[%s1081 + $0xdc] sm:$0xf]
  %v1138 = vld [vmem:[%s1081 + $0xe0] sm:$0xf]
  %v1139 = vld [vmem:[%s1081 + $0xe4] sm:$0xf]
  %v1140 = vld [vmem:[%s1081 + $0xe8] sm:$0xf]
  %v1141 = vld [vmem:[%s1081 + $0xec] sm:$0xf]
  %v1142 = vld [vmem:[%s1081 + $0xf0] sm:$0xf]
  %v1143 = vld [vmem:[%s1081 + $0xf4] sm:$0xf]
  %v1144 = vld [vmem:[%s1081 + $0xf8] sm:$0xf]
  %v1145 = vld [vmem:[%s1081 + $0xfc] sm:$0xf]
  %v1210 = vunpack.c.l.b16 %v1082
  %v1211 = vunpack.c.l.b16 %v1083
  %v1212 = vunpack.c.l.b16 %v1084
  %v1213 = vunpack.c.l.b16 %v1085
  %v1214 = vunpack.c.l.b16 %v1086
  %v1215 = vunpack.c.l.b16 %v1087
  %v1216 = vunpack.c.l.b16 %v1088
  %v1217 = vunpack.c.l.b16 %v1089
  %v1218 = vunpack.c.l.b16 %v1090
  %v1219 = vunpack.c.l.b16 %v1091
  %v1220 = vunpack.c.l.b16 %v1092
  %v1221 = vunpack.c.l.b16 %v1093
  %v1222 = vunpack.c.l.b16 %v1094
  %v1223 = vunpack.c.l.b16 %v1095
  %v1224 = vunpack.c.l.b16 %v1096
  %v1225 = vunpack.c.l.b16 %v1097
  %v1226 = vunpack.c.l.b16 %v1098
  %v1227 = vunpack.c.l.b16 %v1099
  %v1228 = vunpack.c.l.b16 %v1100
  %v1229 = vunpack.c.l.b16 %v1101
  %v1230 = vunpack.c.l.b16 %v1102
  %v1231 = vunpack.c.l.b16 %v1103
  %v1232 = vunpack.c.l.b16 %v1104
  %v1233 = vunpack.c.l.b16 %v1105
  %v1234 = vunpack.c.l.b16 %v1106
  %v1235 = vunpack.c.l.b16 %v1107
  %v1236 = vunpack.c.l.b16 %v1108
  %v1237 = vunpack.c.l.b16 %v1109
  %v1238 = vunpack.c.l.b16 %v1110
  %v1239 = vunpack.c.l.b16 %v1111
  %v1240 = vunpack.c.l.b16 %v1112
  %v1241 = vunpack.c.l.b16 %v1113
  %v1242 = vunpack.c.l.b16 %v1114
  %v1243 = vunpack.c.l.b16 %v1115
  %v1244 = vunpack.c.l.b16 %v1116
  %v1245 = vunpack.c.l.b16 %v1117
  %v1246 = vunpack.c.l.b16 %v1118
  %v1247 = vunpack.c.l.b16 %v1119
  %v1248 = vunpack.c.l.b16 %v1120
  %v1249 = vunpack.c.l.b16 %v1121
  %v1250 = vunpack.c.l.b16 %v1122
  %v1251 = vunpack.c.l.b16 %v1123
  %v1252 = vunpack.c.l.b16 %v1124
  %v1253 = vunpack.c.l.b16 %v1125
  %v1254 = vunpack.c.l.b16 %v1126
  %v1255 = vunpack.c.l.b16 %v1127
  %v1256 = vunpack.c.l.b16 %v1128
  %v1257 = vunpack.c.l.b16 %v1129
  %v1258 = vunpack.c.l.b16 %v1130
  %v1259 = vunpack.c.l.b16 %v1131
  %v1260 = vunpack.c.l.b16 %v1132
  %v1261 = vunpack.c.l.b16 %v1133
  %v1262 = vunpack.c.l.b16 %v1134
  %v1263 = vunpack.c.l.b16 %v1135
  %v1264 = vunpack.c.l.b16 %v1136
  %v1265 = vunpack.c.l.b16 %v1137
  %v1266 = vunpack.c.l.b16 %v1138
  %v1267 = vunpack.c.l.b16 %v1139
  %v1268 = vunpack.c.l.b16 %v1140
  %v1269 = vunpack.c.l.b16 %v1141
  %v1270 = vunpack.c.l.b16 %v1142
  %v1271 = vunpack.c.l.b16 %v1143
  %v1272 = vunpack.c.l.b16 %v1144
  %v1273 = vunpack.c.l.b16 %v1145
  %v1274 = vpack.c.b16 %v1211, %v1210
  %v1275 = vpack.c.b16 %v1213, %v1212
  %v1276 = vpack.c.b16 %v1215, %v1214
  %v1277 = vpack.c.b16 %v1217, %v1216
  %v1278 = vpack.c.b16 %v1219, %v1218
  %v1279 = vpack.c.b16 %v1221, %v1220
  %v1280 = vpack.c.b16 %v1223, %v1222
  %v1281 = vpack.c.b16 %v1225, %v1224
  %v1282 = vpack.c.b16 %v1227, %v1226
  %v1283 = vpack.c.b16 %v1229, %v1228
  %v1284 = vpack.c.b16 %v1231, %v1230
  %v1285 = vpack.c.b16 %v1233, %v1232
  %v1286 = vpack.c.b16 %v1235, %v1234
  %v1287 = vpack.c.b16 %v1237, %v1236
  %v1288 = vpack.c.b16 %v1239, %v1238
  %v1289 = vpack.c.b16 %v1241, %v1240
  %v1290 = vpack.c.b16 %v1243, %v1242
  %v1291 = vpack.c.b16 %v1245, %v1244
  %v1292 = vpack.c.b16 %v1247, %v1246
  %v1293 = vpack.c.b16 %v1249, %v1248
  %v1294 = vpack.c.b16 %v1251, %v1250
  %v1295 = vpack.c.b16 %v1253, %v1252
  %v1296 = vpack.c.b16 %v1255, %v1254
  %v1297 = vpack.c.b16 %v1257, %v1256
  %v1298 = vpack.c.b16 %v1259, %v1258
  %v1299 = vpack.c.b16 %v1261, %v1260
  %v1300 = vpack.c.b16 %v1263, %v1262
  %v1301 = vpack.c.b16 %v1265, %v1264
  %v1302 = vpack.c.b16 %v1267, %v1266
  %v1303 = vpack.c.b16 %v1269, %v1268
  %v1304 = vpack.c.b16 %v1271, %v1270
  %v1305 = vpack.c.b16 %v1273, %v1272
  %v1307 = vsel %vm254, %v1274, 0
  %v1310 = vsel %vm254, %v1275, 0
  %v1313 = vsel %vm254, %v1276, 0
  %v1316 = vsel %vm254, %v1277, 0
  %v1319 = vsel %vm254, %v1278, 0
  %v1322 = vsel %vm254, %v1279, 0
  %v1325 = vsel %vm254, %v1280, 0
  %v1328 = vsel %vm254, %v1281, 0
  %v1331 = vsel %vm254, %v1282, 0
  %v1334 = vsel %vm254, %v1283, 0
  %v1337 = vsel %vm254, %v1284, 0
  %v1340 = vsel %vm254, %v1285, 0
  %v1343 = vsel %vm254, %v1286, 0
  %v1346 = vsel %vm254, %v1287, 0
  %v1349 = vsel %vm254, %v1288, 0
  %v1352 = vsel %vm254, %v1289, 0
  %v1355 = vsel %vm254, %v1290, 0
  %v1358 = vsel %vm254, %v1291, 0
  %v1361 = vsel %vm254, %v1292, 0
  %v1364 = vsel %vm254, %v1293, 0
  %v1367 = vsel %vm254, %v1294, 0
  %v1370 = vsel %vm254, %v1295, 0
  %v1373 = vsel %vm254, %v1296, 0
  %v1376 = vsel %vm254, %v1297, 0
  %v1379 = vsel %vm254, %v1298, 0
  %v1382 = vsel %vm254, %v1299, 0
  %v1385 = vsel %vm254, %v1300, 0
  %v1388 = vsel %vm254, %v1301, 0
  %v1391 = vsel %vm254, %v1302, 0
  %v1394 = vsel %vm254, %v1303, 0
  %v1397 = vsel %vm254, %v1304, 0
  %v1400 = vsel %vm254, %v1305, 0
  %1402 = vmatpush.bf16.msra.mxu0 0
  %1403 = vmatpush.bf16.msra.mxu0 0
  %1404 = vmatpush.bf16.msra.mxu0 0
  %1405 = vmatpush.bf16.msra.mxu0 0
  %1406 = vmatpush.bf16.msra.mxu0 0
  %1407 = vmatpush.bf16.msra.mxu0 0
  %1408 = vmatpush.bf16.msra.mxu0 %v356
  %1409 = vmatpush.bf16.msra.mxu0 %v251
  %1410 = vmatmul.bf16.gmra.mxu0 %v1307
  %v1411 = vpop.f32.mrf.mxu0
  %v1412 = vadd.f32 0.0, %v1411
  %v1413 = vpop.f32.mrf.mxu0
  %v1414 = vadd.f32 0.0, %v1413
  %1415 = vmatmul.bf16.gmra.mxu0 %v1310
  %v1416 = vpop.f32.mrf.mxu0
  %v1417 = vadd.f32 0.0, %v1416
  %v1418 = vpop.f32.mrf.mxu0
  %v1419 = vadd.f32 0.0, %v1418
  %1420 = vmatmul.bf16.gmra.mxu0 %v1313
  %v1421 = vpop.f32.mrf.mxu0
  %v1422 = vadd.f32 0.0, %v1421
  %v1423 = vpop.f32.mrf.mxu0
  %v1424 = vadd.f32 0.0, %v1423
  %1425 = vmatmul.bf16.gmra.mxu0 %v1316
  %v1426 = vpop.f32.mrf.mxu0
  %v1427 = vadd.f32 0.0, %v1426
  %v1428 = vpop.f32.mrf.mxu0
  %v1429 = vadd.f32 0.0, %v1428
  %1430 = vmatmul.bf16.gmra.mxu0 %v1319
  %v1431 = vpop.f32.mrf.mxu0
  %v1432 = vadd.f32 0.0, %v1431
  %v1433 = vpop.f32.mrf.mxu0
  %v1434 = vadd.f32 0.0, %v1433
  %1435 = vmatmul.bf16.gmra.mxu0 %v1322
  %v1436 = vpop.f32.mrf.mxu0
  %v1437 = vadd.f32 0.0, %v1436
  %v1438 = vpop.f32.mrf.mxu0
  %v1439 = vadd.f32 0.0, %v1438
  %1440 = vmatmul.bf16.gmra.mxu0 %v1325
  %v1441 = vpop.f32.mrf.mxu0
  %v1442 = vadd.f32 0.0, %v1441
  %v1443 = vpop.f32.mrf.mxu0
  %v1444 = vadd.f32 0.0, %v1443
  %1445 = vmatmul.bf16.gmra.mxu0 %v1328
  %v1446 = vpop.f32.mrf.mxu0
  %v1447 = vadd.f32 0.0, %v1446
  %v1448 = vpop.f32.mrf.mxu0
  %v1449 = vadd.f32 0.0, %v1448
  %1450 = vmatmul.bf16.gmra.mxu0 %v1331
  %v1451 = vpop.f32.mrf.mxu0
  %v1452 = vadd.f32 0.0, %v1451
  %v1453 = vpop.f32.mrf.mxu0
  %v1454 = vadd.f32 0.0, %v1453
  %1455 = vmatmul.bf16.gmra.mxu0 %v1334
  %v1456 = vpop.f32.mrf.mxu0
  %v1457 = vadd.f32 0.0, %v1456
  %v1458 = vpop.f32.mrf.mxu0
  %v1459 = vadd.f32 0.0, %v1458
  %1460 = vmatmul.bf16.gmra.mxu0 %v1337
  %v1461 = vpop.f32.mrf.mxu0
  %v1462 = vadd.f32 0.0, %v1461
  %v1463 = vpop.f32.mrf.mxu0
  %v1464 = vadd.f32 0.0, %v1463
  %1465 = vmatmul.bf16.gmra.mxu0 %v1340
  %v1466 = vpop.f32.mrf.mxu0
  %v1467 = vadd.f32 0.0, %v1466
  %v1468 = vpop.f32.mrf.mxu0
  %v1469 = vadd.f32 0.0, %v1468
  %1470 = vmatmul.bf16.gmra.mxu0 %v1343
  %v1471 = vpop.f32.mrf.mxu0
  %v1472 = vadd.f32 0.0, %v1471
  %v1473 = vpop.f32.mrf.mxu0
  %v1474 = vadd.f32 0.0, %v1473
  %1475 = vmatmul.bf16.gmra.mxu0 %v1346
  %v1476 = vpop.f32.mrf.mxu0
  %v1477 = vadd.f32 0.0, %v1476
  %v1478 = vpop.f32.mrf.mxu0
  %v1479 = vadd.f32 0.0, %v1478
  %1480 = vmatmul.bf16.gmra.mxu0 %v1349
  %v1481 = vpop.f32.mrf.mxu0
  %v1482 = vadd.f32 0.0, %v1481
  %v1483 = vpop.f32.mrf.mxu0
  %v1484 = vadd.f32 0.0, %v1483
  %1485 = vmatmul.bf16.gmra.mxu0 %v1352
  %v1486 = vpop.f32.mrf.mxu0
  %v1487 = vadd.f32 0.0, %v1486
  %v1488 = vpop.f32.mrf.mxu0
  %v1489 = vadd.f32 0.0, %v1488
  %1490 = vmatmul.bf16.gmra.mxu0 %v1355
  %v1491 = vpop.f32.mrf.mxu0
  %v1492 = vadd.f32 0.0, %v1491
  %v1493 = vpop.f32.mrf.mxu0
  %v1494 = vadd.f32 0.0, %v1493
  %1495 = vmatmul.bf16.gmra.mxu0 %v1358
  %v1496 = vpop.f32.mrf.mxu0
  %v1497 = vadd.f32 0.0, %v1496
  %v1498 = vpop.f32.mrf.mxu0
  %v1499 = vadd.f32 0.0, %v1498
  %1500 = vmatmul.bf16.gmra.mxu0 %v1361
  %v1501 = vpop.f32.mrf.mxu0
  %v1502 = vadd.f32 0.0, %v1501
  %v1503 = vpop.f32.mrf.mxu0
  %v1504 = vadd.f32 0.0, %v1503
  %1505 = vmatmul.bf16.gmra.mxu0 %v1364
  %v1506 = vpop.f32.mrf.mxu0
  %v1507 = vadd.f32 0.0, %v1506
  %v1508 = vpop.f32.mrf.mxu0
  %v1509 = vadd.f32 0.0, %v1508
  %1510 = vmatmul.bf16.gmra.mxu0 %v1367
  %v1511 = vpop.f32.mrf.mxu0
  %v1512 = vadd.f32 0.0, %v1511
  %v1513 = vpop.f32.mrf.mxu0
  %v1514 = vadd.f32 0.0, %v1513
  %1515 = vmatmul.bf16.gmra.mxu0 %v1370
  %v1516 = vpop.f32.mrf.mxu0
  %v1517 = vadd.f32 0.0, %v1516
  %v1518 = vpop.f32.mrf.mxu0
  %v1519 = vadd.f32 0.0, %v1518
  %1520 = vmatmul.bf16.gmra.mxu0 %v1373
  %v1521 = vpop.f32.mrf.mxu0
  %v1522 = vadd.f32 0.0, %v1521
  %v1523 = vpop.f32.mrf.mxu0
  %v1524 = vadd.f32 0.0, %v1523
  %1525 = vmatmul.bf16.gmra.mxu0 %v1376
  %v1526 = vpop.f32.mrf.mxu0
  %v1527 = vadd.f32 0.0, %v1526
  %v1528 = vpop.f32.mrf.mxu0
  %v1529 = vadd.f32 0.0, %v1528
  %1530 = vmatmul.bf16.gmra.mxu0 %v1379
  %v1531 = vpop.f32.mrf.mxu0
  %v1532 = vadd.f32 0.0, %v1531
  %v1533 = vpop.f32.mrf.mxu0
  %v1534 = vadd.f32 0.0, %v1533
  %1535 = vmatmul.bf16.gmra.mxu0 %v1382
  %v1536 = vpop.f32.mrf.mxu0
  %v1537 = vadd.f32 0.0, %v1536
  %v1538 = vpop.f32.mrf.mxu0
  %v1539 = vadd.f32 0.0, %v1538
  %1540 = vmatmul.bf16.gmra.mxu0 %v1385
  %v1541 = vpop.f32.mrf.mxu0
  %v1542 = vadd.f32 0.0, %v1541
  %v1543 = vpop.f32.mrf.mxu0
  %v1544 = vadd.f32 0.0, %v1543
  %1545 = vmatmul.bf16.gmra.mxu0 %v1388
  %v1546 = vpop.f32.mrf.mxu0
  %v1547 = vadd.f32 0.0, %v1546
  %v1548 = vpop.f32.mrf.mxu0
  %v1549 = vadd.f32 0.0, %v1548
  %1550 = vmatmul.bf16.gmra.mxu0 %v1391
  %v1551 = vpop.f32.mrf.mxu0
  %v1552 = vadd.f32 0.0, %v1551
  %v1553 = vpop.f32.mrf.mxu0
  %v1554 = vadd.f32 0.0, %v1553
  %1555 = vmatmul.bf16.gmra.mxu0 %v1394
  %v1556 = vpop.f32.mrf.mxu0
  %v1557 = vadd.f32 0.0, %v1556
  %v1558 = vpop.f32.mrf.mxu0
  %v1559 = vadd.f32 0.0, %v1558
  %1560 = vmatmul.bf16.gmra.mxu0 %v1397
  %v1561 = vpop.f32.mrf.mxu0
  %v1562 = vadd.f32 0.0, %v1561
  %v1563 = vpop.f32.mrf.mxu0
  %v1564 = vadd.f32 0.0, %v1563
  %1565 = vmatmul.bf16.gmra.mxu0 %v1400
  %v1566 = vpop.f32.mrf.mxu0
  %v1567 = vadd.f32 0.0, %v1566
  %v1568 = vpop.f32.mrf.mxu0
  %v1569 = vadd.f32 0.0, %v1568
  %1570 = vdwg.mxu0
  %v1571 = vmax.f32 %v1017, %v1412
  %v1572 = vmax.f32 %v1018, %v1414
  %v1573 = vmax.f32 %v1019, %v1417
  %v1574 = vmax.f32 %v1020, %v1419
  %v1575 = vmax.f32 %v1021, %v1422
  %v1576 = vmax.f32 %v1022, %v1424
  %v1577 = vmax.f32 %v1023, %v1427
  %v1578 = vmax.f32 %v1024, %v1429
  %v1579 = vmax.f32 %v1025, %v1432
  %v1580 = vmax.f32 %v1026, %v1434
  %v1581 = vmax.f32 %v1027, %v1437
  %v1582 = vmax.f32 %v1028, %v1439
  %v1583 = vmax.f32 %v1029, %v1442
  %v1584 = vmax.f32 %v1030, %v1444
  %v1585 = vmax.f32 %v1031, %v1447
  %v1586 = vmax.f32 %v1032, %v1449
  %v1587 = vmax.f32 %v1033, %v1452
  %v1588 = vmax.f32 %v1034, %v1454
  %v1589 = vmax.f32 %v1035, %v1457
  %v1590 = vmax.f32 %v1036, %v1459
  %v1591 = vmax.f32 %v1037, %v1462
  %v1592 = vmax.f32 %v1038, %v1464
  %v1593 = vmax.f32 %v1039, %v1467
  %v1594 = vmax.f32 %v1040, %v1469
  %v1595 = vmax.f32 %v1041, %v1472
  %v1596 = vmax.f32 %v1042, %v1474
  %v1597 = vmax.f32 %v1043, %v1477
  %v1598 = vmax.f32 %v1044, %v1479
  %v1599 = vmax.f32 %v1045, %v1482
  %v1600 = vmax.f32 %v1046, %v1484
  %v1601 = vmax.f32 %v1047, %v1487
  %v1602 = vmax.f32 %v1048, %v1489
  %v1603 = vmax.f32 %v1049, %v1492
  %v1604 = vmax.f32 %v1050, %v1494
  %v1605 = vmax.f32 %v1051, %v1497
  %v1606 = vmax.f32 %v1052, %v1499
  %v1607 = vmax.f32 %v1053, %v1502
  %v1608 = vmax.f32 %v1054, %v1504
  %v1609 = vmax.f32 %v1055, %v1507
  %v1610 = vmax.f32 %v1056, %v1509
  %v1611 = vmax.f32 %v1057, %v1512
  %v1612 = vmax.f32 %v1058, %v1514
  %v1613 = vmax.f32 %v1059, %v1517
  %v1614 = vmax.f32 %v1060, %v1519
  %v1615 = vmax.f32 %v1061, %v1522
  %v1616 = vmax.f32 %v1062, %v1524
  %v1617 = vmax.f32 %v1063, %v1527
  %v1618 = vmax.f32 %v1064, %v1529
  %v1619 = vmax.f32 %v1065, %v1532
  %v1620 = vmax.f32 %v1066, %v1534
  %v1621 = vmax.f32 %v1067, %v1537
  %v1622 = vmax.f32 %v1068, %v1539
  %v1623 = vmax.f32 %v1069, %v1542
  %v1624 = vmax.f32 %v1070, %v1544
  %v1625 = vmax.f32 %v1071, %v1547
  %v1626 = vmax.f32 %v1072, %v1549
  %v1627 = vmax.f32 %v1073, %v1552
  %v1628 = vmax.f32 %v1074, %v1554
  %v1629 = vmax.f32 %v1075, %v1557
  %v1630 = vmax.f32 %v1076, %v1559
  %v1631 = vmax.f32 %v1077, %v1562
  %v1632 = vmax.f32 %v1078, %v1564
  %v1633 = vmax.f32 %v1079, %v1567
  %v1634 = vmax.f32 %v1080, %v1569
  %s1635 = scalar_lea.vmem %s0, 768
  %v1636 = vld [vmem:[%s1635] sm:$0xf]
  %v1637 = vld [vmem:[%s1635 + $0x4] sm:$0xf]
  %v1638 = vld [vmem:[%s1635 + $0x8] sm:$0xf]
  %v1639 = vld [vmem:[%s1635 + $0xc] sm:$0xf]
  %v1640 = vld [vmem:[%s1635 + $0x10] sm:$0xf]
  %v1641 = vld [vmem:[%s1635 + $0x14] sm:$0xf]
  %v1642 = vld [vmem:[%s1635 + $0x18] sm:$0xf]
  %v1643 = vld [vmem:[%s1635 + $0x1c] sm:$0xf]
  %v1644 = vld [vmem:[%s1635 + $0x20] sm:$0xf]
  %v1645 = vld [vmem:[%s1635 + $0x24] sm:$0xf]
  %v1646 = vld [vmem:[%s1635 + $0x28] sm:$0xf]
  %v1647 = vld [vmem:[%s1635 + $0x2c] sm:$0xf]
  %v1648 = vld [vmem:[%s1635 + $0x30] sm:$0xf]
  %v1649 = vld [vmem:[%s1635 + $0x34] sm:$0xf]
  %v1650 = vld [vmem:[%s1635 + $0x38] sm:$0xf]
  %v1651 = vld [vmem:[%s1635 + $0x3c] sm:$0xf]
  %v1652 = vld [vmem:[%s1635 + $0x40] sm:$0xf]
  %v1653 = vld [vmem:[%s1635 + $0x44] sm:$0xf]
  %v1654 = vld [vmem:[%s1635 + $0x48] sm:$0xf]
  %v1655 = vld [vmem:[%s1635 + $0x4c] sm:$0xf]
  %v1656 = vld [vmem:[%s1635 + $0x50] sm:$0xf]
  %v1657 = vld [vmem:[%s1635 + $0x54] sm:$0xf]
  %v1658 = vld [vmem:[%s1635 + $0x58] sm:$0xf]
  %v1659 = vld [vmem:[%s1635 + $0x5c] sm:$0xf]
  %v1660 = vld [vmem:[%s1635 + $0x60] sm:$0xf]
  %v1661 = vld [vmem:[%s1635 + $0x64] sm:$0xf]
  %v1662 = vld [vmem:[%s1635 + $0x68] sm:$0xf]
  %v1663 = vld [vmem:[%s1635 + $0x6c] sm:$0xf]
  %v1664 = vld [vmem:[%s1635 + $0x70] sm:$0xf]
  %v1665 = vld [vmem:[%s1635 + $0x74] sm:$0xf]
  %v1666 = vld [vmem:[%s1635 + $0x78] sm:$0xf]
  %v1667 = vld [vmem:[%s1635 + $0x7c] sm:$0xf]
  %v1668 = vld [vmem:[%s1635 + $0x80] sm:$0xf]
  %v1669 = vld [vmem:[%s1635 + $0x84] sm:$0xf]
  %v1670 = vld [vmem:[%s1635 + $0x88] sm:$0xf]
  %v1671 = vld [vmem:[%s1635 + $0x8c] sm:$0xf]
  %v1672 = vld [vmem:[%s1635 + $0x90] sm:$0xf]
  %v1673 = vld [vmem:[%s1635 + $0x94] sm:$0xf]
  %v1674 = vld [vmem:[%s1635 + $0x98] sm:$0xf]
  %v1675 = vld [vmem:[%s1635 + $0x9c] sm:$0xf]
  %v1676 = vld [vmem:[%s1635 + $0xa0] sm:$0xf]
  %v1677 = vld [vmem:[%s1635 + $0xa4] sm:$0xf]
  %v1678 = vld [vmem:[%s1635 + $0xa8] sm:$0xf]
  %v1679 = vld [vmem:[%s1635 + $0xac] sm:$0xf]
  %v1680 = vld [vmem:[%s1635 + $0xb0] sm:$0xf]
  %v1681 = vld [vmem:[%s1635 + $0xb4] sm:$0xf]
  %v1682 = vld [vmem:[%s1635 + $0xb8] sm:$0xf]
  %v1683 = vld [vmem:[%s1635 + $0xbc] sm:$0xf]
  %v1684 = vld [vmem:[%s1635 + $0xc0] sm:$0xf]
  %v1685 = vld [vmem:[%s1635 + $0xc4] sm:$0xf]
  %v1686 = vld [vmem:[%s1635 + $0xc8] sm:$0xf]
  %v1687 = vld [vmem:[%s1635 + $0xcc] sm:$0xf]
  %v1688 = vld [vmem:[%s1635 + $0xd0] sm:$0xf]
  %v1689 = vld [vmem:[%s1635 + $0xd4] sm:$0xf]
  %v1690 = vld [vmem:[%s1635 + $0xd8] sm:$0xf]
  %v1691 = vld [vmem:[%s1635 + $0xdc] sm:$0xf]
  %v1692 = vld [vmem:[%s1635 + $0xe0] sm:$0xf]
  %v1693 = vld [vmem:[%s1635 + $0xe4] sm:$0xf]
  %v1694 = vld [vmem:[%s1635 + $0xe8] sm:$0xf]
  %v1695 = vld [vmem:[%s1635 + $0xec] sm:$0xf]
  %v1696 = vld [vmem:[%s1635 + $0xf0] sm:$0xf]
  %v1697 = vld [vmem:[%s1635 + $0xf4] sm:$0xf]
  %v1698 = vld [vmem:[%s1635 + $0xf8] sm:$0xf]
  %v1699 = vld [vmem:[%s1635 + $0xfc] sm:$0xf]
  %v1764 = vunpack.c.l.b16 %v1636
  %v1765 = vunpack.c.l.b16 %v1637
  %v1766 = vunpack.c.l.b16 %v1638
  %v1767 = vunpack.c.l.b16 %v1639
  %v1768 = vunpack.c.l.b16 %v1640
  %v1769 = vunpack.c.l.b16 %v1641
  %v1770 = vunpack.c.l.b16 %v1642
  %v1771 = vunpack.c.l.b16 %v1643
  %v1772 = vunpack.c.l.b16 %v1644
  %v1773 = vunpack.c.l.b16 %v1645
  %v1774 = vunpack.c.l.b16 %v1646
  %v1775 = vunpack.c.l.b16 %v1647
  %v1776 = vunpack.c.l.b16 %v1648
  %v1777 = vunpack.c.l.b16 %v1649
  %v1778 = vunpack.c.l.b16 %v1650
  %v1779 = vunpack.c.l.b16 %v1651
  %v1780 = vunpack.c.l.b16 %v1652
  %v1781 = vunpack.c.l.b16 %v1653
  %v1782 = vunpack.c.l.b16 %v1654
  %v1783 = vunpack.c.l.b16 %v1655
  %v1784 = vunpack.c.l.b16 %v1656
  %v1785 = vunpack.c.l.b16 %v1657
  %v1786 = vunpack.c.l.b16 %v1658
  %v1787 = vunpack.c.l.b16 %v1659
  %v1788 = vunpack.c.l.b16 %v1660
  %v1789 = vunpack.c.l.b16 %v1661
  %v1790 = vunpack.c.l.b16 %v1662
  %v1791 = vunpack.c.l.b16 %v1663
  %v1792 = vunpack.c.l.b16 %v1664
  %v1793 = vunpack.c.l.b16 %v1665
  %v1794 = vunpack.c.l.b16 %v1666
  %v1795 = vunpack.c.l.b16 %v1667
  %v1796 = vunpack.c.l.b16 %v1668
  %v1797 = vunpack.c.l.b16 %v1669
  %v1798 = vunpack.c.l.b16 %v1670
  %v1799 = vunpack.c.l.b16 %v1671
  %v1800 = vunpack.c.l.b16 %v1672
  %v1801 = vunpack.c.l.b16 %v1673
  %v1802 = vunpack.c.l.b16 %v1674
  %v1803 = vunpack.c.l.b16 %v1675
  %v1804 = vunpack.c.l.b16 %v1676
  %v1805 = vunpack.c.l.b16 %v1677
  %v1806 = vunpack.c.l.b16 %v1678
  %v1807 = vunpack.c.l.b16 %v1679
  %v1808 = vunpack.c.l.b16 %v1680
  %v1809 = vunpack.c.l.b16 %v1681
  %v1810 = vunpack.c.l.b16 %v1682
  %v1811 = vunpack.c.l.b16 %v1683
  %v1812 = vunpack.c.l.b16 %v1684
  %v1813 = vunpack.c.l.b16 %v1685
  %v1814 = vunpack.c.l.b16 %v1686
  %v1815 = vunpack.c.l.b16 %v1687
  %v1816 = vunpack.c.l.b16 %v1688
  %v1817 = vunpack.c.l.b16 %v1689
  %v1818 = vunpack.c.l.b16 %v1690
  %v1819 = vunpack.c.l.b16 %v1691
  %v1820 = vunpack.c.l.b16 %v1692
  %v1821 = vunpack.c.l.b16 %v1693
  %v1822 = vunpack.c.l.b16 %v1694
  %v1823 = vunpack.c.l.b16 %v1695
  %v1824 = vunpack.c.l.b16 %v1696
  %v1825 = vunpack.c.l.b16 %v1697
  %v1826 = vunpack.c.l.b16 %v1698
  %v1827 = vunpack.c.l.b16 %v1699
  %v1828 = vpack.c.b16 %v1765, %v1764
  %v1829 = vpack.c.b16 %v1767, %v1766
  %v1830 = vpack.c.b16 %v1769, %v1768
  %v1831 = vpack.c.b16 %v1771, %v1770
  %v1832 = vpack.c.b16 %v1773, %v1772
  %v1833 = vpack.c.b16 %v1775, %v1774
  %v1834 = vpack.c.b16 %v1777, %v1776
  %v1835 = vpack.c.b16 %v1779, %v1778
  %v1836 = vpack.c.b16 %v1781, %v1780
  %v1837 = vpack.c.b16 %v1783, %v1782
  %v1838 = vpack.c.b16 %v1785, %v1784
  %v1839 = vpack.c.b16 %v1787, %v1786
  %v1840 = vpack.c.b16 %v1789, %v1788
  %v1841 = vpack.c.b16 %v1791, %v1790
  %v1842 = vpack.c.b16 %v1793, %v1792
  %v1843 = vpack.c.b16 %v1795, %v1794
  %v1844 = vpack.c.b16 %v1797, %v1796
  %v1845 = vpack.c.b16 %v1799, %v1798
  %v1846 = vpack.c.b16 %v1801, %v1800
  %v1847 = vpack.c.b16 %v1803, %v1802
  %v1848 = vpack.c.b16 %v1805, %v1804
  %v1849 = vpack.c.b16 %v1807, %v1806
  %v1850 = vpack.c.b16 %v1809, %v1808
  %v1851 = vpack.c.b16 %v1811, %v1810
  %v1852 = vpack.c.b16 %v1813, %v1812
  %v1853 = vpack.c.b16 %v1815, %v1814
  %v1854 = vpack.c.b16 %v1817, %v1816
  %v1855 = vpack.c.b16 %v1819, %v1818
  %v1856 = vpack.c.b16 %v1821, %v1820
  %v1857 = vpack.c.b16 %v1823, %v1822
  %v1858 = vpack.c.b16 %v1825, %v1824
  %v1859 = vpack.c.b16 %v1827, %v1826
  %v1861 = vsel %vm254, %v1828, 0
  %v1864 = vsel %vm254, %v1829, 0
  %v1867 = vsel %vm254, %v1830, 0
  %v1870 = vsel %vm254, %v1831, 0
  %v1873 = vsel %vm254, %v1832, 0
  %v1876 = vsel %vm254, %v1833, 0
  %v1879 = vsel %vm254, %v1834, 0
  %v1882 = vsel %vm254, %v1835, 0
  %v1885 = vsel %vm254, %v1836, 0
  %v1888 = vsel %vm254, %v1837, 0
  %v1891 = vsel %vm254, %v1838, 0
  %v1894 = vsel %vm254, %v1839, 0
  %v1897 = vsel %vm254, %v1840, 0
  %v1900 = vsel %vm254, %v1841, 0
  %v1903 = vsel %vm254, %v1842, 0
  %v1906 = vsel %vm254, %v1843, 0
  %v1909 = vsel %vm254, %v1844, 0
  %v1912 = vsel %vm254, %v1845, 0
  %v1915 = vsel %vm254, %v1846, 0
  %v1918 = vsel %vm254, %v1847, 0
  %v1921 = vsel %vm254, %v1848, 0
  %v1924 = vsel %vm254, %v1849, 0
  %v1927 = vsel %vm254, %v1850, 0
  %v1930 = vsel %vm254, %v1851, 0
  %v1933 = vsel %vm254, %v1852, 0
  %v1936 = vsel %vm254, %v1853, 0
  %v1939 = vsel %vm254, %v1854, 0
  %v1942 = vsel %vm254, %v1855, 0
  %v1945 = vsel %vm254, %v1856, 0
  %v1948 = vsel %vm254, %v1857, 0
  %v1951 = vsel %vm254, %v1858, 0
  %v1954 = vsel %vm254, %v1859, 0
  %1956 = vmatpush.bf16.msra.mxu0 0
  %1957 = vmatpush.bf16.msra.mxu0 0
  %1958 = vmatpush.bf16.msra.mxu0 0
  %1959 = vmatpush.bf16.msra.mxu0 0
  %1960 = vmatpush.bf16.msra.mxu0 0
  %1961 = vmatpush.bf16.msra.mxu0 0
  %1962 = vmatpush.bf16.msra.mxu0 %v356
  %1963 = vmatpush.bf16.msra.mxu0 %v251
  %1964 = vmatmul.bf16.gmra.mxu0 %v1861
  %v1965 = vpop.f32.mrf.mxu0
  %v1966 = vadd.f32 0.0, %v1965
  %v1967 = vpop.f32.mrf.mxu0
  %v1968 = vadd.f32 0.0, %v1967
  %1969 = vmatmul.bf16.gmra.mxu0 %v1864
  %v1970 = vpop.f32.mrf.mxu0
  %v1971 = vadd.f32 0.0, %v1970
  %v1972 = vpop.f32.mrf.mxu0
  %v1973 = vadd.f32 0.0, %v1972
  %1974 = vmatmul.bf16.gmra.mxu0 %v1867
  %v1975 = vpop.f32.mrf.mxu0
  %v1976 = vadd.f32 0.0, %v1975
  %v1977 = vpop.f32.mrf.mxu0
  %v1978 = vadd.f32 0.0, %v1977
  %1979 = vmatmul.bf16.gmra.mxu0 %v1870
  %v1980 = vpop.f32.mrf.mxu0
  %v1981 = vadd.f32 0.0, %v1980
  %v1982 = vpop.f32.mrf.mxu0
  %v1983 = vadd.f32 0.0, %v1982
  %1984 = vmatmul.bf16.gmra.mxu0 %v1873
  %v1985 = vpop.f32.mrf.mxu0
  %v1986 = vadd.f32 0.0, %v1985
  %v1987 = vpop.f32.mrf.mxu0
  %v1988 = vadd.f32 0.0, %v1987
  %1989 = vmatmul.bf16.gmra.mxu0 %v1876
  %v1990 = vpop.f32.mrf.mxu0
  %v1991 = vadd.f32 0.0, %v1990
  %v1992 = vpop.f32.mrf.mxu0
  %v1993 = vadd.f32 0.0, %v1992
  %1994 = vmatmul.bf16.gmra.mxu0 %v1879
  %v1995 = vpop.f32.mrf.mxu0
  %v1996 = vadd.f32 0.0, %v1995
  %v1997 = vpop.f32.mrf.mxu0
  %v1998 = vadd.f32 0.0, %v1997
  %1999 = vmatmul.bf16.gmra.mxu0 %v1882
  %v2000 = vpop.f32.mrf.mxu0
  %v2001 = vadd.f32 0.0, %v2000
  %v2002 = vpop.f32.mrf.mxu0
  %v2003 = vadd.f32 0.0, %v2002
  %2004 = vmatmul.bf16.gmra.mxu0 %v1885
  %v2005 = vpop.f32.mrf.mxu0
  %v2006 = vadd.f32 0.0, %v2005
  %v2007 = vpop.f32.mrf.mxu0
  %v2008 = vadd.f32 0.0, %v2007
  %2009 = vmatmul.bf16.gmra.mxu0 %v1888
  %v2010 = vpop.f32.mrf.mxu0
  %v2011 = vadd.f32 0.0, %v2010
  %v2012 = vpop.f32.mrf.mxu0
  %v2013 = vadd.f32 0.0, %v2012
  %2014 = vmatmul.bf16.gmra.mxu0 %v1891
  %v2015 = vpop.f32.mrf.mxu0
  %v2016 = vadd.f32 0.0, %v2015
  %v2017 = vpop.f32.mrf.mxu0
  %v2018 = vadd.f32 0.0, %v2017
  %2019 = vmatmul.bf16.gmra.mxu0 %v1894
  %v2020 = vpop.f32.mrf.mxu0
  %v2021 = vadd.f32 0.0, %v2020
  %v2022 = vpop.f32.mrf.mxu0
  %v2023 = vadd.f32 0.0, %v2022
  %2024 = vmatmul.bf16.gmra.mxu0 %v1897
  %v2025 = vpop.f32.mrf.mxu0
  %v2026 = vadd.f32 0.0, %v2025
  %v2027 = vpop.f32.mrf.mxu0
  %v2028 = vadd.f32 0.0, %v2027
  %2029 = vmatmul.bf16.gmra.mxu0 %v1900
  %v2030 = vpop.f32.mrf.mxu0
  %v2031 = vadd.f32 0.0, %v2030
  %v2032 = vpop.f32.mrf.mxu0
  %v2033 = vadd.f32 0.0, %v2032
  %2034 = vmatmul.bf16.gmra.mxu0 %v1903
  %v2035 = vpop.f32.mrf.mxu0
  %v2036 = vadd.f32 0.0, %v2035
  %v2037 = vpop.f32.mrf.mxu0
  %v2038 = vadd.f32 0.0, %v2037
  %2039 = vmatmul.bf16.gmra.mxu0 %v1906
  %v2040 = vpop.f32.mrf.mxu0
  %v2041 = vadd.f32 0.0, %v2040
  %v2042 = vpop.f32.mrf.mxu0
  %v2043 = vadd.f32 0.0, %v2042
  %2044 = vmatmul.bf16.gmra.mxu0 %v1909
  %v2045 = vpop.f32.mrf.mxu0
  %v2046 = vadd.f32 0.0, %v2045
  %v2047 = vpop.f32.mrf.mxu0
  %v2048 = vadd.f32 0.0, %v2047
  %2049 = vmatmul.bf16.gmra.mxu0 %v1912
  %v2050 = vpop.f32.mrf.mxu0
  %v2051 = vadd.f32 0.0, %v2050
  %v2052 = vpop.f32.mrf.mxu0
  %v2053 = vadd.f32 0.0, %v2052
  %2054 = vmatmul.bf16.gmra.mxu0 %v1915
  %v2055 = vpop.f32.mrf.mxu0
  %v2056 = vadd.f32 0.0, %v2055
  %v2057 = vpop.f32.mrf.mxu0
  %v2058 = vadd.f32 0.0, %v2057
  %2059 = vmatmul.bf16.gmra.mxu0 %v1918
  %v2060 = vpop.f32.mrf.mxu0
  %v2061 = vadd.f32 0.0, %v2060
  %v2062 = vpop.f32.mrf.mxu0
  %v2063 = vadd.f32 0.0, %v2062
  %2064 = vmatmul.bf16.gmra.mxu0 %v1921
  %v2065 = vpop.f32.mrf.mxu0
  %v2066 = vadd.f32 0.0, %v2065
  %v2067 = vpop.f32.mrf.mxu0
  %v2068 = vadd.f32 0.0, %v2067
  %2069 = vmatmul.bf16.gmra.mxu0 %v1924
  %v2070 = vpop.f32.mrf.mxu0
  %v2071 = vadd.f32 0.0, %v2070
  %v2072 = vpop.f32.mrf.mxu0
  %v2073 = vadd.f32 0.0, %v2072
  %2074 = vmatmul.bf16.gmra.mxu0 %v1927
  %v2075 = vpop.f32.mrf.mxu0
  %v2076 = vadd.f32 0.0, %v2075
  %v2077 = vpop.f32.mrf.mxu0
  %v2078 = vadd.f32 0.0, %v2077
  %2079 = vmatmul.bf16.gmra.mxu0 %v1930
  %v2080 = vpop.f32.mrf.mxu0
  %v2081 = vadd.f32 0.0, %v2080
  %v2082 = vpop.f32.mrf.mxu0
  %v2083 = vadd.f32 0.0, %v2082
  %2084 = vmatmul.bf16.gmra.mxu0 %v1933
  %v2085 = vpop.f32.mrf.mxu0
  %v2086 = vadd.f32 0.0, %v2085
  %v2087 = vpop.f32.mrf.mxu0
  %v2088 = vadd.f32 0.0, %v2087
  %2089 = vmatmul.bf16.gmra.mxu0 %v1936
  %v2090 = vpop.f32.mrf.mxu0
  %v2091 = vadd.f32 0.0, %v2090
  %v2092 = vpop.f32.mrf.mxu0
  %v2093 = vadd.f32 0.0, %v2092
  %2094 = vmatmul.bf16.gmra.mxu0 %v1939
  %v2095 = vpop.f32.mrf.mxu0
  %v2096 = vadd.f32 0.0, %v2095
  %v2097 = vpop.f32.mrf.mxu0
  %v2098 = vadd.f32 0.0, %v2097
  %2099 = vmatmul.bf16.gmra.mxu0 %v1942
  %v2100 = vpop.f32.mrf.mxu0
  %v2101 = vadd.f32 0.0, %v2100
  %v2102 = vpop.f32.mrf.mxu0
  %v2103 = vadd.f32 0.0, %v2102
  %2104 = vmatmul.bf16.gmra.mxu0 %v1945
  %v2105 = vpop.f32.mrf.mxu0
  %v2106 = vadd.f32 0.0, %v2105
  %v2107 = vpop.f32.mrf.mxu0
  %v2108 = vadd.f32 0.0, %v2107
  %2109 = vmatmul.bf16.gmra.mxu0 %v1948
  %v2110 = vpop.f32.mrf.mxu0
  %v2111 = vadd.f32 0.0, %v2110
  %v2112 = vpop.f32.mrf.mxu0
  %v2113 = vadd.f32 0.0, %v2112
  %2114 = vmatmul.bf16.gmra.mxu0 %v1951
  %v2115 = vpop.f32.mrf.mxu0
  %v2116 = vadd.f32 0.0, %v2115
  %v2117 = vpop.f32.mrf.mxu0
  %v2118 = vadd.f32 0.0, %v2117
  %2119 = vmatmul.bf16.gmra.mxu0 %v1954
  %v2120 = vpop.f32.mrf.mxu0
  %v2121 = vadd.f32 0.0, %v2120
  %v2122 = vpop.f32.mrf.mxu0
  %v2123 = vadd.f32 0.0, %v2122
  %2124 = vdwg.mxu0
  %v2125 = vmax.f32 %v1571, %v1966
  %v2126 = vmax.f32 %v1572, %v1968
  %v2127 = vmax.f32 %v1573, %v1971
  %v2128 = vmax.f32 %v1574, %v1973
  %v2129 = vmax.f32 %v1575, %v1976
  %v2130 = vmax.f32 %v1576, %v1978
  %v2131 = vmax.f32 %v1577, %v1981
  %v2132 = vmax.f32 %v1578, %v1983
  %v2133 = vmax.f32 %v1579, %v1986
  %v2134 = vmax.f32 %v1580, %v1988
  %v2135 = vmax.f32 %v1581, %v1991
  %v2136 = vmax.f32 %v1582, %v1993
  %v2137 = vmax.f32 %v1583, %v1996
  %v2138 = vmax.f32 %v1584, %v1998
  %v2139 = vmax.f32 %v1585, %v2001
  %v2140 = vmax.f32 %v1586, %v2003
  %v2141 = vmax.f32 %v1587, %v2006
  %v2142 = vmax.f32 %v1588, %v2008
  %v2143 = vmax.f32 %v1589, %v2011
  %v2144 = vmax.f32 %v1590, %v2013
  %v2145 = vmax.f32 %v1591, %v2016
  %v2146 = vmax.f32 %v1592, %v2018
  %v2147 = vmax.f32 %v1593, %v2021
  %v2148 = vmax.f32 %v1594, %v2023
  %v2149 = vmax.f32 %v1595, %v2026
  %v2150 = vmax.f32 %v1596, %v2028
  %v2151 = vmax.f32 %v1597, %v2031
  %v2152 = vmax.f32 %v1598, %v2033
  %v2153 = vmax.f32 %v1599, %v2036
  %v2154 = vmax.f32 %v1600, %v2038
  %v2155 = vmax.f32 %v1601, %v2041
  %v2156 = vmax.f32 %v1602, %v2043
  %v2157 = vmax.f32 %v1603, %v2046
  %v2158 = vmax.f32 %v1604, %v2048
  %v2159 = vmax.f32 %v1605, %v2051
  %v2160 = vmax.f32 %v1606, %v2053
  %v2161 = vmax.f32 %v1607, %v2056
  %v2162 = vmax.f32 %v1608, %v2058
  %v2163 = vmax.f32 %v1609, %v2061
  %v2164 = vmax.f32 %v1610, %v2063
  %v2165 = vmax.f32 %v1611, %v2066
  %v2166 = vmax.f32 %v1612, %v2068
  %v2167 = vmax.f32 %v1613, %v2071
  %v2168 = vmax.f32 %v1614, %v2073
  %v2169 = vmax.f32 %v1615, %v2076
  %v2170 = vmax.f32 %v1616, %v2078
  %v2171 = vmax.f32 %v1617, %v2081
  %v2172 = vmax.f32 %v1618, %v2083
  %v2173 = vmax.f32 %v1619, %v2086
  %v2174 = vmax.f32 %v1620, %v2088
  %v2175 = vmax.f32 %v1621, %v2091
  %v2176 = vmax.f32 %v1622, %v2093
  %v2177 = vmax.f32 %v1623, %v2096
  %v2178 = vmax.f32 %v1624, %v2098
  %v2179 = vmax.f32 %v1625, %v2101
  %v2180 = vmax.f32 %v1626, %v2103
  %v2181 = vmax.f32 %v1627, %v2106
  %v2182 = vmax.f32 %v1628, %v2108
  %v2183 = vmax.f32 %v1629, %v2111
  %v2184 = vmax.f32 %v1630, %v2113
  %v2185 = vmax.f32 %v1631, %v2116
  %v2186 = vmax.f32 %v1632, %v2118
  %v2187 = vmax.f32 %v1633, %v2121
  %v2188 = vmax.f32 %v1634, %v2123
  %v2189 = vld [vmem:[%s2] sm:$0x1]
  %v2191 = vperm.slane %v2189, 0
  %v2193 = vadd.f32 %v2125, %v2191
  %v2194 = vadd.f32 %v2126, %v2191
  %v2195 = vadd.f32 %v2127, %v2191
  %v2196 = vadd.f32 %v2128, %v2191
  %v2197 = vadd.f32 %v2129, %v2191
  %v2198 = vadd.f32 %v2130, %v2191
  %v2199 = vadd.f32 %v2131, %v2191
  %v2200 = vadd.f32 %v2132, %v2191
  %v2201 = vadd.f32 %v2133, %v2191
  %v2202 = vadd.f32 %v2134, %v2191
  %v2203 = vadd.f32 %v2135, %v2191
  %v2204 = vadd.f32 %v2136, %v2191
  %v2205 = vadd.f32 %v2137, %v2191
  %v2206 = vadd.f32 %v2138, %v2191
  %v2207 = vadd.f32 %v2139, %v2191
  %v2208 = vadd.f32 %v2140, %v2191
  %v2209 = vadd.f32 %v2141, %v2191
  %v2210 = vadd.f32 %v2142, %v2191
  %v2211 = vadd.f32 %v2143, %v2191
  %v2212 = vadd.f32 %v2144, %v2191
  %v2213 = vadd.f32 %v2145, %v2191
  %v2214 = vadd.f32 %v2146, %v2191
  %v2215 = vadd.f32 %v2147, %v2191
  %v2216 = vadd.f32 %v2148, %v2191
  %v2217 = vadd.f32 %v2149, %v2191
  %v2218 = vadd.f32 %v2150, %v2191
  %v2219 = vadd.f32 %v2151, %v2191
  %v2220 = vadd.f32 %v2152, %v2191
  %v2221 = vadd.f32 %v2153, %v2191
  %v2222 = vadd.f32 %v2154, %v2191
  %v2223 = vadd.f32 %v2155, %v2191
  %v2224 = vadd.f32 %v2156, %v2191
  %v2225 = vadd.f32 %v2157, %v2191
  %v2226 = vadd.f32 %v2158, %v2191
  %v2227 = vadd.f32 %v2159, %v2191
  %v2228 = vadd.f32 %v2160, %v2191
  %v2229 = vadd.f32 %v2161, %v2191
  %v2230 = vadd.f32 %v2162, %v2191
  %v2231 = vadd.f32 %v2163, %v2191
  %v2232 = vadd.f32 %v2164, %v2191
  %v2233 = vadd.f32 %v2165, %v2191
  %v2234 = vadd.f32 %v2166, %v2191
  %v2235 = vadd.f32 %v2167, %v2191
  %v2236 = vadd.f32 %v2168, %v2191
  %v2237 = vadd.f32 %v2169, %v2191
  %v2238 = vadd.f32 %v2170, %v2191
  %v2239 = vadd.f32 %v2171, %v2191
  %v2240 = vadd.f32 %v2172, %v2191
  %v2241 = vadd.f32 %v2173, %v2191
  %v2242 = vadd.f32 %v2174, %v2191
  %v2243 = vadd.f32 %v2175, %v2191
  %v2244 = vadd.f32 %v2176, %v2191
  %v2245 = vadd.f32 %v2177, %v2191
  %v2246 = vadd.f32 %v2178, %v2191
  %v2247 = vadd.f32 %v2179, %v2191
  %v2248 = vadd.f32 %v2180, %v2191
  %v2249 = vadd.f32 %v2181, %v2191
  %v2250 = vadd.f32 %v2182, %v2191
  %v2251 = vadd.f32 %v2183, %v2191
  %v2252 = vadd.f32 %v2184, %v2191
  %v2253 = vadd.f32 %v2185, %v2191
  %v2254 = vadd.f32 %v2186, %v2191
  %v2255 = vadd.f32 %v2187, %v2191
  %v2256 = vadd.f32 %v2188, %v2191
  %v2257 = vmax.f32 %v2193, 0.0
  %v2258 = vmax.f32 %v2194, 0.0
  %v2259 = vmax.f32 %v2195, 0.0
  %v2260 = vmax.f32 %v2196, 0.0
  %v2261 = vmax.f32 %v2197, 0.0
  %v2262 = vmax.f32 %v2198, 0.0
  %v2263 = vmax.f32 %v2199, 0.0
  %v2264 = vmax.f32 %v2200, 0.0
  %v2265 = vmax.f32 %v2201, 0.0
  %v2266 = vmax.f32 %v2202, 0.0
  %v2267 = vmax.f32 %v2203, 0.0
  %v2268 = vmax.f32 %v2204, 0.0
  %v2269 = vmax.f32 %v2205, 0.0
  %v2270 = vmax.f32 %v2206, 0.0
  %v2271 = vmax.f32 %v2207, 0.0
  %v2272 = vmax.f32 %v2208, 0.0
  %v2273 = vmax.f32 %v2209, 0.0
  %v2274 = vmax.f32 %v2210, 0.0
  %v2275 = vmax.f32 %v2211, 0.0
  %v2276 = vmax.f32 %v2212, 0.0
  %v2277 = vmax.f32 %v2213, 0.0
  %v2278 = vmax.f32 %v2214, 0.0
  %v2279 = vmax.f32 %v2215, 0.0
  %v2280 = vmax.f32 %v2216, 0.0
  %v2281 = vmax.f32 %v2217, 0.0
  %v2282 = vmax.f32 %v2218, 0.0
  %v2283 = vmax.f32 %v2219, 0.0
  %v2284 = vmax.f32 %v2220, 0.0
  %v2285 = vmax.f32 %v2221, 0.0
  %v2286 = vmax.f32 %v2222, 0.0
  %v2287 = vmax.f32 %v2223, 0.0
  %v2288 = vmax.f32 %v2224, 0.0
  %v2289 = vmax.f32 %v2225, 0.0
  %v2290 = vmax.f32 %v2226, 0.0
  %v2291 = vmax.f32 %v2227, 0.0
  %v2292 = vmax.f32 %v2228, 0.0
  %v2293 = vmax.f32 %v2229, 0.0
  %v2294 = vmax.f32 %v2230, 0.0
  %v2295 = vmax.f32 %v2231, 0.0
  %v2296 = vmax.f32 %v2232, 0.0
  %v2297 = vmax.f32 %v2233, 0.0
  %v2298 = vmax.f32 %v2234, 0.0
  %v2299 = vmax.f32 %v2235, 0.0
  %v2300 = vmax.f32 %v2236, 0.0
  %v2301 = vmax.f32 %v2237, 0.0
  %v2302 = vmax.f32 %v2238, 0.0
  %v2303 = vmax.f32 %v2239, 0.0
  %v2304 = vmax.f32 %v2240, 0.0
  %v2305 = vmax.f32 %v2241, 0.0
  %v2306 = vmax.f32 %v2242, 0.0
  %v2307 = vmax.f32 %v2243, 0.0
  %v2308 = vmax.f32 %v2244, 0.0
  %v2309 = vmax.f32 %v2245, 0.0
  %v2310 = vmax.f32 %v2246, 0.0
  %v2311 = vmax.f32 %v2247, 0.0
  %v2312 = vmax.f32 %v2248, 0.0
  %v2313 = vmax.f32 %v2249, 0.0
  %v2314 = vmax.f32 %v2250, 0.0
  %v2315 = vmax.f32 %v2251, 0.0
  %v2316 = vmax.f32 %v2252, 0.0
  %v2317 = vmax.f32 %v2253, 0.0
  %v2318 = vmax.f32 %v2254, 0.0
  %v2319 = vmax.f32 %v2255, 0.0
  %v2320 = vmax.f32 %v2256, 0.0
  %v2321 = vpack.c.bf16 %v2257, %v2257
  %v2322 = vpack.c.bf16 %v2258, %v2258
  %v2323 = vpack.c.bf16 %v2259, %v2259
  %v2324 = vpack.c.bf16 %v2260, %v2260
  %v2325 = vpack.c.bf16 %v2261, %v2261
  %v2326 = vpack.c.bf16 %v2262, %v2262
  %v2327 = vpack.c.bf16 %v2263, %v2263
  %v2328 = vpack.c.bf16 %v2264, %v2264
  %v2329 = vpack.c.bf16 %v2265, %v2265
  %v2330 = vpack.c.bf16 %v2266, %v2266
  %v2331 = vpack.c.bf16 %v2267, %v2267
  %v2332 = vpack.c.bf16 %v2268, %v2268
  %v2333 = vpack.c.bf16 %v2269, %v2269
  %v2334 = vpack.c.bf16 %v2270, %v2270
  %v2335 = vpack.c.bf16 %v2271, %v2271
  %v2336 = vpack.c.bf16 %v2272, %v2272
  %v2337 = vpack.c.bf16 %v2273, %v2273
  %v2338 = vpack.c.bf16 %v2274, %v2274
  %v2339 = vpack.c.bf16 %v2275, %v2275
  %v2340 = vpack.c.bf16 %v2276, %v2276
  %v2341 = vpack.c.bf16 %v2277, %v2277
  %v2342 = vpack.c.bf16 %v2278, %v2278
  %v2343 = vpack.c.bf16 %v2279, %v2279
  %v2344 = vpack.c.bf16 %v2280, %v2280
  %v2345 = vpack.c.bf16 %v2281, %v2281
  %v2346 = vpack.c.bf16 %v2282, %v2282
  %v2347 = vpack.c.bf16 %v2283, %v2283
  %v2348 = vpack.c.bf16 %v2284, %v2284
  %v2349 = vpack.c.bf16 %v2285, %v2285
  %v2350 = vpack.c.bf16 %v2286, %v2286
  %v2351 = vpack.c.bf16 %v2287, %v2287
  %v2352 = vpack.c.bf16 %v2288, %v2288
  %v2353 = vpack.c.bf16 %v2289, %v2289
  %v2354 = vpack.c.bf16 %v2290, %v2290
  %v2355 = vpack.c.bf16 %v2291, %v2291
  %v2356 = vpack.c.bf16 %v2292, %v2292
  %v2357 = vpack.c.bf16 %v2293, %v2293
  %v2358 = vpack.c.bf16 %v2294, %v2294
  %v2359 = vpack.c.bf16 %v2295, %v2295
  %v2360 = vpack.c.bf16 %v2296, %v2296
  %v2361 = vpack.c.bf16 %v2297, %v2297
  %v2362 = vpack.c.bf16 %v2298, %v2298
  %v2363 = vpack.c.bf16 %v2299, %v2299
  %v2364 = vpack.c.bf16 %v2300, %v2300
  %v2365 = vpack.c.bf16 %v2301, %v2301
  %v2366 = vpack.c.bf16 %v2302, %v2302
  %v2367 = vpack.c.bf16 %v2303, %v2303
  %v2368 = vpack.c.bf16 %v2304, %v2304
  %v2369 = vpack.c.bf16 %v2305, %v2305
  %v2370 = vpack.c.bf16 %v2306, %v2306
  %v2371 = vpack.c.bf16 %v2307, %v2307
  %v2372 = vpack.c.bf16 %v2308, %v2308
  %v2373 = vpack.c.bf16 %v2309, %v2309
  %v2374 = vpack.c.bf16 %v2310, %v2310
  %v2375 = vpack.c.bf16 %v2311, %v2311
  %v2376 = vpack.c.bf16 %v2312, %v2312
  %v2377 = vpack.c.bf16 %v2313, %v2313
  %v2378 = vpack.c.bf16 %v2314, %v2314
  %v2379 = vpack.c.bf16 %v2315, %v2315
  %v2380 = vpack.c.bf16 %v2316, %v2316
  %v2381 = vpack.c.bf16 %v2317, %v2317
  %v2382 = vpack.c.bf16 %v2318, %v2318
  %v2383 = vpack.c.bf16 %v2319, %v2319
  %v2384 = vpack.c.bf16 %v2320, %v2320
  %vm2385 = vcmask 257024
  %2386 = vst.msk [vmem:[%s3] sm:$0xf] %vm2385, %v2321
  %2387 = vst.msk [vmem:[%s3 + $0x4] sm:$0xf] %vm2385, %v2322
  %2388 = vst.msk [vmem:[%s3 + $0x8] sm:$0xf] %vm2385, %v2323
  %2389 = vst.msk [vmem:[%s3 + $0xc] sm:$0xf] %vm2385, %v2324
  %2390 = vst.msk [vmem:[%s3 + $0x10] sm:$0xf] %vm2385, %v2325
  %2391 = vst.msk [vmem:[%s3 + $0x14] sm:$0xf] %vm2385, %v2326
  %2392 = vst.msk [vmem:[%s3 + $0x18] sm:$0xf] %vm2385, %v2327
  %2393 = vst.msk [vmem:[%s3 + $0x1c] sm:$0xf] %vm2385, %v2328
  %2394 = vst.msk [vmem:[%s3 + $0x20] sm:$0xf] %vm2385, %v2329
  %2395 = vst.msk [vmem:[%s3 + $0x24] sm:$0xf] %vm2385, %v2330
  %2396 = vst.msk [vmem:[%s3 + $0x28] sm:$0xf] %vm2385, %v2331
  %2397 = vst.msk [vmem:[%s3 + $0x2c] sm:$0xf] %vm2385, %v2332
  %2398 = vst.msk [vmem:[%s3 + $0x30] sm:$0xf] %vm2385, %v2333
  %2399 = vst.msk [vmem:[%s3 + $0x34] sm:$0xf] %vm2385, %v2334
  %2400 = vst.msk [vmem:[%s3 + $0x38] sm:$0xf] %vm2385, %v2335
  %2401 = vst.msk [vmem:[%s3 + $0x3c] sm:$0xf] %vm2385, %v2336
  %2402 = vst.msk [vmem:[%s3 + $0x40] sm:$0xf] %vm2385, %v2337
  %2403 = vst.msk [vmem:[%s3 + $0x44] sm:$0xf] %vm2385, %v2338
  %2404 = vst.msk [vmem:[%s3 + $0x48] sm:$0xf] %vm2385, %v2339
  %2405 = vst.msk [vmem:[%s3 + $0x4c] sm:$0xf] %vm2385, %v2340
  %2406 = vst.msk [vmem:[%s3 + $0x50] sm:$0xf] %vm2385, %v2341
  %2407 = vst.msk [vmem:[%s3 + $0x54] sm:$0xf] %vm2385, %v2342
  %2408 = vst.msk [vmem:[%s3 + $0x58] sm:$0xf] %vm2385, %v2343
  %2409 = vst.msk [vmem:[%s3 + $0x5c] sm:$0xf] %vm2385, %v2344
  %2410 = vst.msk [vmem:[%s3 + $0x60] sm:$0xf] %vm2385, %v2345
  %2411 = vst.msk [vmem:[%s3 + $0x64] sm:$0xf] %vm2385, %v2346
  %2412 = vst.msk [vmem:[%s3 + $0x68] sm:$0xf] %vm2385, %v2347
  %2413 = vst.msk [vmem:[%s3 + $0x6c] sm:$0xf] %vm2385, %v2348
  %2414 = vst.msk [vmem:[%s3 + $0x70] sm:$0xf] %vm2385, %v2349
  %2415 = vst.msk [vmem:[%s3 + $0x74] sm:$0xf] %vm2385, %v2350
  %2416 = vst.msk [vmem:[%s3 + $0x78] sm:$0xf] %vm2385, %v2351
  %2417 = vst.msk [vmem:[%s3 + $0x7c] sm:$0xf] %vm2385, %v2352
  %2418 = vst.msk [vmem:[%s3 + $0x80] sm:$0xf] %vm2385, %v2353
  %2419 = vst.msk [vmem:[%s3 + $0x84] sm:$0xf] %vm2385, %v2354
  %2420 = vst.msk [vmem:[%s3 + $0x88] sm:$0xf] %vm2385, %v2355
  %2421 = vst.msk [vmem:[%s3 + $0x8c] sm:$0xf] %vm2385, %v2356
  %2422 = vst.msk [vmem:[%s3 + $0x90] sm:$0xf] %vm2385, %v2357
  %2423 = vst.msk [vmem:[%s3 + $0x94] sm:$0xf] %vm2385, %v2358
  %2424 = vst.msk [vmem:[%s3 + $0x98] sm:$0xf] %vm2385, %v2359
  %2425 = vst.msk [vmem:[%s3 + $0x9c] sm:$0xf] %vm2385, %v2360
  %2426 = vst.msk [vmem:[%s3 + $0xa0] sm:$0xf] %vm2385, %v2361
  %2427 = vst.msk [vmem:[%s3 + $0xa4] sm:$0xf] %vm2385, %v2362
  %2428 = vst.msk [vmem:[%s3 + $0xa8] sm:$0xf] %vm2385, %v2363
  %2429 = vst.msk [vmem:[%s3 + $0xac] sm:$0xf] %vm2385, %v2364
  %2430 = vst.msk [vmem:[%s3 + $0xb0] sm:$0xf] %vm2385, %v2365
  %2431 = vst.msk [vmem:[%s3 + $0xb4] sm:$0xf] %vm2385, %v2366
  %2432 = vst.msk [vmem:[%s3 + $0xb8] sm:$0xf] %vm2385, %v2367
  %2433 = vst.msk [vmem:[%s3 + $0xbc] sm:$0xf] %vm2385, %v2368
  %2434 = vst.msk [vmem:[%s3 + $0xc0] sm:$0xf] %vm2385, %v2369
  %2435 = vst.msk [vmem:[%s3 + $0xc4] sm:$0xf] %vm2385, %v2370
  %2436 = vst.msk [vmem:[%s3 + $0xc8] sm:$0xf] %vm2385, %v2371
  %2437 = vst.msk [vmem:[%s3 + $0xcc] sm:$0xf] %vm2385, %v2372
  %2438 = vst.msk [vmem:[%s3 + $0xd0] sm:$0xf] %vm2385, %v2373
  %2439 = vst.msk [vmem:[%s3 + $0xd4] sm:$0xf] %vm2385, %v2374
  %2440 = vst.msk [vmem:[%s3 + $0xd8] sm:$0xf] %vm2385, %v2375
  %2441 = vst.msk [vmem:[%s3 + $0xdc] sm:$0xf] %vm2385, %v2376
  %2442 = vst.msk [vmem:[%s3 + $0xe0] sm:$0xf] %vm2385, %v2377
  %2443 = vst.msk [vmem:[%s3 + $0xe4] sm:$0xf] %vm2385, %v2378
  %2444 = vst.msk [vmem:[%s3 + $0xe8] sm:$0xf] %vm2385, %v2379
  %2445 = vst.msk [vmem:[%s3 + $0xec] sm:$0xf] %vm2385, %v2380
  %2446 = vst.msk [vmem:[%s3 + $0xf0] sm:$0xf] %vm2385, %v2381
  %2447 = vst.msk [vmem:[%s3 + $0xf4] sm:$0xf] %vm2385, %v2382
  %2448 = vst.msk [vmem:[%s3 + $0xf8] sm:$0xf] %vm2385, %v2383
  %2449 = vst.msk [vmem:[%s3 + $0xfc] sm:$0xf] %vm2385, %v2384
  // Predicated region
  $region14: #{cnn_forward.3} parent=0 // pred_check
    _
  $region15: #{cnn_forward.3} parent=0 // pred_check_branch
    %2451 = sbr.rel (0) target = $region17
  $region16: #{cnn_forward.3} parent=0 // pred_region
    _
  $region17: #{cnn_forward.3} parent=0 // pred_fallthru
    _
  // Predicated region
  $region18: #{cnn_forward.3} parent=0 // pred_check
    _
  $region19: #{cnn_forward.3} parent=0 // pred_check_branch
    %2453 = sbr.rel (0) target = $region21
  $region20: #{cnn_forward.3} parent=0 // pred_region
    _
  $region21: #{cnn_forward.3} parent=0 // pred_fallthru
    _

// kernel: cnn_forward.4
$region0: #{cnn_forward.4}
  #allocation0 [shape = 'u32[]', space=smem, size = 0x4, offset = 0x4, fixed_abs, tag = 'smem constant byte address 0x4 - core index']
  #allocation1 [shape = 'u32[72,128]{1,0:T(1,128)}', space=vmem, size = 0x9000, scoped, tag = 'internal scratch']
  %s0 = inlined_call_operand.vmem [shape: bf16[4,128,288], index: 0, kind: input, shape index: {}]
  %s1 = inlined_call_operand.vmem [shape: bf16[288,64], index: 1, kind: input, shape index: {}]
  %s2 = inlined_call_operand.vmem [shape: f32[1,64], index: 2, kind: input, shape index: {}]
  %s3 = inlined_call_operand.vmem [shape: bf16[128,64], index: 3, kind: output, shape index: {}]
  %s4 = sld [smem:[#allocation0]]
  $region22: #{cnn_forward.4} parent=0
    _
  %s6 = ssub.s32 1, %s4
  %s7 = scalar_select 0, %s6, %s4
  // Predicated region
  $region2: #{cnn_forward.4} parent=0 // pred_check
    _
  $region3: #{cnn_forward.4} parent=0 // pred_check_branch
    %9 = sbr.rel (0) target = $region5
  $region4: #{cnn_forward.4} parent=0 // pred_region
    _
  $region5: #{cnn_forward.4} parent=0 // pred_fallthru
    _
  // Predicated region
  $region6: #{cnn_forward.4} parent=0 // pred_check
    _
  $region7: #{cnn_forward.4} parent=0 // pred_check_branch
    %11 = sbr.rel (0) target = $region9
  $region8: #{cnn_forward.4} parent=0 // pred_region
    _
  $region9: #{cnn_forward.4} parent=0 // pred_fallthru
    _
  // Predicated region
  $region10: #{cnn_forward.4} parent=0 // pred_check
    _
  $region11: #{cnn_forward.4} parent=0 // pred_check_branch
    %13 = sbr.rel (0) target = $region13
  $region12: #{cnn_forward.4} parent=0 // pred_region
    _
  $region13: #{cnn_forward.4} parent=0 // pred_fallthru
    _
  %v15 = vld [vmem:[%s1] sm:$0xf]
  %v16 = vld [vmem:[%s1 + $0x4] sm:$0xf]
  %v17 = vld [vmem:[%s1 + $0x8] sm:$0xf]
  %v18 = vld [vmem:[%s1 + $0xc] sm:$0xf]
  %v19 = vld [vmem:[%s1 + $0x10] sm:$0xf]
  %v20 = vld [vmem:[%s1 + $0x14] sm:$0xf]
  %v21 = vld [vmem:[%s1 + $0x18] sm:$0xf]
  %v22 = vld [vmem:[%s1 + $0x1c] sm:$0xf]
  %v23 = vld [vmem:[%s1 + $0x20] sm:$0xf]
  %v24 = vld [vmem:[%s1 + $0x24] sm:$0xf]
  %v25 = vld [vmem:[%s1 + $0x28] sm:$0xf]
  %v26 = vld [vmem:[%s1 + $0x2c] sm:$0xf]
  %v27 = vld [vmem:[%s1 + $0x30] sm:$0xf]
  %v28 = vld [vmem:[%s1 + $0x34] sm:$0xf]
  %v29 = vld [vmem:[%s1 + $0x38] sm:$0xf]
  %v30 = vld [vmem:[%s1 + $0x3c] sm:$0xf]
  %v31 = vld [vmem:[%s1 + $0x40] sm:$0xf]
  %v32 = vld [vmem:[%s1 + $0x44] sm:$0xf]
  %v33 = vld [vmem:[%s1 + $0x48] sm:$0xf]
  %v34 = vld [vmem:[%s1 + $0x4c] sm:$0xf]
  %v35 = vld [vmem:[%s1 + $0x50] sm:$0xf]
  %v36 = vld [vmem:[%s1 + $0x54] sm:$0xf]
  %v37 = vld [vmem:[%s1 + $0x58] sm:$0xf]
  %v38 = vld [vmem:[%s1 + $0x5c] sm:$0xf]
  %v39 = vld [vmem:[%s1 + $0x60] sm:$0xf]
  %v40 = vld [vmem:[%s1 + $0x64] sm:$0xf]
  %v41 = vld [vmem:[%s1 + $0x68] sm:$0xf]
  %v42 = vld [vmem:[%s1 + $0x6c] sm:$0xf]
  %v43 = vld [vmem:[%s1 + $0x70] sm:$0xf]
  %v44 = vld [vmem:[%s1 + $0x74] sm:$0xf]
  %v45 = vld [vmem:[%s1 + $0x78] sm:$0xf]
  %v46 = vld [vmem:[%s1 + $0x7c] sm:$0xf]
  %v47 = vld [vmem:[%s1 + $0x80] sm:$0xf]
  %v48 = vld [vmem:[%s1 + $0x84] sm:$0xf]
  %v49 = vld [vmem:[%s1 + $0x88] sm:$0xf]
  %v50 = vld [vmem:[%s1 + $0x8c] sm:$0xf]
  %v51 = vld [vmem:[%s0] sm:$0xff]
  %v52 = vld [vmem:[%s0 + $0x8] sm:$0xf]
  %v53 = vld [vmem:[%s0 + $0xc] sm:$0xff]
  %v54 = vld [vmem:[%s0 + $0x14] sm:$0xf]
  %v55 = vld [vmem:[%s0 + $0x18] sm:$0xff]
  %v56 = vld [vmem:[%s0 + $0x20] sm:$0xf]
  %v57 = vld [vmem:[%s0 + $0x24] sm:$0xff]
  %v58 = vld [vmem:[%s0 + $0x2c] sm:$0xf]
  %v59 = vld [vmem:[%s0 + $0x30] sm:$0xff]
  %v60 = vld [vmem:[%s0 + $0x38] sm:$0xf]
  %v61 = vld [vmem:[%s0 + $0x3c] sm:$0xff]
  %v62 = vld [vmem:[%s0 + $0x44] sm:$0xf]
  %v63 = vld [vmem:[%s0 + $0x48] sm:$0xff]
  %v64 = vld [vmem:[%s0 + $0x50] sm:$0xf]
  %v65 = vld [vmem:[%s0 + $0x54] sm:$0xff]
  %v66 = vld [vmem:[%s0 + $0x5c] sm:$0xf]
  %v67 = vld [vmem:[%s0 + $0x60] sm:$0xff]
  %v68 = vld [vmem:[%s0 + $0x68] sm:$0xf]
  %v69 = vld [vmem:[%s0 + $0x6c] sm:$0xff]
  %v70 = vld [vmem:[%s0 + $0x74] sm:$0xf]
  %v71 = vld [vmem:[%s0 + $0x78] sm:$0xff]
  %v72 = vld [vmem:[%s0 + $0x80] sm:$0xf]
  %v73 = vld [vmem:[%s0 + $0x84] sm:$0xff]
  %v74 = vld [vmem:[%s0 + $0x8c] sm:$0xf]
  %v75 = vld [vmem:[%s0 + $0x90] sm:$0xff]
  %v76 = vld [vmem:[%s0 + $0x98] sm:$0xf]
  %v77 = vld [vmem:[%s0 + $0x9c] sm:$0xff]
  %v78 = vld [vmem:[%s0 + $0xa4] sm:$0xf]
  %v79 = vld [vmem:[%s0 + $0xa8] sm:$0xff]
  %v80 = vld [vmem:[%s0 + $0xb0] sm:$0xf]
  %v81 = vld [vmem:[%s0 + $0xb4] sm:$0xff]
  %v82 = vld [vmem:[%s0 + $0xbc] sm:$0xf]
  %v115 = vunpack.c.l.b16 %v51
  %v116 = vunpack.c.h.b16 %v51
  %v117 = vunpack.c.l.b16 %v52
  %v118 = vunpack.c.l.b16 %v53
  %v119 = vunpack.c.h.b16 %v53
  %v120 = vunpack.c.l.b16 %v54
  %v121 = vunpack.c.l.b16 %v55
  %v122 = vunpack.c.h.b16 %v55
  %v123 = vunpack.c.l.b16 %v56
  %v124 = vunpack.c.l.b16 %v57
  %v125 = vunpack.c.h.b16 %v57
  %v126 = vunpack.c.l.b16 %v58
  %v127 = vunpack.c.l.b16 %v59
  %v128 = vunpack.c.h.b16 %v59
  %v129 = vunpack.c.l.b16 %v60
  %v130 = vunpack.c.l.b16 %v61
  %v131 = vunpack.c.h.b16 %v61
  %v132 = vunpack.c.l.b16 %v62
  %v133 = vunpack.c.l.b16 %v63
  %v134 = vunpack.c.h.b16 %v63
  %v135 = vunpack.c.l.b16 %v64
  %v136 = vunpack.c.l.b16 %v65
  %v137 = vunpack.c.h.b16 %v65
  %v138 = vunpack.c.l.b16 %v66
  %v139 = vunpack.c.l.b16 %v67
  %v140 = vunpack.c.h.b16 %v67
  %v141 = vunpack.c.l.b16 %v68
  %v142 = vunpack.c.l.b16 %v69
  %v143 = vunpack.c.h.b16 %v69
  %v144 = vunpack.c.l.b16 %v70
  %v145 = vunpack.c.l.b16 %v71
  %v146 = vunpack.c.h.b16 %v71
  %v147 = vunpack.c.l.b16 %v72
  %v148 = vunpack.c.l.b16 %v73
  %v149 = vunpack.c.h.b16 %v73
  %v150 = vunpack.c.l.b16 %v74
  %v151 = vunpack.c.l.b16 %v75
  %v152 = vunpack.c.h.b16 %v75
  %v153 = vunpack.c.l.b16 %v76
  %v154 = vunpack.c.l.b16 %v77
  %v155 = vunpack.c.h.b16 %v77
  %v156 = vunpack.c.l.b16 %v78
  %v157 = vunpack.c.l.b16 %v79
  %v158 = vunpack.c.h.b16 %v79
  %v159 = vunpack.c.l.b16 %v80
  %v160 = vunpack.c.l.b16 %v81
  %v161 = vunpack.c.h.b16 %v81
  %v162 = vunpack.c.l.b16 %v82
  %v163 = vpack.c.b16 %v118, %v115
  %v164 = vpack.c.b16 %v119, %v116
  %v165 = vpack.c.b16 %v120, %v117
  %v166 = vpack.c.b16 %v124, %v121
  %v167 = vpack.c.b16 %v125, %v122
  %v168 = vpack.c.b16 %v126, %v123
  %v169 = vpack.c.b16 %v130, %v127
  %v170 = vpack.c.b16 %v131, %v128
  %v171 = vpack.c.b16 %v132, %v129
  %v172 = vpack.c.b16 %v136, %v133
  %v173 = vpack.c.b16 %v137, %v134
  %v174 = vpack.c.b16 %v138, %v135
  %v175 = vpack.c.b16 %v142, %v139
  %v176 = vpack.c.b16 %v143, %v140
  %v177 = vpack.c.b16 %v144, %v141
  %v178 = vpack.c.b16 %v148, %v145
  %v179 = vpack.c.b16 %v149, %v146
  %v180 = vpack.c.b16 %v150, %v147
  %v181 = vpack.c.b16 %v154, %v151
  %v182 = vpack.c.b16 %v155, %v152
  %v183 = vpack.c.b16 %v156, %v153
  %v184 = vpack.c.b16 %v160, %v157
  %v185 = vpack.c.b16 %v161, %v158
  %v186 = vpack.c.b16 %v162, %v159
  %v239 = vunpack.c.l.b16 %v15
  %v240 = vunpack.c.l.b16 %v16
  %v241 = vunpack.c.l.b16 %v17
  %v242 = vunpack.c.l.b16 %v18
  %v243 = vunpack.c.l.b16 %v19
  %v244 = vunpack.c.l.b16 %v20
  %v245 = vunpack.c.l.b16 %v21
  %v246 = vunpack.c.l.b16 %v22
  %v247 = vunpack.c.l.b16 %v23
  %v248 = vunpack.c.l.b16 %v24
  %v249 = vunpack.c.l.b16 %v25
  %v250 = vunpack.c.l.b16 %v26
  %v251 = vunpack.c.l.b16 %v27
  %v252 = vunpack.c.l.b16 %v28
  %v253 = vunpack.c.l.b16 %v29
  %v254 = vunpack.c.l.b16 %v30
  %v255 = vunpack.c.l.b16 %v31
  %v256 = vunpack.c.l.b16 %v32
  %v257 = vunpack.c.l.b16 %v33
  %v258 = vunpack.c.l.b16 %v34
  %v259 = vunpack.c.l.b16 %v35
  %v260 = vunpack.c.l.b16 %v36
  %v261 = vunpack.c.l.b16 %v37
  %v262 = vunpack.c.l.b16 %v38
  %v263 = vunpack.c.l.b16 %v39
  %v264 = vunpack.c.l.b16 %v40
  %v265 = vunpack.c.l.b16 %v41
  %v266 = vunpack.c.l.b16 %v42
  %v267 = vunpack.c.l.b16 %v43
  %v268 = vunpack.c.l.b16 %v44
  %v269 = vunpack.c.l.b16 %v45
  %v270 = vunpack.c.l.b16 %v46
  %v271 = vunpack.c.l.b16 %v47
  %v272 = vunpack.c.l.b16 %v48
  %v273 = vunpack.c.l.b16 %v49
  %v274 = vunpack.c.l.b16 %v50
  %v275 = vpack.c.b16 %v240, %v239
  %v276 = vpack.c.b16 %v242, %v241
  %v277 = vpack.c.b16 %v244, %v243
  %v278 = vpack.c.b16 %v246, %v245
  %v279 = vpack.c.b16 %v248, %v247
  %v280 = vpack.c.b16 %v250, %v249
  %v281 = vpack.c.b16 %v252, %v251
  %v282 = vpack.c.b16 %v254, %v253
  %v283 = vpack.c.b16 %v256, %v255
  %v284 = vpack.c.b16 %v258, %v257
  %v285 = vpack.c.b16 %v260, %v259
  %v286 = vpack.c.b16 %v262, %v261
  %v287 = vpack.c.b16 %v264, %v263
  %v288 = vpack.c.b16 %v266, %v265
  %v289 = vpack.c.b16 %v268, %v267
  %v290 = vpack.c.b16 %v270, %v269
  %v291 = vpack.c.b16 %v272, %v271
  %v292 = vpack.c.b16 %v274, %v273
  %vm311 = vcmask 261120
  %v313 = vsel %vm311, %v165, 0
  %v316 = vsel %vm311, %v168, 0
  %v319 = vsel %vm311, %v171, 0
  %v322 = vsel %vm311, %v174, 0
  %v325 = vsel %vm311, %v177, 0
  %v328 = vsel %vm311, %v180, 0
  %v331 = vsel %vm311, %v183, 0
  %v334 = vsel %vm311, %v186, 0
  %336 = vmatpush.bf16.msra.mxu0 %v282
  %337 = vmatpush.bf16.msra.mxu0 %v281
  %338 = vmatpush.bf16.msra.mxu0 %v280
  %339 = vmatpush.bf16.msra.mxu0 %v279
  %340 = vmatpush.bf16.msra.mxu0 %v278
  %341 = vmatpush.bf16.msra.mxu0 %v277
  %342 = vmatpush.bf16.msra.mxu0 %v276
  %343 = vmatpush.bf16.msra.mxu0 %v275
  %344 = vmatmul.bf16.gmra.mxu0 %v163
  %v345 = vpop.f32.mrf.mxu0
  %v346 = vadd.f32 0.0, %v345
  %v347 = vpop.f32.mrf.mxu0
  %v348 = vadd.f32 0.0, %v347
  %349 = vmatmul.bf16.gmra.mxu0 %v166
  %v350 = vpop.f32.mrf.mxu0
  %v351 = vadd.f32 0.0, %v350
  %v352 = vpop.f32.mrf.mxu0
  %v353 = vadd.f32 0.0, %v352
  %354 = vmatmul.bf16.gmra.mxu0 %v169
  %v355 = vpop.f32.mrf.mxu0
  %v356 = vadd.f32 0.0, %v355
  %v357 = vpop.f32.mrf.mxu0
  %v358 = vadd.f32 0.0, %v357
  %359 = vmatmul.bf16.gmra.mxu0 %v172
  %v360 = vpop.f32.mrf.mxu0
  %v361 = vadd.f32 0.0, %v360
  %v362 = vpop.f32.mrf.mxu0
  %v363 = vadd.f32 0.0, %v362
  %364 = vmatmul.bf16.gmra.mxu0 %v175
  %v365 = vpop.f32.mrf.mxu0
  %v366 = vadd.f32 0.0, %v365
  %v367 = vpop.f32.mrf.mxu0
  %v368 = vadd.f32 0.0, %v367
  %369 = vmatmul.bf16.gmra.mxu0 %v178
  %v370 = vpop.f32.mrf.mxu0
  %v371 = vadd.f32 0.0, %v370
  %v372 = vpop.f32.mrf.mxu0
  %v373 = vadd.f32 0.0, %v372
  %374 = vmatmul.bf16.gmra.mxu0 %v181
  %v375 = vpop.f32.mrf.mxu0
  %v376 = vadd.f32 0.0, %v375
  %v377 = vpop.f32.mrf.mxu0
  %v378 = vadd.f32 0.0, %v377
  %379 = vmatmul.bf16.gmra.mxu0 %v184
  %v380 = vpop.f32.mrf.mxu0
  %v381 = vadd.f32 0.0, %v380
  %v382 = vpop.f32.mrf.mxu0
  %v383 = vadd.f32 0.0, %v382
  %384 = vdwg.mxu0
  %385 = vmatpush.bf16.msra.mxu0 %v290
  %386 = vmatpush.bf16.msra.mxu0 %v289
  %387 = vmatpush.bf16.msra.mxu0 %v288
  %388 = vmatpush.bf16.msra.mxu0 %v287
  %389 = vmatpush.bf16.msra.mxu0 %v286
  %390 = vmatpush.bf16.msra.mxu0 %v285
  %391 = vmatpush.bf16.msra.mxu0 %v284
  %392 = vmatpush.bf16.msra.mxu0 %v283
  %393 = vmatmul.bf16.gmra.mxu0 %v164
  %v394 = vpop.f32.mrf.mxu0
  %v395 = vadd.f32 %v346, %v394
  %v396 = vpop.f32.mrf.mxu0
  %v397 = vadd.f32 %v348, %v396
  %398 = vmatmul.bf16.gmra.mxu0 %v167
  %v399 = vpop.f32.mrf.mxu0
  %v400 = vadd.f32 %v351, %v399
  %v401 = vpop.f32.mrf.mxu0
  %v402 = vadd.f32 %v353, %v401
  %403 = vmatmul.bf16.gmra.mxu0 %v170
  %v404 = vpop.f32.mrf.mxu0
  %v405 = vadd.f32 %v356, %v404
  %v406 = vpop.f32.mrf.mxu0
  %v407 = vadd.f32 %v358, %v406
  %408 = vmatmul.bf16.gmra.mxu0 %v173
  %v409 = vpop.f32.mrf.mxu0
  %v410 = vadd.f32 %v361, %v409
  %v411 = vpop.f32.mrf.mxu0
  %v412 = vadd.f32 %v363, %v411
  %413 = vmatmul.bf16.gmra.mxu0 %v176
  %v414 = vpop.f32.mrf.mxu0
  %v415 = vadd.f32 %v366, %v414
  %v416 = vpop.f32.mrf.mxu0
  %v417 = vadd.f32 %v368, %v416
  %418 = vmatmul.bf16.gmra.mxu0 %v179
  %v419 = vpop.f32.mrf.mxu0
  %v420 = vadd.f32 %v371, %v419
  %v421 = vpop.f32.mrf.mxu0
  %v422 = vadd.f32 %v373, %v421
  %423 = vmatmul.bf16.gmra.mxu0 %v182
  %v424 = vpop.f32.mrf.mxu0
  %v425 = vadd.f32 %v376, %v424
  %v426 = vpop.f32.mrf.mxu0
  %v427 = vadd.f32 %v378, %v426
  %428 = vmatmul.bf16.gmra.mxu0 %v185
  %v429 = vpop.f32.mrf.mxu0
  %v430 = vadd.f32 %v381, %v429
  %v431 = vpop.f32.mrf.mxu0
  %v432 = vadd.f32 %v383, %v431
  %433 = vdwg.mxu0
  %434 = vmatpush.bf16.msra.mxu0 0
  %435 = vmatpush.bf16.msra.mxu0 0
  %436 = vmatpush.bf16.msra.mxu0 0
  %437 = vmatpush.bf16.msra.mxu0 0
  %438 = vmatpush.bf16.msra.mxu0 0
  %439 = vmatpush.bf16.msra.mxu0 0
  %440 = vmatpush.bf16.msra.mxu0 %v292
  %441 = vmatpush.bf16.msra.mxu0 %v291
  %442 = vmatmul.bf16.gmra.mxu0 %v313
  %v443 = vpop.f32.mrf.mxu0
  %v444 = vadd.f32 %v395, %v443
  %v445 = vpop.f32.mrf.mxu0
  %v446 = vadd.f32 %v397, %v445
  %447 = vmatmul.bf16.gmra.mxu0 %v316
  %v448 = vpop.f32.mrf.mxu0
  %v449 = vadd.f32 %v400, %v448
  %v450 = vpop.f32.mrf.mxu0
  %v451 = vadd.f32 %v402, %v450
  %452 = vmatmul.bf16.gmra.mxu0 %v319
  %v453 = vpop.f32.mrf.mxu0
  %v454 = vadd.f32 %v405, %v453
  %v455 = vpop.f32.mrf.mxu0
  %v456 = vadd.f32 %v407, %v455
  %457 = vmatmul.bf16.gmra.mxu0 %v322
  %v458 = vpop.f32.mrf.mxu0
  %v459 = vadd.f32 %v410, %v458
  %v460 = vpop.f32.mrf.mxu0
  %v461 = vadd.f32 %v412, %v460
  %462 = vmatmul.bf16.gmra.mxu0 %v325
  %v463 = vpop.f32.mrf.mxu0
  %v464 = vadd.f32 %v415, %v463
  %v465 = vpop.f32.mrf.mxu0
  %v466 = vadd.f32 %v417, %v465
  %467 = vmatmul.bf16.gmra.mxu0 %v328
  %v468 = vpop.f32.mrf.mxu0
  %v469 = vadd.f32 %v420, %v468
  %v470 = vpop.f32.mrf.mxu0
  %v471 = vadd.f32 %v422, %v470
  %472 = vmatmul.bf16.gmra.mxu0 %v331
  %v473 = vpop.f32.mrf.mxu0
  %v474 = vadd.f32 %v425, %v473
  %v475 = vpop.f32.mrf.mxu0
  %v476 = vadd.f32 %v427, %v475
  %477 = vmatmul.bf16.gmra.mxu0 %v334
  %v478 = vpop.f32.mrf.mxu0
  %v479 = vadd.f32 %v430, %v478
  %v480 = vpop.f32.mrf.mxu0
  %v481 = vadd.f32 %v432, %v480
  %482 = vdwg.mxu0
  %s483 = scalar_lea.vmem %s0, 192
  %v484 = vld [vmem:[%s483] sm:$0xff]
  %v485 = vld [vmem:[%s483 + $0x8] sm:$0xf]
  %v486 = vld [vmem:[%s483 + $0xc] sm:$0xff]
  %v487 = vld [vmem:[%s483 + $0x14] sm:$0xf]
  %v488 = vld [vmem:[%s483 + $0x18] sm:$0xff]
  %v489 = vld [vmem:[%s483 + $0x20] sm:$0xf]
  %v490 = vld [vmem:[%s483 + $0x24] sm:$0xff]
  %v491 = vld [vmem:[%s483 + $0x2c] sm:$0xf]
  %v492 = vld [vmem:[%s483 + $0x30] sm:$0xff]
  %v493 = vld [vmem:[%s483 + $0x38] sm:$0xf]
  %v494 = vld [vmem:[%s483 + $0x3c] sm:$0xff]
  %v495 = vld [vmem:[%s483 + $0x44] sm:$0xf]
  %v496 = vld [vmem:[%s483 + $0x48] sm:$0xff]
  %v497 = vld [vmem:[%s483 + $0x50] sm:$0xf]
  %v498 = vld [vmem:[%s483 + $0x54] sm:$0xff]
  %v499 = vld [vmem:[%s483 + $0x5c] sm:$0xf]
  %v500 = vld [vmem:[%s483 + $0x60] sm:$0xff]
  %v501 = vld [vmem:[%s483 + $0x68] sm:$0xf]
  %v502 = vld [vmem:[%s483 + $0x6c] sm:$0xff]
  %v503 = vld [vmem:[%s483 + $0x74] sm:$0xf]
  %v504 = vld [vmem:[%s483 + $0x78] sm:$0xff]
  %v505 = vld [vmem:[%s483 + $0x80] sm:$0xf]
  %v506 = vld [vmem:[%s483 + $0x84] sm:$0xff]
  %v507 = vld [vmem:[%s483 + $0x8c] sm:$0xf]
  %v508 = vld [vmem:[%s483 + $0x90] sm:$0xff]
  %v509 = vld [vmem:[%s483 + $0x98] sm:$0xf]
  %v510 = vld [vmem:[%s483 + $0x9c] sm:$0xff]
  %v511 = vld [vmem:[%s483 + $0xa4] sm:$0xf]
  %v512 = vld [vmem:[%s483 + $0xa8] sm:$0xff]
  %v513 = vld [vmem:[%s483 + $0xb0] sm:$0xf]
  %v514 = vld [vmem:[%s483 + $0xb4] sm:$0xff]
  %v515 = vld [vmem:[%s483 + $0xbc] sm:$0xf]
  %v548 = vunpack.c.l.b16 %v484
  %v549 = vunpack.c.h.b16 %v484
  %v550 = vunpack.c.l.b16 %v485
  %v551 = vunpack.c.l.b16 %v486
  %v552 = vunpack.c.h.b16 %v486
  %v553 = vunpack.c.l.b16 %v487
  %v554 = vunpack.c.l.b16 %v488
  %v555 = vunpack.c.h.b16 %v488
  %v556 = vunpack.c.l.b16 %v489
  %v557 = vunpack.c.l.b16 %v490
  %v558 = vunpack.c.h.b16 %v490
  %v559 = vunpack.c.l.b16 %v491
  %v560 = vunpack.c.l.b16 %v492
  %v561 = vunpack.c.h.b16 %v492
  %v562 = vunpack.c.l.b16 %v493
  %v563 = vunpack.c.l.b16 %v494
  %v564 = vunpack.c.h.b16 %v494
  %v565 = vunpack.c.l.b16 %v495
  %v566 = vunpack.c.l.b16 %v496
  %v567 = vunpack.c.h.b16 %v496
  %v568 = vunpack.c.l.b16 %v497
  %v569 = vunpack.c.l.b16 %v498
  %v570 = vunpack.c.h.b16 %v498
  %v571 = vunpack.c.l.b16 %v499
  %v572 = vunpack.c.l.b16 %v500
  %v573 = vunpack.c.h.b16 %v500
  %v574 = vunpack.c.l.b16 %v501
  %v575 = vunpack.c.l.b16 %v502
  %v576 = vunpack.c.h.b16 %v502
  %v577 = vunpack.c.l.b16 %v503
  %v578 = vunpack.c.l.b16 %v504
  %v579 = vunpack.c.h.b16 %v504
  %v580 = vunpack.c.l.b16 %v505
  %v581 = vunpack.c.l.b16 %v506
  %v582 = vunpack.c.h.b16 %v506
  %v583 = vunpack.c.l.b16 %v507
  %v584 = vunpack.c.l.b16 %v508
  %v585 = vunpack.c.h.b16 %v508
  %v586 = vunpack.c.l.b16 %v509
  %v587 = vunpack.c.l.b16 %v510
  %v588 = vunpack.c.h.b16 %v510
  %v589 = vunpack.c.l.b16 %v511
  %v590 = vunpack.c.l.b16 %v512
  %v591 = vunpack.c.h.b16 %v512
  %v592 = vunpack.c.l.b16 %v513
  %v593 = vunpack.c.l.b16 %v514
  %v594 = vunpack.c.h.b16 %v514
  %v595 = vunpack.c.l.b16 %v515
  %v596 = vpack.c.b16 %v551, %v548
  %v597 = vpack.c.b16 %v552, %v549
  %v598 = vpack.c.b16 %v553, %v550
  %v599 = vpack.c.b16 %v557, %v554
  %v600 = vpack.c.b16 %v558, %v555
  %v601 = vpack.c.b16 %v559, %v556
  %v602 = vpack.c.b16 %v563, %v560
  %v603 = vpack.c.b16 %v564, %v561
  %v604 = vpack.c.b16 %v565, %v562
  %v605 = vpack.c.b16 %v569, %v566
  %v606 = vpack.c.b16 %v570, %v567
  %v607 = vpack.c.b16 %v571, %v568
  %v608 = vpack.c.b16 %v575, %v572
  %v609 = vpack.c.b16 %v576, %v573
  %v610 = vpack.c.b16 %v577, %v574
  %v611 = vpack.c.b16 %v581, %v578
  %v612 = vpack.c.b16 %v582, %v579
  %v613 = vpack.c.b16 %v583, %v580
  %v614 = vpack.c.b16 %v587, %v584
  %v615 = vpack.c.b16 %v588, %v585
  %v616 = vpack.c.b16 %v589, %v586
  %v617 = vpack.c.b16 %v593, %v590
  %v618 = vpack.c.b16 %v594, %v591
  %v619 = vpack.c.b16 %v595, %v592
  %v637 = vsel %vm311, %v598, 0
  %v640 = vsel %vm311, %v601, 0
  %v643 = vsel %vm311, %v604, 0
  %v646 = vsel %vm311, %v607, 0
  %v649 = vsel %vm311, %v610, 0
  %v652 = vsel %vm311, %v613, 0
  %v655 = vsel %vm311, %v616, 0
  %v658 = vsel %vm311, %v619, 0
  %660 = vmatpush.bf16.msra.mxu0 %v282
  %661 = vmatpush.bf16.msra.mxu0 %v281
  %662 = vmatpush.bf16.msra.mxu0 %v280
  %663 = vmatpush.bf16.msra.mxu0 %v279
  %664 = vmatpush.bf16.msra.mxu0 %v278
  %665 = vmatpush.bf16.msra.mxu0 %v277
  %666 = vmatpush.bf16.msra.mxu0 %v276
  %667 = vmatpush.bf16.msra.mxu0 %v275
  %668 = vmatmul.bf16.gmra.mxu0 %v596
  %v669 = vpop.f32.mrf.mxu0
  %v670 = vadd.f32 0.0, %v669
  %v671 = vpop.f32.mrf.mxu0
  %v672 = vadd.f32 0.0, %v671
  %673 = vmatmul.bf16.gmra.mxu0 %v599
  %v674 = vpop.f32.mrf.mxu0
  %v675 = vadd.f32 0.0, %v674
  %v676 = vpop.f32.mrf.mxu0
  %v677 = vadd.f32 0.0, %v676
  %678 = vmatmul.bf16.gmra.mxu0 %v602
  %v679 = vpop.f32.mrf.mxu0
  %v680 = vadd.f32 0.0, %v679
  %v681 = vpop.f32.mrf.mxu0
  %v682 = vadd.f32 0.0, %v681
  %683 = vmatmul.bf16.gmra.mxu0 %v605
  %v684 = vpop.f32.mrf.mxu0
  %v685 = vadd.f32 0.0, %v684
  %v686 = vpop.f32.mrf.mxu0
  %v687 = vadd.f32 0.0, %v686
  %688 = vmatmul.bf16.gmra.mxu0 %v608
  %v689 = vpop.f32.mrf.mxu0
  %v690 = vadd.f32 0.0, %v689
  %v691 = vpop.f32.mrf.mxu0
  %v692 = vadd.f32 0.0, %v691
  %693 = vmatmul.bf16.gmra.mxu0 %v611
  %v694 = vpop.f32.mrf.mxu0
  %v695 = vadd.f32 0.0, %v694
  %v696 = vpop.f32.mrf.mxu0
  %v697 = vadd.f32 0.0, %v696
  %698 = vmatmul.bf16.gmra.mxu0 %v614
  %v699 = vpop.f32.mrf.mxu0
  %v700 = vadd.f32 0.0, %v699
  %v701 = vpop.f32.mrf.mxu0
  %v702 = vadd.f32 0.0, %v701
  %703 = vmatmul.bf16.gmra.mxu0 %v617
  %v704 = vpop.f32.mrf.mxu0
  %v705 = vadd.f32 0.0, %v704
  %v706 = vpop.f32.mrf.mxu0
  %v707 = vadd.f32 0.0, %v706
  %708 = vdwg.mxu0
  %709 = vmatpush.bf16.msra.mxu0 %v290
  %710 = vmatpush.bf16.msra.mxu0 %v289
  %711 = vmatpush.bf16.msra.mxu0 %v288
  %712 = vmatpush.bf16.msra.mxu0 %v287
  %713 = vmatpush.bf16.msra.mxu0 %v286
  %714 = vmatpush.bf16.msra.mxu0 %v285
  %715 = vmatpush.bf16.msra.mxu0 %v284
  %716 = vmatpush.bf16.msra.mxu0 %v283
  %717 = vmatmul.bf16.gmra.mxu0 %v597
  %v718 = vpop.f32.mrf.mxu0
  %v719 = vadd.f32 %v670, %v718
  %v720 = vpop.f32.mrf.mxu0
  %v721 = vadd.f32 %v672, %v720
  %722 = vmatmul.bf16.gmra.mxu0 %v600
  %v723 = vpop.f32.mrf.mxu0
  %v724 = vadd.f32 %v675, %v723
  %v725 = vpop.f32.mrf.mxu0
  %v726 = vadd.f32 %v677, %v725
  %727 = vmatmul.bf16.gmra.mxu0 %v603
  %v728 = vpop.f32.mrf.mxu0
  %v729 = vadd.f32 %v680, %v728
  %v730 = vpop.f32.mrf.mxu0
  %v731 = vadd.f32 %v682, %v730
  %732 = vmatmul.bf16.gmra.mxu0 %v606
  %v733 = vpop.f32.mrf.mxu0
  %v734 = vadd.f32 %v685, %v733
  %v735 = vpop.f32.mrf.mxu0
  %v736 = vadd.f32 %v687, %v735
  %737 = vmatmul.bf16.gmra.mxu0 %v609
  %v738 = vpop.f32.mrf.mxu0
  %v739 = vadd.f32 %v690, %v738
  %v740 = vpop.f32.mrf.mxu0
  %v741 = vadd.f32 %v692, %v740
  %742 = vmatmul.bf16.gmra.mxu0 %v612
  %v743 = vpop.f32.mrf.mxu0
  %v744 = vadd.f32 %v695, %v743
  %v745 = vpop.f32.mrf.mxu0
  %v746 = vadd.f32 %v697, %v745
  %747 = vmatmul.bf16.gmra.mxu0 %v615
  %v748 = vpop.f32.mrf.mxu0
  %v749 = vadd.f32 %v700, %v748
  %v750 = vpop.f32.mrf.mxu0
  %v751 = vadd.f32 %v702, %v750
  %752 = vmatmul.bf16.gmra.mxu0 %v618
  %v753 = vpop.f32.mrf.mxu0
  %v754 = vadd.f32 %v705, %v753
  %v755 = vpop.f32.mrf.mxu0
  %v756 = vadd.f32 %v707, %v755
  %757 = vdwg.mxu0
  %758 = vmatpush.bf16.msra.mxu0 0
  %759 = vmatpush.bf16.msra.mxu0 0
  %760 = vmatpush.bf16.msra.mxu0 0
  %761 = vmatpush.bf16.msra.mxu0 0
  %762 = vmatpush.bf16.msra.mxu0 0
  %763 = vmatpush.bf16.msra.mxu0 0
  %764 = vmatpush.bf16.msra.mxu0 %v292
  %765 = vmatpush.bf16.msra.mxu0 %v291
  %766 = vmatmul.bf16.gmra.mxu0 %v637
  %v767 = vpop.f32.mrf.mxu0
  %v768 = vadd.f32 %v719, %v767
  %v769 = vpop.f32.mrf.mxu0
  %v770 = vadd.f32 %v721, %v769
  %771 = vmatmul.bf16.gmra.mxu0 %v640
  %v772 = vpop.f32.mrf.mxu0
  %v773 = vadd.f32 %v724, %v772
  %v774 = vpop.f32.mrf.mxu0
  %v775 = vadd.f32 %v726, %v774
  %776 = vmatmul.bf16.gmra.mxu0 %v643
  %v777 = vpop.f32.mrf.mxu0
  %v778 = vadd.f32 %v729, %v777
  %v779 = vpop.f32.mrf.mxu0
  %v780 = vadd.f32 %v731, %v779
  %781 = vmatmul.bf16.gmra.mxu0 %v646
  %v782 = vpop.f32.mrf.mxu0
  %v783 = vadd.f32 %v734, %v782
  %v784 = vpop.f32.mrf.mxu0
  %v785 = vadd.f32 %v736, %v784
  %786 = vmatmul.bf16.gmra.mxu0 %v649
  %v787 = vpop.f32.mrf.mxu0
  %v788 = vadd.f32 %v739, %v787
  %v789 = vpop.f32.mrf.mxu0
  %v790 = vadd.f32 %v741, %v789
  %791 = vmatmul.bf16.gmra.mxu0 %v652
  %v792 = vpop.f32.mrf.mxu0
  %v793 = vadd.f32 %v744, %v792
  %v794 = vpop.f32.mrf.mxu0
  %v795 = vadd.f32 %v746, %v794
  %796 = vmatmul.bf16.gmra.mxu0 %v655
  %v797 = vpop.f32.mrf.mxu0
  %v798 = vadd.f32 %v749, %v797
  %v799 = vpop.f32.mrf.mxu0
  %v800 = vadd.f32 %v751, %v799
  %801 = vmatmul.bf16.gmra.mxu0 %v658
  %v802 = vpop.f32.mrf.mxu0
  %v803 = vadd.f32 %v754, %v802
  %v804 = vpop.f32.mrf.mxu0
  %v805 = vadd.f32 %v756, %v804
  %806 = vdwg.mxu0
  %v807 = vmax.f32 %v444, %v768
  %v808 = vmax.f32 %v446, %v770
  %v809 = vmax.f32 %v449, %v773
  %v810 = vmax.f32 %v451, %v775
  %v811 = vmax.f32 %v454, %v778
  %v812 = vmax.f32 %v456, %v780
  %v813 = vmax.f32 %v459, %v783
  %v814 = vmax.f32 %v461, %v785
  %v815 = vmax.f32 %v464, %v788
  %v816 = vmax.f32 %v466, %v790
  %v817 = vmax.f32 %v469, %v793
  %v818 = vmax.f32 %v471, %v795
  %v819 = vmax.f32 %v474, %v798
  %v820 = vmax.f32 %v476, %v800
  %v821 = vmax.f32 %v479, %v803
  %v822 = vmax.f32 %v481, %v805
  %s823 = scalar_lea.vmem %s0, 384
  %v824 = vld [vmem:[%s823] sm:$0xff]
  %v825 = vld [vmem:[%s823 + $0x8] sm:$0xf]
  %v826 = vld [vmem:[%s823 + $0xc] sm:$0xff]
  %v827 = vld [vmem:[%s823 + $0x14] sm:$0xf]
  %v828 = vld [vmem:[%s823 + $0x18] sm:$0xff]
  %v829 = vld [vmem:[%s823 + $0x20] sm:$0xf]
  %v830 = vld [vmem:[%s823 + $0x24] sm:$0xff]
  %v831 = vld [vmem:[%s823 + $0x2c] sm:$0xf]
  %v832 = vld [vmem:[%s823 + $0x30] sm:$0xff]
  %v833 = vld [vmem:[%s823 + $0x38] sm:$0xf]
  %v834 = vld [vmem:[%s823 + $0x3c] sm:$0xff]
  %v835 = vld [vmem:[%s823 + $0x44] sm:$0xf]
  %v836 = vld [vmem:[%s823 + $0x48] sm:$0xff]
  %v837 = vld [vmem:[%s823 + $0x50] sm:$0xf]
  %v838 = vld [vmem:[%s823 + $0x54] sm:$0xff]
  %v839 = vld [vmem:[%s823 + $0x5c] sm:$0xf]
  %v840 = vld [vmem:[%s823 + $0x60] sm:$0xff]
  %v841 = vld [vmem:[%s823 + $0x68] sm:$0xf]
  %v842 = vld [vmem:[%s823 + $0x6c] sm:$0xff]
  %v843 = vld [vmem:[%s823 + $0x74] sm:$0xf]
  %v844 = vld [vmem:[%s823 + $0x78] sm:$0xff]
  %v845 = vld [vmem:[%s823 + $0x80] sm:$0xf]
  %v846 = vld [vmem:[%s823 + $0x84] sm:$0xff]
  %v847 = vld [vmem:[%s823 + $0x8c] sm:$0xf]
  %v848 = vld [vmem:[%s823 + $0x90] sm:$0xff]
  %v849 = vld [vmem:[%s823 + $0x98] sm:$0xf]
  %v850 = vld [vmem:[%s823 + $0x9c] sm:$0xff]
  %v851 = vld [vmem:[%s823 + $0xa4] sm:$0xf]
  %v852 = vld [vmem:[%s823 + $0xa8] sm:$0xff]
  %v853 = vld [vmem:[%s823 + $0xb0] sm:$0xf]
  %v854 = vld [vmem:[%s823 + $0xb4] sm:$0xff]
  %v855 = vld [vmem:[%s823 + $0xbc] sm:$0xf]
  %v888 = vunpack.c.l.b16 %v824
  %v889 = vunpack.c.h.b16 %v824
  %v890 = vunpack.c.l.b16 %v825
  %v891 = vunpack.c.l.b16 %v826
  %v892 = vunpack.c.h.b16 %v826
  %v893 = vunpack.c.l.b16 %v827
  %v894 = vunpack.c.l.b16 %v828
  %v895 = vunpack.c.h.b16 %v828
  %v896 = vunpack.c.l.b16 %v829
  %v897 = vunpack.c.l.b16 %v830
  %v898 = vunpack.c.h.b16 %v830
  %v899 = vunpack.c.l.b16 %v831
  %v900 = vunpack.c.l.b16 %v832
  %v901 = vunpack.c.h.b16 %v832
  %v902 = vunpack.c.l.b16 %v833
  %v903 = vunpack.c.l.b16 %v834
  %v904 = vunpack.c.h.b16 %v834
  %v905 = vunpack.c.l.b16 %v835
  %v906 = vunpack.c.l.b16 %v836
  %v907 = vunpack.c.h.b16 %v836
  %v908 = vunpack.c.l.b16 %v837
  %v909 = vunpack.c.l.b16 %v838
  %v910 = vunpack.c.h.b16 %v838
  %v911 = vunpack.c.l.b16 %v839
  %v912 = vunpack.c.l.b16 %v840
  %v913 = vunpack.c.h.b16 %v840
  %v914 = vunpack.c.l.b16 %v841
  %v915 = vunpack.c.l.b16 %v842
  %v916 = vunpack.c.h.b16 %v842
  %v917 = vunpack.c.l.b16 %v843
  %v918 = vunpack.c.l.b16 %v844
  %v919 = vunpack.c.h.b16 %v844
  %v920 = vunpack.c.l.b16 %v845
  %v921 = vunpack.c.l.b16 %v846
  %v922 = vunpack.c.h.b16 %v846
  %v923 = vunpack.c.l.b16 %v847
  %v924 = vunpack.c.l.b16 %v848
  %v925 = vunpack.c.h.b16 %v848
  %v926 = vunpack.c.l.b16 %v849
  %v927 = vunpack.c.l.b16 %v850
  %v928 = vunpack.c.h.b16 %v850
  %v929 = vunpack.c.l.b16 %v851
  %v930 = vunpack.c.l.b16 %v852
  %v931 = vunpack.c.h.b16 %v852
  %v932 = vunpack.c.l.b16 %v853
  %v933 = vunpack.c.l.b16 %v854
  %v934 = vunpack.c.h.b16 %v854
  %v935 = vunpack.c.l.b16 %v855
  %v936 = vpack.c.b16 %v891, %v888
  %v937 = vpack.c.b16 %v892, %v889
  %v938 = vpack.c.b16 %v893, %v890
  %v939 = vpack.c.b16 %v897, %v894
  %v940 = vpack.c.b16 %v898, %v895
  %v941 = vpack.c.b16 %v899, %v896
  %v942 = vpack.c.b16 %v903, %v900
  %v943 = vpack.c.b16 %v904, %v901
  %v944 = vpack.c.b16 %v905, %v902
  %v945 = vpack.c.b16 %v909, %v906
  %v946 = vpack.c.b16 %v910, %v907
  %v947 = vpack.c.b16 %v911, %v908
  %v948 = vpack.c.b16 %v915, %v912
  %v949 = vpack.c.b16 %v916, %v913
  %v950 = vpack.c.b16 %v917, %v914
  %v951 = vpack.c.b16 %v921, %v918
  %v952 = vpack.c.b16 %v922, %v919
  %v953 = vpack.c.b16 %v923, %v920
  %v954 = vpack.c.b16 %v927, %v924
  %v955 = vpack.c.b16 %v928, %v925
  %v956 = vpack.c.b16 %v929, %v926
  %v957 = vpack.c.b16 %v933, %v930
  %v958 = vpack.c.b16 %v934, %v931
  %v959 = vpack.c.b16 %v935, %v932
  %v977 = vsel %vm311, %v938, 0
  %v980 = vsel %vm311, %v941, 0
  %v983 = vsel %vm311, %v944, 0
  %v986 = vsel %vm311, %v947, 0
  %v989 = vsel %vm311, %v950, 0
  %v992 = vsel %vm311, %v953, 0
  %v995 = vsel %vm311, %v956, 0
  %v998 = vsel %vm311, %v959, 0
  %1000 = vmatpush.bf16.msra.mxu0 %v282
  %1001 = vmatpush.bf16.msra.mxu0 %v281
  %1002 = vmatpush.bf16.msra.mxu0 %v280
  %1003 = vmatpush.bf16.msra.mxu0 %v279
  %1004 = vmatpush.bf16.msra.mxu0 %v278
  %1005 = vmatpush.bf16.msra.mxu0 %v277
  %1006 = vmatpush.bf16.msra.mxu0 %v276
  %1007 = vmatpush.bf16.msra.mxu0 %v275
  %1008 = vmatmul.bf16.gmra.mxu0 %v936
  %v1009 = vpop.f32.mrf.mxu0
  %v1010 = vadd.f32 0.0, %v1009
  %v1011 = vpop.f32.mrf.mxu0
  %v1012 = vadd.f32 0.0, %v1011
  %1013 = vmatmul.bf16.gmra.mxu0 %v939
  %v1014 = vpop.f32.mrf.mxu0
  %v1015 = vadd.f32 0.0, %v1014
  %v1016 = vpop.f32.mrf.mxu0
  %v1017 = vadd.f32 0.0, %v1016
  %1018 = vmatmul.bf16.gmra.mxu0 %v942
  %v1019 = vpop.f32.mrf.mxu0
  %v1020 = vadd.f32 0.0, %v1019
  %v1021 = vpop.f32.mrf.mxu0
  %v1022 = vadd.f32 0.0, %v1021
  %1023 = vmatmul.bf16.gmra.mxu0 %v945
  %v1024 = vpop.f32.mrf.mxu0
  %v1025 = vadd.f32 0.0, %v1024
  %v1026 = vpop.f32.mrf.mxu0
  %v1027 = vadd.f32 0.0, %v1026
  %1028 = vmatmul.bf16.gmra.mxu0 %v948
  %v1029 = vpop.f32.mrf.mxu0
  %v1030 = vadd.f32 0.0, %v1029
  %v1031 = vpop.f32.mrf.mxu0
  %v1032 = vadd.f32 0.0, %v1031
  %1033 = vmatmul.bf16.gmra.mxu0 %v951
  %v1034 = vpop.f32.mrf.mxu0
  %v1035 = vadd.f32 0.0, %v1034
  %v1036 = vpop.f32.mrf.mxu0
  %v1037 = vadd.f32 0.0, %v1036
  %1038 = vmatmul.bf16.gmra.mxu0 %v954
  %v1039 = vpop.f32.mrf.mxu0
  %v1040 = vadd.f32 0.0, %v1039
  %v1041 = vpop.f32.mrf.mxu0
  %v1042 = vadd.f32 0.0, %v1041
  %1043 = vmatmul.bf16.gmra.mxu0 %v957
  %v1044 = vpop.f32.mrf.mxu0
  %v1045 = vadd.f32 0.0, %v1044
  %v1046 = vpop.f32.mrf.mxu0
  %v1047 = vadd.f32 0.0, %v1046
  %1048 = vdwg.mxu0
  %1049 = vmatpush.bf16.msra.mxu0 %v290
  %1050 = vmatpush.bf16.msra.mxu0 %v289
  %1051 = vmatpush.bf16.msra.mxu0 %v288
  %1052 = vmatpush.bf16.msra.mxu0 %v287
  %1053 = vmatpush.bf16.msra.mxu0 %v286
  %1054 = vmatpush.bf16.msra.mxu0 %v285
  %1055 = vmatpush.bf16.msra.mxu0 %v284
  %1056 = vmatpush.bf16.msra.mxu0 %v283
  %1057 = vmatmul.bf16.gmra.mxu0 %v937
  %v1058 = vpop.f32.mrf.mxu0
  %v1059 = vadd.f32 %v1010, %v1058
  %v1060 = vpop.f32.mrf.mxu0
  %v1061 = vadd.f32 %v1012, %v1060
  %1062 = vmatmul.bf16.gmra.mxu0 %v940
  %v1063 = vpop.f32.mrf.mxu0
  %v1064 = vadd.f32 %v1015, %v1063
  %v1065 = vpop.f32.mrf.mxu0
  %v1066 = vadd.f32 %v1017, %v1065
  %1067 = vmatmul.bf16.gmra.mxu0 %v943
  %v1068 = vpop.f32.mrf.mxu0
  %v1069 = vadd.f32 %v1020, %v1068
  %v1070 = vpop.f32.mrf.mxu0
  %v1071 = vadd.f32 %v1022, %v1070
  %1072 = vmatmul.bf16.gmra.mxu0 %v946
  %v1073 = vpop.f32.mrf.mxu0
  %v1074 = vadd.f32 %v1025, %v1073
  %v1075 = vpop.f32.mrf.mxu0
  %v1076 = vadd.f32 %v1027, %v1075
  %1077 = vmatmul.bf16.gmra.mxu0 %v949
  %v1078 = vpop.f32.mrf.mxu0
  %v1079 = vadd.f32 %v1030, %v1078
  %v1080 = vpop.f32.mrf.mxu0
  %v1081 = vadd.f32 %v1032, %v1080
  %1082 = vmatmul.bf16.gmra.mxu0 %v952
  %v1083 = vpop.f32.mrf.mxu0
  %v1084 = vadd.f32 %v1035, %v1083
  %v1085 = vpop.f32.mrf.mxu0
  %v1086 = vadd.f32 %v1037, %v1085
  %1087 = vmatmul.bf16.gmra.mxu0 %v955
  %v1088 = vpop.f32.mrf.mxu0
  %v1089 = vadd.f32 %v1040, %v1088
  %v1090 = vpop.f32.mrf.mxu0
  %v1091 = vadd.f32 %v1042, %v1090
  %1092 = vmatmul.bf16.gmra.mxu0 %v958
  %v1093 = vpop.f32.mrf.mxu0
  %v1094 = vadd.f32 %v1045, %v1093
  %v1095 = vpop.f32.mrf.mxu0
  %v1096 = vadd.f32 %v1047, %v1095
  %1097 = vdwg.mxu0
  %1098 = vmatpush.bf16.msra.mxu0 0
  %1099 = vmatpush.bf16.msra.mxu0 0
  %1100 = vmatpush.bf16.msra.mxu0 0
  %1101 = vmatpush.bf16.msra.mxu0 0
  %1102 = vmatpush.bf16.msra.mxu0 0
  %1103 = vmatpush.bf16.msra.mxu0 0
  %1104 = vmatpush.bf16.msra.mxu0 %v292
  %1105 = vmatpush.bf16.msra.mxu0 %v291
  %1106 = vmatmul.bf16.gmra.mxu0 %v977
  %v1107 = vpop.f32.mrf.mxu0
  %v1108 = vadd.f32 %v1059, %v1107
  %v1109 = vpop.f32.mrf.mxu0
  %v1110 = vadd.f32 %v1061, %v1109
  %1111 = vmatmul.bf16.gmra.mxu0 %v980
  %v1112 = vpop.f32.mrf.mxu0
  %v1113 = vadd.f32 %v1064, %v1112
  %v1114 = vpop.f32.mrf.mxu0
  %v1115 = vadd.f32 %v1066, %v1114
  %1116 = vmatmul.bf16.gmra.mxu0 %v983
  %v1117 = vpop.f32.mrf.mxu0
  %v1118 = vadd.f32 %v1069, %v1117
  %v1119 = vpop.f32.mrf.mxu0
  %v1120 = vadd.f32 %v1071, %v1119
  %1121 = vmatmul.bf16.gmra.mxu0 %v986
  %v1122 = vpop.f32.mrf.mxu0
  %v1123 = vadd.f32 %v1074, %v1122
  %v1124 = vpop.f32.mrf.mxu0
  %v1125 = vadd.f32 %v1076, %v1124
  %1126 = vmatmul.bf16.gmra.mxu0 %v989
  %v1127 = vpop.f32.mrf.mxu0
  %v1128 = vadd.f32 %v1079, %v1127
  %v1129 = vpop.f32.mrf.mxu0
  %v1130 = vadd.f32 %v1081, %v1129
  %1131 = vmatmul.bf16.gmra.mxu0 %v992
  %v1132 = vpop.f32.mrf.mxu0
  %v1133 = vadd.f32 %v1084, %v1132
  %v1134 = vpop.f32.mrf.mxu0
  %v1135 = vadd.f32 %v1086, %v1134
  %1136 = vmatmul.bf16.gmra.mxu0 %v995
  %v1137 = vpop.f32.mrf.mxu0
  %v1138 = vadd.f32 %v1089, %v1137
  %v1139 = vpop.f32.mrf.mxu0
  %v1140 = vadd.f32 %v1091, %v1139
  %1141 = vmatmul.bf16.gmra.mxu0 %v998
  %v1142 = vpop.f32.mrf.mxu0
  %v1143 = vadd.f32 %v1094, %v1142
  %v1144 = vpop.f32.mrf.mxu0
  %v1145 = vadd.f32 %v1096, %v1144
  %1146 = vdwg.mxu0
  %v1147 = vmax.f32 %v807, %v1108
  %v1148 = vmax.f32 %v808, %v1110
  %v1149 = vmax.f32 %v809, %v1113
  %v1150 = vmax.f32 %v810, %v1115
  %v1151 = vmax.f32 %v811, %v1118
  %v1152 = vmax.f32 %v812, %v1120
  %v1153 = vmax.f32 %v813, %v1123
  %v1154 = vmax.f32 %v814, %v1125
  %v1155 = vmax.f32 %v815, %v1128
  %v1156 = vmax.f32 %v816, %v1130
  %v1157 = vmax.f32 %v817, %v1133
  %v1158 = vmax.f32 %v818, %v1135
  %v1159 = vmax.f32 %v819, %v1138
  %v1160 = vmax.f32 %v820, %v1140
  %v1161 = vmax.f32 %v821, %v1143
  %v1162 = vmax.f32 %v822, %v1145
  %s1163 = scalar_lea.vmem %s0, 576
  %v1164 = vld [vmem:[%s1163] sm:$0xff]
  %v1165 = vld [vmem:[%s1163 + $0x8] sm:$0xf]
  %v1166 = vld [vmem:[%s1163 + $0xc] sm:$0xff]
  %v1167 = vld [vmem:[%s1163 + $0x14] sm:$0xf]
  %v1168 = vld [vmem:[%s1163 + $0x18] sm:$0xff]
  %v1169 = vld [vmem:[%s1163 + $0x20] sm:$0xf]
  %v1170 = vld [vmem:[%s1163 + $0x24] sm:$0xff]
  %v1171 = vld [vmem:[%s1163 + $0x2c] sm:$0xf]
  %v1172 = vld [vmem:[%s1163 + $0x30] sm:$0xff]
  %v1173 = vld [vmem:[%s1163 + $0x38] sm:$0xf]
  %v1174 = vld [vmem:[%s1163 + $0x3c] sm:$0xff]
  %v1175 = vld [vmem:[%s1163 + $0x44] sm:$0xf]
  %v1176 = vld [vmem:[%s1163 + $0x48] sm:$0xff]
  %v1177 = vld [vmem:[%s1163 + $0x50] sm:$0xf]
  %v1178 = vld [vmem:[%s1163 + $0x54] sm:$0xff]
  %v1179 = vld [vmem:[%s1163 + $0x5c] sm:$0xf]
  %v1180 = vld [vmem:[%s1163 + $0x60] sm:$0xff]
  %v1181 = vld [vmem:[%s1163 + $0x68] sm:$0xf]
  %v1182 = vld [vmem:[%s1163 + $0x6c] sm:$0xff]
  %v1183 = vld [vmem:[%s1163 + $0x74] sm:$0xf]
  %v1184 = vld [vmem:[%s1163 + $0x78] sm:$0xff]
  %v1185 = vld [vmem:[%s1163 + $0x80] sm:$0xf]
  %v1186 = vld [vmem:[%s1163 + $0x84] sm:$0xff]
  %v1187 = vld [vmem:[%s1163 + $0x8c] sm:$0xf]
  %v1188 = vld [vmem:[%s1163 + $0x90] sm:$0xff]
  %v1189 = vld [vmem:[%s1163 + $0x98] sm:$0xf]
  %v1190 = vld [vmem:[%s1163 + $0x9c] sm:$0xff]
  %v1191 = vld [vmem:[%s1163 + $0xa4] sm:$0xf]
  %v1192 = vld [vmem:[%s1163 + $0xa8] sm:$0xff]
  %v1193 = vld [vmem:[%s1163 + $0xb0] sm:$0xf]
  %v1194 = vld [vmem:[%s1163 + $0xb4] sm:$0xff]
  %v1195 = vld [vmem:[%s1163 + $0xbc] sm:$0xf]
  %v1228 = vunpack.c.l.b16 %v1164
  %v1229 = vunpack.c.h.b16 %v1164
  %v1230 = vunpack.c.l.b16 %v1165
  %v1231 = vunpack.c.l.b16 %v1166
  %v1232 = vunpack.c.h.b16 %v1166
  %v1233 = vunpack.c.l.b16 %v1167
  %v1234 = vunpack.c.l.b16 %v1168
  %v1235 = vunpack.c.h.b16 %v1168
  %v1236 = vunpack.c.l.b16 %v1169
  %v1237 = vunpack.c.l.b16 %v1170
  %v1238 = vunpack.c.h.b16 %v1170
  %v1239 = vunpack.c.l.b16 %v1171
  %v1240 = vunpack.c.l.b16 %v1172
  %v1241 = vunpack.c.h.b16 %v1172
  %v1242 = vunpack.c.l.b16 %v1173
  %v1243 = vunpack.c.l.b16 %v1174
  %v1244 = vunpack.c.h.b16 %v1174
  %v1245 = vunpack.c.l.b16 %v1175
  %v1246 = vunpack.c.l.b16 %v1176
  %v1247 = vunpack.c.h.b16 %v1176
  %v1248 = vunpack.c.l.b16 %v1177
  %v1249 = vunpack.c.l.b16 %v1178
  %v1250 = vunpack.c.h.b16 %v1178
  %v1251 = vunpack.c.l.b16 %v1179
  %v1252 = vunpack.c.l.b16 %v1180
  %v1253 = vunpack.c.h.b16 %v1180
  %v1254 = vunpack.c.l.b16 %v1181
  %v1255 = vunpack.c.l.b16 %v1182
  %v1256 = vunpack.c.h.b16 %v1182
  %v1257 = vunpack.c.l.b16 %v1183
  %v1258 = vunpack.c.l.b16 %v1184
  %v1259 = vunpack.c.h.b16 %v1184
  %v1260 = vunpack.c.l.b16 %v1185
  %v1261 = vunpack.c.l.b16 %v1186
  %v1262 = vunpack.c.h.b16 %v1186
  %v1263 = vunpack.c.l.b16 %v1187
  %v1264 = vunpack.c.l.b16 %v1188
  %v1265 = vunpack.c.h.b16 %v1188
  %v1266 = vunpack.c.l.b16 %v1189
  %v1267 = vunpack.c.l.b16 %v1190
  %v1268 = vunpack.c.h.b16 %v1190
  %v1269 = vunpack.c.l.b16 %v1191
  %v1270 = vunpack.c.l.b16 %v1192
  %v1271 = vunpack.c.h.b16 %v1192
  %v1272 = vunpack.c.l.b16 %v1193
  %v1273 = vunpack.c.l.b16 %v1194
  %v1274 = vunpack.c.h.b16 %v1194
  %v1275 = vunpack.c.l.b16 %v1195
  %v1276 = vpack.c.b16 %v1231, %v1228
  %v1277 = vpack.c.b16 %v1232, %v1229
  %v1278 = vpack.c.b16 %v1233, %v1230
  %v1279 = vpack.c.b16 %v1237, %v1234
  %v1280 = vpack.c.b16 %v1238, %v1235
  %v1281 = vpack.c.b16 %v1239, %v1236
  %v1282 = vpack.c.b16 %v1243, %v1240
  %v1283 = vpack.c.b16 %v1244, %v1241
  %v1284 = vpack.c.b16 %v1245, %v1242
  %v1285 = vpack.c.b16 %v1249, %v1246
  %v1286 = vpack.c.b16 %v1250, %v1247
  %v1287 = vpack.c.b16 %v1251, %v1248
  %v1288 = vpack.c.b16 %v1255, %v1252
  %v1289 = vpack.c.b16 %v1256, %v1253
  %v1290 = vpack.c.b16 %v1257, %v1254
  %v1291 = vpack.c.b16 %v1261, %v1258
  %v1292 = vpack.c.b16 %v1262, %v1259
  %v1293 = vpack.c.b16 %v1263, %v1260
  %v1294 = vpack.c.b16 %v1267, %v1264
  %v1295 = vpack.c.b16 %v1268, %v1265
  %v1296 = vpack.c.b16 %v1269, %v1266
  %v1297 = vpack.c.b16 %v1273, %v1270
  %v1298 = vpack.c.b16 %v1274, %v1271
  %v1299 = vpack.c.b16 %v1275, %v1272
  %v1317 = vsel %vm311, %v1278, 0
  %v1320 = vsel %vm311, %v1281, 0
  %v1323 = vsel %vm311, %v1284, 0
  %v1326 = vsel %vm311, %v1287, 0
  %v1329 = vsel %vm311, %v1290, 0
  %v1332 = vsel %vm311, %v1293, 0
  %v1335 = vsel %vm311, %v1296, 0
  %v1338 = vsel %vm311, %v1299, 0
  %1340 = vmatpush.bf16.msra.mxu0 %v282
  %1341 = vmatpush.bf16.msra.mxu0 %v281
  %1342 = vmatpush.bf16.msra.mxu0 %v280
  %1343 = vmatpush.bf16.msra.mxu0 %v279
  %1344 = vmatpush.bf16.msra.mxu0 %v278
  %1345 = vmatpush.bf16.msra.mxu0 %v277
  %1346 = vmatpush.bf16.msra.mxu0 %v276
  %1347 = vmatpush.bf16.msra.mxu0 %v275
  %1348 = vmatmul.bf16.gmra.mxu0 %v1276
  %v1349 = vpop.f32.mrf.mxu0
  %v1350 = vadd.f32 0.0, %v1349
  %v1351 = vpop.f32.mrf.mxu0
  %v1352 = vadd.f32 0.0, %v1351
  %1353 = vmatmul.bf16.gmra.mxu0 %v1279
  %v1354 = vpop.f32.mrf.mxu0
  %v1355 = vadd.f32 0.0, %v1354
  %v1356 = vpop.f32.mrf.mxu0
  %v1357 = vadd.f32 0.0, %v1356
  %1358 = vmatmul.bf16.gmra.mxu0 %v1282
  %v1359 = vpop.f32.mrf.mxu0
  %v1360 = vadd.f32 0.0, %v1359
  %v1361 = vpop.f32.mrf.mxu0
  %v1362 = vadd.f32 0.0, %v1361
  %1363 = vmatmul.bf16.gmra.mxu0 %v1285
  %v1364 = vpop.f32.mrf.mxu0
  %v1365 = vadd.f32 0.0, %v1364
  %v1366 = vpop.f32.mrf.mxu0
  %v1367 = vadd.f32 0.0, %v1366
  %1368 = vmatmul.bf16.gmra.mxu0 %v1288
  %v1369 = vpop.f32.mrf.mxu0
  %v1370 = vadd.f32 0.0, %v1369
  %v1371 = vpop.f32.mrf.mxu0
  %v1372 = vadd.f32 0.0, %v1371
  %1373 = vmatmul.bf16.gmra.mxu0 %v1291
  %v1374 = vpop.f32.mrf.mxu0
  %v1375 = vadd.f32 0.0, %v1374
  %v1376 = vpop.f32.mrf.mxu0
  %v1377 = vadd.f32 0.0, %v1376
  %1378 = vmatmul.bf16.gmra.mxu0 %v1294
  %v1379 = vpop.f32.mrf.mxu0
  %v1380 = vadd.f32 0.0, %v1379
  %v1381 = vpop.f32.mrf.mxu0
  %v1382 = vadd.f32 0.0, %v1381
  %1383 = vmatmul.bf16.gmra.mxu0 %v1297
  %v1384 = vpop.f32.mrf.mxu0
  %v1385 = vadd.f32 0.0, %v1384
  %v1386 = vpop.f32.mrf.mxu0
  %v1387 = vadd.f32 0.0, %v1386
  %1388 = vdwg.mxu0
  %1389 = vmatpush.bf16.msra.mxu0 %v290
  %1390 = vmatpush.bf16.msra.mxu0 %v289
  %1391 = vmatpush.bf16.msra.mxu0 %v288
  %1392 = vmatpush.bf16.msra.mxu0 %v287
  %1393 = vmatpush.bf16.msra.mxu0 %v286
  %1394 = vmatpush.bf16.msra.mxu0 %v285
  %1395 = vmatpush.bf16.msra.mxu0 %v284
  %1396 = vmatpush.bf16.msra.mxu0 %v283
  %1397 = vmatmul.bf16.gmra.mxu0 %v1277
  %v1398 = vpop.f32.mrf.mxu0
  %v1399 = vadd.f32 %v1350, %v1398
  %v1400 = vpop.f32.mrf.mxu0
  %v1401 = vadd.f32 %v1352, %v1400
  %1402 = vmatmul.bf16.gmra.mxu0 %v1280
  %v1403 = vpop.f32.mrf.mxu0
  %v1404 = vadd.f32 %v1355, %v1403
  %v1405 = vpop.f32.mrf.mxu0
  %v1406 = vadd.f32 %v1357, %v1405
  %1407 = vmatmul.bf16.gmra.mxu0 %v1283
  %v1408 = vpop.f32.mrf.mxu0
  %v1409 = vadd.f32 %v1360, %v1408
  %v1410 = vpop.f32.mrf.mxu0
  %v1411 = vadd.f32 %v1362, %v1410
  %1412 = vmatmul.bf16.gmra.mxu0 %v1286
  %v1413 = vpop.f32.mrf.mxu0
  %v1414 = vadd.f32 %v1365, %v1413
  %v1415 = vpop.f32.mrf.mxu0
  %v1416 = vadd.f32 %v1367, %v1415
  %1417 = vmatmul.bf16.gmra.mxu0 %v1289
  %v1418 = vpop.f32.mrf.mxu0
  %v1419 = vadd.f32 %v1370, %v1418
  %v1420 = vpop.f32.mrf.mxu0
  %v1421 = vadd.f32 %v1372, %v1420
  %1422 = vmatmul.bf16.gmra.mxu0 %v1292
  %v1423 = vpop.f32.mrf.mxu0
  %v1424 = vadd.f32 %v1375, %v1423
  %v1425 = vpop.f32.mrf.mxu0
  %v1426 = vadd.f32 %v1377, %v1425
  %1427 = vmatmul.bf16.gmra.mxu0 %v1295
  %v1428 = vpop.f32.mrf.mxu0
  %v1429 = vadd.f32 %v1380, %v1428
  %v1430 = vpop.f32.mrf.mxu0
  %v1431 = vadd.f32 %v1382, %v1430
  %1432 = vmatmul.bf16.gmra.mxu0 %v1298
  %v1433 = vpop.f32.mrf.mxu0
  %v1434 = vadd.f32 %v1385, %v1433
  %v1435 = vpop.f32.mrf.mxu0
  %v1436 = vadd.f32 %v1387, %v1435
  %1437 = vdwg.mxu0
  %1438 = vmatpush.bf16.msra.mxu0 0
  %1439 = vmatpush.bf16.msra.mxu0 0
  %1440 = vmatpush.bf16.msra.mxu0 0
  %1441 = vmatpush.bf16.msra.mxu0 0
  %1442 = vmatpush.bf16.msra.mxu0 0
  %1443 = vmatpush.bf16.msra.mxu0 0
  %1444 = vmatpush.bf16.msra.mxu0 %v292
  %1445 = vmatpush.bf16.msra.mxu0 %v291
  %1446 = vmatmul.bf16.gmra.mxu0 %v1317
  %v1447 = vpop.f32.mrf.mxu0
  %v1448 = vadd.f32 %v1399, %v1447
  %v1449 = vpop.f32.mrf.mxu0
  %v1450 = vadd.f32 %v1401, %v1449
  %1451 = vmatmul.bf16.gmra.mxu0 %v1320
  %v1452 = vpop.f32.mrf.mxu0
  %v1453 = vadd.f32 %v1404, %v1452
  %v1454 = vpop.f32.mrf.mxu0
  %v1455 = vadd.f32 %v1406, %v1454
  %1456 = vmatmul.bf16.gmra.mxu0 %v1323
  %v1457 = vpop.f32.mrf.mxu0
  %v1458 = vadd.f32 %v1409, %v1457
  %v1459 = vpop.f32.mrf.mxu0
  %v1460 = vadd.f32 %v1411, %v1459
  %1461 = vmatmul.bf16.gmra.mxu0 %v1326
  %v1462 = vpop.f32.mrf.mxu0
  %v1463 = vadd.f32 %v1414, %v1462
  %v1464 = vpop.f32.mrf.mxu0
  %v1465 = vadd.f32 %v1416, %v1464
  %1466 = vmatmul.bf16.gmra.mxu0 %v1329
  %v1467 = vpop.f32.mrf.mxu0
  %v1468 = vadd.f32 %v1419, %v1467
  %v1469 = vpop.f32.mrf.mxu0
  %v1470 = vadd.f32 %v1421, %v1469
  %1471 = vmatmul.bf16.gmra.mxu0 %v1332
  %v1472 = vpop.f32.mrf.mxu0
  %v1473 = vadd.f32 %v1424, %v1472
  %v1474 = vpop.f32.mrf.mxu0
  %v1475 = vadd.f32 %v1426, %v1474
  %1476 = vmatmul.bf16.gmra.mxu0 %v1335
  %v1477 = vpop.f32.mrf.mxu0
  %v1478 = vadd.f32 %v1429, %v1477
  %v1479 = vpop.f32.mrf.mxu0
  %v1480 = vadd.f32 %v1431, %v1479
  %1481 = vmatmul.bf16.gmra.mxu0 %v1338
  %v1482 = vpop.f32.mrf.mxu0
  %v1483 = vadd.f32 %v1434, %v1482
  %v1484 = vpop.f32.mrf.mxu0
  %v1485 = vadd.f32 %v1436, %v1484
  %1486 = vdwg.mxu0
  %v1487 = vmax.f32 %v1147, %v1448
  %v1488 = vmax.f32 %v1148, %v1450
  %v1489 = vmax.f32 %v1149, %v1453
  %v1490 = vmax.f32 %v1150, %v1455
  %v1491 = vmax.f32 %v1151, %v1458
  %v1492 = vmax.f32 %v1152, %v1460
  %v1493 = vmax.f32 %v1153, %v1463
  %v1494 = vmax.f32 %v1154, %v1465
  %v1495 = vmax.f32 %v1155, %v1468
  %v1496 = vmax.f32 %v1156, %v1470
  %v1497 = vmax.f32 %v1157, %v1473
  %v1498 = vmax.f32 %v1158, %v1475
  %v1499 = vmax.f32 %v1159, %v1478
  %v1500 = vmax.f32 %v1160, %v1480
  %v1501 = vmax.f32 %v1161, %v1483
  %v1502 = vmax.f32 %v1162, %v1485
  %v1503 = vld [vmem:[%s2] sm:$0x1]
  %v1505 = vperm.slane %v1503, 0
  %v1507 = vadd.f32 %v1487, %v1505
  %v1508 = vadd.f32 %v1488, %v1505
  %v1509 = vadd.f32 %v1489, %v1505
  %v1510 = vadd.f32 %v1490, %v1505
  %v1511 = vadd.f32 %v1491, %v1505
  %v1512 = vadd.f32 %v1492, %v1505
  %v1513 = vadd.f32 %v1493, %v1505
  %v1514 = vadd.f32 %v1494, %v1505
  %v1515 = vadd.f32 %v1495, %v1505
  %v1516 = vadd.f32 %v1496, %v1505
  %v1517 = vadd.f32 %v1497, %v1505
  %v1518 = vadd.f32 %v1498, %v1505
  %v1519 = vadd.f32 %v1499, %v1505
  %v1520 = vadd.f32 %v1500, %v1505
  %v1521 = vadd.f32 %v1501, %v1505
  %v1522 = vadd.f32 %v1502, %v1505
  %v1523 = vmax.f32 %v1507, 0.0
  %v1524 = vmax.f32 %v1508, 0.0
  %v1525 = vmax.f32 %v1509, 0.0
  %v1526 = vmax.f32 %v1510, 0.0
  %v1527 = vmax.f32 %v1511, 0.0
  %v1528 = vmax.f32 %v1512, 0.0
  %v1529 = vmax.f32 %v1513, 0.0
  %v1530 = vmax.f32 %v1514, 0.0
  %v1531 = vmax.f32 %v1515, 0.0
  %v1532 = vmax.f32 %v1516, 0.0
  %v1533 = vmax.f32 %v1517, 0.0
  %v1534 = vmax.f32 %v1518, 0.0
  %v1535 = vmax.f32 %v1519, 0.0
  %v1536 = vmax.f32 %v1520, 0.0
  %v1537 = vmax.f32 %v1521, 0.0
  %v1538 = vmax.f32 %v1522, 0.0
  %v1539 = vpack.c.bf16 %v1523, %v1523
  %v1540 = vpack.c.bf16 %v1524, %v1524
  %v1541 = vpack.c.bf16 %v1525, %v1525
  %v1542 = vpack.c.bf16 %v1526, %v1526
  %v1543 = vpack.c.bf16 %v1527, %v1527
  %v1544 = vpack.c.bf16 %v1528, %v1528
  %v1545 = vpack.c.bf16 %v1529, %v1529
  %v1546 = vpack.c.bf16 %v1530, %v1530
  %v1547 = vpack.c.bf16 %v1531, %v1531
  %v1548 = vpack.c.bf16 %v1532, %v1532
  %v1549 = vpack.c.bf16 %v1533, %v1533
  %v1550 = vpack.c.bf16 %v1534, %v1534
  %v1551 = vpack.c.bf16 %v1535, %v1535
  %v1552 = vpack.c.bf16 %v1536, %v1536
  %v1553 = vpack.c.bf16 %v1537, %v1537
  %v1554 = vpack.c.bf16 %v1538, %v1538
  %vm1555 = vcmask 519168
  %1556 = vst.msk [vmem:[%s3] sm:$0xf] %vm1555, %v1539
  %1557 = vst.msk [vmem:[%s3 + $0x4] sm:$0xf] %vm1555, %v1540
  %1558 = vst.msk [vmem:[%s3 + $0x8] sm:$0xf] %vm1555, %v1541
  %1559 = vst.msk [vmem:[%s3 + $0xc] sm:$0xf] %vm1555, %v1542
  %1560 = vst.msk [vmem:[%s3 + $0x10] sm:$0xf] %vm1555, %v1543
  %1561 = vst.msk [vmem:[%s3 + $0x14] sm:$0xf] %vm1555, %v1544
  %1562 = vst.msk [vmem:[%s3 + $0x18] sm:$0xf] %vm1555, %v1545
  %1563 = vst.msk [vmem:[%s3 + $0x1c] sm:$0xf] %vm1555, %v1546
  %1564 = vst.msk [vmem:[%s3 + $0x20] sm:$0xf] %vm1555, %v1547
  %1565 = vst.msk [vmem:[%s3 + $0x24] sm:$0xf] %vm1555, %v1548
  %1566 = vst.msk [vmem:[%s3 + $0x28] sm:$0xf] %vm1555, %v1549
  %1567 = vst.msk [vmem:[%s3 + $0x2c] sm:$0xf] %vm1555, %v1550
  %1568 = vst.msk [vmem:[%s3 + $0x30] sm:$0xf] %vm1555, %v1551
  %1569 = vst.msk [vmem:[%s3 + $0x34] sm:$0xf] %vm1555, %v1552
  %1570 = vst.msk [vmem:[%s3 + $0x38] sm:$0xf] %vm1555, %v1553
  %1571 = vst.msk [vmem:[%s3 + $0x3c] sm:$0xf] %vm1555, %v1554
  // Predicated region
  $region14: #{cnn_forward.4} parent=0 // pred_check
    _
  $region15: #{cnn_forward.4} parent=0 // pred_check_branch
    %1573 = sbr.rel (0) target = $region17
  $region16: #{cnn_forward.4} parent=0 // pred_region
    _
  $region17: #{cnn_forward.4} parent=0 // pred_fallthru
    _
  // Predicated region
  $region18: #{cnn_forward.4} parent=0 // pred_check
    _
  $region19: #{cnn_forward.4} parent=0 // pred_check_branch
    %1575 = sbr.rel (0) target = $region21
  $region20: #{cnn_forward.4} parent=0 // pred_region
    _
  $region21: #{cnn_forward.4} parent=0 // pred_fallthru
    _

// kernel: cnn_forward.5
$region0: #{cnn_forward.5}
  #allocation0 [shape = 'u32[]', space=smem, size = 0x4, offset = 0x4, fixed_abs, tag = 'smem constant byte address 0x4 - core index']
  #allocation1 [shape = 'u32[72,128]{1,0:T(1,128)}', space=vmem, size = 0x9000, scoped, tag = 'internal scratch']
  #allocation2 [shape = 'f32[2,512]{1,0:T(2,128)}', space=vmem, size = 0x1000, scoped, tag = 'scratch operand']
  %s0 = inlined_call_operand.vmem [shape: bf16[2,4096], index: 0, kind: input, shape index: {}]
  %s1 = inlined_call_operand.vmem [shape: bf16[4096,512], index: 1, kind: input, shape index: {}]
  %s2 = inlined_call_operand.vmem [shape: f32[1,512], index: 2, kind: input, shape index: {}]
  %s3 = inlined_call_operand.vmem [shape: bf16[512,10], index: 3, kind: input, shape index: {}]
  %s4 = inlined_call_operand.vmem [shape: f32[1,10], index: 4, kind: input, shape index: {}]
  %s5 = inlined_call_operand.hbm [shape: f32[2,10], index: 5, kind: output, shape index: {}]
  %s6 = sld [smem:[#allocation0]]
  $region61: #{cnn_forward.5} parent=0
    _
  %s8 = ssub.s32 1, %s6
  %s9 = scalar_select 0, %s8, %s6
  $region1: #{cnn_forward.5} parent=0
    #allocation3 [shape = 'u8[1024]{0}', space=vmem, size = 0x400, scoped, tag = 'output window, operand 0, single buffered']
    #allocation4 [shape = 's32[2]{0}', space=sflag, size = 0x8, scoped, tag = 'scoped memory for cnn_forward.5']
    %10 = vsyncpa [#allocation4], 0
    loop: start=0, step=1, limit=4
    $region2: #{cnn_forward.5} parent=1 // loop_pre_header
      _
    $region3: #{cnn_forward.5} parent=1 // loop_header
      %s12 = sphi 0, %s16
      %p13 = scmp.ge.s32.totalorder %s12, 4
      %s22 = sphi 0, %s24
      %s25 = sphi 0, %s22
      %s26 = sphi 0, %s25
      %s42 = sphi 0, %s26
      %s48 = sphi 0, %s50
      %s51 = sphi 0, %s48
      %s52 = sphi 0, %s51
      %s68 = sphi 0, %s52
      %s72 = sphi 0, %s72
      %s74 = sphi 0, %s72
      %s75 = sphi 0, %s74
      %s89 = sphi 0, %s75
      %s93 = sphi 0, %s93
      %s95 = sphi 0, %s93
      %s96 = sphi 0, %s95
      %s110 = sphi 0, %s96
      %s114 = sphi 0, %s114
      %s116 = sphi 0, %s114
      %s117 = sphi 0, %s116
      %s131 = sphi 0, %s117
      %s135 = sphi 0, %s135
      %s137 = sphi 0, %s135
      %s138 = sphi 0, %s137
      %s152 = sphi 0, %s138
    $region4: #{cnn_forward.5} parent=1 // loop_header_branch
      %15 = sbr.rel (%p13) target = $region8
    $region5: #{cnn_forward.5} parent=1 // loop_body
      %s17 = ssub.s32 %s12, 1
      %s18 = ssub.s32 %s12, 2
      %s19 = sadd.s32 %s12, 1
      %s20 = ssub.s32 %s12, %s19
      %p21 = scmp.eq.s32.totalorder %s20, 0
      %s23 = sadd.s32 %s22, 1
      %s24 = scalar_select %p21, %s22, %s23
      %p27 = pneg %p21
      %p28 = scmp.eq.s32.totalorder %s12, 1
      %p29 = por %p27, %p28
      %p30 = scmp.ne.s32.totalorder %s22, %s25
      %p31 = scmp.eq.s32.totalorder %s12, 0
      %p32 = por %p30, %p31
      %p33 = scmp.ne.s32.totalorder %s22, %s25
      %p34 = scmp.eq.s32.totalorder %s17, 1
      %p35 = por %p33, %p34
      %p36 = scmp.ne.s32.totalorder %s25, %s26
      %p37 = scmp.eq.s32.totalorder %s17, 0
      %p38 = por %p36, %p37
      %p39 = scmp.ne.s32.totalorder %s25, %s26
      %p40 = scmp.eq.s32.totalorder %s18, 1
      %p41 = por %p39, %p40
      %p43 = scmp.ne.s32.totalorder %s26, %s42
      %p44 = scmp.eq.s32.totalorder %s18, 0
      %p45 = por %p43, %p44
      %s46 = ssub.s32 %s12, %s19
      %p47 = scmp.eq.s32.totalorder %s46, 0
      %s49 = sadd.s32 %s48, 1
      %s50 = scalar_select %p47, %s48, %s49
      %p53 = pneg %p47
      %p54 = scmp.eq.s32.totalorder %s12, 1
      %p55 = por %p53, %p54
      %p56 = scmp.ne.s32.totalorder %s48, %s51
      %p57 = scmp.eq.s32.totalorder %s12, 0
      %p58 = por %p56, %p57
      %p59 = scmp.ne.s32.totalorder %s48, %s51
      %p60 = scmp.eq.s32.totalorder %s17, 1
      %p61 = por %p59, %p60
      %p62 = scmp.ne.s32.totalorder %s51, %s52
      %p63 = scmp.eq.s32.totalorder %s17, 0
      %p64 = por %p62, %p63
      %p65 = scmp.ne.s32.totalorder %s51, %s52
      %p66 = scmp.eq.s32.totalorder %s18, 1
      %p67 = por %p65, %p66
      %p69 = scmp.ne.s32.totalorder %s52, %s68
      %p70 = scmp.eq.s32.totalorder %s18, 0
      %p71 = por %p69, %p70
      %s73 = sadd.s32 %s72, 1
      %p76 = scmp.eq.s32.totalorder %s12, 1
      %p77 = scmp.ne.s32.totalorder %s72, %s74
      %p78 = scmp.eq.s32.totalorder %s12, 0
      %p79 = por %p77, %p78
      %p80 = scmp.ne.s32.totalorder %s72, %s74
      %p81 = scmp.eq.s32.totalorder %s17, 1
      %p82 = por %p80, %p81
      %p83 = scmp.ne.s32.totalorder %s74, %s75
      %p84 = scmp.eq.s32.totalorder %s17, 0
      %p85 = por %p83, %p84
      %p86 = scmp.ne.s32.totalorder %s74, %s75
      %p87 = scmp.eq.s32.totalorder %s18, 1
      %p88 = por %p86, %p87
      %p90 = scmp.ne.s32.totalorder %s75, %s89
      %p91 = scmp.eq.s32.totalorder %s18, 0
      %p92 = por %p90, %p91
      %s94 = sadd.s32 %s93, 1
      %p97 = scmp.eq.s32.totalorder %s12, 1
      %p98 = scmp.ne.s32.totalorder %s93, %s95
      %p99 = scmp.eq.s32.totalorder %s12, 0
      %p100 = por %p98, %p99
      %p101 = scmp.ne.s32.totalorder %s93, %s95
      %p102 = scmp.eq.s32.totalorder %s17, 1
      %p103 = por %p101, %p102
      %p104 = scmp.ne.s32.totalorder %s95, %s96
      %p105 = scmp.eq.s32.totalorder %s17, 0
      %p106 = por %p104, %p105
      %p107 = scmp.ne.s32.totalorder %s95, %s96
      %p108 = scmp.eq.s32.totalorder %s18, 1
      %p109 = por %p107, %p108
      %p111 = scmp.ne.s32.totalorder %s96, %s110
      %p112 = scmp.eq.s32.totalorder %s18, 0
      %p113 = por %p111, %p112
      %s115 = sadd.s32 %s114, 1
      %p118 = scmp.eq.s32.totalorder %s12, 1
      %p119 = scmp.ne.s32.totalorder %s114, %s116
      %p120 = scmp.eq.s32.totalorder %s12, 0
      %p121 = por %p119, %p120
      %p122 = scmp.ne.s32.totalorder %s114, %s116
      %p123 = scmp.eq.s32.totalorder %s17, 1
      %p124 = por %p122, %p123
      %p125 = scmp.ne.s32.totalorder %s116, %s117
      %p126 = scmp.eq.s32.totalorder %s17, 0
      %p127 = por %p125, %p126
      %p128 = scmp.ne.s32.totalorder %s116, %s117
      %p129 = scmp.eq.s32.totalorder %s18, 1
      %p130 = por %p128, %p129
      %p132 = scmp.ne.s32.totalorder %s117, %s131
      %p133 = scmp.eq.s32.totalorder %s18, 0
      %p134 = por %p132, %p133
      %s136 = sadd.s32 %s135, 1
      %p139 = scmp.eq.s32.totalorder %s12, 1
      %p140 = scmp.ne.s32.totalorder %s135, %s137
      %p141 = scmp.eq.s32.totalorder %s12, 0
      %p142 = por %p140, %p141
      %p143 = scmp.ne.s32.totalorder %s135, %s137
      %p144 = scmp.eq.s32.totalorder %s17, 1
      %p145 = por %p143, %p144
      %p146 = scmp.ne.s32.totalorder %s137, %s138
      %p147 = scmp.eq.s32.totalorder %s17, 0
      %p148 = por %p146, %p147
      %p149 = scmp.ne.s32.totalorder %s137, %s138
      %p150 = scmp.eq.s32.totalorder %s18, 1
      %p151 = por %p149, %p150
      %p153 = scmp.ne.s32.totalorder %s138, %s152
      %p154 = scmp.eq.s32.totalorder %s18, 0
      %p155 = por %p153, %p154
      %p156 = scmp.le.s32.totalorder 1, %s12
      %p157 = scmp.lt.s32.totalorder %s12, 3
      %p158 = pnand %p156, %p157
      %p159 = pneg %p158
      // Predicated region
      $region9: #{cnn_forward.5} parent=5 // pred_check
        _
      $region10: #{cnn_forward.5} parent=5 // pred_check_branch
        %161 = sbr.rel (%p158) target = $region12
      $region11: #{cnn_forward.5} parent=5 // pred_region
        %s162 = ssub.s32 %s12, 1
        // Predicated region
        $region13: #{cnn_forward.5} parent=11 // pred_check
          %p163 = pneg %p85
        $region14: #{cnn_forward.5} parent=11 // pred_check_branch
          %165 = sbr.rel (%p163) target = $region16
        $region15: #{cnn_forward.5} parent=11 // pred_region
          _
        $region16: #{cnn_forward.5} parent=11 // pred_fallthru
          _
        // Predicated region
        $region17: #{cnn_forward.5} parent=11 // pred_check
          %p166 = pneg %p106
        $region18: #{cnn_forward.5} parent=11 // pred_check_branch
          %168 = sbr.rel (%p166) target = $region20
        $region19: #{cnn_forward.5} parent=11 // pred_region
          _
        $region20: #{cnn_forward.5} parent=11 // pred_fallthru
          _
        // Predicated region
        $region21: #{cnn_forward.5} parent=11 // pred_check
          %p169 = pneg %p127
        $region22: #{cnn_forward.5} parent=11 // pred_check_branch
          %171 = sbr.rel (%p169) target = $region24
        $region23: #{cnn_forward.5} parent=11 // pred_region
          _
        $region24: #{cnn_forward.5} parent=11 // pred_fallthru
          _
      $region12: #{cnn_forward.5} parent=5 // pred_fallthru
        _
      %p172 = scmp.lt.s32.totalorder %s12, 2
      // Predicated region
      $region25: #{cnn_forward.5} parent=5 // pred_check
        %p173 = pneg %p172
      $region26: #{cnn_forward.5} parent=5 // pred_check_branch
        %175 = sbr.rel (%p173) target = $region28
      $region27: #{cnn_forward.5} parent=5 // pred_region
        // Predicated region
        $region29: #{cnn_forward.5} parent=27 // pred_check
          %p176 = pneg %p32
        $region30: #{cnn_forward.5} parent=27 // pred_check_branch
          %178 = sbr.rel (%p176) target = $region32
        $region31: #{cnn_forward.5} parent=27 // pred_region
          %s179 = smul.u32 16, %s12
          %p180 = scmp.lt.s32.totalorder %s179, 31
          %s181 = scalar_select %p180, %s179, 31
          %s182 = scalar_lea.vmem %s0, %s181
          %s183 = smul.u32 16, %s12
        $region32: #{cnn_forward.5} parent=27 // pred_fallthru
          _
        // Predicated region
        $region33: #{cnn_forward.5} parent=27 // pred_check
          %p184 = pneg %p58
        $region34: #{cnn_forward.5} parent=27 // pred_check_branch
          %186 = sbr.rel (%p184) target = $region36
        $region35: #{cnn_forward.5} parent=27 // pred_region
          %s187 = smul.u32 256, %s12
          %p188 = scmp.lt.s32.totalorder %s187, 511
          %s189 = scalar_select %p188, %s187, 511
          %s190 = smul.addr %s189, 4
          %s191 = smul.addr %s190, 4
          %s192 = scalar_lea.vmem %s1, %s191
          %s193 = smul.u32 256, %s12
        $region36: #{cnn_forward.5} parent=27 // pred_fallthru
          _
      $region28: #{cnn_forward.5} parent=5 // pred_fallthru
        _
      %p194 = scmp.le.s32.totalorder 1, %s12
      %p195 = scmp.lt.s32.totalorder %s12, 3
      %p196 = pnand %p194, %p195
      %p197 = pneg %p196
      // Predicated region
      $region37: #{cnn_forward.5} parent=5 // pred_check
        _
      $region38: #{cnn_forward.5} parent=5 // pred_check_branch
        %199 = sbr.rel (%p196) target = $region40
      $region39: #{cnn_forward.5} parent=5 // pred_region
        %s200 = ssub.s32 %s12, 1
        %s201 = smul.u32 16, %s17
        %p202 = scmp.lt.s32.totalorder %s201, 31
        %s203 = scalar_select %p202, %s201, 31
        %s204 = scalar_lea.vmem %s0, %s203
        %p205 = pneg %p38
        %p206 = pneg %p35
        %s207 = smul.u32 256, %s17
        %p208 = scmp.lt.s32.totalorder %s207, 511
        %s209 = scalar_select %p208, %s207, 511
        %s210 = smul.addr %s209, 4
        %s211 = smul.addr %s210, 4
        %s212 = scalar_lea.vmem %s1, %s211
        %p213 = pneg %p64
        %p214 = pneg %p61
        %p215 = pneg %p85
        %p216 = pneg %p82
        %p217 = pneg %p106
        %p218 = pneg %p103
        %p219 = pneg %p127
        %p220 = pneg %p124
        %p221 = pneg %p148
        %p222 = pneg %p145
        %s223 = smul.u32 16, %s17
        %p224 = scmp.lt.s32.totalorder %s223, 31
        %s225 = scalar_select %p224, %s223, 31
        %s226 = scalar_lea.vmem %s0, %s225
        %s227 = smul.u32 16, %s17
        %s228 = smul.u32 256, %s17
        %p229 = scmp.lt.s32.totalorder %s228, 511
        %s230 = scalar_select %p229, %s228, 511
        %s231 = smul.addr %s230, 4
        %s232 = smul.addr %s231, 4
        %s233 = scalar_lea.vmem %s1, %s232
        %s234 = smul.u32 256, %s17
        %p235 = scmp.eq.s32.totalorder %s17, 0
        // Predicated region
        $region41: #{cnn_forward.5} parent=39 // pred_check
          %p236 = pneg %p235
        $region42: #{cnn_forward.5} parent=39 // pred_check_branch
          %238 = sbr.rel (%p236) target = $region44
        $region43: #{cnn_forward.5} parent=39 // pred_region
          %239 = vst [vmem:[#allocation2] sm:$0xff] 0.0
        $region44: #{cnn_forward.5} parent=39 // pred_fallthru
          _
        %v240 = vld [vmem:[#allocation2] sm:$0xff]
        %v241 = vld [vmem:[%s226] sm:$0xff]
        %v242 = vld [vmem:[%s226 + $0x8] sm:$0xff]
        %v243 = vld [vmem:[%s233] sm:$0xff]
        %v244 = vld [vmem:[%s233 + $0x8] sm:$0xff]
        %v245 = vld [vmem:[%s233 + $0x10] sm:$0xff]
        %v246 = vld [vmem:[%s233 + $0x18] sm:$0xff]
        %v247 = vld [vmem:[%s233 + $0x20] sm:$0xff]
        %v248 = vld [vmem:[%s233 + $0x28] sm:$0xff]
        %v249 = vld [vmem:[%s233 + $0x30] sm:$0xff]
        %v250 = vld [vmem:[%s233 + $0x38] sm:$0xff]
        %v251 = vld [vmem:[%s233 + $0x40] sm:$0xff]
        %v252 = vld [vmem:[%s233 + $0x48] sm:$0xff]
        %v253 = vld [vmem:[%s233 + $0x50] sm:$0xff]
        %v254 = vld [vmem:[%s233 + $0x58] sm:$0xff]
        %v255 = vld [vmem:[%s233 + $0x60] sm:$0xff]
        %v256 = vld [vmem:[%s233 + $0x68] sm:$0xff]
        %v257 = vld [vmem:[%s233 + $0x70] sm:$0xff]
        %v258 = vld [vmem:[%s233 + $0x78] sm:$0xff]
        %v259 = vld [vmem:[%s233 + $0x80] sm:$0xff]
        %v260 = vld [vmem:[%s233 + $0x88] sm:$0xff]
        %v261 = vld [vmem:[%s233 + $0x90] sm:$0xff]
        %v262 = vld [vmem:[%s233 + $0x98] sm:$0xff]
        %v263 = vld [vmem:[%s233 + $0xa0] sm:$0xff]
        %v264 = vld [vmem:[%s233 + $0xa8] sm:$0xff]
        %v265 = vld [vmem:[%s233 + $0xb0] sm:$0xff]
        %v266 = vld [vmem:[%s233 + $0xb8] sm:$0xff]
        %v267 = vld [vmem:[%s233 + $0xc0] sm:$0xff]
        %v268 = vld [vmem:[%s233 + $0xc8] sm:$0xff]
        %v269 = vld [vmem:[%s233 + $0xd0] sm:$0xff]
        %v270 = vld [vmem:[%s233 + $0xd8] sm:$0xff]
        %v271 = vld [vmem:[%s233 + $0xe0] sm:$0xff]
        %v272 = vld [vmem:[%s233 + $0xe8] sm:$0xff]
        %v273 = vld [vmem:[%s233 + $0xf0] sm:$0xff]
        %v274 = vld [vmem:[%s233 + $0xf8] sm:$0xff]
        %v275 = vld [vmem:[%s233 + $0x100] sm:$0xff]
        %v276 = vld [vmem:[%s233 + $0x108] sm:$0xff]
        %v277 = vld [vmem:[%s233 + $0x110] sm:$0xff]
        %v278 = vld [vmem:[%s233 + $0x118] sm:$0xff]
        %v279 = vld [vmem:[%s233 + $0x120] sm:$0xff]
        %v280 = vld [vmem:[%s233 + $0x128] sm:$0xff]
        %v281 = vld [vmem:[%s233 + $0x130] sm:$0xff]
        %v282 = vld [vmem:[%s233 + $0x138] sm:$0xff]
        %v283 = vld [vmem:[%s233 + $0x140] sm:$0xff]
        %v284 = vld [vmem:[%s233 + $0x148] sm:$0xff]
        %v285 = vld [vmem:[%s233 + $0x150] sm:$0xff]
        %v286 = vld [vmem:[%s233 + $0x158] sm:$0xff]
        %v287 = vld [vmem:[%s233 + $0x160] sm:$0xff]
        %v288 = vld [vmem:[%s233 + $0x168] sm:$0xff]
        %v289 = vld [vmem:[%s233 + $0x170] sm:$0xff]
        %v290 = vld [vmem:[%s233 + $0x178] sm:$0xff]
        %v291 = vld [vmem:[%s233 + $0x180] sm:$0xff]
        %v292 = vld [vmem:[%s233 + $0x188] sm:$0xff]
        %v293 = vld [vmem:[%s233 + $0x190] sm:$0xff]
        %v294 = vld [vmem:[%s233 + $0x198] sm:$0xff]
        %v295 = vld [vmem:[%s233 + $0x1a0] sm:$0xff]
        %v296 = vld [vmem:[%s233 + $0x1a8] sm:$0xff]
        %v297 = vld [vmem:[%s233 + $0x1b0] sm:$0xff]
        %v298 = vld [vmem:[%s233 + $0x1b8] sm:$0xff]
        %v299 = vld [vmem:[%s233 + $0x1c0] sm:$0xff]
        %v300 = vld [vmem:[%s233 + $0x1c8] sm:$0xff]
        %v301 = vld [vmem:[%s233 + $0x1d0] sm:$0xff]
        %v302 = vld [vmem:[%s233 + $0x1d8] sm:$0xff]
        %v303 = vld [vmem:[%s233 + $0x1e0] sm:$0xff]
        %v304 = vld [vmem:[%s233 + $0x1e8] sm:$0xff]
        %v305 = vld [vmem:[%s233 + $0x1f0] sm:$0xff]
        %v306 = vld [vmem:[%s233 + $0x1f8] sm:$0xff]
        %v307 = vld [vmem:[%s233 + $0x200] sm:$0xff]
        %v308 = vld [vmem:[%s233 + $0x208] sm:$0xff]
        %v309 = vld [vmem:[%s233 + $0x210] sm:$0xff]
        %v310 = vld [vmem:[%s233 + $0x218] sm:$0xff]
        %v311 = vld [vmem:[%s233 + $0x220] sm:$0xff]
        %v312 = vld [vmem:[%s233 + $0x228] sm:$0xff]
        %v313 = vld [vmem:[%s233 + $0x230] sm:$0xff]
        %v314 = vld [vmem:[%s233 + $0x238] sm:$0xff]
        %v315 = vld [vmem:[%s233 + $0x240] sm:$0xff]
        %v316 = vld [vmem:[%s233 + $0x248] sm:$0xff]
        %v317 = vld [vmem:[%s233 + $0x250] sm:$0xff]
        %v318 = vld [vmem:[%s233 + $0x258] sm:$0xff]
        %v319 = vld [vmem:[%s233 + $0x260] sm:$0xff]
        %v320 = vld [vmem:[%s233 + $0x268] sm:$0xff]
        %v321 = vld [vmem:[%s233 + $0x270] sm:$0xff]
        %v322 = vld [vmem:[%s233 + $0x278] sm:$0xff]
        %v323 = vld [vmem:[%s233 + $0x280] sm:$0xff]
        %v324 = vld [vmem:[%s233 + $0x288] sm:$0xff]
        %v325 = vld [vmem:[%s233 + $0x290] sm:$0xff]
        %v326 = vld [vmem:[%s233 + $0x298] sm:$0xff]
        %v327 = vld [vmem:[%s233 + $0x2a0] sm:$0xff]
        %v328 = vld [vmem:[%s233 + $0x2a8] sm:$0xff]
        %v329 = vld [vmem:[%s233 + $0x2b0] sm:$0xff]
        %v330 = vld [vmem:[%s233 + $0x2b8] sm:$0xff]
        %v331 = vld [vmem:[%s233 + $0x2c0] sm:$0xff]
        %v332 = vld [vmem:[%s233 + $0x2c8] sm:$0xff]
        %v333 = vld [vmem:[%s233 + $0x2d0] sm:$0xff]
        %v334 = vld [vmem:[%s233 + $0x2d8] sm:$0xff]
        %v335 = vld [vmem:[%s233 + $0x2e0] sm:$0xff]
        %v336 = vld [vmem:[%s233 + $0x2e8] sm:$0xff]
        %v337 = vld [vmem:[%s233 + $0x2f0] sm:$0xff]
        %v338 = vld [vmem:[%s233 + $0x2f8] sm:$0xff]
        %v339 = vld [vmem:[%s233 + $0x300] sm:$0xff]
        %v340 = vld [vmem:[%s233 + $0x308] sm:$0xff]
        %v341 = vld [vmem:[%s233 + $0x310] sm:$0xff]
        %v342 = vld [vmem:[%s233 + $0x318] sm:$0xff]
        %v343 = vld [vmem:[%s233 + $0x320] sm:$0xff]
        %v344 = vld [vmem:[%s233 + $0x328] sm:$0xff]
        %v345 = vld [vmem:[%s233 + $0x330] sm:$0xff]
        %v346 = vld [vmem:[%s233 + $0x338] sm:$0xff]
        %v347 = vld [vmem:[%s233 + $0x340] sm:$0xff]
        %v348 = vld [vmem:[%s233 + $0x348] sm:$0xff]
        %v349 = vld [vmem:[%s233 + $0x350] sm:$0xff]
        %v350 = vld [vmem:[%s233 + $0x358] sm:$0xff]
        %v351 = vld [vmem:[%s233 + $0x360] sm:$0xff]
        %v352 = vld [vmem:[%s233 + $0x368] sm:$0xff]
        %v353 = vld [vmem:[%s233 + $0x370] sm:$0xff]
        %v354 = vld [vmem:[%s233 + $0x378] sm:$0xff]
        %v355 = vld [vmem:[%s233 + $0x380] sm:$0xff]
        %v356 = vld [vmem:[%s233 + $0x388] sm:$0xff]
        %v357 = vld [vmem:[%s233 + $0x390] sm:$0xff]
        %v358 = vld [vmem:[%s233 + $0x398] sm:$0xff]
        %v359 = vld [vmem:[%s233 + $0x3a0] sm:$0xff]
        %v360 = vld [vmem:[%s233 + $0x3a8] sm:$0xff]
        %v361 = vld [vmem:[%s233 + $0x3b0] sm:$0xff]
        %v362 = vld [vmem:[%s233 + $0x3b8] sm:$0xff]
        %v363 = vld [vmem:[%s233 + $0x3c0] sm:$0xff]
        %v364 = vld [vmem:[%s233 + $0x3c8] sm:$0xff]
        %v365 = vld [vmem:[%s233 + $0x3d0] sm:$0xff]
        %v366 = vld [vmem:[%s233 + $0x3d8] sm:$0xff]
        %v367 = vld [vmem:[%s233 + $0x3e0] sm:$0xff]
        %v368 = vld [vmem:[%s233 + $0x3e8] sm:$0xff]
        %v369 = vld [vmem:[%s233 + $0x3f0] sm:$0xff]
        %v370 = vld [vmem:[%s233 + $0x3f8] sm:$0xff]
        %v371 = vld [vmem:[%s233 + $0x400] sm:$0xff]
        %v372 = vld [vmem:[%s233 + $0x408] sm:$0xff]
        %v373 = vld [vmem:[%s233 + $0x410] sm:$0xff]
        %v374 = vld [vmem:[%s233 + $0x418] sm:$0xff]
        %v375 = vld [vmem:[%s233 + $0x420] sm:$0xff]
        %v376 = vld [vmem:[%s233 + $0x428] sm:$0xff]
        %v377 = vld [vmem:[%s233 + $0x430] sm:$0xff]
        %v378 = vld [vmem:[%s233 + $0x438] sm:$0xff]
        %v379 = vld [vmem:[%s233 + $0x440] sm:$0xff]
        %v380 = vld [vmem:[%s233 + $0x448] sm:$0xff]
        %v381 = vld [vmem:[%s233 + $0x450] sm:$0xff]
        %v382 = vld [vmem:[%s233 + $0x458] sm:$0xff]
        %v383 = vld [vmem:[%s233 + $0x460] sm:$0xff]
        %v384 = vld [vmem:[%s233 + $0x468] sm:$0xff]
        %v385 = vld [vmem:[%s233 + $0x470] sm:$0xff]
        %v386 = vld [vmem:[%s233 + $0x478] sm:$0xff]
        %v387 = vld [vmem:[%s233 + $0x480] sm:$0xff]
        %v388 = vld [vmem:[%s233 + $0x488] sm:$0xff]
        %v389 = vld [vmem:[%s233 + $0x490] sm:$0xff]
        %v390 = vld [vmem:[%s233 + $0x498] sm:$0xff]
        %v391 = vld [vmem:[%s233 + $0x4a0] sm:$0xff]
        %v392 = vld [vmem:[%s233 + $0x4a8] sm:$0xff]
        %v393 = vld [vmem:[%s233 + $0x4b0] sm:$0xff]
        %v394 = vld [vmem:[%s233 + $0x4b8] sm:$0xff]
        %v395 = vld [vmem:[%s233 + $0x4c0] sm:$0xff]
        %v396 = vld [vmem:[%s233 + $0x4c8] sm:$0xff]
        %v397 = vld [vmem:[%s233 + $0x4d0] sm:$0xff]
        %v398 = vld [vmem:[%s233 + $0x4d8] sm:$0xff]
        %v399 = vld [vmem:[%s233 + $0x4e0] sm:$0xff]
        %v400 = vld [vmem:[%s233 + $0x4e8] sm:$0xff]
        %v401 = vld [vmem:[%s233 + $0x4f0] sm:$0xff]
        %v402 = vld [vmem:[%s233 + $0x4f8] sm:$0xff]
        %v403 = vld [vmem:[%s233 + $0x500] sm:$0xff]
        %v404 = vld [vmem:[%s233 + $0x508] sm:$0xff]
        %v405 = vld [vmem:[%s233 + $0x510] sm:$0xff]
        %v406 = vld [vmem:[%s233 + $0x518] sm:$0xff]
        %v407 = vld [vmem:[%s233 + $0x520] sm:$0xff]
        %v408 = vld [vmem:[%s233 + $0x528] sm:$0xff]
        %v409 = vld [vmem:[%s233 + $0x530] sm:$0xff]
        %v410 = vld [vmem:[%s233 + $0x538] sm:$0xff]
        %v411 = vld [vmem:[%s233 + $0x540] sm:$0xff]
        %v412 = vld [vmem:[%s233 + $0x548] sm:$0xff]
        %v413 = vld [vmem:[%s233 + $0x550] sm:$0xff]
        %v414 = vld [vmem:[%s233 + $0x558] sm:$0xff]
        %v415 = vld [vmem:[%s233 + $0x560] sm:$0xff]
        %v416 = vld [vmem:[%s233 + $0x568] sm:$0xff]
        %v417 = vld [vmem:[%s233 + $0x570] sm:$0xff]
        %v418 = vld [vmem:[%s233 + $0x578] sm:$0xff]
        %v419 = vld [vmem:[%s233 + $0x580] sm:$0xff]
        %v420 = vld [vmem:[%s233 + $0x588] sm:$0xff]
        %v421 = vld [vmem:[%s233 + $0x590] sm:$0xff]
        %v422 = vld [vmem:[%s233 + $0x598] sm:$0xff]
        %v423 = vld [vmem:[%s233 + $0x5a0] sm:$0xff]
        %v424 = vld [vmem:[%s233 + $0x5a8] sm:$0xff]
        %v425 = vld [vmem:[%s233 + $0x5b0] sm:$0xff]
        %v426 = vld [vmem:[%s233 + $0x5b8] sm:$0xff]
        %v427 = vld [vmem:[%s233 + $0x5c0] sm:$0xff]
        %v428 = vld [vmem:[%s233 + $0x5c8] sm:$0xff]
        %v429 = vld [vmem:[%s233 + $0x5d0] sm:$0xff]
        %v430 = vld [vmem:[%s233 + $0x5d8] sm:$0xff]
        %v431 = vld [vmem:[%s233 + $0x5e0] sm:$0xff]
        %v432 = vld [vmem:[%s233 + $0x5e8] sm:$0xff]
        %v433 = vld [vmem:[%s233 + $0x5f0] sm:$0xff]
        %v434 = vld [vmem:[%s233 + $0x5f8] sm:$0xff]
        %v435 = vld [vmem:[%s233 + $0x600] sm:$0xff]
        %v436 = vld [vmem:[%s233 + $0x608] sm:$0xff]
        %v437 = vld [vmem:[%s233 + $0x610] sm:$0xff]
        %v438 = vld [vmem:[%s233 + $0x618] sm:$0xff]
        %v439 = vld [vmem:[%s233 + $0x620] sm:$0xff]
        %v440 = vld [vmem:[%s233 + $0x628] sm:$0xff]
        %v441 = vld [vmem:[%s233 + $0x630] sm:$0xff]
        %v442 = vld [vmem:[%s233 + $0x638] sm:$0xff]
        %v443 = vld [vmem:[%s233 + $0x640] sm:$0xff]
        %v444 = vld [vmem:[%s233 + $0x648] sm:$0xff]
        %v445 = vld [vmem:[%s233 + $0x650] sm:$0xff]
        %v446 = vld [vmem:[%s233 + $0x658] sm:$0xff]
        %v447 = vld [vmem:[%s233 + $0x660] sm:$0xff]
        %v448 = vld [vmem:[%s233 + $0x668] sm:$0xff]
        %v449 = vld [vmem:[%s233 + $0x670] sm:$0xff]
        %v450 = vld [vmem:[%s233 + $0x678] sm:$0xff]
        %v451 = vld [vmem:[%s233 + $0x680] sm:$0xff]
        %v452 = vld [vmem:[%s233 + $0x688] sm:$0xff]
        %v453 = vld [vmem:[%s233 + $0x690] sm:$0xff]
        %v454 = vld [vmem:[%s233 + $0x698] sm:$0xff]
        %v455 = vld [vmem:[%s233 + $0x6a0] sm:$0xff]
        %v456 = vld [vmem:[%s233 + $0x6a8] sm:$0xff]
        %v457 = vld [vmem:[%s233 + $0x6b0] sm:$0xff]
        %v458 = vld [vmem:[%s233 + $0x6b8] sm:$0xff]
        %v459 = vld [vmem:[%s233 + $0x6c0] sm:$0xff]
        %v460 = vld [vmem:[%s233 + $0x6c8] sm:$0xff]
        %v461 = vld [vmem:[%s233 + $0x6d0] sm:$0xff]
        %v462 = vld [vmem:[%s233 + $0x6d8] sm:$0xff]
        %v463 = vld [vmem:[%s233 + $0x6e0] sm:$0xff]
        %v464 = vld [vmem:[%s233 + $0x6e8] sm:$0xff]
        %v465 = vld [vmem:[%s233 + $0x6f0] sm:$0xff]
        %v466 = vld [vmem:[%s233 + $0x6f8] sm:$0xff]
        %v467 = vld [vmem:[%s233 + $0x700] sm:$0xff]
        %v468 = vld [vmem:[%s233 + $0x708] sm:$0xff]
        %v469 = vld [vmem:[%s233 + $0x710] sm:$0xff]
        %v470 = vld [vmem:[%s233 + $0x718] sm:$0xff]
        %v471 = vld [vmem:[%s233 + $0x720] sm:$0xff]
        %v472 = vld [vmem:[%s233 + $0x728] sm:$0xff]
        %v473 = vld [vmem:[%s233 + $0x730] sm:$0xff]
        %v474 = vld [vmem:[%s233 + $0x738] sm:$0xff]
        %v475 = vld [vmem:[%s233 + $0x740] sm:$0xff]
        %v476 = vld [vmem:[%s233 + $0x748] sm:$0xff]
        %v477 = vld [vmem:[%s233 + $0x750] sm:$0xff]
        %v478 = vld [vmem:[%s233 + $0x758] sm:$0xff]
        %v479 = vld [vmem:[%s233 + $0x760] sm:$0xff]
        %v480 = vld [vmem:[%s233 + $0x768] sm:$0xff]
        %v481 = vld [vmem:[%s233 + $0x770] sm:$0xff]
        %v482 = vld [vmem:[%s233 + $0x778] sm:$0xff]
        %v483 = vld [vmem:[%s233 + $0x780] sm:$0xff]
        %v484 = vld [vmem:[%s233 + $0x788] sm:$0xff]
        %v485 = vld [vmem:[%s233 + $0x790] sm:$0xff]
        %v486 = vld [vmem:[%s233 + $0x798] sm:$0xff]
        %v487 = vld [vmem:[%s233 + $0x7a0] sm:$0xff]
        %v488 = vld [vmem:[%s233 + $0x7a8] sm:$0xff]
        %v489 = vld [vmem:[%s233 + $0x7b0] sm:$0xff]
        %v490 = vld [vmem:[%s233 + $0x7b8] sm:$0xff]
        %v491 = vld [vmem:[%s233 + $0x7c0] sm:$0xff]
        %v492 = vld [vmem:[%s233 + $0x7c8] sm:$0xff]
        %v493 = vld [vmem:[%s233 + $0x7d0] sm:$0xff]
        %v494 = vld [vmem:[%s233 + $0x7d8] sm:$0xff]
        %v495 = vld [vmem:[%s233 + $0x7e0] sm:$0xff]
        %v496 = vld [vmem:[%s233 + $0x7e8] sm:$0xff]
        %v497 = vld [vmem:[%s233 + $0x7f0] sm:$0xff]
        %v498 = vld [vmem:[%s233 + $0x7f8] sm:$0xff]
        %v499 = vld [vmem:[%s233 + $0x800] sm:$0xff]
        %v500 = vld [vmem:[%s233 + $0x808] sm:$0xff]
        %v501 = vld [vmem:[%s233 + $0x810] sm:$0xff]
        %v502 = vld [vmem:[%s233 + $0x818] sm:$0xff]
        %v503 = vld [vmem:[%s233 + $0x820] sm:$0xff]
        %v504 = vld [vmem:[%s233 + $0x828] sm:$0xff]
        %v505 = vld [vmem:[%s233 + $0x830] sm:$0xff]
        %v506 = vld [vmem:[%s233 + $0x838] sm:$0xff]
        %v507 = vld [vmem:[%s233 + $0x840] sm:$0xff]
        %v508 = vld [vmem:[%s233 + $0x848] sm:$0xff]
        %v509 = vld [vmem:[%s233 + $0x850] sm:$0xff]
        %v510 = vld [vmem:[%s233 + $0x858] sm:$0xff]
        %v511 = vld [vmem:[%s233 + $0x860] sm:$0xff]
        %v512 = vld [vmem:[%s233 + $0x868] sm:$0xff]
        %v513 = vld [vmem:[%s233 + $0x870] sm:$0xff]
        %v514 = vld [vmem:[%s233 + $0x878] sm:$0xff]
        %v515 = vld [vmem:[%s233 + $0x880] sm:$0xff]
        %v516 = vld [vmem:[%s233 + $0x888] sm:$0xff]
        %v517 = vld [vmem:[%s233 + $0x890] sm:$0xff]
        %v518 = vld [vmem:[%s233 + $0x898] sm:$0xff]
        %v519 = vld [vmem:[%s233 + $0x8a0] sm:$0xff]
        %v520 = vld [vmem:[%s233 + $0x8a8] sm:$0xff]
        %v521 = vld [vmem:[%s233 + $0x8b0] sm:$0xff]
        %v522 = vld [vmem:[%s233 + $0x8b8] sm:$0xff]
        %v523 = vld [vmem:[%s233 + $0x8c0] sm:$0xff]
        %v524 = vld [vmem:[%s233 + $0x8c8] sm:$0xff]
        %v525 = vld [vmem:[%s233 + $0x8d0] sm:$0xff]
        %v526 = vld [vmem:[%s233 + $0x8d8] sm:$0xff]
        %v527 = vld [vmem:[%s233 + $0x8e0] sm:$0xff]
        %v528 = vld [vmem:[%s233 + $0x8e8] sm:$0xff]
        %v529 = vld [vmem:[%s233 + $0x8f0] sm:$0xff]
        %v530 = vld [vmem:[%s233 + $0x8f8] sm:$0xff]
        %v531 = vld [vmem:[%s233 + $0x900] sm:$0xff]
        %v532 = vld [vmem:[%s233 + $0x908] sm:$0xff]
        %v533 = vld [vmem:[%s233 + $0x910] sm:$0xff]
        %v534 = vld [vmem:[%s233 + $0x918] sm:$0xff]
        %v535 = vld [vmem:[%s233 + $0x920] sm:$0xff]
        %v536 = vld [vmem:[%s233 + $0x928] sm:$0xff]
        %v537 = vld [vmem:[%s233 + $0x930] sm:$0xff]
        %v538 = vld [vmem:[%s233 + $0x938] sm:$0xff]
        %v539 = vld [vmem:[%s233 + $0x940] sm:$0xff]
        %v540 = vld [vmem:[%s233 + $0x948] sm:$0xff]
        %v541 = vld [vmem:[%s233 + $0x950] sm:$0xff]
        %v542 = vld [vmem:[%s233 + $0x958] sm:$0xff]
        %v543 = vld [vmem:[%s233 + $0x960] sm:$0xff]
        %v544 = vld [vmem:[%s233 + $0x968] sm:$0xff]
        %v545 = vld [vmem:[%s233 + $0x970] sm:$0xff]
        %v546 = vld [vmem:[%s233 + $0x978] sm:$0xff]
        %v547 = vld [vmem:[%s233 + $0x980] sm:$0xff]
        %v548 = vld [vmem:[%s233 + $0x988] sm:$0xff]
        %v549 = vld [vmem:[%s233 + $0x990] sm:$0xff]
        %v550 = vld [vmem:[%s233 + $0x998] sm:$0xff]
        %v551 = vld [vmem:[%s233 + $0x9a0] sm:$0xff]
        %v552 = vld [vmem:[%s233 + $0x9a8] sm:$0xff]
        %v553 = vld [vmem:[%s233 + $0x9b0] sm:$0xff]
        %v554 = vld [vmem:[%s233 + $0x9b8] sm:$0xff]
        %v555 = vld [vmem:[%s233 + $0x9c0] sm:$0xff]
        %v556 = vld [vmem:[%s233 + $0x9c8] sm:$0xff]
        %v557 = vld [vmem:[%s233 + $0x9d0] sm:$0xff]
        %v558 = vld [vmem:[%s233 + $0x9d8] sm:$0xff]
        %v559 = vld [vmem:[%s233 + $0x9e0] sm:$0xff]
        %v560 = vld [vmem:[%s233 + $0x9e8] sm:$0xff]
        %v561 = vld [vmem:[%s233 + $0x9f0] sm:$0xff]
        %v562 = vld [vmem:[%s233 + $0x9f8] sm:$0xff]
        %v563 = vld [vmem:[%s233 + $0xa00] sm:$0xff]
        %v564 = vld [vmem:[%s233 + $0xa08] sm:$0xff]
        %v565 = vld [vmem:[%s233 + $0xa10] sm:$0xff]
        %v566 = vld [vmem:[%s233 + $0xa18] sm:$0xff]
        %v567 = vld [vmem:[%s233 + $0xa20] sm:$0xff]
        %v568 = vld [vmem:[%s233 + $0xa28] sm:$0xff]
        %v569 = vld [vmem:[%s233 + $0xa30] sm:$0xff]
        %v570 = vld [vmem:[%s233 + $0xa38] sm:$0xff]
        %v571 = vld [vmem:[%s233 + $0xa40] sm:$0xff]
        %v572 = vld [vmem:[%s233 + $0xa48] sm:$0xff]
        %v573 = vld [vmem:[%s233 + $0xa50] sm:$0xff]
        %v574 = vld [vmem:[%s233 + $0xa58] sm:$0xff]
        %v575 = vld [vmem:[%s233 + $0xa60] sm:$0xff]
        %v576 = vld [vmem:[%s233 + $0xa68] sm:$0xff]
        %v577 = vld [vmem:[%s233 + $0xa70] sm:$0xff]
        %v578 = vld [vmem:[%s233 + $0xa78] sm:$0xff]
        %v579 = vld [vmem:[%s233 + $0xa80] sm:$0xff]
        %v580 = vld [vmem:[%s233 + $0xa88] sm:$0xff]
        %v581 = vld [vmem:[%s233 + $0xa90] sm:$0xff]
        %v582 = vld [vmem:[%s233 + $0xa98] sm:$0xff]
        %v583 = vld [vmem:[%s233 + $0xaa0] sm:$0xff]
        %v584 = vld [vmem:[%s233 + $0xaa8] sm:$0xff]
        %v585 = vld [vmem:[%s233 + $0xab0] sm:$0xff]
        %v586 = vld [vmem:[%s233 + $0xab8] sm:$0xff]
        %v587 = vld [vmem:[%s233 + $0xac0] sm:$0xff]
        %v588 = vld [vmem:[%s233 + $0xac8] sm:$0xff]
        %v589 = vld [vmem:[%s233 + $0xad0] sm:$0xff]
        %v590 = vld [vmem:[%s233 + $0xad8] sm:$0xff]
        %v591 = vld [vmem:[%s233 + $0xae0] sm:$0xff]
        %v592 = vld [vmem:[%s233 + $0xae8] sm:$0xff]
        %v593 = vld [vmem:[%s233 + $0xaf0] sm:$0xff]
        %v594 = vld [vmem:[%s233 + $0xaf8] sm:$0xff]
        %v595 = vld [vmem:[%s233 + $0xb00] sm:$0xff]
        %v596 = vld [vmem:[%s233 + $0xb08] sm:$0xff]
        %v597 = vld [vmem:[%s233 + $0xb10] sm:$0xff]
        %v598 = vld [vmem:[%s233 + $0xb18] sm:$0xff]
        %v599 = vld [vmem:[%s233 + $0xb20] sm:$0xff]
        %v600 = vld [vmem:[%s233 + $0xb28] sm:$0xff]
        %v601 = vld [vmem:[%s233 + $0xb30] sm:$0xff]
        %v602 = vld [vmem:[%s233 + $0xb38] sm:$0xff]
        %v603 = vld [vmem:[%s233 + $0xb40] sm:$0xff]
        %v604 = vld [vmem:[%s233 + $0xb48] sm:$0xff]
        %v605 = vld [vmem:[%s233 + $0xb50] sm:$0xff]
        %v606 = vld [vmem:[%s233 + $0xb58] sm:$0xff]
        %v607 = vld [vmem:[%s233 + $0xb60] sm:$0xff]
        %v608 = vld [vmem:[%s233 + $0xb68] sm:$0xff]
        %v609 = vld [vmem:[%s233 + $0xb70] sm:$0xff]
        %v610 = vld [vmem:[%s233 + $0xb78] sm:$0xff]
        %v611 = vld [vmem:[%s233 + $0xb80] sm:$0xff]
        %v612 = vld [vmem:[%s233 + $0xb88] sm:$0xff]
        %v613 = vld [vmem:[%s233 + $0xb90] sm:$0xff]
        %v614 = vld [vmem:[%s233 + $0xb98] sm:$0xff]
        %v615 = vld [vmem:[%s233 + $0xba0] sm:$0xff]
        %v616 = vld [vmem:[%s233 + $0xba8] sm:$0xff]
        %v617 = vld [vmem:[%s233 + $0xbb0] sm:$0xff]
        %v618 = vld [vmem:[%s233 + $0xbb8] sm:$0xff]
        %v619 = vld [vmem:[%s233 + $0xbc0] sm:$0xff]
        %v620 = vld [vmem:[%s233 + $0xbc8] sm:$0xff]
        %v621 = vld [vmem:[%s233 + $0xbd0] sm:$0xff]
        %v622 = vld [vmem:[%s233 + $0xbd8] sm:$0xff]
        %v623 = vld [vmem:[%s233 + $0xbe0] sm:$0xff]
        %v624 = vld [vmem:[%s233 + $0xbe8] sm:$0xff]
        %v625 = vld [vmem:[%s233 + $0xbf0] sm:$0xff]
        %v626 = vld [vmem:[%s233 + $0xbf8] sm:$0xff]
        %v627 = vld [vmem:[%s233 + $0xc00] sm:$0xff]
        %v628 = vld [vmem:[%s233 + $0xc08] sm:$0xff]
        %v629 = vld [vmem:[%s233 + $0xc10] sm:$0xff]
        %v630 = vld [vmem:[%s233 + $0xc18] sm:$0xff]
        %v631 = vld [vmem:[%s233 + $0xc20] sm:$0xff]
        %v632 = vld [vmem:[%s233 + $0xc28] sm:$0xff]
        %v633 = vld [vmem:[%s233 + $0xc30] sm:$0xff]
        %v634 = vld [vmem:[%s233 + $0xc38] sm:$0xff]
        %v635 = vld [vmem:[%s233 + $0xc40] sm:$0xff]
        %v636 = vld [vmem:[%s233 + $0xc48] sm:$0xff]
        %v637 = vld [vmem:[%s233 + $0xc50] sm:$0xff]
        %v638 = vld [vmem:[%s233 + $0xc58] sm:$0xff]
        %v639 = vld [vmem:[%s233 + $0xc60] sm:$0xff]
        %v640 = vld [vmem:[%s233 + $0xc68] sm:$0xff]
        %v641 = vld [vmem:[%s233 + $0xc70] sm:$0xff]
        %v642 = vld [vmem:[%s233 + $0xc78] sm:$0xff]
        %v643 = vld [vmem:[%s233 + $0xc80] sm:$0xff]
        %v644 = vld [vmem:[%s233 + $0xc88] sm:$0xff]
        %v645 = vld [vmem:[%s233 + $0xc90] sm:$0xff]
        %v646 = vld [vmem:[%s233 + $0xc98] sm:$0xff]
        %v647 = vld [vmem:[%s233 + $0xca0] sm:$0xff]
        %v648 = vld [vmem:[%s233 + $0xca8] sm:$0xff]
        %v649 = vld [vmem:[%s233 + $0xcb0] sm:$0xff]
        %v650 = vld [vmem:[%s233 + $0xcb8] sm:$0xff]
        %v651 = vld [vmem:[%s233 + $0xcc0] sm:$0xff]
        %v652 = vld [vmem:[%s233 + $0xcc8] sm:$0xff]
        %v653 = vld [vmem:[%s233 + $0xcd0] sm:$0xff]
        %v654 = vld [vmem:[%s233 + $0xcd8] sm:$0xff]
        %v655 = vld [vmem:[%s233 + $0xce0] sm:$0xff]
        %v656 = vld [vmem:[%s233 + $0xce8] sm:$0xff]
        %v657 = vld [vmem:[%s233 + $0xcf0] sm:$0xff]
        %v658 = vld [vmem:[%s233 + $0xcf8] sm:$0xff]
        %v659 = vld [vmem:[%s233 + $0xd00] sm:$0xff]
        %v660 = vld [vmem:[%s233 + $0xd08] sm:$0xff]
        %v661 = vld [vmem:[%s233 + $0xd10] sm:$0xff]
        %v662 = vld [vmem:[%s233 + $0xd18] sm:$0xff]
        %v663 = vld [vmem:[%s233 + $0xd20] sm:$0xff]
        %v664 = vld [vmem:[%s233 + $0xd28] sm:$0xff]
        %v665 = vld [vmem:[%s233 + $0xd30] sm:$0xff]
        %v666 = vld [vmem:[%s233 + $0xd38] sm:$0xff]
        %v667 = vld [vmem:[%s233 + $0xd40] sm:$0xff]
        %v668 = vld [vmem:[%s233 + $0xd48] sm:$0xff]
        %v669 = vld [vmem:[%s233 + $0xd50] sm:$0xff]
        %v670 = vld [vmem:[%s233 + $0xd58] sm:$0xff]
        %v671 = vld [vmem:[%s233 + $0xd60] sm:$0xff]
        %v672 = vld [vmem:[%s233 + $0xd68] sm:$0xff]
        %v673 = vld [vmem:[%s233 + $0xd70] sm:$0xff]
        %v674 = vld [vmem:[%s233 + $0xd78] sm:$0xff]
        %v675 = vld [vmem:[%s233 + $0xd80] sm:$0xff]
        %v676 = vld [vmem:[%s233 + $0xd88] sm:$0xff]
        %v677 = vld [vmem:[%s233 + $0xd90] sm:$0xff]
        %v678 = vld [vmem:[%s233 + $0xd98] sm:$0xff]
        %v679 = vld [vmem:[%s233 + $0xda0] sm:$0xff]
        %v680 = vld [vmem:[%s233 + $0xda8] sm:$0xff]
        %v681 = vld [vmem:[%s233 + $0xdb0] sm:$0xff]
        %v682 = vld [vmem:[%s233 + $0xdb8] sm:$0xff]
        %v683 = vld [vmem:[%s233 + $0xdc0] sm:$0xff]
        %v684 = vld [vmem:[%s233 + $0xdc8] sm:$0xff]
        %v685 = vld [vmem:[%s233 + $0xdd0] sm:$0xff]
        %v686 = vld [vmem:[%s233 + $0xdd8] sm:$0xff]
        %v687 = vld [vmem:[%s233 + $0xde0] sm:$0xff]
        %v688 = vld [vmem:[%s233 + $0xde8] sm:$0xff]
        %v689 = vld [vmem:[%s233 + $0xdf0] sm:$0xff]
        %v690 = vld [vmem:[%s233 + $0xdf8] sm:$0xff]
        %v691 = vld [vmem:[%s233 + $0xe00] sm:$0xff]
        %v692 = vld [vmem:[%s233 + $0xe08] sm:$0xff]
        %v693 = vld [vmem:[%s233 + $0xe10] sm:$0xff]
        %v694 = vld [vmem:[%s233 + $0xe18] sm:$0xff]
        %v695 = vld [vmem:[%s233 + $0xe20] sm:$0xff]
        %v696 = vld [vmem:[%s233 + $0xe28] sm:$0xff]
        %v697 = vld [vmem:[%s233 + $0xe30] sm:$0xff]
        %v698 = vld [vmem:[%s233 + $0xe38] sm:$0xff]
        %v699 = vld [vmem:[%s233 + $0xe40] sm:$0xff]
        %v700 = vld [vmem:[%s233 + $0xe48] sm:$0xff]
        %v701 = vld [vmem:[%s233 + $0xe50] sm:$0xff]
        %v702 = vld [vmem:[%s233 + $0xe58] sm:$0xff]
        %v703 = vld [vmem:[%s233 + $0xe60] sm:$0xff]
        %v704 = vld [vmem:[%s233 + $0xe68] sm:$0xff]
        %v705 = vld [vmem:[%s233 + $0xe70] sm:$0xff]
        %v706 = vld [vmem:[%s233 + $0xe78] sm:$0xff]
        %v707 = vld [vmem:[%s233 + $0xe80] sm:$0xff]
        %v708 = vld [vmem:[%s233 + $0xe88] sm:$0xff]
        %v709 = vld [vmem:[%s233 + $0xe90] sm:$0xff]
        %v710 = vld [vmem:[%s233 + $0xe98] sm:$0xff]
        %v711 = vld [vmem:[%s233 + $0xea0] sm:$0xff]
        %v712 = vld [vmem:[%s233 + $0xea8] sm:$0xff]
        %v713 = vld [vmem:[%s233 + $0xeb0] sm:$0xff]
        %v714 = vld [vmem:[%s233 + $0xeb8] sm:$0xff]
        %v715 = vld [vmem:[%s233 + $0xec0] sm:$0xff]
        %v716 = vld [vmem:[%s233 + $0xec8] sm:$0xff]
        %v717 = vld [vmem:[%s233 + $0xed0] sm:$0xff]
        %v718 = vld [vmem:[%s233 + $0xed8] sm:$0xff]
        %v719 = vld [vmem:[%s233 + $0xee0] sm:$0xff]
        %v720 = vld [vmem:[%s233 + $0xee8] sm:$0xff]
        %v721 = vld [vmem:[%s233 + $0xef0] sm:$0xff]
        %v722 = vld [vmem:[%s233 + $0xef8] sm:$0xff]
        %v723 = vld [vmem:[%s233 + $0xf00] sm:$0xff]
        %v724 = vld [vmem:[%s233 + $0xf08] sm:$0xff]
        %v725 = vld [vmem:[%s233 + $0xf10] sm:$0xff]
        %v726 = vld [vmem:[%s233 + $0xf18] sm:$0xff]
        %v727 = vld [vmem:[%s233 + $0xf20] sm:$0xff]
        %v728 = vld [vmem:[%s233 + $0xf28] sm:$0xff]
        %v729 = vld [vmem:[%s233 + $0xf30] sm:$0xff]
        %v730 = vld [vmem:[%s233 + $0xf38] sm:$0xff]
        %v731 = vld [vmem:[%s233 + $0xf40] sm:$0xff]
        %v732 = vld [vmem:[%s233 + $0xf48] sm:$0xff]
        %v733 = vld [vmem:[%s233 + $0xf50] sm:$0xff]
        %v734 = vld [vmem:[%s233 + $0xf58] sm:$0xff]
        %v735 = vld [vmem:[%s233 + $0xf60] sm:$0xff]
        %v736 = vld [vmem:[%s233 + $0xf68] sm:$0xff]
        %v737 = vld [vmem:[%s233 + $0xf70] sm:$0xff]
        %v738 = vld [vmem:[%s233 + $0xf78] sm:$0xff]
        %v739 = vld [vmem:[%s233 + $0xf80] sm:$0xff]
        %v740 = vld [vmem:[%s233 + $0xf88] sm:$0xff]
        %v741 = vld [vmem:[%s233 + $0xf90] sm:$0xff]
        %v742 = vld [vmem:[%s233 + $0xf98] sm:$0xff]
        %v743 = vld [vmem:[%s233 + $0xfa0] sm:$0xff]
        %v744 = vld [vmem:[%s233 + $0xfa8] sm:$0xff]
        %v745 = vld [vmem:[%s233 + $0xfb0] sm:$0xff]
        %v746 = vld [vmem:[%s233 + $0xfb8] sm:$0xff]
        %v747 = vld [vmem:[%s233 + $0xfc0] sm:$0xff]
        %v748 = vld [vmem:[%s233 + $0xfc8] sm:$0xff]
        %v749 = vld [vmem:[%s233 + $0xfd0] sm:$0xff]
        %v750 = vld [vmem:[%s233 + $0xfd8] sm:$0xff]
        %v751 = vld [vmem:[%s233 + $0xfe0] sm:$0xff]
        %v752 = vld [vmem:[%s233 + $0xfe8] sm:$0xff]
        %v753 = vld [vmem:[%s233 + $0xff0] sm:$0xff]
        %v754 = vld [vmem:[%s233 + $0xff8] sm:$0xff]
        %756 = vst [vmem:[#allocation1] ss:$9 sm:$0xff] %v241
        %v757 = vld [vmem:[#allocation1] sm:$0xff]
        %v758 = vld [vmem:[#allocation1 + $0x9] sm:$0xff]
        %v759 = vld [vmem:[#allocation1 + $0x12] sm:$0xff]
        %v760 = vld [vmem:[#allocation1 + $0x1b] sm:$0xff]
        %v761 = vld [vmem:[#allocation1 + $0x24] sm:$0xff]
        %v762 = vld [vmem:[#allocation1 + $0x2d] sm:$0xff]
        %v763 = vld [vmem:[#allocation1 + $0x36] sm:$0xff]
        %v764 = vld [vmem:[#allocation1 + $0x3f] sm:$0xff]
        %766 = vst [vmem:[#allocation1] ss:$9 sm:$0xff] %v242
        %v767 = vld [vmem:[#allocation1] sm:$0xff]
        %v768 = vld [vmem:[#allocation1 + $0x9] sm:$0xff]
        %v769 = vld [vmem:[#allocation1 + $0x12] sm:$0xff]
        %v770 = vld [vmem:[#allocation1 + $0x1b] sm:$0xff]
        %v771 = vld [vmem:[#allocation1 + $0x24] sm:$0xff]
        %v772 = vld [vmem:[#allocation1 + $0x2d] sm:$0xff]
        %v773 = vld [vmem:[#allocation1 + $0x36] sm:$0xff]
        %v774 = vld [vmem:[#allocation1 + $0x3f] sm:$0xff]
        %v1303 = vunpack.c.l.b16 %v243
        %v1304 = vunpack.c.h.b16 %v243
        %v1305 = vunpack.c.l.b16 %v244
        %v1306 = vunpack.c.h.b16 %v244
        %v1307 = vunpack.c.l.b16 %v245
        %v1308 = vunpack.c.h.b16 %v245
        %v1309 = vunpack.c.l.b16 %v246
        %v1310 = vunpack.c.h.b16 %v246
        %v1311 = vunpack.c.l.b16 %v247
        %v1312 = vunpack.c.h.b16 %v247
        %v1313 = vunpack.c.l.b16 %v248
        %v1314 = vunpack.c.h.b16 %v248
        %v1315 = vunpack.c.l.b16 %v249
        %v1316 = vunpack.c.h.b16 %v249
        %v1317 = vunpack.c.l.b16 %v250
        %v1318 = vunpack.c.h.b16 %v250
        %v1319 = vunpack.c.l.b16 %v251
        %v1320 = vunpack.c.h.b16 %v251
        %v1321 = vunpack.c.l.b16 %v252
        %v1322 = vunpack.c.h.b16 %v252
        %v1323 = vunpack.c.l.b16 %v253
        %v1324 = vunpack.c.h.b16 %v253
        %v1325 = vunpack.c.l.b16 %v254
        %v1326 = vunpack.c.h.b16 %v254
        %v1327 = vunpack.c.l.b16 %v255
        %v1328 = vunpack.c.h.b16 %v255
        %v1329 = vunpack.c.l.b16 %v256
        %v1330 = vunpack.c.h.b16 %v256
        %v1331 = vunpack.c.l.b16 %v257
        %v1332 = vunpack.c.h.b16 %v257
        %v1333 = vunpack.c.l.b16 %v258
        %v1334 = vunpack.c.h.b16 %v258
        %v1335 = vunpack.c.l.b16 %v259
        %v1336 = vunpack.c.h.b16 %v259
        %v1337 = vunpack.c.l.b16 %v260
        %v1338 = vunpack.c.h.b16 %v260
        %v1339 = vunpack.c.l.b16 %v261
        %v1340 = vunpack.c.h.b16 %v261
        %v1341 = vunpack.c.l.b16 %v262
        %v1342 = vunpack.c.h.b16 %v262
        %v1343 = vunpack.c.l.b16 %v263
        %v1344 = vunpack.c.h.b16 %v263
        %v1345 = vunpack.c.l.b16 %v264
        %v1346 = vunpack.c.h.b16 %v264
        %v1347 = vunpack.c.l.b16 %v265
        %v1348 = vunpack.c.h.b16 %v265
        %v1349 = vunpack.c.l.b16 %v266
        %v1350 = vunpack.c.h.b16 %v266
        %v1351 = vunpack.c.l.b16 %v267
        %v1352 = vunpack.c.h.b16 %v267
        %v1353 = vunpack.c.l.b16 %v268
        %v1354 = vunpack.c.h.b16 %v268
        %v1355 = vunpack.c.l.b16 %v269
        %v1356 = vunpack.c.h.b16 %v269
        %v1357 = vunpack.c.l.b16 %v270
        %v1358 = vunpack.c.h.b16 %v270
        %v1359 = vunpack.c.l.b16 %v271
        %v1360 = vunpack.c.h.b16 %v271
        %v1361 = vunpack.c.l.b16 %v272
        %v1362 = vunpack.c.h.b16 %v272
        %v1363 = vunpack.c.l.b16 %v273
        %v1364 = vunpack.c.h.b16 %v273
        %v1365 = vunpack.c.l.b16 %v274
        %v1366 = vunpack.c.h.b16 %v274
        %v1367 = vunpack.c.l.b16 %v275
        %v1368 = vunpack.c.h.b16 %v275
        %v1369 = vunpack.c.l.b16 %v276
        %v1370 = vunpack.c.h.b16 %v276
        %v1371 = vunpack.c.l.b16 %v277
        %v1372 = vunpack.c.h.b16 %v277
        %v1373 = vunpack.c.l.b16 %v278
        %v1374 = vunpack.c.h.b16 %v278
        %v1375 = vunpack.c.l.b16 %v279
        %v1376 = vunpack.c.h.b16 %v279
        %v1377 = vunpack.c.l.b16 %v280
        %v1378 = vunpack.c.h.b16 %v280
        %v1379 = vunpack.c.l.b16 %v281
        %v1380 = vunpack.c.h.b16 %v281
        %v1381 = vunpack.c.l.b16 %v282
        %v1382 = vunpack.c.h.b16 %v282
        %v1383 = vunpack.c.l.b16 %v283
        %v1384 = vunpack.c.h.b16 %v283
        %v1385 = vunpack.c.l.b16 %v284
        %v1386 = vunpack.c.h.b16 %v284
        %v1387 = vunpack.c.l.b16 %v285
        %v1388 = vunpack.c.h.b16 %v285
        %v1389 = vunpack.c.l.b16 %v286
        %v1390 = vunpack.c.h.b16 %v286
        %v1391 = vunpack.c.l.b16 %v287
        %v1392 = vunpack.c.h.b16 %v287
        %v1393 = vunpack.c.l.b16 %v288
        %v1394 = vunpack.c.h.b16 %v288
        %v1395 = vunpack.c.l.b16 %v289
        %v1396 = vunpack.c.h.b16 %v289
        %v1397 = vunpack.c.l.b16 %v290
        %v1398 = vunpack.c.h.b16 %v290
        %v1399 = vunpack.c.l.b16 %v291
        %v1400 = vunpack.c.h.b16 %v291
        %v1401 = vunpack.c.l.b16 %v292
        %v1402 = vunpack.c.h.b16 %v292
        %v1403 = vunpack.c.l.b16 %v293
        %v1404 = vunpack.c.h.b16 %v293
        %v1405 = vunpack.c.l.b16 %v294
        %v1406 = vunpack.c.h.b16 %v294
        %v1407 = vunpack.c.l.b16 %v295
        %v1408 = vunpack.c.h.b16 %v295
        %v1409 = vunpack.c.l.b16 %v296
        %v1410 = vunpack.c.h.b16 %v296
        %v1411 = vunpack.c.l.b16 %v297
        %v1412 = vunpack.c.h.b16 %v297
        %v1413 = vunpack.c.l.b16 %v298
        %v1414 = vunpack.c.h.b16 %v298
        %v1415 = vunpack.c.l.b16 %v299
        %v1416 = vunpack.c.h.b16 %v299
        %v1417 = vunpack.c.l.b16 %v300
        %v1418 = vunpack.c.h.b16 %v300
        %v1419 = vunpack.c.l.b16 %v301
        %v1420 = vunpack.c.h.b16 %v301
        %v1421 = vunpack.c.l.b16 %v302
        %v1422 = vunpack.c.h.b16 %v302
        %v1423 = vunpack.c.l.b16 %v303
        %v1424 = vunpack.c.h.b16 %v303
        %v1425 = vunpack.c.l.b16 %v304
        %v1426 = vunpack.c.h.b16 %v304
        %v1427 = vunpack.c.l.b16 %v305
        %v1428 = vunpack.c.h.b16 %v305
        %v1429 = vunpack.c.l.b16 %v306
        %v1430 = vunpack.c.h.b16 %v306
        %v1431 = vunpack.c.l.b16 %v307
        %v1432 = vunpack.c.h.b16 %v307
        %v1433 = vunpack.c.l.b16 %v308
        %v1434 = vunpack.c.h.b16 %v308
        %v1435 = vunpack.c.l.b16 %v309
        %v1436 = vunpack.c.h.b16 %v309
        %v1437 = vunpack.c.l.b16 %v310
        %v1438 = vunpack.c.h.b16 %v310
        %v1439 = vunpack.c.l.b16 %v311
        %v1440 = vunpack.c.h.b16 %v311
        %v1441 = vunpack.c.l.b16 %v312
        %v1442 = vunpack.c.h.b16 %v312
        %v1443 = vunpack.c.l.b16 %v313
        %v1444 = vunpack.c.h.b16 %v313
        %v1445 = vunpack.c.l.b16 %v314
        %v1446 = vunpack.c.h.b16 %v314
        %v1447 = vunpack.c.l.b16 %v315
        %v1448 = vunpack.c.h.b16 %v315
        %v1449 = vunpack.c.l.b16 %v316
        %v1450 = vunpack.c.h.b16 %v316
        %v1451 = vunpack.c.l.b16 %v317
        %v1452 = vunpack.c.h.b16 %v317
        %v1453 = vunpack.c.l.b16 %v318
        %v1454 = vunpack.c.h.b16 %v318
        %v1455 = vunpack.c.l.b16 %v319
        %v1456 = vunpack.c.h.b16 %v319
        %v1457 = vunpack.c.l.b16 %v320
        %v1458 = vunpack.c.h.b16 %v320
        %v1459 = vunpack.c.l.b16 %v321
        %v1460 = vunpack.c.h.b16 %v321
        %v1461 = vunpack.c.l.b16 %v322
        %v1462 = vunpack.c.h.b16 %v322
        %v1463 = vunpack.c.l.b16 %v323
        %v1464 = vunpack.c.h.b16 %v323
        %v1465 = vunpack.c.l.b16 %v324
        %v1466 = vunpack.c.h.b16 %v324
        %v1467 = vunpack.c.l.b16 %v325
        %v1468 = vunpack.c.h.b16 %v325
        %v1469 = vunpack.c.l.b16 %v326
        %v1470 = vunpack.c.h.b16 %v326
        %v1471 = vunpack.c.l.b16 %v327
        %v1472 = vunpack.c.h.b16 %v327
        %v1473 = vunpack.c.l.b16 %v328
        %v1474 = vunpack.c.h.b16 %v328
        %v1475 = vunpack.c.l.b16 %v329
        %v1476 = vunpack.c.h.b16 %v329
        %v1477 = vunpack.c.l.b16 %v330
        %v1478 = vunpack.c.h.b16 %v330
        %v1479 = vunpack.c.l.b16 %v331
        %v1480 = vunpack.c.h.b16 %v331
        %v1481 = vunpack.c.l.b16 %v332
        %v1482 = vunpack.c.h.b16 %v332
        %v1483 = vunpack.c.l.b16 %v333
        %v1484 = vunpack.c.h.b16 %v333
        %v1485 = vunpack.c.l.b16 %v334
        %v1486 = vunpack.c.h.b16 %v334
        %v1487 = vunpack.c.l.b16 %v335
        %v1488 = vunpack.c.h.b16 %v335
        %v1489 = vunpack.c.l.b16 %v336
        %v1490 = vunpack.c.h.b16 %v336
        %v1491 = vunpack.c.l.b16 %v337
        %v1492 = vunpack.c.h.b16 %v337
        %v1493 = vunpack.c.l.b16 %v338
        %v1494 = vunpack.c.h.b16 %v338
        %v1495 = vunpack.c.l.b16 %v339
        %v1496 = vunpack.c.h.b16 %v339
        %v1497 = vunpack.c.l.b16 %v340
        %v1498 = vunpack.c.h.b16 %v340
        %v1499 = vunpack.c.l.b16 %v341
        %v1500 = vunpack.c.h.b16 %v341
        %v1501 = vunpack.c.l.b16 %v342
        %v1502 = vunpack.c.h.b16 %v342
        %v1503 = vunpack.c.l.b16 %v343
        %v1504 = vunpack.c.h.b16 %v343
        %v1505 = vunpack.c.l.b16 %v344
        %v1506 = vunpack.c.h.b16 %v344
        %v1507 = vunpack.c.l.b16 %v345
        %v1508 = vunpack.c.h.b16 %v345
        %v1509 = vunpack.c.l.b16 %v346
        %v1510 = vunpack.c.h.b16 %v346
        %v1511 = vunpack.c.l.b16 %v347
        %v1512 = vunpack.c.h.b16 %v347
        %v1513 = vunpack.c.l.b16 %v348
        %v1514 = vunpack.c.h.b16 %v348
        %v1515 = vunpack.c.l.b16 %v349
        %v1516 = vunpack.c.h.b16 %v349
        %v1517 = vunpack.c.l.b16 %v350
        %v1518 = vunpack.c.h.b16 %v350
        %v1519 = vunpack.c.l.b16 %v351
        %v1520 = vunpack.c.h.b16 %v351
        %v1521 = vunpack.c.l.b16 %v352
        %v1522 = vunpack.c.h.b16 %v352
        %v1523 = vunpack.c.l.b16 %v353
        %v1524 = vunpack.c.h.b16 %v353
        %v1525 = vunpack.c.l.b16 %v354
        %v1526 = vunpack.c.h.b16 %v354
        %v1527 = vunpack.c.l.b16 %v355
        %v1528 = vunpack.c.h.b16 %v355
        %v1529 = vunpack.c.l.b16 %v356
        %v1530 = vunpack.c.h.b16 %v356
        %v1531 = vunpack.c.l.b16 %v357
        %v1532 = vunpack.c.h.b16 %v357
        %v1533 = vunpack.c.l.b16 %v358
        %v1534 = vunpack.c.h.b16 %v358
        %v1535 = vunpack.c.l.b16 %v359
        %v1536 = vunpack.c.h.b16 %v359
        %v1537 = vunpack.c.l.b16 %v360
        %v1538 = vunpack.c.h.b16 %v360
        %v1539 = vunpack.c.l.b16 %v361
        %v1540 = vunpack.c.h.b16 %v361
        %v1541 = vunpack.c.l.b16 %v362
        %v1542 = vunpack.c.h.b16 %v362
        %v1543 = vunpack.c.l.b16 %v363
        %v1544 = vunpack.c.h.b16 %v363
        %v1545 = vunpack.c.l.b16 %v364
        %v1546 = vunpack.c.h.b16 %v364
        %v1547 = vunpack.c.l.b16 %v365
        %v1548 = vunpack.c.h.b16 %v365
        %v1549 = vunpack.c.l.b16 %v366
        %v1550 = vunpack.c.h.b16 %v366
        %v1551 = vunpack.c.l.b16 %v367
        %v1552 = vunpack.c.h.b16 %v367
        %v1553 = vunpack.c.l.b16 %v368
        %v1554 = vunpack.c.h.b16 %v368
        %v1555 = vunpack.c.l.b16 %v369
        %v1556 = vunpack.c.h.b16 %v369
        %v1557 = vunpack.c.l.b16 %v370
        %v1558 = vunpack.c.h.b16 %v370
        %v1559 = vunpack.c.l.b16 %v371
        %v1560 = vunpack.c.h.b16 %v371
        %v1561 = vunpack.c.l.b16 %v372
        %v1562 = vunpack.c.h.b16 %v372
        %v1563 = vunpack.c.l.b16 %v373
        %v1564 = vunpack.c.h.b16 %v373
        %v1565 = vunpack.c.l.b16 %v374
        %v1566 = vunpack.c.h.b16 %v374
        %v1567 = vunpack.c.l.b16 %v375
        %v1568 = vunpack.c.h.b16 %v375
        %v1569 = vunpack.c.l.b16 %v376
        %v1570 = vunpack.c.h.b16 %v376
        %v1571 = vunpack.c.l.b16 %v377
        %v1572 = vunpack.c.h.b16 %v377
        %v1573 = vunpack.c.l.b16 %v378
        %v1574 = vunpack.c.h.b16 %v378
        %v1575 = vunpack.c.l.b16 %v379
        %v1576 = vunpack.c.h.b16 %v379
        %v1577 = vunpack.c.l.b16 %v380
        %v1578 = vunpack.c.h.b16 %v380
        %v1579 = vunpack.c.l.b16 %v381
        %v1580 = vunpack.c.h.b16 %v381
        %v1581 = vunpack.c.l.b16 %v382
        %v1582 = vunpack.c.h.b16 %v382
        %v1583 = vunpack.c.l.b16 %v383
        %v1584 = vunpack.c.h.b16 %v383
        %v1585 = vunpack.c.l.b16 %v384
        %v1586 = vunpack.c.h.b16 %v384
        %v1587 = vunpack.c.l.b16 %v385
        %v1588 = vunpack.c.h.b16 %v385
        %v1589 = vunpack.c.l.b16 %v386
        %v1590 = vunpack.c.h.b16 %v386
        %v1591 = vunpack.c.l.b16 %v387
        %v1592 = vunpack.c.h.b16 %v387
        %v1593 = vunpack.c.l.b16 %v388
        %v1594 = vunpack.c.h.b16 %v388
        %v1595 = vunpack.c.l.b16 %v389
        %v1596 = vunpack.c.h.b16 %v389
        %v1597 = vunpack.c.l.b16 %v390
        %v1598 = vunpack.c.h.b16 %v390
        %v1599 = vunpack.c.l.b16 %v391
        %v1600 = vunpack.c.h.b16 %v391
        %v1601 = vunpack.c.l.b16 %v392
        %v1602 = vunpack.c.h.b16 %v392
        %v1603 = vunpack.c.l.b16 %v393
        %v1604 = vunpack.c.h.b16 %v393
        %v1605 = vunpack.c.l.b16 %v394
        %v1606 = vunpack.c.h.b16 %v394
        %v1607 = vunpack.c.l.b16 %v395
        %v1608 = vunpack.c.h.b16 %v395
        %v1609 = vunpack.c.l.b16 %v396
        %v1610 = vunpack.c.h.b16 %v396
        %v1611 = vunpack.c.l.b16 %v397
        %v1612 = vunpack.c.h.b16 %v397
        %v1613 = vunpack.c.l.b16 %v398
        %v1614 = vunpack.c.h.b16 %v398
        %v1615 = vunpack.c.l.b16 %v399
        %v1616 = vunpack.c.h.b16 %v399
        %v1617 = vunpack.c.l.b16 %v400
        %v1618 = vunpack.c.h.b16 %v400
        %v1619 = vunpack.c.l.b16 %v401
        %v1620 = vunpack.c.h.b16 %v401
        %v1621 = vunpack.c.l.b16 %v402
        %v1622 = vunpack.c.h.b16 %v402
        %v1623 = vunpack.c.l.b16 %v403
        %v1624 = vunpack.c.h.b16 %v403
        %v1625 = vunpack.c.l.b16 %v404
        %v1626 = vunpack.c.h.b16 %v404
        %v1627 = vunpack.c.l.b16 %v405
        %v1628 = vunpack.c.h.b16 %v405
        %v1629 = vunpack.c.l.b16 %v406
        %v1630 = vunpack.c.h.b16 %v406
        %v1631 = vunpack.c.l.b16 %v407
        %v1632 = vunpack.c.h.b16 %v407
        %v1633 = vunpack.c.l.b16 %v408
        %v1634 = vunpack.c.h.b16 %v408
        %v1635 = vunpack.c.l.b16 %v409
        %v1636 = vunpack.c.h.b16 %v409
        %v1637 = vunpack.c.l.b16 %v410
        %v1638 = vunpack.c.h.b16 %v410
        %v1639 = vunpack.c.l.b16 %v411
        %v1640 = vunpack.c.h.b16 %v411
        %v1641 = vunpack.c.l.b16 %v412
        %v1642 = vunpack.c.h.b16 %v412
        %v1643 = vunpack.c.l.b16 %v413
        %v1644 = vunpack.c.h.b16 %v413
        %v1645 = vunpack.c.l.b16 %v414
        %v1646 = vunpack.c.h.b16 %v414
        %v1647 = vunpack.c.l.b16 %v415
        %v1648 = vunpack.c.h.b16 %v415
        %v1649 = vunpack.c.l.b16 %v416
        %v1650 = vunpack.c.h.b16 %v416
        %v1651 = vunpack.c.l.b16 %v417
        %v1652 = vunpack.c.h.b16 %v417
        %v1653 = vunpack.c.l.b16 %v418
        %v1654 = vunpack.c.h.b16 %v418
        %v1655 = vunpack.c.l.b16 %v419
        %v1656 = vunpack.c.h.b16 %v419
        %v1657 = vunpack.c.l.b16 %v420
        %v1658 = vunpack.c.h.b16 %v420
        %v1659 = vunpack.c.l.b16 %v421
        %v1660 = vunpack.c.h.b16 %v421
        %v1661 = vunpack.c.l.b16 %v422
        %v1662 = vunpack.c.h.b16 %v422
        %v1663 = vunpack.c.l.b16 %v423
        %v1664 = vunpack.c.h.b16 %v423
        %v1665 = vunpack.c.l.b16 %v424
        %v1666 = vunpack.c.h.b16 %v424
        %v1667 = vunpack.c.l.b16 %v425
        %v1668 = vunpack.c.h.b16 %v425
        %v1669 = vunpack.c.l.b16 %v426
        %v1670 = vunpack.c.h.b16 %v426
        %v1671 = vunpack.c.l.b16 %v427
        %v1672 = vunpack.c.h.b16 %v427
        %v1673 = vunpack.c.l.b16 %v428
        %v1674 = vunpack.c.h.b16 %v428
        %v1675 = vunpack.c.l.b16 %v429
        %v1676 = vunpack.c.h.b16 %v429
        %v1677 = vunpack.c.l.b16 %v430
        %v1678 = vunpack.c.h.b16 %v430
        %v1679 = vunpack.c.l.b16 %v431
        %v1680 = vunpack.c.h.b16 %v431
        %v1681 = vunpack.c.l.b16 %v432
        %v1682 = vunpack.c.h.b16 %v432
        %v1683 = vunpack.c.l.b16 %v433
        %v1684 = vunpack.c.h.b16 %v433
        %v1685 = vunpack.c.l.b16 %v434
        %v1686 = vunpack.c.h.b16 %v434
        %v1687 = vunpack.c.l.b16 %v435
        %v1688 = vunpack.c.h.b16 %v435
        %v1689 = vunpack.c.l.b16 %v436
        %v1690 = vunpack.c.h.b16 %v436
        %v1691 = vunpack.c.l.b16 %v437
        %v1692 = vunpack.c.h.b16 %v437
        %v1693 = vunpack.c.l.b16 %v438
        %v1694 = vunpack.c.h.b16 %v438
        %v1695 = vunpack.c.l.b16 %v439
        %v1696 = vunpack.c.h.b16 %v439
        %v1697 = vunpack.c.l.b16 %v440
        %v1698 = vunpack.c.h.b16 %v440
        %v1699 = vunpack.c.l.b16 %v441
        %v1700 = vunpack.c.h.b16 %v441
        %v1701 = vunpack.c.l.b16 %v442
        %v1702 = vunpack.c.h.b16 %v442
        %v1703 = vunpack.c.l.b16 %v443
        %v1704 = vunpack.c.h.b16 %v443
        %v1705 = vunpack.c.l.b16 %v444
        %v1706 = vunpack.c.h.b16 %v444
        %v1707 = vunpack.c.l.b16 %v445
        %v1708 = vunpack.c.h.b16 %v445
        %v1709 = vunpack.c.l.b16 %v446
        %v1710 = vunpack.c.h.b16 %v446
        %v1711 = vunpack.c.l.b16 %v447
        %v1712 = vunpack.c.h.b16 %v447
        %v1713 = vunpack.c.l.b16 %v448
        %v1714 = vunpack.c.h.b16 %v448
        %v1715 = vunpack.c.l.b16 %v449
        %v1716 = vunpack.c.h.b16 %v449
        %v1717 = vunpack.c.l.b16 %v450
        %v1718 = vunpack.c.h.b16 %v450
        %v1719 = vunpack.c.l.b16 %v451
        %v1720 = vunpack.c.h.b16 %v451
        %v1721 = vunpack.c.l.b16 %v452
        %v1722 = vunpack.c.h.b16 %v452
        %v1723 = vunpack.c.l.b16 %v453
        %v1724 = vunpack.c.h.b16 %v453
        %v1725 = vunpack.c.l.b16 %v454
        %v1726 = vunpack.c.h.b16 %v454
        %v1727 = vunpack.c.l.b16 %v455
        %v1728 = vunpack.c.h.b16 %v455
        %v1729 = vunpack.c.l.b16 %v456
        %v1730 = vunpack.c.h.b16 %v456
        %v1731 = vunpack.c.l.b16 %v457
        %v1732 = vunpack.c.h.b16 %v457
        %v1733 = vunpack.c.l.b16 %v458
        %v1734 = vunpack.c.h.b16 %v458
        %v1735 = vunpack.c.l.b16 %v459
        %v1736 = vunpack.c.h.b16 %v459
        %v1737 = vunpack.c.l.b16 %v460
        %v1738 = vunpack.c.h.b16 %v460
        %v1739 = vunpack.c.l.b16 %v461
        %v1740 = vunpack.c.h.b16 %v461
        %v1741 = vunpack.c.l.b16 %v462
        %v1742 = vunpack.c.h.b16 %v462
        %v1743 = vunpack.c.l.b16 %v463
        %v1744 = vunpack.c.h.b16 %v463
        %v1745 = vunpack.c.l.b16 %v464
        %v1746 = vunpack.c.h.b16 %v464
        %v1747 = vunpack.c.l.b16 %v465
        %v1748 = vunpack.c.h.b16 %v465
        %v1749 = vunpack.c.l.b16 %v466
        %v1750 = vunpack.c.h.b16 %v466
        %v1751 = vunpack.c.l.b16 %v467
        %v1752 = vunpack.c.h.b16 %v467
        %v1753 = vunpack.c.l.b16 %v468
        %v1754 = vunpack.c.h.b16 %v468
        %v1755 = vunpack.c.l.b16 %v469
        %v1756 = vunpack.c.h.b16 %v469
        %v1757 = vunpack.c.l.b16 %v470
        %v1758 = vunpack.c.h.b16 %v470
        %v1759 = vunpack.c.l.b16 %v471
        %v1760 = vunpack.c.h.b16 %v471
        %v1761 = vunpack.c.l.b16 %v472
        %v1762 = vunpack.c.h.b16 %v472
        %v1763 = vunpack.c.l.b16 %v473
        %v1764 = vunpack.c.h.b16 %v473
        %v1765 = vunpack.c.l.b16 %v474
        %v1766 = vunpack.c.h.b16 %v474
        %v1767 = vunpack.c.l.b16 %v475
        %v1768 = vunpack.c.h.b16 %v475
        %v1769 = vunpack.c.l.b16 %v476
        %v1770 = vunpack.c.h.b16 %v476
        %v1771 = vunpack.c.l.b16 %v477
        %v1772 = vunpack.c.h.b16 %v477
        %v1773 = vunpack.c.l.b16 %v478
        %v1774 = vunpack.c.h.b16 %v478
        %v1775 = vunpack.c.l.b16 %v479
        %v1776 = vunpack.c.h.b16 %v479
        %v1777 = vunpack.c.l.b16 %v480
        %v1778 = vunpack.c.h.b16 %v480
        %v1779 = vunpack.c.l.b16 %v481
        %v1780 = vunpack.c.h.b16 %v481
        %v1781 = vunpack.c.l.b16 %v482
        %v1782 = vunpack.c.h.b16 %v482
        %v1783 = vunpack.c.l.b16 %v483
        %v1784 = vunpack.c.h.b16 %v483
        %v1785 = vunpack.c.l.b16 %v484
        %v1786 = vunpack.c.h.b16 %v484
        %v1787 = vunpack.c.l.b16 %v485
        %v1788 = vunpack.c.h.b16 %v485
        %v1789 = vunpack.c.l.b16 %v486
        %v1790 = vunpack.c.h.b16 %v486
        %v1791 = vunpack.c.l.b16 %v487
        %v1792 = vunpack.c.h.b16 %v487
        %v1793 = vunpack.c.l.b16 %v488
        %v1794 = vunpack.c.h.b16 %v488
        %v1795 = vunpack.c.l.b16 %v489
        %v1796 = vunpack.c.h.b16 %v489
        %v1797 = vunpack.c.l.b16 %v490
        %v1798 = vunpack.c.h.b16 %v490
        %v1799 = vunpack.c.l.b16 %v491
        %v1800 = vunpack.c.h.b16 %v491
        %v1801 = vunpack.c.l.b16 %v492
        %v1802 = vunpack.c.h.b16 %v492
        %v1803 = vunpack.c.l.b16 %v493
        %v1804 = vunpack.c.h.b16 %v493
        %v1805 = vunpack.c.l.b16 %v494
        %v1806 = vunpack.c.h.b16 %v494
        %v1807 = vunpack.c.l.b16 %v495
        %v1808 = vunpack.c.h.b16 %v495
        %v1809 = vunpack.c.l.b16 %v496
        %v1810 = vunpack.c.h.b16 %v496
        %v1811 = vunpack.c.l.b16 %v497
        %v1812 = vunpack.c.h.b16 %v497
        %v1813 = vunpack.c.l.b16 %v498
        %v1814 = vunpack.c.h.b16 %v498
        %v1815 = vunpack.c.l.b16 %v499
        %v1816 = vunpack.c.h.b16 %v499
        %v1817 = vunpack.c.l.b16 %v500
        %v1818 = vunpack.c.h.b16 %v500
        %v1819 = vunpack.c.l.b16 %v501
        %v1820 = vunpack.c.h.b16 %v501
        %v1821 = vunpack.c.l.b16 %v502
        %v1822 = vunpack.c.h.b16 %v502
        %v1823 = vunpack.c.l.b16 %v503
        %v1824 = vunpack.c.h.b16 %v503
        %v1825 = vunpack.c.l.b16 %v504
        %v1826 = vunpack.c.h.b16 %v504
        %v1827 = vunpack.c.l.b16 %v505
        %v1828 = vunpack.c.h.b16 %v505
        %v1829 = vunpack.c.l.b16 %v506
        %v1830 = vunpack.c.h.b16 %v506
        %v1831 = vunpack.c.l.b16 %v507
        %v1832 = vunpack.c.h.b16 %v507
        %v1833 = vunpack.c.l.b16 %v508
        %v1834 = vunpack.c.h.b16 %v508
        %v1835 = vunpack.c.l.b16 %v509
        %v1836 = vunpack.c.h.b16 %v509
        %v1837 = vunpack.c.l.b16 %v510
        %v1838 = vunpack.c.h.b16 %v510
        %v1839 = vunpack.c.l.b16 %v511
        %v1840 = vunpack.c.h.b16 %v511
        %v1841 = vunpack.c.l.b16 %v512
        %v1842 = vunpack.c.h.b16 %v512
        %v1843 = vunpack.c.l.b16 %v513
        %v1844 = vunpack.c.h.b16 %v513
        %v1845 = vunpack.c.l.b16 %v514
        %v1846 = vunpack.c.h.b16 %v514
        %v1847 = vunpack.c.l.b16 %v515
        %v1848 = vunpack.c.h.b16 %v515
        %v1849 = vunpack.c.l.b16 %v516
        %v1850 = vunpack.c.h.b16 %v516
        %v1851 = vunpack.c.l.b16 %v517
        %v1852 = vunpack.c.h.b16 %v517
        %v1853 = vunpack.c.l.b16 %v518
        %v1854 = vunpack.c.h.b16 %v518
        %v1855 = vunpack.c.l.b16 %v519
        %v1856 = vunpack.c.h.b16 %v519
        %v1857 = vunpack.c.l.b16 %v520
        %v1858 = vunpack.c.h.b16 %v520
        %v1859 = vunpack.c.l.b16 %v521
        %v1860 = vunpack.c.h.b16 %v521
        %v1861 = vunpack.c.l.b16 %v522
        %v1862 = vunpack.c.h.b16 %v522
        %v1863 = vunpack.c.l.b16 %v523
        %v1864 = vunpack.c.h.b16 %v523
        %v1865 = vunpack.c.l.b16 %v524
        %v1866 = vunpack.c.h.b16 %v524
        %v1867 = vunpack.c.l.b16 %v525
        %v1868 = vunpack.c.h.b16 %v525
        %v1869 = vunpack.c.l.b16 %v526
        %v1870 = vunpack.c.h.b16 %v526
        %v1871 = vunpack.c.l.b16 %v527
        %v1872 = vunpack.c.h.b16 %v527
        %v1873 = vunpack.c.l.b16 %v528
        %v1874 = vunpack.c.h.b16 %v528
        %v1875 = vunpack.c.l.b16 %v529
        %v1876 = vunpack.c.h.b16 %v529
        %v1877 = vunpack.c.l.b16 %v530
        %v1878 = vunpack.c.h.b16 %v530
        %v1879 = vunpack.c.l.b16 %v531
        %v1880 = vunpack.c.h.b16 %v531
        %v1881 = vunpack.c.l.b16 %v532
        %v1882 = vunpack.c.h.b16 %v532
        %v1883 = vunpack.c.l.b16 %v533
        %v1884 = vunpack.c.h.b16 %v533
        %v1885 = vunpack.c.l.b16 %v534
        %v1886 = vunpack.c.h.b16 %v534
        %v1887 = vunpack.c.l.b16 %v535
        %v1888 = vunpack.c.h.b16 %v535
        %v1889 = vunpack.c.l.b16 %v536
        %v1890 = vunpack.c.h.b16 %v536
        %v1891 = vunpack.c.l.b16 %v537
        %v1892 = vunpack.c.h.b16 %v537
        %v1893 = vunpack.c.l.b16 %v538
        %v1894 = vunpack.c.h.b16 %v538
        %v1895 = vunpack.c.l.b16 %v539
        %v1896 = vunpack.c.h.b16 %v539
        %v1897 = vunpack.c.l.b16 %v540
        %v1898 = vunpack.c.h.b16 %v540
        %v1899 = vunpack.c.l.b16 %v541
        %v1900 = vunpack.c.h.b16 %v541
        %v1901 = vunpack.c.l.b16 %v542
        %v1902 = vunpack.c.h.b16 %v542
        %v1903 = vunpack.c.l.b16 %v543
        %v1904 = vunpack.c.h.b16 %v543
        %v1905 = vunpack.c.l.b16 %v544
        %v1906 = vunpack.c.h.b16 %v544
        %v1907 = vunpack.c.l.b16 %v545
        %v1908 = vunpack.c.h.b16 %v545
        %v1909 = vunpack.c.l.b16 %v546
        %v1910 = vunpack.c.h.b16 %v546
        %v1911 = vunpack.c.l.b16 %v547
        %v1912 = vunpack.c.h.b16 %v547
        %v1913 = vunpack.c.l.b16 %v548
        %v1914 = vunpack.c.h.b16 %v548
        %v1915 = vunpack.c.l.b16 %v549
        %v1916 = vunpack.c.h.b16 %v549
        %v1917 = vunpack.c.l.b16 %v550
        %v1918 = vunpack.c.h.b16 %v550
        %v1919 = vunpack.c.l.b16 %v551
        %v1920 = vunpack.c.h.b16 %v551
        %v1921 = vunpack.c.l.b16 %v552
        %v1922 = vunpack.c.h.b16 %v552
        %v1923 = vunpack.c.l.b16 %v553
        %v1924 = vunpack.c.h.b16 %v553
        %v1925 = vunpack.c.l.b16 %v554
        %v1926 = vunpack.c.h.b16 %v554
        %v1927 = vunpack.c.l.b16 %v555
        %v1928 = vunpack.c.h.b16 %v555
        %v1929 = vunpack.c.l.b16 %v556
        %v1930 = vunpack.c.h.b16 %v556
        %v1931 = vunpack.c.l.b16 %v557
        %v1932 = vunpack.c.h.b16 %v557
        %v1933 = vunpack.c.l.b16 %v558
        %v1934 = vunpack.c.h.b16 %v558
        %v1935 = vunpack.c.l.b16 %v559
        %v1936 = vunpack.c.h.b16 %v559
        %v1937 = vunpack.c.l.b16 %v560
        %v1938 = vunpack.c.h.b16 %v560
        %v1939 = vunpack.c.l.b16 %v561
        %v1940 = vunpack.c.h.b16 %v561
        %v1941 = vunpack.c.l.b16 %v562
        %v1942 = vunpack.c.h.b16 %v562
        %v1943 = vunpack.c.l.b16 %v563
        %v1944 = vunpack.c.h.b16 %v563
        %v1945 = vunpack.c.l.b16 %v564
        %v1946 = vunpack.c.h.b16 %v564
        %v1947 = vunpack.c.l.b16 %v565
        %v1948 = vunpack.c.h.b16 %v565
        %v1949 = vunpack.c.l.b16 %v566
        %v1950 = vunpack.c.h.b16 %v566
        %v1951 = vunpack.c.l.b16 %v567
        %v1952 = vunpack.c.h.b16 %v567
        %v1953 = vunpack.c.l.b16 %v568
        %v1954 = vunpack.c.h.b16 %v568
        %v1955 = vunpack.c.l.b16 %v569
        %v1956 = vunpack.c.h.b16 %v569
        %v1957 = vunpack.c.l.b16 %v570
        %v1958 = vunpack.c.h.b16 %v570
        %v1959 = vunpack.c.l.b16 %v571
        %v1960 = vunpack.c.h.b16 %v571
        %v1961 = vunpack.c.l.b16 %v572
        %v1962 = vunpack.c.h.b16 %v572
        %v1963 = vunpack.c.l.b16 %v573
        %v1964 = vunpack.c.h.b16 %v573
        %v1965 = vunpack.c.l.b16 %v574
        %v1966 = vunpack.c.h.b16 %v574
        %v1967 = vunpack.c.l.b16 %v575
        %v1968 = vunpack.c.h.b16 %v575
        %v1969 = vunpack.c.l.b16 %v576
        %v1970 = vunpack.c.h.b16 %v576
        %v1971 = vunpack.c.l.b16 %v577
        %v1972 = vunpack.c.h.b16 %v577
        %v1973 = vunpack.c.l.b16 %v578
        %v1974 = vunpack.c.h.b16 %v578
        %v1975 = vunpack.c.l.b16 %v579
        %v1976 = vunpack.c.h.b16 %v579
        %v1977 = vunpack.c.l.b16 %v580
        %v1978 = vunpack.c.h.b16 %v580
        %v1979 = vunpack.c.l.b16 %v581
        %v1980 = vunpack.c.h.b16 %v581
        %v1981 = vunpack.c.l.b16 %v582
        %v1982 = vunpack.c.h.b16 %v582
        %v1983 = vunpack.c.l.b16 %v583
        %v1984 = vunpack.c.h.b16 %v583
        %v1985 = vunpack.c.l.b16 %v584
        %v1986 = vunpack.c.h.b16 %v584
        %v1987 = vunpack.c.l.b16 %v585
        %v1988 = vunpack.c.h.b16 %v585
        %v1989 = vunpack.c.l.b16 %v586
        %v1990 = vunpack.c.h.b16 %v586
        %v1991 = vunpack.c.l.b16 %v587
        %v1992 = vunpack.c.h.b16 %v587
        %v1993 = vunpack.c.l.b16 %v588
        %v1994 = vunpack.c.h.b16 %v588
        %v1995 = vunpack.c.l.b16 %v589
        %v1996 = vunpack.c.h.b16 %v589
        %v1997 = vunpack.c.l.b16 %v590
        %v1998 = vunpack.c.h.b16 %v590
        %v1999 = vunpack.c.l.b16 %v591
        %v2000 = vunpack.c.h.b16 %v591
        %v2001 = vunpack.c.l.b16 %v592
        %v2002 = vunpack.c.h.b16 %v592
        %v2003 = vunpack.c.l.b16 %v593
        %v2004 = vunpack.c.h.b16 %v593
        %v2005 = vunpack.c.l.b16 %v594
        %v2006 = vunpack.c.h.b16 %v594
        %v2007 = vunpack.c.l.b16 %v595
        %v2008 = vunpack.c.h.b16 %v595
        %v2009 = vunpack.c.l.b16 %v596
        %v2010 = vunpack.c.h.b16 %v596
        %v2011 = vunpack.c.l.b16 %v597
        %v2012 = vunpack.c.h.b16 %v597
        %v2013 = vunpack.c.l.b16 %v598
        %v2014 = vunpack.c.h.b16 %v598
        %v2015 = vunpack.c.l.b16 %v599
        %v2016 = vunpack.c.h.b16 %v599
        %v2017 = vunpack.c.l.b16 %v600
        %v2018 = vunpack.c.h.b16 %v600
        %v2019 = vunpack.c.l.b16 %v601
        %v2020 = vunpack.c.h.b16 %v601
        %v2021 = vunpack.c.l.b16 %v602
        %v2022 = vunpack.c.h.b16 %v602
        %v2023 = vunpack.c.l.b16 %v603
        %v2024 = vunpack.c.h.b16 %v603
        %v2025 = vunpack.c.l.b16 %v604
        %v2026 = vunpack.c.h.b16 %v604
        %v2027 = vunpack.c.l.b16 %v605
        %v2028 = vunpack.c.h.b16 %v605
        %v2029 = vunpack.c.l.b16 %v606
        %v2030 = vunpack.c.h.b16 %v606
        %v2031 = vunpack.c.l.b16 %v607
        %v2032 = vunpack.c.h.b16 %v607
        %v2033 = vunpack.c.l.b16 %v608
        %v2034 = vunpack.c.h.b16 %v608
        %v2035 = vunpack.c.l.b16 %v609
        %v2036 = vunpack.c.h.b16 %v609
        %v2037 = vunpack.c.l.b16 %v610
        %v2038 = vunpack.c.h.b16 %v610
        %v2039 = vunpack.c.l.b16 %v611
        %v2040 = vunpack.c.h.b16 %v611
        %v2041 = vunpack.c.l.b16 %v612
        %v2042 = vunpack.c.h.b16 %v612
        %v2043 = vunpack.c.l.b16 %v613
        %v2044 = vunpack.c.h.b16 %v613
        %v2045 = vunpack.c.l.b16 %v614
        %v2046 = vunpack.c.h.b16 %v614
        %v2047 = vunpack.c.l.b16 %v615
        %v2048 = vunpack.c.h.b16 %v615
        %v2049 = vunpack.c.l.b16 %v616
        %v2050 = vunpack.c.h.b16 %v616
        %v2051 = vunpack.c.l.b16 %v617
        %v2052 = vunpack.c.h.b16 %v617
        %v2053 = vunpack.c.l.b16 %v618
        %v2054 = vunpack.c.h.b16 %v618
        %v2055 = vunpack.c.l.b16 %v619
        %v2056 = vunpack.c.h.b16 %v619
        %v2057 = vunpack.c.l.b16 %v620
        %v2058 = vunpack.c.h.b16 %v620
        %v2059 = vunpack.c.l.b16 %v621
        %v2060 = vunpack.c.h.b16 %v621
        %v2061 = vunpack.c.l.b16 %v622
        %v2062 = vunpack.c.h.b16 %v622
        %v2063 = vunpack.c.l.b16 %v623
        %v2064 = vunpack.c.h.b16 %v623
        %v2065 = vunpack.c.l.b16 %v624
        %v2066 = vunpack.c.h.b16 %v624
        %v2067 = vunpack.c.l.b16 %v625
        %v2068 = vunpack.c.h.b16 %v625
        %v2069 = vunpack.c.l.b16 %v626
        %v2070 = vunpack.c.h.b16 %v626
        %v2071 = vunpack.c.l.b16 %v627
        %v2072 = vunpack.c.h.b16 %v627
        %v2073 = vunpack.c.l.b16 %v628
        %v2074 = vunpack.c.h.b16 %v628
        %v2075 = vunpack.c.l.b16 %v629
        %v2076 = vunpack.c.h.b16 %v629
        %v2077 = vunpack.c.l.b16 %v630
        %v2078 = vunpack.c.h.b16 %v630
        %v2079 = vunpack.c.l.b16 %v631
        %v2080 = vunpack.c.h.b16 %v631
        %v2081 = vunpack.c.l.b16 %v632
        %v2082 = vunpack.c.h.b16 %v632
        %v2083 = vunpack.c.l.b16 %v633
        %v2084 = vunpack.c.h.b16 %v633
        %v2085 = vunpack.c.l.b16 %v634
        %v2086 = vunpack.c.h.b16 %v634
        %v2087 = vunpack.c.l.b16 %v635
        %v2088 = vunpack.c.h.b16 %v635
        %v2089 = vunpack.c.l.b16 %v636
        %v2090 = vunpack.c.h.b16 %v636
        %v2091 = vunpack.c.l.b16 %v637
        %v2092 = vunpack.c.h.b16 %v637
        %v2093 = vunpack.c.l.b16 %v638
        %v2094 = vunpack.c.h.b16 %v638
        %v2095 = vunpack.c.l.b16 %v639
        %v2096 = vunpack.c.h.b16 %v639
        %v2097 = vunpack.c.l.b16 %v640
        %v2098 = vunpack.c.h.b16 %v640
        %v2099 = vunpack.c.l.b16 %v641
        %v2100 = vunpack.c.h.b16 %v641
        %v2101 = vunpack.c.l.b16 %v642
        %v2102 = vunpack.c.h.b16 %v642
        %v2103 = vunpack.c.l.b16 %v643
        %v2104 = vunpack.c.h.b16 %v643
        %v2105 = vunpack.c.l.b16 %v644
        %v2106 = vunpack.c.h.b16 %v644
        %v2107 = vunpack.c.l.b16 %v645
        %v2108 = vunpack.c.h.b16 %v645
        %v2109 = vunpack.c.l.b16 %v646
        %v2110 = vunpack.c.h.b16 %v646
        %v2111 = vunpack.c.l.b16 %v647
        %v2112 = vunpack.c.h.b16 %v647
        %v2113 = vunpack.c.l.b16 %v648
        %v2114 = vunpack.c.h.b16 %v648
        %v2115 = vunpack.c.l.b16 %v649
        %v2116 = vunpack.c.h.b16 %v649
        %v2117 = vunpack.c.l.b16 %v650
        %v2118 = vunpack.c.h.b16 %v650
        %v2119 = vunpack.c.l.b16 %v651
        %v2120 = vunpack.c.h.b16 %v651
        %v2121 = vunpack.c.l.b16 %v652
        %v2122 = vunpack.c.h.b16 %v652
        %v2123 = vunpack.c.l.b16 %v653
        %v2124 = vunpack.c.h.b16 %v653
        %v2125 = vunpack.c.l.b16 %v654
        %v2126 = vunpack.c.h.b16 %v654
        %v2127 = vunpack.c.l.b16 %v655
        %v2128 = vunpack.c.h.b16 %v655
        %v2129 = vunpack.c.l.b16 %v656
        %v2130 = vunpack.c.h.b16 %v656
        %v2131 = vunpack.c.l.b16 %v657
        %v2132 = vunpack.c.h.b16 %v657
        %v2133 = vunpack.c.l.b16 %v658
        %v2134 = vunpack.c.h.b16 %v658
        %v2135 = vunpack.c.l.b16 %v659
        %v2136 = vunpack.c.h.b16 %v659
        %v2137 = vunpack.c.l.b16 %v660
        %v2138 = vunpack.c.h.b16 %v660
        %v2139 = vunpack.c.l.b16 %v661
        %v2140 = vunpack.c.h.b16 %v661
        %v2141 = vunpack.c.l.b16 %v662
        %v2142 = vunpack.c.h.b16 %v662
        %v2143 = vunpack.c.l.b16 %v663
        %v2144 = vunpack.c.h.b16 %v663
        %v2145 = vunpack.c.l.b16 %v664
        %v2146 = vunpack.c.h.b16 %v664
        %v2147 = vunpack.c.l.b16 %v665
        %v2148 = vunpack.c.h.b16 %v665
        %v2149 = vunpack.c.l.b16 %v666
        %v2150 = vunpack.c.h.b16 %v666
        %v2151 = vunpack.c.l.b16 %v667
        %v2152 = vunpack.c.h.b16 %v667
        %v2153 = vunpack.c.l.b16 %v668
        %v2154 = vunpack.c.h.b16 %v668
        %v2155 = vunpack.c.l.b16 %v669
        %v2156 = vunpack.c.h.b16 %v669
        %v2157 = vunpack.c.l.b16 %v670
        %v2158 = vunpack.c.h.b16 %v670
        %v2159 = vunpack.c.l.b16 %v671
        %v2160 = vunpack.c.h.b16 %v671
        %v2161 = vunpack.c.l.b16 %v672
        %v2162 = vunpack.c.h.b16 %v672
        %v2163 = vunpack.c.l.b16 %v673
        %v2164 = vunpack.c.h.b16 %v673
        %v2165 = vunpack.c.l.b16 %v674
        %v2166 = vunpack.c.h.b16 %v674
        %v2167 = vunpack.c.l.b16 %v675
        %v2168 = vunpack.c.h.b16 %v675
        %v2169 = vunpack.c.l.b16 %v676
        %v2170 = vunpack.c.h.b16 %v676
        %v2171 = vunpack.c.l.b16 %v677
        %v2172 = vunpack.c.h.b16 %v677
        %v2173 = vunpack.c.l.b16 %v678
        %v2174 = vunpack.c.h.b16 %v678
        %v2175 = vunpack.c.l.b16 %v679
        %v2176 = vunpack.c.h.b16 %v679
        %v2177 = vunpack.c.l.b16 %v680
        %v2178 = vunpack.c.h.b16 %v680
        %v2179 = vunpack.c.l.b16 %v681
        %v2180 = vunpack.c.h.b16 %v681
        %v2181 = vunpack.c.l.b16 %v682
        %v2182 = vunpack.c.h.b16 %v682
        %v2183 = vunpack.c.l.b16 %v683
        %v2184 = vunpack.c.h.b16 %v683
        %v2185 = vunpack.c.l.b16 %v684
        %v2186 = vunpack.c.h.b16 %v684
        %v2187 = vunpack.c.l.b16 %v685
        %v2188 = vunpack.c.h.b16 %v685
        %v2189 = vunpack.c.l.b16 %v686
        %v2190 = vunpack.c.h.b16 %v686
        %v2191 = vunpack.c.l.b16 %v687
        %v2192 = vunpack.c.h.b16 %v687
        %v2193 = vunpack.c.l.b16 %v688
        %v2194 = vunpack.c.h.b16 %v688
        %v2195 = vunpack.c.l.b16 %v689
        %v2196 = vunpack.c.h.b16 %v689
        %v2197 = vunpack.c.l.b16 %v690
        %v2198 = vunpack.c.h.b16 %v690
        %v2199 = vunpack.c.l.b16 %v691
        %v2200 = vunpack.c.h.b16 %v691
        %v2201 = vunpack.c.l.b16 %v692
        %v2202 = vunpack.c.h.b16 %v692
        %v2203 = vunpack.c.l.b16 %v693
        %v2204 = vunpack.c.h.b16 %v693
        %v2205 = vunpack.c.l.b16 %v694
        %v2206 = vunpack.c.h.b16 %v694
        %v2207 = vunpack.c.l.b16 %v695
        %v2208 = vunpack.c.h.b16 %v695
        %v2209 = vunpack.c.l.b16 %v696
        %v2210 = vunpack.c.h.b16 %v696
        %v2211 = vunpack.c.l.b16 %v697
        %v2212 = vunpack.c.h.b16 %v697
        %v2213 = vunpack.c.l.b16 %v698
        %v2214 = vunpack.c.h.b16 %v698
        %v2215 = vunpack.c.l.b16 %v699
        %v2216 = vunpack.c.h.b16 %v699
        %v2217 = vunpack.c.l.b16 %v700
        %v2218 = vunpack.c.h.b16 %v700
        %v2219 = vunpack.c.l.b16 %v701
        %v2220 = vunpack.c.h.b16 %v701
        %v2221 = vunpack.c.l.b16 %v702
        %v2222 = vunpack.c.h.b16 %v702
        %v2223 = vunpack.c.l.b16 %v703
        %v2224 = vunpack.c.h.b16 %v703
        %v2225 = vunpack.c.l.b16 %v704
        %v2226 = vunpack.c.h.b16 %v704
        %v2227 = vunpack.c.l.b16 %v705
        %v2228 = vunpack.c.h.b16 %v705
        %v2229 = vunpack.c.l.b16 %v706
        %v2230 = vunpack.c.h.b16 %v706
        %v2231 = vunpack.c.l.b16 %v707
        %v2232 = vunpack.c.h.b16 %v707
        %v2233 = vunpack.c.l.b16 %v708
        %v2234 = vunpack.c.h.b16 %v708
        %v2235 = vunpack.c.l.b16 %v709
        %v2236 = vunpack.c.h.b16 %v709
        %v2237 = vunpack.c.l.b16 %v710
        %v2238 = vunpack.c.h.b16 %v710
        %v2239 = vunpack.c.l.b16 %v711
        %v2240 = vunpack.c.h.b16 %v711
        %v2241 = vunpack.c.l.b16 %v712
        %v2242 = vunpack.c.h.b16 %v712
        %v2243 = vunpack.c.l.b16 %v713
        %v2244 = vunpack.c.h.b16 %v713
        %v2245 = vunpack.c.l.b16 %v714
        %v2246 = vunpack.c.h.b16 %v714
        %v2247 = vunpack.c.l.b16 %v715
        %v2248 = vunpack.c.h.b16 %v715
        %v2249 = vunpack.c.l.b16 %v716
        %v2250 = vunpack.c.h.b16 %v716
        %v2251 = vunpack.c.l.b16 %v717
        %v2252 = vunpack.c.h.b16 %v717
        %v2253 = vunpack.c.l.b16 %v718
        %v2254 = vunpack.c.h.b16 %v718
        %v2255 = vunpack.c.l.b16 %v719
        %v2256 = vunpack.c.h.b16 %v719
        %v2257 = vunpack.c.l.b16 %v720
        %v2258 = vunpack.c.h.b16 %v720
        %v2259 = vunpack.c.l.b16 %v721
        %v2260 = vunpack.c.h.b16 %v721
        %v2261 = vunpack.c.l.b16 %v722
        %v2262 = vunpack.c.h.b16 %v722
        %v2263 = vunpack.c.l.b16 %v723
        %v2264 = vunpack.c.h.b16 %v723
        %v2265 = vunpack.c.l.b16 %v724
        %v2266 = vunpack.c.h.b16 %v724
        %v2267 = vunpack.c.l.b16 %v725
        %v2268 = vunpack.c.h.b16 %v725
        %v2269 = vunpack.c.l.b16 %v726
        %v2270 = vunpack.c.h.b16 %v726
        %v2271 = vunpack.c.l.b16 %v727
        %v2272 = vunpack.c.h.b16 %v727
        %v2273 = vunpack.c.l.b16 %v728
        %v2274 = vunpack.c.h.b16 %v728
        %v2275 = vunpack.c.l.b16 %v729
        %v2276 = vunpack.c.h.b16 %v729
        %v2277 = vunpack.c.l.b16 %v730
        %v2278 = vunpack.c.h.b16 %v730
        %v2279 = vunpack.c.l.b16 %v731
        %v2280 = vunpack.c.h.b16 %v731
        %v2281 = vunpack.c.l.b16 %v732
        %v2282 = vunpack.c.h.b16 %v732
        %v2283 = vunpack.c.l.b16 %v733
        %v2284 = vunpack.c.h.b16 %v733
        %v2285 = vunpack.c.l.b16 %v734
        %v2286 = vunpack.c.h.b16 %v734
        %v2287 = vunpack.c.l.b16 %v735
        %v2288 = vunpack.c.h.b16 %v735
        %v2289 = vunpack.c.l.b16 %v736
        %v2290 = vunpack.c.h.b16 %v736
        %v2291 = vunpack.c.l.b16 %v737
        %v2292 = vunpack.c.h.b16 %v737
        %v2293 = vunpack.c.l.b16 %v738
        %v2294 = vunpack.c.h.b16 %v738
        %v2295 = vunpack.c.l.b16 %v739
        %v2296 = vunpack.c.h.b16 %v739
        %v2297 = vunpack.c.l.b16 %v740
        %v2298 = vunpack.c.h.b16 %v740
        %v2299 = vunpack.c.l.b16 %v741
        %v2300 = vunpack.c.h.b16 %v741
        %v2301 = vunpack.c.l.b16 %v742
        %v2302 = vunpack.c.h.b16 %v742
        %v2303 = vunpack.c.l.b16 %v743
        %v2304 = vunpack.c.h.b16 %v743
        %v2305 = vunpack.c.l.b16 %v744
        %v2306 = vunpack.c.h.b16 %v744
        %v2307 = vunpack.c.l.b16 %v745
        %v2308 = vunpack.c.h.b16 %v745
        %v2309 = vunpack.c.l.b16 %v746
        %v2310 = vunpack.c.h.b16 %v746
        %v2311 = vunpack.c.l.b16 %v747
        %v2312 = vunpack.c.h.b16 %v747
        %v2313 = vunpack.c.l.b16 %v748
        %v2314 = vunpack.c.h.b16 %v748
        %v2315 = vunpack.c.l.b16 %v749
        %v2316 = vunpack.c.h.b16 %v749
        %v2317 = vunpack.c.l.b16 %v750
        %v2318 = vunpack.c.h.b16 %v750
        %v2319 = vunpack.c.l.b16 %v751
        %v2320 = vunpack.c.h.b16 %v751
        %v2321 = vunpack.c.l.b16 %v752
        %v2322 = vunpack.c.h.b16 %v752
        %v2323 = vunpack.c.l.b16 %v753
        %v2324 = vunpack.c.h.b16 %v753
        %v2325 = vunpack.c.l.b16 %v754
        %v2326 = vunpack.c.h.b16 %v754
        %v2327 = vpack.c.b16 %v1307, %v1303
        %v2328 = vpack.c.b16 %v1308, %v1304
        %v2329 = vpack.c.b16 %v1309, %v1305
        %v2330 = vpack.c.b16 %v1310, %v1306
        %v2331 = vpack.c.b16 %v1315, %v1311
        %v2332 = vpack.c.b16 %v1316, %v1312
        %v2333 = vpack.c.b16 %v1317, %v1313
        %v2334 = vpack.c.b16 %v1318, %v1314
        %v2335 = vpack.c.b16 %v1323, %v1319
        %v2336 = vpack.c.b16 %v1324, %v1320
        %v2337 = vpack.c.b16 %v1325, %v1321
        %v2338 = vpack.c.b16 %v1326, %v1322
        %v2339 = vpack.c.b16 %v1331, %v1327
        %v2340 = vpack.c.b16 %v1332, %v1328
        %v2341 = vpack.c.b16 %v1333, %v1329
        %v2342 = vpack.c.b16 %v1334, %v1330
        %v2343 = vpack.c.b16 %v1339, %v1335
        %v2344 = vpack.c.b16 %v1340, %v1336
        %v2345 = vpack.c.b16 %v1341, %v1337
        %v2346 = vpack.c.b16 %v1342, %v1338
        %v2347 = vpack.c.b16 %v1347, %v1343
        %v2348 = vpack.c.b16 %v1348, %v1344
        %v2349 = vpack.c.b16 %v1349, %v1345
        %v2350 = vpack.c.b16 %v1350, %v1346
        %v2351 = vpack.c.b16 %v1355, %v1351
        %v2352 = vpack.c.b16 %v1356, %v1352
        %v2353 = vpack.c.b16 %v1357, %v1353
        %v2354 = vpack.c.b16 %v1358, %v1354
        %v2355 = vpack.c.b16 %v1363, %v1359
        %v2356 = vpack.c.b16 %v1364, %v1360
        %v2357 = vpack.c.b16 %v1365, %v1361
        %v2358 = vpack.c.b16 %v1366, %v1362
        %v2359 = vpack.c.b16 %v1371, %v1367
        %v2360 = vpack.c.b16 %v1372, %v1368
        %v2361 = vpack.c.b16 %v1373, %v1369
        %v2362 = vpack.c.b16 %v1374, %v1370
        %v2363 = vpack.c.b16 %v1379, %v1375
        %v2364 = vpack.c.b16 %v1380, %v1376
        %v2365 = vpack.c.b16 %v1381, %v1377
        %v2366 = vpack.c.b16 %v1382, %v1378
        %v2367 = vpack.c.b16 %v1387, %v1383
        %v2368 = vpack.c.b16 %v1388, %v1384
        %v2369 = vpack.c.b16 %v1389, %v1385
        %v2370 = vpack.c.b16 %v1390, %v1386
        %v2371 = vpack.c.b16 %v1395, %v1391
        %v2372 = vpack.c.b16 %v1396, %v1392
        %v2373 = vpack.c.b16 %v1397, %v1393
        %v2374 = vpack.c.b16 %v1398, %v1394
        %v2375 = vpack.c.b16 %v1403, %v1399
        %v2376 = vpack.c.b16 %v1404, %v1400
        %v2377 = vpack.c.b16 %v1405, %v1401
        %v2378 = vpack.c.b16 %v1406, %v1402
        %v2379 = vpack.c.b16 %v1411, %v1407
        %v2380 = vpack.c.b16 %v1412, %v1408
        %v2381 = vpack.c.b16 %v1413, %v1409
        %v2382 = vpack.c.b16 %v1414, %v1410
        %v2383 = vpack.c.b16 %v1419, %v1415
        %v2384 = vpack.c.b16 %v1420, %v1416
        %v2385 = vpack.c.b16 %v1421, %v1417
        %v2386 = vpack.c.b16 %v1422, %v1418
        %v2387 = vpack.c.b16 %v1427, %v1423
        %v2388 = vpack.c.b16 %v1428, %v1424
        %v2389 = vpack.c.b16 %v1429, %v1425
        %v2390 = vpack.c.b16 %v1430, %v1426
        %v2391 = vpack.c.b16 %v1435, %v1431
        %v2392 = vpack.c.b16 %v1436, %v1432
        %v2393 = vpack.c.b16 %v1437, %v1433
        %v2394 = vpack.c.b16 %v1438, %v1434
        %v2395 = vpack.c.b16 %v1443, %v1439
        %v2396 = vpack.c.b16 %v1444, %v1440
        %v2397 = vpack.c.b16 %v1445, %v1441
        %v2398 = vpack.c.b16 %v1446, %v1442
        %v2399 = vpack.c.b16 %v1451, %v1447
        %v2400 = vpack.c.b16 %v1452, %v1448
        %v2401 = vpack.c.b16 %v1453, %v1449
        %v2402 = vpack.c.b16 %v1454, %v1450
        %v2403 = vpack.c.b16 %v1459, %v1455
        %v2404 = vpack.c.b16 %v1460, %v1456
        %v2405 = vpack.c.b16 %v1461, %v1457
        %v2406 = vpack.c.b16 %v1462, %v1458
        %v2407 = vpack.c.b16 %v1467, %v1463
        %v2408 = vpack.c.b16 %v1468, %v1464
        %v2409 = vpack.c.b16 %v1469, %v1465
        %v2410 = vpack.c.b16 %v1470, %v1466
        %v2411 = vpack.c.b16 %v1475, %v1471
        %v2412 = vpack.c.b16 %v1476, %v1472
        %v2413 = vpack.c.b16 %v1477, %v1473
        %v2414 = vpack.c.b16 %v1478, %v1474
        %v2415 = vpack.c.b16 %v1483, %v1479
        %v2416 = vpack.c.b16 %v1484, %v1480
        %v2417 = vpack.c.b16 %v1485, %v1481
        %v2418 = vpack.c.b16 %v1486, %v1482
        %v2419 = vpack.c.b16 %v1491, %v1487
        %v2420 = vpack.c.b16 %v1492, %v1488
        %v2421 = vpack.c.b16 %v1493, %v1489
        %v2422 = vpack.c.b16 %v1494, %v1490
        %v2423 = vpack.c.b16 %v1499, %v1495
        %v2424 = vpack.c.b16 %v1500, %v1496
        %v2425 = vpack.c.b16 %v1501, %v1497
        %v2426 = vpack.c.b16 %v1502, %v1498
        %v2427 = vpack.c.b16 %v1507, %v1503
        %v2428 = vpack.c.b16 %v1508, %v1504
        %v2429 = vpack.c.b16 %v1509, %v1505
        %v2430 = vpack.c.b16 %v1510, %v1506
        %v2431 = vpack.c.b16 %v1515, %v1511
        %v2432 = vpack.c.b16 %v1516, %v1512
        %v2433 = vpack.c.b16 %v1517, %v1513
        %v2434 = vpack.c.b16 %v1518, %v1514
        %v2435 = vpack.c.b16 %v1523, %v1519
        %v2436 = vpack.c.b16 %v1524, %v1520
        %v2437 = vpack.c.b16 %v1525, %v1521
        %v2438 = vpack.c.b16 %v1526, %v1522
        %v2439 = vpack.c.b16 %v1531, %v1527
        %v2440 = vpack.c.b16 %v1532, %v1528
        %v2441 = vpack.c.b16 %v1533, %v1529
        %v2442 = vpack.c.b16 %v1534, %v1530
        %v2443 = vpack.c.b16 %v1539, %v1535
        %v2444 = vpack.c.b16 %v1540, %v1536
        %v2445 = vpack.c.b16 %v1541, %v1537
        %v2446 = vpack.c.b16 %v1542, %v1538
        %v2447 = vpack.c.b16 %v1547, %v1543
        %v2448 = vpack.c.b16 %v1548, %v1544
        %v2449 = vpack.c.b16 %v1549, %v1545
        %v2450 = vpack.c.b16 %v1550, %v1546
        %v2451 = vpack.c.b16 %v1555, %v1551
        %v2452 = vpack.c.b16 %v1556, %v1552
        %v2453 = vpack.c.b16 %v1557, %v1553
        %v2454 = vpack.c.b16 %v1558, %v1554
        %v2455 = vpack.c.b16 %v1563, %v1559
        %v2456 = vpack.c.b16 %v1564, %v1560
        %v2457 = vpack.c.b16 %v1565, %v1561
        %v2458 = vpack.c.b16 %v1566, %v1562
        %v2459 = vpack.c.b16 %v1571, %v1567
        %v2460 = vpack.c.b16 %v1572, %v1568
        %v2461 = vpack.c.b16 %v1573, %v1569
        %v2462 = vpack.c.b16 %v1574, %v1570
        %v2463 = vpack.c.b16 %v1579, %v1575
        %v2464 = vpack.c.b16 %v1580, %v1576
        %v2465 = vpack.c.b16 %v1581, %v1577
        %v2466 = vpack.c.b16 %v1582, %v1578
        %v2467 = vpack.c.b16 %v1587, %v1583
        %v2468 = vpack.c.b16 %v1588, %v1584
        %v2469 = vpack.c.b16 %v1589, %v1585
        %v2470 = vpack.c.b16 %v1590, %v1586
        %v2471 = vpack.c.b16 %v1595, %v1591
        %v2472 = vpack.c.b16 %v1596, %v1592
        %v2473 = vpack.c.b16 %v1597, %v1593
        %v2474 = vpack.c.b16 %v1598, %v1594
        %v2475 = vpack.c.b16 %v1603, %v1599
        %v2476 = vpack.c.b16 %v1604, %v1600
        %v2477 = vpack.c.b16 %v1605, %v1601
        %v2478 = vpack.c.b16 %v1606, %v1602
        %v2479 = vpack.c.b16 %v1611, %v1607
        %v2480 = vpack.c.b16 %v1612, %v1608
        %v2481 = vpack.c.b16 %v1613, %v1609
        %v2482 = vpack.c.b16 %v1614, %v1610
        %v2483 = vpack.c.b16 %v1619, %v1615
        %v2484 = vpack.c.b16 %v1620, %v1616
        %v2485 = vpack.c.b16 %v1621, %v1617
        %v2486 = vpack.c.b16 %v1622, %v1618
        %v2487 = vpack.c.b16 %v1627, %v1623
        %v2488 = vpack.c.b16 %v1628, %v1624
        %v2489 = vpack.c.b16 %v1629, %v1625
        %v2490 = vpack.c.b16 %v1630, %v1626
        %v2491 = vpack.c.b16 %v1635, %v1631
        %v2492 = vpack.c.b16 %v1636, %v1632
        %v2493 = vpack.c.b16 %v1637, %v1633
        %v2494 = vpack.c.b16 %v1638, %v1634
        %v2495 = vpack.c.b16 %v1643, %v1639
        %v2496 = vpack.c.b16 %v1644, %v1640
        %v2497 = vpack.c.b16 %v1645, %v1641
        %v2498 = vpack.c.b16 %v1646, %v1642
        %v2499 = vpack.c.b16 %v1651, %v1647
        %v2500 = vpack.c.b16 %v1652, %v1648
        %v2501 = vpack.c.b16 %v1653, %v1649
        %v2502 = vpack.c.b16 %v1654, %v1650
        %v2503 = vpack.c.b16 %v1659, %v1655
        %v2504 = vpack.c.b16 %v1660, %v1656
        %v2505 = vpack.c.b16 %v1661, %v1657
        %v2506 = vpack.c.b16 %v1662, %v1658
        %v2507 = vpack.c.b16 %v1667, %v1663
        %v2508 = vpack.c.b16 %v1668, %v1664
        %v2509 = vpack.c.b16 %v1669, %v1665
        %v2510 = vpack.c.b16 %v1670, %v1666
        %v2511 = vpack.c.b16 %v1675, %v1671
        %v2512 = vpack.c.b16 %v1676, %v1672
        %v2513 = vpack.c.b16 %v1677, %v1673
        %v2514 = vpack.c.b16 %v1678, %v1674
        %v2515 = vpack.c.b16 %v1683, %v1679
        %v2516 = vpack.c.b16 %v1684, %v1680
        %v2517 = vpack.c.b16 %v1685, %v1681
        %v2518 = vpack.c.b16 %v1686, %v1682
        %v2519 = vpack.c.b16 %v1691, %v1687
        %v2520 = vpack.c.b16 %v1692, %v1688
        %v2521 = vpack.c.b16 %v1693, %v1689
        %v2522 = vpack.c.b16 %v1694, %v1690
        %v2523 = vpack.c.b16 %v1699, %v1695
        %v2524 = vpack.c.b16 %v1700, %v1696
        %v2525 = vpack.c.b16 %v1701, %v1697
        %v2526 = vpack.c.b16 %v1702, %v1698
        %v2527 = vpack.c.b16 %v1707, %v1703
        %v2528 = vpack.c.b16 %v1708, %v1704
        %v2529 = vpack.c.b16 %v1709, %v1705
        %v2530 = vpack.c.b16 %v1710, %v1706
        %v2531 = vpack.c.b16 %v1715, %v1711
        %v2532 = vpack.c.b16 %v1716, %v1712
        %v2533 = vpack.c.b16 %v1717, %v1713
        %v2534 = vpack.c.b16 %v1718, %v1714
        %v2535 = vpack.c.b16 %v1723, %v1719
        %v2536 = vpack.c.b16 %v1724, %v1720
        %v2537 = vpack.c.b16 %v1725, %v1721
        %v2538 = vpack.c.b16 %v1726, %v1722
        %v2539 = vpack.c.b16 %v1731, %v1727
        %v2540 = vpack.c.b16 %v1732, %v1728
        %v2541 = vpack.c.b16 %v1733, %v1729
        %v2542 = vpack.c.b16 %v1734, %v1730
        %v2543 = vpack.c.b16 %v1739, %v1735
        %v2544 = vpack.c.b16 %v1740, %v1736
        %v2545 = vpack.c.b16 %v1741, %v1737
        %v2546 = vpack.c.b16 %v1742, %v1738
        %v2547 = vpack.c.b16 %v1747, %v1743
        %v2548 = vpack.c.b16 %v1748, %v1744
        %v2549 = vpack.c.b16 %v1749, %v1745
        %v2550 = vpack.c.b16 %v1750, %v1746
        %v2551 = vpack.c.b16 %v1755, %v1751
        %v2552 = vpack.c.b16 %v1756, %v1752
        %v2553 = vpack.c.b16 %v1757, %v1753
        %v2554 = vpack.c.b16 %v1758, %v1754
        %v2555 = vpack.c.b16 %v1763, %v1759
        %v2556 = vpack.c.b16 %v1764, %v1760
        %v2557 = vpack.c.b16 %v1765, %v1761
        %v2558 = vpack.c.b16 %v1766, %v1762
        %v2559 = vpack.c.b16 %v1771, %v1767
        %v2560 = vpack.c.b16 %v1772, %v1768
        %v2561 = vpack.c.b16 %v1773, %v1769
        %v2562 = vpack.c.b16 %v1774, %v1770
        %v2563 = vpack.c.b16 %v1779, %v1775
        %v2564 = vpack.c.b16 %v1780, %v1776
        %v2565 = vpack.c.b16 %v1781, %v1777
        %v2566 = vpack.c.b16 %v1782, %v1778
        %v2567 = vpack.c.b16 %v1787, %v1783
        %v2568 = vpack.c.b16 %v1788, %v1784
        %v2569 = vpack.c.b16 %v1789, %v1785
        %v2570 = vpack.c.b16 %v1790, %v1786
        %v2571 = vpack.c.b16 %v1795, %v1791
        %v2572 = vpack.c.b16 %v1796, %v1792
        %v2573 = vpack.c.b16 %v1797, %v1793
        %v2574 = vpack.c.b16 %v1798, %v1794
        %v2575 = vpack.c.b16 %v1803, %v1799
        %v2576 = vpack.c.b16 %v1804, %v1800
        %v2577 = vpack.c.b16 %v1805, %v1801
        %v2578 = vpack.c.b16 %v1806, %v1802
        %v2579 = vpack.c.b16 %v1811, %v1807
        %v2580 = vpack.c.b16 %v1812, %v1808
        %v2581 = vpack.c.b16 %v1813, %v1809
        %v2582 = vpack.c.b16 %v1814, %v1810
        %v2583 = vpack.c.b16 %v1819, %v1815
        %v2584 = vpack.c.b16 %v1820, %v1816
        %v2585 = vpack.c.b16 %v1821, %v1817
        %v2586 = vpack.c.b16 %v1822, %v1818
        %v2587 = vpack.c.b16 %v1827, %v1823
        %v2588 = vpack.c.b16 %v1828, %v1824
        %v2589 = vpack.c.b16 %v1829, %v1825
        %v2590 = vpack.c.b16 %v1830, %v1826
        %v2591 = vpack.c.b16 %v1835, %v1831
        %v2592 = vpack.c.b16 %v1836, %v1832
        %v2593 = vpack.c.b16 %v1837, %v1833
        %v2594 = vpack.c.b16 %v1838, %v1834
        %v2595 = vpack.c.b16 %v1843, %v1839
        %v2596 = vpack.c.b16 %v1844, %v1840
        %v2597 = vpack.c.b16 %v1845, %v1841
        %v2598 = vpack.c.b16 %v1846, %v1842
        %v2599 = vpack.c.b16 %v1851, %v1847
        %v2600 = vpack.c.b16 %v1852, %v1848
        %v2601 = vpack.c.b16 %v1853, %v1849
        %v2602 = vpack.c.b16 %v1854, %v1850
        %v2603 = vpack.c.b16 %v1859, %v1855
        %v2604 = vpack.c.b16 %v1860, %v1856
        %v2605 = vpack.c.b16 %v1861, %v1857
        %v2606 = vpack.c.b16 %v1862, %v1858
        %v2607 = vpack.c.b16 %v1867, %v1863
        %v2608 = vpack.c.b16 %v1868, %v1864
        %v2609 = vpack.c.b16 %v1869, %v1865
        %v2610 = vpack.c.b16 %v1870, %v1866
        %v2611 = vpack.c.b16 %v1875, %v1871
        %v2612 = vpack.c.b16 %v1876, %v1872
        %v2613 = vpack.c.b16 %v1877, %v1873
        %v2614 = vpack.c.b16 %v1878, %v1874
        %v2615 = vpack.c.b16 %v1883, %v1879
        %v2616 = vpack.c.b16 %v1884, %v1880
        %v2617 = vpack.c.b16 %v1885, %v1881
        %v2618 = vpack.c.b16 %v1886, %v1882
        %v2619 = vpack.c.b16 %v1891, %v1887
        %v2620 = vpack.c.b16 %v1892, %v1888
        %v2621 = vpack.c.b16 %v1893, %v1889
        %v2622 = vpack.c.b16 %v1894, %v1890
        %v2623 = vpack.c.b16 %v1899, %v1895
        %v2624 = vpack.c.b16 %v1900, %v1896
        %v2625 = vpack.c.b16 %v1901, %v1897
        %v2626 = vpack.c.b16 %v1902, %v1898
        %v2627 = vpack.c.b16 %v1907, %v1903
        %v2628 = vpack.c.b16 %v1908, %v1904
        %v2629 = vpack.c.b16 %v1909, %v1905
        %v2630 = vpack.c.b16 %v1910, %v1906
        %v2631 = vpack.c.b16 %v1915, %v1911
        %v2632 = vpack.c.b16 %v1916, %v1912
        %v2633 = vpack.c.b16 %v1917, %v1913
        %v2634 = vpack.c.b16 %v1918, %v1914
        %v2635 = vpack.c.b16 %v1923, %v1919
        %v2636 = vpack.c.b16 %v1924, %v1920
        %v2637 = vpack.c.b16 %v1925, %v1921
        %v2638 = vpack.c.b16 %v1926, %v1922
        %v2639 = vpack.c.b16 %v1931, %v1927
        %v2640 = vpack.c.b16 %v1932, %v1928
        %v2641 = vpack.c.b16 %v1933, %v1929
        %v2642 = vpack.c.b16 %v1934, %v1930
        %v2643 = vpack.c.b16 %v1939, %v1935
        %v2644 = vpack.c.b16 %v1940, %v1936
        %v2645 = vpack.c.b16 %v1941, %v1937
        %v2646 = vpack.c.b16 %v1942, %v1938
        %v2647 = vpack.c.b16 %v1947, %v1943
        %v2648 = vpack.c.b16 %v1948, %v1944
        %v2649 = vpack.c.b16 %v1949, %v1945
        %v2650 = vpack.c.b16 %v1950, %v1946
        %v2651 = vpack.c.b16 %v1955, %v1951
        %v2652 = vpack.c.b16 %v1956, %v1952
        %v2653 = vpack.c.b16 %v1957, %v1953
        %v2654 = vpack.c.b16 %v1958, %v1954
        %v2655 = vpack.c.b16 %v1963, %v1959
        %v2656 = vpack.c.b16 %v1964, %v1960
        %v2657 = vpack.c.b16 %v1965, %v1961
        %v2658 = vpack.c.b16 %v1966, %v1962
        %v2659 = vpack.c.b16 %v1971, %v1967
        %v2660 = vpack.c.b16 %v1972, %v1968
        %v2661 = vpack.c.b16 %v1973, %v1969
        %v2662 = vpack.c.b16 %v1974, %v1970
        %v2663 = vpack.c.b16 %v1979, %v1975
        %v2664 = vpack.c.b16 %v1980, %v1976
        %v2665 = vpack.c.b16 %v1981, %v1977
        %v2666 = vpack.c.b16 %v1982, %v1978
        %v2667 = vpack.c.b16 %v1987, %v1983
        %v2668 = vpack.c.b16 %v1988, %v1984
        %v2669 = vpack.c.b16 %v1989, %v1985
        %v2670 = vpack.c.b16 %v1990, %v1986
        %v2671 = vpack.c.b16 %v1995, %v1991
        %v2672 = vpack.c.b16 %v1996, %v1992
        %v2673 = vpack.c.b16 %v1997, %v1993
        %v2674 = vpack.c.b16 %v1998, %v1994
        %v2675 = vpack.c.b16 %v2003, %v1999
        %v2676 = vpack.c.b16 %v2004, %v2000
        %v2677 = vpack.c.b16 %v2005, %v2001
        %v2678 = vpack.c.b16 %v2006, %v2002
        %v2679 = vpack.c.b16 %v2011, %v2007
        %v2680 = vpack.c.b16 %v2012, %v2008
        %v2681 = vpack.c.b16 %v2013, %v2009
        %v2682 = vpack.c.b16 %v2014, %v2010
        %v2683 = vpack.c.b16 %v2019, %v2015
        %v2684 = vpack.c.b16 %v2020, %v2016
        %v2685 = vpack.c.b16 %v2021, %v2017
        %v2686 = vpack.c.b16 %v2022, %v2018
        %v2687 = vpack.c.b16 %v2027, %v2023
        %v2688 = vpack.c.b16 %v2028, %v2024
        %v2689 = vpack.c.b16 %v2029, %v2025
        %v2690 = vpack.c.b16 %v2030, %v2026
        %v2691 = vpack.c.b16 %v2035, %v2031
        %v2692 = vpack.c.b16 %v2036, %v2032
        %v2693 = vpack.c.b16 %v2037, %v2033
        %v2694 = vpack.c.b16 %v2038, %v2034
        %v2695 = vpack.c.b16 %v2043, %v2039
        %v2696 = vpack.c.b16 %v2044, %v2040
        %v2697 = vpack.c.b16 %v2045, %v2041
        %v2698 = vpack.c.b16 %v2046, %v2042
        %v2699 = vpack.c.b16 %v2051, %v2047
        %v2700 = vpack.c.b16 %v2052, %v2048
        %v2701 = vpack.c.b16 %v2053, %v2049
        %v2702 = vpack.c.b16 %v2054, %v2050
        %v2703 = vpack.c.b16 %v2059, %v2055
        %v2704 = vpack.c.b16 %v2060, %v2056
        %v2705 = vpack.c.b16 %v2061, %v2057
        %v2706 = vpack.c.b16 %v2062, %v2058
        %v2707 = vpack.c.b16 %v2067, %v2063
        %v2708 = vpack.c.b16 %v2068, %v2064
        %v2709 = vpack.c.b16 %v2069, %v2065
        %v2710 = vpack.c.b16 %v2070, %v2066
        %v2711 = vpack.c.b16 %v2075, %v2071
        %v2712 = vpack.c.b16 %v2076, %v2072
        %v2713 = vpack.c.b16 %v2077, %v2073
        %v2714 = vpack.c.b16 %v2078, %v2074
        %v2715 = vpack.c.b16 %v2083, %v2079
        %v2716 = vpack.c.b16 %v2084, %v2080
        %v2717 = vpack.c.b16 %v2085, %v2081
        %v2718 = vpack.c.b16 %v2086, %v2082
        %v2719 = vpack.c.b16 %v2091, %v2087
        %v2720 = vpack.c.b16 %v2092, %v2088
        %v2721 = vpack.c.b16 %v2093, %v2089
        %v2722 = vpack.c.b16 %v2094, %v2090
        %v2723 = vpack.c.b16 %v2099, %v2095
        %v2724 = vpack.c.b16 %v2100, %v2096
        %v2725 = vpack.c.b16 %v2101, %v2097
        %v2726 = vpack.c.b16 %v2102, %v2098
        %v2727 = vpack.c.b16 %v2107, %v2103
        %v2728 = vpack.c.b16 %v2108, %v2104
        %v2729 = vpack.c.b16 %v2109, %v2105
        %v2730 = vpack.c.b16 %v2110, %v2106
        %v2731 = vpack.c.b16 %v2115, %v2111
        %v2732 = vpack.c.b16 %v2116, %v2112
        %v2733 = vpack.c.b16 %v2117, %v2113
        %v2734 = vpack.c.b16 %v2118, %v2114
        %v2735 = vpack.c.b16 %v2123, %v2119
        %v2736 = vpack.c.b16 %v2124, %v2120
        %v2737 = vpack.c.b16 %v2125, %v2121
        %v2738 = vpack.c.b16 %v2126, %v2122
        %v2739 = vpack.c.b16 %v2131, %v2127
        %v2740 = vpack.c.b16 %v2132, %v2128
        %v2741 = vpack.c.b16 %v2133, %v2129
        %v2742 = vpack.c.b16 %v2134, %v2130
        %v2743 = vpack.c.b16 %v2139, %v2135
        %v2744 = vpack.c.b16 %v2140, %v2136
        %v2745 = vpack.c.b16 %v2141, %v2137
        %v2746 = vpack.c.b16 %v2142, %v2138
        %v2747 = vpack.c.b16 %v2147, %v2143
        %v2748 = vpack.c.b16 %v2148, %v2144
        %v2749 = vpack.c.b16 %v2149, %v2145
        %v2750 = vpack.c.b16 %v2150, %v2146
        %v2751 = vpack.c.b16 %v2155, %v2151
        %v2752 = vpack.c.b16 %v2156, %v2152
        %v2753 = vpack.c.b16 %v2157, %v2153
        %v2754 = vpack.c.b16 %v2158, %v2154
        %v2755 = vpack.c.b16 %v2163, %v2159
        %v2756 = vpack.c.b16 %v2164, %v2160
        %v2757 = vpack.c.b16 %v2165, %v2161
        %v2758 = vpack.c.b16 %v2166, %v2162
        %v2759 = vpack.c.b16 %v2171, %v2167
        %v2760 = vpack.c.b16 %v2172, %v2168
        %v2761 = vpack.c.b16 %v2173, %v2169
        %v2762 = vpack.c.b16 %v2174, %v2170
        %v2763 = vpack.c.b16 %v2179, %v2175
        %v2764 = vpack.c.b16 %v2180, %v2176
        %v2765 = vpack.c.b16 %v2181, %v2177
        %v2766 = vpack.c.b16 %v2182, %v2178
        %v2767 = vpack.c.b16 %v2187, %v2183
        %v2768 = vpack.c.b16 %v2188, %v2184
        %v2769 = vpack.c.b16 %v2189, %v2185
        %v2770 = vpack.c.b16 %v2190, %v2186
        %v2771 = vpack.c.b16 %v2195, %v2191
        %v2772 = vpack.c.b16 %v2196, %v2192
        %v2773 = vpack.c.b16 %v2197, %v2193
        %v2774 = vpack.c.b16 %v2198, %v2194
        %v2775 = vpack.c.b16 %v2203, %v2199
        %v2776 = vpack.c.b16 %v2204, %v2200
        %v2777 = vpack.c.b16 %v2205, %v2201
        %v2778 = vpack.c.b16 %v2206, %v2202
        %v2779 = vpack.c.b16 %v2211, %v2207
        %v2780 = vpack.c.b16 %v2212, %v2208
        %v2781 = vpack.c.b16 %v2213, %v2209
        %v2782 = vpack.c.b16 %v2214, %v2210
        %v2783 = vpack.c.b16 %v2219, %v2215
        %v2784 = vpack.c.b16 %v2220, %v2216
        %v2785 = vpack.c.b16 %v2221, %v2217
        %v2786 = vpack.c.b16 %v2222, %v2218
        %v2787 = vpack.c.b16 %v2227, %v2223
        %v2788 = vpack.c.b16 %v2228, %v2224
        %v2789 = vpack.c.b16 %v2229, %v2225
        %v2790 = vpack.c.b16 %v2230, %v2226
        %v2791 = vpack.c.b16 %v2235, %v2231
        %v2792 = vpack.c.b16 %v2236, %v2232
        %v2793 = vpack.c.b16 %v2237, %v2233
        %v2794 = vpack.c.b16 %v2238, %v2234
        %v2795 = vpack.c.b16 %v2243, %v2239
        %v2796 = vpack.c.b16 %v2244, %v2240
        %v2797 = vpack.c.b16 %v2245, %v2241
        %v2798 = vpack.c.b16 %v2246, %v2242
        %v2799 = vpack.c.b16 %v2251, %v2247
        %v2800 = vpack.c.b16 %v2252, %v2248
        %v2801 = vpack.c.b16 %v2253, %v2249
        %v2802 = vpack.c.b16 %v2254, %v2250
        %v2803 = vpack.c.b16 %v2259, %v2255
        %v2804 = vpack.c.b16 %v2260, %v2256
        %v2805 = vpack.c.b16 %v2261, %v2257
        %v2806 = vpack.c.b16 %v2262, %v2258
        %v2807 = vpack.c.b16 %v2267, %v2263
        %v2808 = vpack.c.b16 %v2268, %v2264
        %v2809 = vpack.c.b16 %v2269, %v2265
        %v2810 = vpack.c.b16 %v2270, %v2266
        %v2811 = vpack.c.b16 %v2275, %v2271
        %v2812 = vpack.c.b16 %v2276, %v2272
        %v2813 = vpack.c.b16 %v2277, %v2273
        %v2814 = vpack.c.b16 %v2278, %v2274
        %v2815 = vpack.c.b16 %v2283, %v2279
        %v2816 = vpack.c.b16 %v2284, %v2280
        %v2817 = vpack.c.b16 %v2285, %v2281
        %v2818 = vpack.c.b16 %v2286, %v2282
        %v2819 = vpack.c.b16 %v2291, %v2287
        %v2820 = vpack.c.b16 %v2292, %v2288
        %v2821 = vpack.c.b16 %v2293, %v2289
        %v2822 = vpack.c.b16 %v2294, %v2290
        %v2823 = vpack.c.b16 %v2299, %v2295
        %v2824 = vpack.c.b16 %v2300, %v2296
        %v2825 = vpack.c.b16 %v2301, %v2297
        %v2826 = vpack.c.b16 %v2302, %v2298
        %v2827 = vpack.c.b16 %v2307, %v2303
        %v2828 = vpack.c.b16 %v2308, %v2304
        %v2829 = vpack.c.b16 %v2309, %v2305
        %v2830 = vpack.c.b16 %v2310, %v2306
        %v2831 = vpack.c.b16 %v2315, %v2311
        %v2832 = vpack.c.b16 %v2316, %v2312
        %v2833 = vpack.c.b16 %v2317, %v2313
        %v2834 = vpack.c.b16 %v2318, %v2314
        %v2835 = vpack.c.b16 %v2323, %v2319
        %v2836 = vpack.c.b16 %v2324, %v2320
        %v2837 = vpack.c.b16 %v2325, %v2321
        %v2838 = vpack.c.b16 %v2326, %v2322
        %3351 = vmatpush.bf16.msra.mxu0 %v2355
        %3352 = vmatpush.bf16.msra.mxu0 %v2351
        %3353 = vmatpush.bf16.msra.mxu0 %v2347
        %3354 = vmatpush.bf16.msra.mxu0 %v2343
        %3355 = vmatpush.bf16.msra.mxu0 %v2339
        %3356 = vmatpush.bf16.msra.mxu0 %v2335
        %3357 = vmatpush.bf16.msra.mxu0 %v2331
        %3358 = vmatpush.bf16.msra.mxu0 %v2327
        %3359 = vmatmul.bf16.gmra.mxu0 %v757
        %v3360 = vpop.f32.mrf.mxu0
        %v3361 = vadd.f32 0.0, %v3360
        %v3362 = vpop.f32.mrf.mxu0
        %3363 = vdwg.mxu0
        %3364 = vmatpush.bf16.msra.mxu0 %v2387
        %3365 = vmatpush.bf16.msra.mxu0 %v2383
        %3366 = vmatpush.bf16.msra.mxu0 %v2379
        %3367 = vmatpush.bf16.msra.mxu0 %v2375
        %3368 = vmatpush.bf16.msra.mxu0 %v2371
        %3369 = vmatpush.bf16.msra.mxu0 %v2367
        %3370 = vmatpush.bf16.msra.mxu0 %v2363
        %3371 = vmatpush.bf16.msra.mxu0 %v2359
        %3372 = vmatmul.bf16.gmra.mxu0 %v758
        %v3373 = vpop.f32.mrf.mxu0
        %v3374 = vadd.f32 %v3361, %v3373
        %v3375 = vpop.f32.mrf.mxu0
        %3376 = vdwg.mxu0
        %3377 = vmatpush.bf16.msra.mxu0 %v2419
        %3378 = vmatpush.bf16.msra.mxu0 %v2415
        %3379 = vmatpush.bf16.msra.mxu0 %v2411
        %3380 = vmatpush.bf16.msra.mxu0 %v2407
        %3381 = vmatpush.bf16.msra.mxu0 %v2403
        %3382 = vmatpush.bf16.msra.mxu0 %v2399
        %3383 = vmatpush.bf16.msra.mxu0 %v2395
        %3384 = vmatpush.bf16.msra.mxu0 %v2391
        %3385 = vmatmul.bf16.gmra.mxu0 %v759
        %v3386 = vpop.f32.mrf.mxu0
        %v3387 = vadd.f32 %v3374, %v3386
        %v3388 = vpop.f32.mrf.mxu0
        %3389 = vdwg.mxu0
        %3390 = vmatpush.bf16.msra.mxu0 %v2451
        %3391 = vmatpush.bf16.msra.mxu0 %v2447
        %3392 = vmatpush.bf16.msra.mxu0 %v2443
        %3393 = vmatpush.bf16.msra.mxu0 %v2439
        %3394 = vmatpush.bf16.msra.mxu0 %v2435
        %3395 = vmatpush.bf16.msra.mxu0 %v2431
        %3396 = vmatpush.bf16.msra.mxu0 %v2427
        %3397 = vmatpush.bf16.msra.mxu0 %v2423
        %3398 = vmatmul.bf16.gmra.mxu0 %v760
        %v3399 = vpop.f32.mrf.mxu0
        %v3400 = vadd.f32 %v3387, %v3399
        %v3401 = vpop.f32.mrf.mxu0
        %3402 = vdwg.mxu0
        %3403 = vmatpush.bf16.msra.mxu0 %v2483
        %3404 = vmatpush.bf16.msra.mxu0 %v2479
        %3405 = vmatpush.bf16.msra.mxu0 %v2475
        %3406 = vmatpush.bf16.msra.mxu0 %v2471
        %3407 = vmatpush.bf16.msra.mxu0 %v2467
        %3408 = vmatpush.bf16.msra.mxu0 %v2463
        %3409 = vmatpush.bf16.msra.mxu0 %v2459
        %3410 = vmatpush.bf16.msra.mxu0 %v2455
        %3411 = vmatmul.bf16.gmra.mxu0 %v761
        %v3412 = vpop.f32.mrf.mxu0
        %v3413 = vadd.f32 %v3400, %v3412
        %v3414 = vpop.f32.mrf.mxu0
        %3415 = vdwg.mxu0
        %3416 = vmatpush.bf16.msra.mxu0 %v2515
        %3417 = vmatpush.bf16.msra.mxu0 %v2511
        %3418 = vmatpush.bf16.msra.mxu0 %v2507
        %3419 = vmatpush.bf16.msra.mxu0 %v2503
        %3420 = vmatpush.bf16.msra.mxu0 %v2499
        %3421 = vmatpush.bf16.msra.mxu0 %v2495
        %3422 = vmatpush.bf16.msra.mxu0 %v2491
        %3423 = vmatpush.bf16.msra.mxu0 %v2487
        %3424 = vmatmul.bf16.gmra.mxu0 %v762
        %v3425 = vpop.f32.mrf.mxu0
        %v3426 = vadd.f32 %v3413, %v3425
        %v3427 = vpop.f32.mrf.mxu0
        %3428 = vdwg.mxu0
        %3429 = vmatpush.bf16.msra.mxu0 %v2547
        %3430 = vmatpush.bf16.msra.mxu0 %v2543
        %3431 = vmatpush.bf16.msra.mxu0 %v2539
        %3432 = vmatpush.bf16.msra.mxu0 %v2535
        %3433 = vmatpush.bf16.msra.mxu0 %v2531
        %3434 = vmatpush.bf16.msra.mxu0 %v2527
        %3435 = vmatpush.bf16.msra.mxu0 %v2523
        %3436 = vmatpush.bf16.msra.mxu0 %v2519
        %3437 = vmatmul.bf16.gmra.mxu0 %v763
        %v3438 = vpop.f32.mrf.mxu0
        %v3439 = vadd.f32 %v3426, %v3438
        %v3440 = vpop.f32.mrf.mxu0
        %3441 = vdwg.mxu0
        %3442 = vmatpush.bf16.msra.mxu0 %v2579
        %3443 = vmatpush.bf16.msra.mxu0 %v2575
        %3444 = vmatpush.bf16.msra.mxu0 %v2571
        %3445 = vmatpush.bf16.msra.mxu0 %v2567
        %3446 = vmatpush.bf16.msra.mxu0 %v2563
        %3447 = vmatpush.bf16.msra.mxu0 %v2559
        %3448 = vmatpush.bf16.msra.mxu0 %v2555
        %3449 = vmatpush.bf16.msra.mxu0 %v2551
        %3450 = vmatmul.bf16.gmra.mxu0 %v764
        %v3451 = vpop.f32.mrf.mxu0
        %v3452 = vadd.f32 %v3439, %v3451
        %v3453 = vpop.f32.mrf.mxu0
        %3454 = vdwg.mxu0
        %3455 = vmatpush.bf16.msra.mxu0 %v2611
        %3456 = vmatpush.bf16.msra.mxu0 %v2607
        %3457 = vmatpush.bf16.msra.mxu0 %v2603
        %3458 = vmatpush.bf16.msra.mxu0 %v2599
        %3459 = vmatpush.bf16.msra.mxu0 %v2595
        %3460 = vmatpush.bf16.msra.mxu0 %v2591
        %3461 = vmatpush.bf16.msra.mxu0 %v2587
        %3462 = vmatpush.bf16.msra.mxu0 %v2583
        %3463 = vmatmul.bf16.gmra.mxu0 %v767
        %v3464 = vpop.f32.mrf.mxu0
        %v3465 = vadd.f32 %v3452, %v3464
        %v3466 = vpop.f32.mrf.mxu0
        %3467 = vdwg.mxu0
        %3468 = vmatpush.bf16.msra.mxu0 %v2643
        %3469 = vmatpush.bf16.msra.mxu0 %v2639
        %3470 = vmatpush.bf16.msra.mxu0 %v2635
        %3471 = vmatpush.bf16.msra.mxu0 %v2631
        %3472 = vmatpush.bf16.msra.mxu0 %v2627
        %3473 = vmatpush.bf16.msra.mxu0 %v2623
        %3474 = vmatpush.bf16.msra.mxu0 %v2619
        %3475 = vmatpush.bf16.msra.mxu0 %v2615
        %3476 = vmatmul.bf16.gmra.mxu0 %v768
        %v3477 = vpop.f32.mrf.mxu0
        %v3478 = vadd.f32 %v3465, %v3477
        %v3479 = vpop.f32.mrf.mxu0
        %3480 = vdwg.mxu0
        %3481 = vmatpush.bf16.msra.mxu0 %v2675
        %3482 = vmatpush.bf16.msra.mxu0 %v2671
        %3483 = vmatpush.bf16.msra.mxu0 %v2667
        %3484 = vmatpush.bf16.msra.mxu0 %v2663
        %3485 = vmatpush.bf16.msra.mxu0 %v2659
        %3486 = vmatpush.bf16.msra.mxu0 %v2655
        %3487 = vmatpush.bf16.msra.mxu0 %v2651
        %3488 = vmatpush.bf16.msra.mxu0 %v2647
        %3489 = vmatmul.bf16.gmra.mxu0 %v769
        %v3490 = vpop.f32.mrf.mxu0
        %v3491 = vadd.f32 %v3478, %v3490
        %v3492 = vpop.f32.mrf.mxu0
        %3493 = vdwg.mxu0
        %3494 = vmatpush.bf16.msra.mxu0 %v2707
        %3495 = vmatpush.bf16.msra.mxu0 %v2703
        %3496 = vmatpush.bf16.msra.mxu0 %v2699
        %3497 = vmatpush.bf16.msra.mxu0 %v2695
        %3498 = vmatpush.bf16.msra.mxu0 %v2691
        %3499 = vmatpush.bf16.msra.mxu0 %v2687
        %3500 = vmatpush.bf16.msra.mxu0 %v2683
        %3501 = vmatpush.bf16.msra.mxu0 %v2679
        %3502 = vmatmul.bf16.gmra.mxu0 %v770
        %v3503 = vpop.f32.mrf.mxu0
        %v3504 = vadd.f32 %v3491, %v3503
        %v3505 = vpop.f32.mrf.mxu0
        %3506 = vdwg.mxu0
        %3507 = vmatpush.bf16.msra.mxu0 %v2739
        %3508 = vmatpush.bf16.msra.mxu0 %v2735
        %3509 = vmatpush.bf16.msra.mxu0 %v2731
        %3510 = vmatpush.bf16.msra.mxu0 %v2727
        %3511 = vmatpush.bf16.msra.mxu0 %v2723
        %3512 = vmatpush.bf16.msra.mxu0 %v2719
        %3513 = vmatpush.bf16.msra.mxu0 %v2715
        %3514 = vmatpush.bf16.msra.mxu0 %v2711
        %3515 = vmatmul.bf16.gmra.mxu0 %v771
        %v3516 = vpop.f32.mrf.mxu0
        %v3517 = vadd.f32 %v3504, %v3516
        %v3518 = vpop.f32.mrf.mxu0
        %3519 = vdwg.mxu0
        %3520 = vmatpush.bf16.msra.mxu0 %v2771
        %3521 = vmatpush.bf16.msra.mxu0 %v2767
        %3522 = vmatpush.bf16.msra.mxu0 %v2763
        %3523 = vmatpush.bf16.msra.mxu0 %v2759
        %3524 = vmatpush.bf16.msra.mxu0 %v2755
        %3525 = vmatpush.bf16.msra.mxu0 %v2751
        %3526 = vmatpush.bf16.msra.mxu0 %v2747
        %3527 = vmatpush.bf16.msra.mxu0 %v2743
        %3528 = vmatmul.bf16.gmra.mxu0 %v772
        %v3529 = vpop.f32.mrf.mxu0
        %v3530 = vadd.f32 %v3517, %v3529
        %v3531 = vpop.f32.mrf.mxu0
        %3532 = vdwg.mxu0
        %3533 = vmatpush.bf16.msra.mxu0 %v2803
        %3534 = vmatpush.bf16.msra.mxu0 %v2799
        %3535 = vmatpush.bf16.msra.mxu0 %v2795
        %3536 = vmatpush.bf16.msra.mxu0 %v2791
        %3537 = vmatpush.bf16.msra.mxu0 %v2787
        %3538 = vmatpush.bf16.msra.mxu0 %v2783
        %3539 = vmatpush.bf16.msra.mxu0 %v2779
        %3540 = vmatpush.bf16.msra.mxu0 %v2775
        %3541 = vmatmul.bf16.gmra.mxu0 %v773
        %v3542 = vpop.f32.mrf.mxu0
        %v3543 = vadd.f32 %v3530, %v3542
        %v3544 = vpop.f32.mrf.mxu0
        %3545 = vdwg.mxu0
        %3546 = vmatpush.bf16.msra.mxu0 %v2835
        %3547 = vmatpush.bf16.msra.mxu0 %v2831
        %3548 = vmatpush.bf16.msra.mxu0 %v2827
        %3549 = vmatpush.bf16.msra.mxu0 %v2823
        %3550 = vmatpush.bf16.msra.mxu0 %v2819
        %3551 = vmatpush.bf16.msra.mxu0 %v2815
        %3552 = vmatpush.bf16.msra.mxu0 %v2811
        %3553 = vmatpush.bf16.msra.mxu0 %v2807
        %3554 = vmatmul.bf16.gmra.mxu0 %v774
        %v3555 = vpop.f32.mrf.mxu0
        %v3556 = vadd.f32 %v3543, %v3555
        %v3557 = vpop.f32.mrf.mxu0
        %3558 = vdwg.mxu0
        %3559 = vmatpush.bf16.msra.mxu0 %v2356
        %3560 = vmatpush.bf16.msra.mxu0 %v2352
        %3561 = vmatpush.bf16.msra.mxu0 %v2348
        %3562 = vmatpush.bf16.msra.mxu0 %v2344
        %3563 = vmatpush.bf16.msra.mxu0 %v2340
        %3564 = vmatpush.bf16.msra.mxu0 %v2336
        %3565 = vmatpush.bf16.msra.mxu0 %v2332
        %3566 = vmatpush.bf16.msra.mxu0 %v2328
        %3567 = vmatmul.bf16.gmra.mxu0 %v757
        %v3568 = vpop.f32.mrf.mxu0
        %v3569 = vadd.f32 0.0, %v3568
        %v3570 = vpop.f32.mrf.mxu0
        %3571 = vdwg.mxu0
        %3572 = vmatpush.bf16.msra.mxu0 %v2388
        %3573 = vmatpush.bf16.msra.mxu0 %v2384
        %3574 = vmatpush.bf16.msra.mxu0 %v2380
        %3575 = vmatpush.bf16.msra.mxu0 %v2376
        %3576 = vmatpush.bf16.msra.mxu0 %v2372
        %3577 = vmatpush.bf16.msra.mxu0 %v2368
        %3578 = vmatpush.bf16.msra.mxu0 %v2364
        %3579 = vmatpush.bf16.msra.mxu0 %v2360
        %3580 = vmatmul.bf16.gmra.mxu0 %v758
        %v3581 = vpop.f32.mrf.mxu0
        %v3582 = vadd.f32 %v3569, %v3581
        %v3583 = vpop.f32.mrf.mxu0
        %3584 = vdwg.mxu0
        %3585 = vmatpush.bf16.msra.mxu0 %v2420
        %3586 = vmatpush.bf16.msra.mxu0 %v2416
        %3587 = vmatpush.bf16.msra.mxu0 %v2412
        %3588 = vmatpush.bf16.msra.mxu0 %v2408
        %3589 = vmatpush.bf16.msra.mxu0 %v2404
        %3590 = vmatpush.bf16.msra.mxu0 %v2400
        %3591 = vmatpush.bf16.msra.mxu0 %v2396
        %3592 = vmatpush.bf16.msra.mxu0 %v2392
        %3593 = vmatmul.bf16.gmra.mxu0 %v759
        %v3594 = vpop.f32.mrf.mxu0
        %v3595 = vadd.f32 %v3582, %v3594
        %v3596 = vpop.f32.mrf.mxu0
        %3597 = vdwg.mxu0
        %3598 = vmatpush.bf16.msra.mxu0 %v2452
        %3599 = vmatpush.bf16.msra.mxu0 %v2448
        %3600 = vmatpush.bf16.msra.mxu0 %v2444
        %3601 = vmatpush.bf16.msra.mxu0 %v2440
        %3602 = vmatpush.bf16.msra.mxu0 %v2436
        %3603 = vmatpush.bf16.msra.mxu0 %v2432
        %3604 = vmatpush.bf16.msra.mxu0 %v2428
        %3605 = vmatpush.bf16.msra.mxu0 %v2424
        %3606 = vmatmul.bf16.gmra.mxu0 %v760
        %v3607 = vpop.f32.mrf.mxu0
        %v3608 = vadd.f32 %v3595, %v3607
        %v3609 = vpop.f32.mrf.mxu0
        %3610 = vdwg.mxu0
        %3611 = vmatpush.bf16.msra.mxu0 %v2484
        %3612 = vmatpush.bf16.msra.mxu0 %v2480
        %3613 = vmatpush.bf16.msra.mxu0 %v2476
        %3614 = vmatpush.bf16.msra.mxu0 %v2472
        %3615 = vmatpush.bf16.msra.mxu0 %v2468
        %3616 = vmatpush.bf16.msra.mxu0 %v2464
        %3617 = vmatpush.bf16.msra.mxu0 %v2460
        %3618 = vmatpush.bf16.msra.mxu0 %v2456
        %3619 = vmatmul.bf16.gmra.mxu0 %v761
        %v3620 = vpop.f32.mrf.mxu0
        %v3621 = vadd.f32 %v3608, %v3620
        %v3622 = vpop.f32.mrf.mxu0
        %3623 = vdwg.mxu0
        %3624 = vmatpush.bf16.msra.mxu0 %v2516
        %3625 = vmatpush.bf16.msra.mxu0 %v2512
        %3626 = vmatpush.bf16.msra.mxu0 %v2508
        %3627 = vmatpush.bf16.msra.mxu0 %v2504
        %3628 = vmatpush.bf16.msra.mxu0 %v2500
        %3629 = vmatpush.bf16.msra.mxu0 %v2496
        %3630 = vmatpush.bf16.msra.mxu0 %v2492
        %3631 = vmatpush.bf16.msra.mxu0 %v2488
        %3632 = vmatmul.bf16.gmra.mxu0 %v762
        %v3633 = vpop.f32.mrf.mxu0
        %v3634 = vadd.f32 %v3621, %v3633
        %v3635 = vpop.f32.mrf.mxu0
        %3636 = vdwg.mxu0
        %3637 = vmatpush.bf16.msra.mxu0 %v2548
        %3638 = vmatpush.bf16.msra.mxu0 %v2544
        %3639 = vmatpush.bf16.msra.mxu0 %v2540
        %3640 = vmatpush.bf16.msra.mxu0 %v2536
        %3641 = vmatpush.bf16.msra.mxu0 %v2532
        %3642 = vmatpush.bf16.msra.mxu0 %v2528
        %3643 = vmatpush.bf16.msra.mxu0 %v2524
        %3644 = vmatpush.bf16.msra.mxu0 %v2520
        %3645 = vmatmul.bf16.gmra.mxu0 %v763
        %v3646 = vpop.f32.mrf.mxu0
        %v3647 = vadd.f32 %v3634, %v3646
        %v3648 = vpop.f32.mrf.mxu0
        %3649 = vdwg.mxu0
        %3650 = vmatpush.bf16.msra.mxu0 %v2580
        %3651 = vmatpush.bf16.msra.mxu0 %v2576
        %3652 = vmatpush.bf16.msra.mxu0 %v2572
        %3653 = vmatpush.bf16.msra.mxu0 %v2568
        %3654 = vmatpush.bf16.msra.mxu0 %v2564
        %3655 = vmatpush.bf16.msra.mxu0 %v2560
        %3656 = vmatpush.bf16.msra.mxu0 %v2556
        %3657 = vmatpush.bf16.msra.mxu0 %v2552
        %3658 = vmatmul.bf16.gmra.mxu0 %v764
        %v3659 = vpop.f32.mrf.mxu0
        %v3660 = vadd.f32 %v3647, %v3659
        %v3661 = vpop.f32.mrf.mxu0
        %3662 = vdwg.mxu0
        %3663 = vmatpush.bf16.msra.mxu0 %v2612
        %3664 = vmatpush.bf16.msra.mxu0 %v2608
        %3665 = vmatpush.bf16.msra.mxu0 %v2604
        %3666 = vmatpush.bf16.msra.mxu0 %v2600
        %3667 = vmatpush.bf16.msra.mxu0 %v2596
        %3668 = vmatpush.bf16.msra.mxu0 %v2592
        %3669 = vmatpush.bf16.msra.mxu0 %v2588
        %3670 = vmatpush.bf16.msra.mxu0 %v2584
        %3671 = vmatmul.bf16.gmra.mxu0 %v767
        %v3672 = vpop.f32.mrf.mxu0
        %v3673 = vadd.f32 %v3660, %v3672
        %v3674 = vpop.f32.mrf.mxu0
        %3675 = vdwg.mxu0
        %3676 = vmatpush.bf16.msra.mxu0 %v2644
        %3677 = vmatpush.bf16.msra.mxu0 %v2640
        %3678 = vmatpush.bf16.msra.mxu0 %v2636
        %3679 = vmatpush.bf16.msra.mxu0 %v2632
        %3680 = vmatpush.bf16.msra.mxu0 %v2628
        %3681 = vmatpush.bf16.msra.mxu0 %v2624
        %3682 = vmatpush.bf16.msra.mxu0 %v2620
        %3683 = vmatpush.bf16.msra.mxu0 %v2616
        %3684 = vmatmul.bf16.gmra.mxu0 %v768
        %v3685 = vpop.f32.mrf.mxu0
        %v3686 = vadd.f32 %v3673, %v3685
        %v3687 = vpop.f32.mrf.mxu0
        %3688 = vdwg.mxu0
        %3689 = vmatpush.bf16.msra.mxu0 %v2676
        %3690 = vmatpush.bf16.msra.mxu0 %v2672
        %3691 = vmatpush.bf16.msra.mxu0 %v2668
        %3692 = vmatpush.bf16.msra.mxu0 %v2664
        %3693 = vmatpush.bf16.msra.mxu0 %v2660
        %3694 = vmatpush.bf16.msra.mxu0 %v2656
        %3695 = vmatpush.bf16.msra.mxu0 %v2652
        %3696 = vmatpush.bf16.msra.mxu0 %v2648
        %3697 = vmatmul.bf16.gmra.mxu0 %v769
        %v3698 = vpop.f32.mrf.mxu0
        %v3699 = vadd.f32 %v3686, %v3698
        %v3700 = vpop.f32.mrf.mxu0
        %3701 = vdwg.mxu0
        %3702 = vmatpush.bf16.msra.mxu0 %v2708
        %3703 = vmatpush.bf16.msra.mxu0 %v2704
        %3704 = vmatpush.bf16.msra.mxu0 %v2700
        %3705 = vmatpush.bf16.msra.mxu0 %v2696
        %3706 = vmatpush.bf16.msra.mxu0 %v2692
        %3707 = vmatpush.bf16.msra.mxu0 %v2688
        %3708 = vmatpush.bf16.msra.mxu0 %v2684
        %3709 = vmatpush.bf16.msra.mxu0 %v2680
        %3710 = vmatmul.bf16.gmra.mxu0 %v770
        %v3711 = vpop.f32.mrf.mxu0
        %v3712 = vadd.f32 %v3699, %v3711
        %v3713 = vpop.f32.mrf.mxu0
        %3714 = vdwg.mxu0
        %3715 = vmatpush.bf16.msra.mxu0 %v2740
        %3716 = vmatpush.bf16.msra.mxu0 %v2736
        %3717 = vmatpush.bf16.msra.mxu0 %v2732
        %3718 = vmatpush.bf16.msra.mxu0 %v2728
        %3719 = vmatpush.bf16.msra.mxu0 %v2724
        %3720 = vmatpush.bf16.msra.mxu0 %v2720
        %3721 = vmatpush.bf16.msra.mxu0 %v2716
        %3722 = vmatpush.bf16.msra.mxu0 %v2712
        %3723 = vmatmul.bf16.gmra.mxu0 %v771
        %v3724 = vpop.f32.mrf.mxu0
        %v3725 = vadd.f32 %v3712, %v3724
        %v3726 = vpop.f32.mrf.mxu0
        %3727 = vdwg.mxu0
        %3728 = vmatpush.bf16.msra.mxu0 %v2772
        %3729 = vmatpush.bf16.msra.mxu0 %v2768
        %3730 = vmatpush.bf16.msra.mxu0 %v2764
        %3731 = vmatpush.bf16.msra.mxu0 %v2760
        %3732 = vmatpush.bf16.msra.mxu0 %v2756
        %3733 = vmatpush.bf16.msra.mxu0 %v2752
        %3734 = vmatpush.bf16.msra.mxu0 %v2748
        %3735 = vmatpush.bf16.msra.mxu0 %v2744
        %3736 = vmatmul.bf16.gmra.mxu0 %v772
        %v3737 = vpop.f32.mrf.mxu0
        %v3738 = vadd.f32 %v3725, %v3737
        %v3739 = vpop.f32.mrf.mxu0
        %3740 = vdwg.mxu0
        %3741 = vmatpush.bf16.msra.mxu0 %v2804
        %3742 = vmatpush.bf16.msra.mxu0 %v2800
        %3743 = vmatpush.bf16.msra.mxu0 %v2796
        %3744 = vmatpush.bf16.msra.mxu0 %v2792
        %3745 = vmatpush.bf16.msra.mxu0 %v2788
        %3746 = vmatpush.bf16.msra.mxu0 %v2784
        %3747 = vmatpush.bf16.msra.mxu0 %v2780
        %3748 = vmatpush.bf16.msra.mxu0 %v2776
        %3749 = vmatmul.bf16.gmra.mxu0 %v773
        %v3750 = vpop.f32.mrf.mxu0
        %v3751 = vadd.f32 %v3738, %v3750
        %v3752 = vpop.f32.mrf.mxu0
        %3753 = vdwg.mxu0
        %3754 = vmatpush.bf16.msra.mxu0 %v2836
        %3755 = vmatpush.bf16.msra.mxu0 %v2832
        %3756 = vmatpush.bf16.msra.mxu0 %v2828
        %3757 = vmatpush.bf16.msra.mxu0 %v2824
        %3758 = vmatpush.bf16.msra.mxu0 %v2820
        %3759 = vmatpush.bf16.msra.mxu0 %v2816
        %3760 = vmatpush.bf16.msra.mxu0 %v2812
        %3761 = vmatpush.bf16.msra.mxu0 %v2808
        %3762 = vmatmul.bf16.gmra.mxu0 %v774
        %v3763 = vpop.f32.mrf.mxu0
        %v3764 = vadd.f32 %v3751, %v3763
        %v3765 = vpop.f32.mrf.mxu0
        %3766 = vdwg.mxu0
        %3767 = vmatpush.bf16.msra.mxu0 %v2357
        %3768 = vmatpush.bf16.msra.mxu0 %v2353
        %3769 = vmatpush.bf16.msra.mxu0 %v2349
        %3770 = vmatpush.bf16.msra.mxu0 %v2345
        %3771 = vmatpush.bf16.msra.mxu0 %v2341
        %3772 = vmatpush.bf16.msra.mxu0 %v2337
        %3773 = vmatpush.bf16.msra.mxu0 %v2333
        %3774 = vmatpush.bf16.msra.mxu0 %v2329
        %3775 = vmatmul.bf16.gmra.mxu0 %v757
        %v3776 = vpop.f32.mrf.mxu0
        %v3777 = vadd.f32 0.0, %v3776
        %v3778 = vpop.f32.mrf.mxu0
        %3779 = vdwg.mxu0
        %3780 = vmatpush.bf16.msra.mxu0 %v2389
        %3781 = vmatpush.bf16.msra.mxu0 %v2385
        %3782 = vmatpush.bf16.msra.mxu0 %v2381
        %3783 = vmatpush.bf16.msra.mxu0 %v2377
        %3784 = vmatpush.bf16.msra.mxu0 %v2373
        %3785 = vmatpush.bf16.msra.mxu0 %v2369
        %3786 = vmatpush.bf16.msra.mxu0 %v2365
        %3787 = vmatpush.bf16.msra.mxu0 %v2361
        %3788 = vmatmul.bf16.gmra.mxu0 %v758
        %v3789 = vpop.f32.mrf.mxu0
        %v3790 = vadd.f32 %v3777, %v3789
        %v3791 = vpop.f32.mrf.mxu0
        %3792 = vdwg.mxu0
        %3793 = vmatpush.bf16.msra.mxu0 %v2421
        %3794 = vmatpush.bf16.msra.mxu0 %v2417
        %3795 = vmatpush.bf16.msra.mxu0 %v2413
        %3796 = vmatpush.bf16.msra.mxu0 %v2409
        %3797 = vmatpush.bf16.msra.mxu0 %v2405
        %3798 = vmatpush.bf16.msra.mxu0 %v2401
        %3799 = vmatpush.bf16.msra.mxu0 %v2397
        %3800 = vmatpush.bf16.msra.mxu0 %v2393
        %3801 = vmatmul.bf16.gmra.mxu0 %v759
        %v3802 = vpop.f32.mrf.mxu0
        %v3803 = vadd.f32 %v3790, %v3802
        %v3804 = vpop.f32.mrf.mxu0
        %3805 = vdwg.mxu0
        %3806 = vmatpush.bf16.msra.mxu0 %v2453
        %3807 = vmatpush.bf16.msra.mxu0 %v2449
        %3808 = vmatpush.bf16.msra.mxu0 %v2445
        %3809 = vmatpush.bf16.msra.mxu0 %v2441
        %3810 = vmatpush.bf16.msra.mxu0 %v2437
        %3811 = vmatpush.bf16.msra.mxu0 %v2433
        %3812 = vmatpush.bf16.msra.mxu0 %v2429
        %3813 = vmatpush.bf16.msra.mxu0 %v2425
        %3814 = vmatmul.bf16.gmra.mxu0 %v760
        %v3815 = vpop.f32.mrf.mxu0
        %v3816 = vadd.f32 %v3803, %v3815
        %v3817 = vpop.f32.mrf.mxu0
        %3818 = vdwg.mxu0
        %3819 = vmatpush.bf16.msra.mxu0 %v2485
        %3820 = vmatpush.bf16.msra.mxu0 %v2481
        %3821 = vmatpush.bf16.msra.mxu0 %v2477
        %3822 = vmatpush.bf16.msra.mxu0 %v2473
        %3823 = vmatpush.bf16.msra.mxu0 %v2469
        %3824 = vmatpush.bf16.msra.mxu0 %v2465
        %3825 = vmatpush.bf16.msra.mxu0 %v2461
        %3826 = vmatpush.bf16.msra.mxu0 %v2457
        %3827 = vmatmul.bf16.gmra.mxu0 %v761
        %v3828 = vpop.f32.mrf.mxu0
        %v3829 = vadd.f32 %v3816, %v3828
        %v3830 = vpop.f32.mrf.mxu0
        %3831 = vdwg.mxu0
        %3832 = vmatpush.bf16.msra.mxu0 %v2517
        %3833 = vmatpush.bf16.msra.mxu0 %v2513
        %3834 = vmatpush.bf16.msra.mxu0 %v2509
        %3835 = vmatpush.bf16.msra.mxu0 %v2505
        %3836 = vmatpush.bf16.msra.mxu0 %v2501
        %3837 = vmatpush.bf16.msra.mxu0 %v2497
        %3838 = vmatpush.bf16.msra.mxu0 %v2493
        %3839 = vmatpush.bf16.msra.mxu0 %v2489
        %3840 = vmatmul.bf16.gmra.mxu0 %v762
        %v3841 = vpop.f32.mrf.mxu0
        %v3842 = vadd.f32 %v3829, %v3841
        %v3843 = vpop.f32.mrf.mxu0
        %3844 = vdwg.mxu0
        %3845 = vmatpush.bf16.msra.mxu0 %v2549
        %3846 = vmatpush.bf16.msra.mxu0 %v2545
        %3847 = vmatpush.bf16.msra.mxu0 %v2541
        %3848 = vmatpush.bf16.msra.mxu0 %v2537
        %3849 = vmatpush.bf16.msra.mxu0 %v2533
        %3850 = vmatpush.bf16.msra.mxu0 %v2529
        %3851 = vmatpush.bf16.msra.mxu0 %v2525
        %3852 = vmatpush.bf16.msra.mxu0 %v2521
        %3853 = vmatmul.bf16.gmra.mxu0 %v763
        %v3854 = vpop.f32.mrf.mxu0
        %v3855 = vadd.f32 %v3842, %v3854
        %v3856 = vpop.f32.mrf.mxu0
        %3857 = vdwg.mxu0
        %3858 = vmatpush.bf16.msra.mxu0 %v2581
        %3859 = vmatpush.bf16.msra.mxu0 %v2577
        %3860 = vmatpush.bf16.msra.mxu0 %v2573
        %3861 = vmatpush.bf16.msra.mxu0 %v2569
        %3862 = vmatpush.bf16.msra.mxu0 %v2565
        %3863 = vmatpush.bf16.msra.mxu0 %v2561
        %3864 = vmatpush.bf16.msra.mxu0 %v2557
        %3865 = vmatpush.bf16.msra.mxu0 %v2553
        %3866 = vmatmul.bf16.gmra.mxu0 %v764
        %v3867 = vpop.f32.mrf.mxu0
        %v3868 = vadd.f32 %v3855, %v3867
        %v3869 = vpop.f32.mrf.mxu0
        %3870 = vdwg.mxu0
        %3871 = vmatpush.bf16.msra.mxu0 %v2613
        %3872 = vmatpush.bf16.msra.mxu0 %v2609
        %3873 = vmatpush.bf16.msra.mxu0 %v2605
        %3874 = vmatpush.bf16.msra.mxu0 %v2601
        %3875 = vmatpush.bf16.msra.mxu0 %v2597
        %3876 = vmatpush.bf16.msra.mxu0 %v2593
        %3877 = vmatpush.bf16.msra.mxu0 %v2589
        %3878 = vmatpush.bf16.msra.mxu0 %v2585
        %3879 = vmatmul.bf16.gmra.mxu0 %v767
        %v3880 = vpop.f32.mrf.mxu0
        %v3881 = vadd.f32 %v3868, %v3880
        %v3882 = vpop.f32.mrf.mxu0
        %3883 = vdwg.mxu0
        %3884 = vmatpush.bf16.msra.mxu0 %v2645
        %3885 = vmatpush.bf16.msra.mxu0 %v2641
        %3886 = vmatpush.bf16.msra.mxu0 %v2637
        %3887 = vmatpush.bf16.msra.mxu0 %v2633
        %3888 = vmatpush.bf16.msra.mxu0 %v2629
        %3889 = vmatpush.bf16.msra.mxu0 %v2625
        %3890 = vmatpush.bf16.msra.mxu0 %v2621
        %3891 = vmatpush.bf16.msra.mxu0 %v2617
        %3892 = vmatmul.bf16.gmra.mxu0 %v768
        %v3893 = vpop.f32.mrf.mxu0
        %v3894 = vadd.f32 %v3881, %v3893
        %v3895 = vpop.f32.mrf.mxu0
        %3896 = vdwg.mxu0
        %3897 = vmatpush.bf16.msra.mxu0 %v2677
        %3898 = vmatpush.bf16.msra.mxu0 %v2673
        %3899 = vmatpush.bf16.msra.mxu0 %v2669
        %3900 = vmatpush.bf16.msra.mxu0 %v2665
        %3901 = vmatpush.bf16.msra.mxu0 %v2661
        %3902 = vmatpush.bf16.msra.mxu0 %v2657
        %3903 = vmatpush.bf16.msra.mxu0 %v2653
        %3904 = vmatpush.bf16.msra.mxu0 %v2649
        %3905 = vmatmul.bf16.gmra.mxu0 %v769
        %v3906 = vpop.f32.mrf.mxu0
        %v3907 = vadd.f32 %v3894, %v3906
        %v3908 = vpop.f32.mrf.mxu0
        %3909 = vdwg.mxu0
        %3910 = vmatpush.bf16.msra.mxu0 %v2709
        %3911 = vmatpush.bf16.msra.mxu0 %v2705
        %3912 = vmatpush.bf16.msra.mxu0 %v2701
        %3913 = vmatpush.bf16.msra.mxu0 %v2697
        %3914 = vmatpush.bf16.msra.mxu0 %v2693
        %3915 = vmatpush.bf16.msra.mxu0 %v2689
        %3916 = vmatpush.bf16.msra.mxu0 %v2685
        %3917 = vmatpush.bf16.msra.mxu0 %v2681
        %3918 = vmatmul.bf16.gmra.mxu0 %v770
        %v3919 = vpop.f32.mrf.mxu0
        %v3920 = vadd.f32 %v3907, %v3919
        %v3921 = vpop.f32.mrf.mxu0
        %3922 = vdwg.mxu0
        %3923 = vmatpush.bf16.msra.mxu0 %v2741
        %3924 = vmatpush.bf16.msra.mxu0 %v2737
        %3925 = vmatpush.bf16.msra.mxu0 %v2733
        %3926 = vmatpush.bf16.msra.mxu0 %v2729
        %3927 = vmatpush.bf16.msra.mxu0 %v2725
        %3928 = vmatpush.bf16.msra.mxu0 %v2721
        %3929 = vmatpush.bf16.msra.mxu0 %v2717
        %3930 = vmatpush.bf16.msra.mxu0 %v2713
        %3931 = vmatmul.bf16.gmra.mxu0 %v771
        %v3932 = vpop.f32.mrf.mxu0
        %v3933 = vadd.f32 %v3920, %v3932
        %v3934 = vpop.f32.mrf.mxu0
        %3935 = vdwg.mxu0
        %3936 = vmatpush.bf16.msra.mxu0 %v2773
        %3937 = vmatpush.bf16.msra.mxu0 %v2769
        %3938 = vmatpush.bf16.msra.mxu0 %v2765
        %3939 = vmatpush.bf16.msra.mxu0 %v2761
        %3940 = vmatpush.bf16.msra.mxu0 %v2757
        %3941 = vmatpush.bf16.msra.mxu0 %v2753
        %3942 = vmatpush.bf16.msra.mxu0 %v2749
        %3943 = vmatpush.bf16.msra.mxu0 %v2745
        %3944 = vmatmul.bf16.gmra.mxu0 %v772
        %v3945 = vpop.f32.mrf.mxu0
        %v3946 = vadd.f32 %v3933, %v3945
        %v3947 = vpop.f32.mrf.mxu0
        %3948 = vdwg.mxu0
        %3949 = vmatpush.bf16.msra.mxu0 %v2805
        %3950 = vmatpush.bf16.msra.mxu0 %v2801
        %3951 = vmatpush.bf16.msra.mxu0 %v2797
        %3952 = vmatpush.bf16.msra.mxu0 %v2793
        %3953 = vmatpush.bf16.msra.mxu0 %v2789
        %3954 = vmatpush.bf16.msra.mxu0 %v2785
        %3955 = vmatpush.bf16.msra.mxu0 %v2781
        %3956 = vmatpush.bf16.msra.mxu0 %v2777
        %3957 = vmatmul.bf16.gmra.mxu0 %v773
        %v3958 = vpop.f32.mrf.mxu0
        %v3959 = vadd.f32 %v3946, %v3958
        %v3960 = vpop.f32.mrf.mxu0
        %3961 = vdwg.mxu0
        %3962 = vmatpush.bf16.msra.mxu0 %v2837
        %3963 = vmatpush.bf16.msra.mxu0 %v2833
        %3964 = vmatpush.bf16.msra.mxu0 %v2829
        %3965 = vmatpush.bf16.msra.mxu0 %v2825
        %3966 = vmatpush.bf16.msra.mxu0 %v2821
        %3967 = vmatpush.bf16.msra.mxu0 %v2817
        %3968 = vmatpush.bf16.msra.mxu0 %v2813
        %3969 = vmatpush.bf16.msra.mxu0 %v2809
        %3970 = vmatmul.bf16.gmra.mxu0 %v774
        %v3971 = vpop.f32.mrf.mxu0
        %v3972 = vadd.f32 %v3959, %v3971
        %v3973 = vpop.f32.mrf.mxu0
        %3974 = vdwg.mxu0
        %3975 = vmatpush.bf16.msra.mxu0 %v2358
        %3976 = vmatpush.bf16.msra.mxu0 %v2354
        %3977 = vmatpush.bf16.msra.mxu0 %v2350
        %3978 = vmatpush.bf16.msra.mxu0 %v2346
        %3979 = vmatpush.bf16.msra.mxu0 %v2342
        %3980 = vmatpush.bf16.msra.mxu0 %v2338
        %3981 = vmatpush.bf16.msra.mxu0 %v2334
        %3982 = vmatpush.bf16.msra.mxu0 %v2330
        %3983 = vmatmul.bf16.gmra.mxu0 %v757
        %v3984 = vpop.f32.mrf.mxu0
        %v3985 = vadd.f32 0.0, %v3984
        %v3986 = vpop.f32.mrf.mxu0
        %3987 = vdwg.mxu0
        %3988 = vmatpush.bf16.msra.mxu0 %v2390
        %3989 = vmatpush.bf16.msra.mxu0 %v2386
        %3990 = vmatpush.bf16.msra.mxu0 %v2382
        %3991 = vmatpush.bf16.msra.mxu0 %v2378
        %3992 = vmatpush.bf16.msra.mxu0 %v2374
        %3993 = vmatpush.bf16.msra.mxu0 %v2370
        %3994 = vmatpush.bf16.msra.mxu0 %v2366
        %3995 = vmatpush.bf16.msra.mxu0 %v2362
        %3996 = vmatmul.bf16.gmra.mxu0 %v758
        %v3997 = vpop.f32.mrf.mxu0
        %v3998 = vadd.f32 %v3985, %v3997
        %v3999 = vpop.f32.mrf.mxu0
        %4000 = vdwg.mxu0
        %4001 = vmatpush.bf16.msra.mxu0 %v2422
        %4002 = vmatpush.bf16.msra.mxu0 %v2418
        %4003 = vmatpush.bf16.msra.mxu0 %v2414
        %4004 = vmatpush.bf16.msra.mxu0 %v2410
        %4005 = vmatpush.bf16.msra.mxu0 %v2406
        %4006 = vmatpush.bf16.msra.mxu0 %v2402
        %4007 = vmatpush.bf16.msra.mxu0 %v2398
        %4008 = vmatpush.bf16.msra.mxu0 %v2394
        %4009 = vmatmul.bf16.gmra.mxu0 %v759
        %v4010 = vpop.f32.mrf.mxu0
        %v4011 = vadd.f32 %v3998, %v4010
        %v4012 = vpop.f32.mrf.mxu0
        %4013 = vdwg.mxu0
        %4014 = vmatpush.bf16.msra.mxu0 %v2454
        %4015 = vmatpush.bf16.msra.mxu0 %v2450
        %4016 = vmatpush.bf16.msra.mxu0 %v2446
        %4017 = vmatpush.bf16.msra.mxu0 %v2442
        %4018 = vmatpush.bf16.msra.mxu0 %v2438
        %4019 = vmatpush.bf16.msra.mxu0 %v2434
        %4020 = vmatpush.bf16.msra.mxu0 %v2430
        %4021 = vmatpush.bf16.msra.mxu0 %v2426
        %4022 = vmatmul.bf16.gmra.mxu0 %v760
        %v4023 = vpop.f32.mrf.mxu0
        %v4024 = vadd.f32 %v4011, %v4023
        %v4025 = vpop.f32.mrf.mxu0
        %4026 = vdwg.mxu0
        %4027 = vmatpush.bf16.msra.mxu0 %v2486
        %4028 = vmatpush.bf16.msra.mxu0 %v2482
        %4029 = vmatpush.bf16.msra.mxu0 %v2478
        %4030 = vmatpush.bf16.msra.mxu0 %v2474
        %4031 = vmatpush.bf16.msra.mxu0 %v2470
        %4032 = vmatpush.bf16.msra.mxu0 %v2466
        %4033 = vmatpush.bf16.msra.mxu0 %v2462
        %4034 = vmatpush.bf16.msra.mxu0 %v2458
        %4035 = vmatmul.bf16.gmra.mxu0 %v761
        %v4036 = vpop.f32.mrf.mxu0
        %v4037 = vadd.f32 %v4024, %v4036
        %v4038 = vpop.f32.mrf.mxu0
        %4039 = vdwg.mxu0
        %4040 = vmatpush.bf16.msra.mxu0 %v2518
        %4041 = vmatpush.bf16.msra.mxu0 %v2514
        %4042 = vmatpush.bf16.msra.mxu0 %v2510
        %4043 = vmatpush.bf16.msra.mxu0 %v2506
        %4044 = vmatpush.bf16.msra.mxu0 %v2502
        %4045 = vmatpush.bf16.msra.mxu0 %v2498
        %4046 = vmatpush.bf16.msra.mxu0 %v2494
        %4047 = vmatpush.bf16.msra.mxu0 %v2490
        %4048 = vmatmul.bf16.gmra.mxu0 %v762
        %v4049 = vpop.f32.mrf.mxu0
        %v4050 = vadd.f32 %v4037, %v4049
        %v4051 = vpop.f32.mrf.mxu0
        %4052 = vdwg.mxu0
        %4053 = vmatpush.bf16.msra.mxu0 %v2550
        %4054 = vmatpush.bf16.msra.mxu0 %v2546
        %4055 = vmatpush.bf16.msra.mxu0 %v2542
        %4056 = vmatpush.bf16.msra.mxu0 %v2538
        %4057 = vmatpush.bf16.msra.mxu0 %v2534
        %4058 = vmatpush.bf16.msra.mxu0 %v2530
        %4059 = vmatpush.bf16.msra.mxu0 %v2526
        %4060 = vmatpush.bf16.msra.mxu0 %v2522
        %4061 = vmatmul.bf16.gmra.mxu0 %v763
        %v4062 = vpop.f32.mrf.mxu0
        %v4063 = vadd.f32 %v4050, %v4062
        %v4064 = vpop.f32.mrf.mxu0
        %4065 = vdwg.mxu0
        %4066 = vmatpush.bf16.msra.mxu0 %v2582
        %4067 = vmatpush.bf16.msra.mxu0 %v2578
        %4068 = vmatpush.bf16.msra.mxu0 %v2574
        %4069 = vmatpush.bf16.msra.mxu0 %v2570
        %4070 = vmatpush.bf16.msra.mxu0 %v2566
        %4071 = vmatpush.bf16.msra.mxu0 %v2562
        %4072 = vmatpush.bf16.msra.mxu0 %v2558
        %4073 = vmatpush.bf16.msra.mxu0 %v2554
        %4074 = vmatmul.bf16.gmra.mxu0 %v764
        %v4075 = vpop.f32.mrf.mxu0
        %v4076 = vadd.f32 %v4063, %v4075
        %v4077 = vpop.f32.mrf.mxu0
        %4078 = vdwg.mxu0
        %4079 = vmatpush.bf16.msra.mxu0 %v2614
        %4080 = vmatpush.bf16.msra.mxu0 %v2610
        %4081 = vmatpush.bf16.msra.mxu0 %v2606
        %4082 = vmatpush.bf16.msra.mxu0 %v2602
        %4083 = vmatpush.bf16.msra.mxu0 %v2598
        %4084 = vmatpush.bf16.msra.mxu0 %v2594
        %4085 = vmatpush.bf16.msra.mxu0 %v2590
        %4086 = vmatpush.bf16.msra.mxu0 %v2586
        %4087 = vmatmul.bf16.gmra.mxu0 %v767
        %v4088 = vpop.f32.mrf.mxu0
        %v4089 = vadd.f32 %v4076, %v4088
        %v4090 = vpop.f32.mrf.mxu0
        %4091 = vdwg.mxu0
        %4092 = vmatpush.bf16.msra.mxu0 %v2646
        %4093 = vmatpush.bf16.msra.mxu0 %v2642
        %4094 = vmatpush.bf16.msra.mxu0 %v2638
        %4095 = vmatpush.bf16.msra.mxu0 %v2634
        %4096 = vmatpush.bf16.msra.mxu0 %v2630
        %4097 = vmatpush.bf16.msra.mxu0 %v2626
        %4098 = vmatpush.bf16.msra.mxu0 %v2622
        %4099 = vmatpush.bf16.msra.mxu0 %v2618
        %4100 = vmatmul.bf16.gmra.mxu0 %v768
        %v4101 = vpop.f32.mrf.mxu0
        %v4102 = vadd.f32 %v4089, %v4101
        %v4103 = vpop.f32.mrf.mxu0
        %4104 = vdwg.mxu0
        %4105 = vmatpush.bf16.msra.mxu0 %v2678
        %4106 = vmatpush.bf16.msra.mxu0 %v2674
        %4107 = vmatpush.bf16.msra.mxu0 %v2670
        %4108 = vmatpush.bf16.msra.mxu0 %v2666
        %4109 = vmatpush.bf16.msra.mxu0 %v2662
        %4110 = vmatpush.bf16.msra.mxu0 %v2658
        %4111 = vmatpush.bf16.msra.mxu0 %v2654
        %4112 = vmatpush.bf16.msra.mxu0 %v2650
        %4113 = vmatmul.bf16.gmra.mxu0 %v769
        %v4114 = vpop.f32.mrf.mxu0
        %v4115 = vadd.f32 %v4102, %v4114
        %v4116 = vpop.f32.mrf.mxu0
        %4117 = vdwg.mxu0
        %4118 = vmatpush.bf16.msra.mxu0 %v2710
        %4119 = vmatpush.bf16.msra.mxu0 %v2706
        %4120 = vmatpush.bf16.msra.mxu0 %v2702
        %4121 = vmatpush.bf16.msra.mxu0 %v2698
        %4122 = vmatpush.bf16.msra.mxu0 %v2694
        %4123 = vmatpush.bf16.msra.mxu0 %v2690
        %4124 = vmatpush.bf16.msra.mxu0 %v2686
        %4125 = vmatpush.bf16.msra.mxu0 %v2682
        %4126 = vmatmul.bf16.gmra.mxu0 %v770
        %v4127 = vpop.f32.mrf.mxu0
        %v4128 = vadd.f32 %v4115, %v4127
        %v4129 = vpop.f32.mrf.mxu0
        %4130 = vdwg.mxu0
        %4131 = vmatpush.bf16.msra.mxu0 %v2742
        %4132 = vmatpush.bf16.msra.mxu0 %v2738
        %4133 = vmatpush.bf16.msra.mxu0 %v2734
        %4134 = vmatpush.bf16.msra.mxu0 %v2730
        %4135 = vmatpush.bf16.msra.mxu0 %v2726
        %4136 = vmatpush.bf16.msra.mxu0 %v2722
        %4137 = vmatpush.bf16.msra.mxu0 %v2718
        %4138 = vmatpush.bf16.msra.mxu0 %v2714
        %4139 = vmatmul.bf16.gmra.mxu0 %v771
        %v4140 = vpop.f32.mrf.mxu0
        %v4141 = vadd.f32 %v4128, %v4140
        %v4142 = vpop.f32.mrf.mxu0
        %4143 = vdwg.mxu0
        %4144 = vmatpush.bf16.msra.mxu0 %v2774
        %4145 = vmatpush.bf16.msra.mxu0 %v2770
        %4146 = vmatpush.bf16.msra.mxu0 %v2766
        %4147 = vmatpush.bf16.msra.mxu0 %v2762
        %4148 = vmatpush.bf16.msra.mxu0 %v2758
        %4149 = vmatpush.bf16.msra.mxu0 %v2754
        %4150 = vmatpush.bf16.msra.mxu0 %v2750
        %4151 = vmatpush.bf16.msra.mxu0 %v2746
        %4152 = vmatmul.bf16.gmra.mxu0 %v772
        %v4153 = vpop.f32.mrf.mxu0
        %v4154 = vadd.f32 %v4141, %v4153
        %v4155 = vpop.f32.mrf.mxu0
        %4156 = vdwg.mxu0
        %4157 = vmatpush.bf16.msra.mxu0 %v2806
        %4158 = vmatpush.bf16.msra.mxu0 %v2802
        %4159 = vmatpush.bf16.msra.mxu0 %v2798
        %4160 = vmatpush.bf16.msra.mxu0 %v2794
        %4161 = vmatpush.bf16.msra.mxu0 %v2790
        %4162 = vmatpush.bf16.msra.mxu0 %v2786
        %4163 = vmatpush.bf16.msra.mxu0 %v2782
        %4164 = vmatpush.bf16.msra.mxu0 %v2778
        %4165 = vmatmul.bf16.gmra.mxu0 %v773
        %v4166 = vpop.f32.mrf.mxu0
        %v4167 = vadd.f32 %v4154, %v4166
        %v4168 = vpop.f32.mrf.mxu0
        %4169 = vdwg.mxu0
        %4170 = vmatpush.bf16.msra.mxu0 %v2838
        %4171 = vmatpush.bf16.msra.mxu0 %v2834
        %4172 = vmatpush.bf16.msra.mxu0 %v2830
        %4173 = vmatpush.bf16.msra.mxu0 %v2826
        %4174 = vmatpush.bf16.msra.mxu0 %v2822
        %4175 = vmatpush.bf16.msra.mxu0 %v2818
        %4176 = vmatpush.bf16.msra.mxu0 %v2814
        %4177 = vmatpush.bf16.msra.mxu0 %v2810
        %4178 = vmatmul.bf16.gmra.mxu0 %v774
        %v4179 = vpop.f32.mrf.mxu0
        %v4180 = vadd.f32 %v4167, %v4179
        %v4181 = vpop.f32.mrf.mxu0
        %4182 = vdwg.mxu0
        %v4187 = vrot.slane %v3764, 6
        %v4188 = vrot.slane %v3972, 4
        %v4189 = vrot.slane %v4180, 2
        %vm4190 = vcmask 1041408
        %v4191 = vsel %vm4190, %v3556, %v4187
        %vm4192 = vcmask 1045508
        %v4193 = vsel %vm4192, %v4188, %v4189
        %vm4194 = vcmask 1043456
        %v4195 = vsel %vm4194, %v4191, %v4193
        %v4197 = vadd.f32 %v240, %v4195
        %4198 = vst [vmem:[#allocation2] sm:$0xff] %v4197
        %p4199 = scmp.eq.s32.totalorder %s17, 1
        // Predicated region
        $region45: #{cnn_forward.5} parent=39 // pred_check
          %p4200 = pneg %p4199
        $region46: #{cnn_forward.5} parent=39 // pred_check_branch
          %4202 = sbr.rel (%p4200) target = $region48
        $region47: #{cnn_forward.5} parent=39 // pred_region
          %v4203 = vld [vmem:[#allocation2] sm:$0xff]
          %v4204 = vld [vmem:[%s2] sm:$0xf]
          %v4206 = vperm.slane %v4204, 0
          %v4207 = vperm.slane %v4204, 1
          %v4208 = vperm.slane %v4204, 2
          %v4209 = vperm.slane %v4204, 3
          %v4210 = vrot.slane %v4207, 6
          %v4211 = vrot.slane %v4208, 4
          %v4212 = vrot.slane %v4209, 2
          %v4213 = vsel %vm4190, %v4206, %v4210
          %v4214 = vsel %vm4192, %v4211, %v4212
          %v4215 = vsel %vm4194, %v4213, %v4214
          %v4217 = vadd.f32 %v4203, %v4215
          %v4218 = vmax.f32 %v4217, 0.0
          %4220 = vst [vmem:[#allocation1] ss:$4 sm:$0xff] %v4218
          %v4221 = vld.sshfl [vmem:[#allocation1] sm:$0xff pattern:$0x73625140]
          %v4222 = vld.sshfl [vmem:[#allocation1 + $0x8] sm:$0xff pattern:$0x73625140]
          %v4223 = vld.sshfl [vmem:[#allocation1 + $0x10] sm:$0xff pattern:$0x73625140]
          %v4224 = vld.sshfl [vmem:[#allocation1 + $0x18] sm:$0xff pattern:$0x73625140]
          %v4229 = vpack.c.bf16 %v4221, %v4221
          %v4230 = vpack.c.bf16 %v4222, %v4222
          %v4231 = vpack.c.bf16 %v4223, %v4223
          %v4232 = vpack.c.bf16 %v4224, %v4224
          %v4233 = vld [vmem:[%s3] sm:$0xf]
          %v4234 = vld [vmem:[%s3 + $0x4] sm:$0xf]
          %v4235 = vld [vmem:[%s3 + $0x8] sm:$0xf]
          %v4236 = vld [vmem:[%s3 + $0xc] sm:$0xf]
          %v4237 = vld [vmem:[%s3 + $0x10] sm:$0xf]
          %v4238 = vld [vmem:[%s3 + $0x14] sm:$0xf]
          %v4239 = vld [vmem:[%s3 + $0x18] sm:$0xf]
          %v4240 = vld [vmem:[%s3 + $0x1c] sm:$0xf]
          %v4241 = vld [vmem:[%s3 + $0x20] sm:$0xf]
          %v4242 = vld [vmem:[%s3 + $0x24] sm:$0xf]
          %v4243 = vld [vmem:[%s3 + $0x28] sm:$0xf]
          %v4244 = vld [vmem:[%s3 + $0x2c] sm:$0xf]
          %v4245 = vld [vmem:[%s3 + $0x30] sm:$0xf]
          %v4246 = vld [vmem:[%s3 + $0x34] sm:$0xf]
          %v4247 = vld [vmem:[%s3 + $0x38] sm:$0xf]
          %v4248 = vld [vmem:[%s3 + $0x3c] sm:$0xf]
          %v4249 = vld [vmem:[%s3 + $0x40] sm:$0xf]
          %v4250 = vld [vmem:[%s3 + $0x44] sm:$0xf]
          %v4251 = vld [vmem:[%s3 + $0x48] sm:$0xf]
          %v4252 = vld [vmem:[%s3 + $0x4c] sm:$0xf]
          %v4253 = vld [vmem:[%s3 + $0x50] sm:$0xf]
          %v4254 = vld [vmem:[%s3 + $0x54] sm:$0xf]
          %v4255 = vld [vmem:[%s3 + $0x58] sm:$0xf]
          %v4256 = vld [vmem:[%s3 + $0x5c] sm:$0xf]
          %v4257 = vld [vmem:[%s3 + $0x60] sm:$0xf]
          %v4258 = vld [vmem:[%s3 + $0x64] sm:$0xf]
          %v4259 = vld [vmem:[%s3 + $0x68] sm:$0xf]
          %v4260 = vld [vmem:[%s3 + $0x6c] sm:$0xf]
          %v4261 = vld [vmem:[%s3 + $0x70] sm:$0xf]
          %v4262 = vld [vmem:[%s3 + $0x74] sm:$0xf]
          %v4263 = vld [vmem:[%s3 + $0x78] sm:$0xf]
          %v4264 = vld [vmem:[%s3 + $0x7c] sm:$0xf]
          %v4265 = vld [vmem:[%s3 + $0x80] sm:$0xf]
          %v4266 = vld [vmem:[%s3 + $0x84] sm:$0xf]
          %v4267 = vld [vmem:[%s3 + $0x88] sm:$0xf]
          %v4268 = vld [vmem:[%s3 + $0x8c] sm:$0xf]
          %v4269 = vld [vmem:[%s3 + $0x90] sm:$0xf]
          %v4270 = vld [vmem:[%s3 + $0x94] sm:$0xf]
          %v4271 = vld [vmem:[%s3 + $0x98] sm:$0xf]
          %v4272 = vld [vmem:[%s3 + $0x9c] sm:$0xf]
          %v4273 = vld [vmem:[%s3 + $0xa0] sm:$0xf]
          %v4274 = vld [vmem:[%s3 + $0xa4] sm:$0xf]
          %v4275 = vld [vmem:[%s3 + $0xa8] sm:$0xf]
          %v4276 = vld [vmem:[%s3 + $0xac] sm:$0xf]
          %v4277 = vld [vmem:[%s3 + $0xb0] sm:$0xf]
          %v4278 = vld [vmem:[%s3 + $0xb4] sm:$0xf]
          %v4279 = vld [vmem:[%s3 + $0xb8] sm:$0xf]
          %v4280 = vld [vmem:[%s3 + $0xbc] sm:$0xf]
          %v4281 = vld [vmem:[%s3 + $0xc0] sm:$0xf]
          %v4282 = vld [vmem:[%s3 + $0xc4] sm:$0xf]
          %v4283 = vld [vmem:[%s3 + $0xc8] sm:$0xf]
          %v4284 = vld [vmem:[%s3 + $0xcc] sm:$0xf]
          %v4285 = vld [vmem:[%s3 + $0xd0] sm:$0xf]
          %v4286 = vld [vmem:[%s3 + $0xd4] sm:$0xf]
          %v4287 = vld [vmem:[%s3 + $0xd8] sm:$0xf]
          %v4288 = vld [vmem:[%s3 + $0xdc] sm:$0xf]
          %v4289 = vld [vmem:[%s3 + $0xe0] sm:$0xf]
          %v4290 = vld [vmem:[%s3 + $0xe4] sm:$0xf]
          %v4291 = vld [vmem:[%s3 + $0xe8] sm:$0xf]
          %v4292 = vld [vmem:[%s3 + $0xec] sm:$0xf]
          %v4293 = vld [vmem:[%s3 + $0xf0] sm:$0xf]
          %v4294 = vld [vmem:[%s3 + $0xf4] sm:$0xf]
          %v4295 = vld [vmem:[%s3 + $0xf8] sm:$0xf]
          %v4296 = vld [vmem:[%s3 + $0xfc] sm:$0xf]
          %v4297 = vld [vmem:[%s4] sm:$0x1]
          %v4299 = vperm.slane %v4297, 0
          %v4365 = vunpack.c.l.b16 %v4233
          %v4366 = vunpack.c.l.b16 %v4234
          %v4367 = vunpack.c.l.b16 %v4235
          %v4368 = vunpack.c.l.b16 %v4236
          %v4369 = vunpack.c.l.b16 %v4237
          %v4370 = vunpack.c.l.b16 %v4238
          %v4371 = vunpack.c.l.b16 %v4239
          %v4372 = vunpack.c.l.b16 %v4240
          %v4373 = vunpack.c.l.b16 %v4241
          %v4374 = vunpack.c.l.b16 %v4242
          %v4375 = vunpack.c.l.b16 %v4243
          %v4376 = vunpack.c.l.b16 %v4244
          %v4377 = vunpack.c.l.b16 %v4245
          %v4378 = vunpack.c.l.b16 %v4246
          %v4379 = vunpack.c.l.b16 %v4247
          %v4380 = vunpack.c.l.b16 %v4248
          %v4381 = vunpack.c.l.b16 %v4249
          %v4382 = vunpack.c.l.b16 %v4250
          %v4383 = vunpack.c.l.b16 %v4251
          %v4384 = vunpack.c.l.b16 %v4252
          %v4385 = vunpack.c.l.b16 %v4253
          %v4386 = vunpack.c.l.b16 %v4254
          %v4387 = vunpack.c.l.b16 %v4255
          %v4388 = vunpack.c.l.b16 %v4256
          %v4389 = vunpack.c.l.b16 %v4257
          %v4390 = vunpack.c.l.b16 %v4258
          %v4391 = vunpack.c.l.b16 %v4259
          %v4392 = vunpack.c.l.b16 %v4260
          %v4393 = vunpack.c.l.b16 %v4261
          %v4394 = vunpack.c.l.b16 %v4262
          %v4395 = vunpack.c.l.b16 %v4263
          %v4396 = vunpack.c.l.b16 %v4264
          %v4397 = vunpack.c.l.b16 %v4265
          %v4398 = vunpack.c.l.b16 %v4266
          %v4399 = vunpack.c.l.b16 %v4267
          %v4400 = vunpack.c.l.b16 %v4268
          %v4401 = vunpack.c.l.b16 %v4269
          %v4402 = vunpack.c.l.b16 %v4270
          %v4403 = vunpack.c.l.b16 %v4271
          %v4404 = vunpack.c.l.b16 %v4272
          %v4405 = vunpack.c.l.b16 %v4273
          %v4406 = vunpack.c.l.b16 %v4274
          %v4407 = vunpack.c.l.b16 %v4275
          %v4408 = vunpack.c.l.b16 %v4276
          %v4409 = vunpack.c.l.b16 %v4277
          %v4410 = vunpack.c.l.b16 %v4278
          %v4411 = vunpack.c.l.b16 %v4279
          %v4412 = vunpack.c.l.b16 %v4280
          %v4413 = vunpack.c.l.b16 %v4281
          %v4414 = vunpack.c.l.b16 %v4282
          %v4415 = vunpack.c.l.b16 %v4283
          %v4416 = vunpack.c.l.b16 %v4284
          %v4417 = vunpack.c.l.b16 %v4285
          %v4418 = vunpack.c.l.b16 %v4286
          %v4419 = vunpack.c.l.b16 %v4287
          %v4420 = vunpack.c.l.b16 %v4288
          %v4421 = vunpack.c.l.b16 %v4289
          %v4422 = vunpack.c.l.b16 %v4290
          %v4423 = vunpack.c.l.b16 %v4291
          %v4424 = vunpack.c.l.b16 %v4292
          %v4425 = vunpack.c.l.b16 %v4293
          %v4426 = vunpack.c.l.b16 %v4294
          %v4427 = vunpack.c.l.b16 %v4295
          %v4428 = vunpack.c.l.b16 %v4296
          %v4429 = vpack.c.b16 %v4366, %v4365
          %v4430 = vpack.c.b16 %v4368, %v4367
          %v4431 = vpack.c.b16 %v4370, %v4369
          %v4432 = vpack.c.b16 %v4372, %v4371
          %v4433 = vpack.c.b16 %v4374, %v4373
          %v4434 = vpack.c.b16 %v4376, %v4375
          %v4435 = vpack.c.b16 %v4378, %v4377
          %v4436 = vpack.c.b16 %v4380, %v4379
          %v4437 = vpack.c.b16 %v4382, %v4381
          %v4438 = vpack.c.b16 %v4384, %v4383
          %v4439 = vpack.c.b16 %v4386, %v4385
          %v4440 = vpack.c.b16 %v4388, %v4387
          %v4441 = vpack.c.b16 %v4390, %v4389
          %v4442 = vpack.c.b16 %v4392, %v4391
          %v4443 = vpack.c.b16 %v4394, %v4393
          %v4444 = vpack.c.b16 %v4396, %v4395
          %v4445 = vpack.c.b16 %v4398, %v4397
          %v4446 = vpack.c.b16 %v4400, %v4399
          %v4447 = vpack.c.b16 %v4402, %v4401
          %v4448 = vpack.c.b16 %v4404, %v4403
          %v4449 = vpack.c.b16 %v4406, %v4405
          %v4450 = vpack.c.b16 %v4408, %v4407
          %v4451 = vpack.c.b16 %v4410, %v4409
          %v4452 = vpack.c.b16 %v4412, %v4411
          %v4453 = vpack.c.b16 %v4414, %v4413
          %v4454 = vpack.c.b16 %v4416, %v4415
          %v4455 = vpack.c.b16 %v4418, %v4417
          %v4456 = vpack.c.b16 %v4420, %v4419
          %v4457 = vpack.c.b16 %v4422, %v4421
          %v4458 = vpack.c.b16 %v4424, %v4423
          %v4459 = vpack.c.b16 %v4426, %v4425
          %v4460 = vpack.c.b16 %v4428, %v4427
          %4493 = vmatpush.bf16.msra.mxu0 %v4436
          %4494 = vmatpush.bf16.msra.mxu0 %v4435
          %4495 = vmatpush.bf16.msra.mxu0 %v4434
          %4496 = vmatpush.bf16.msra.mxu0 %v4433
          %4497 = vmatpush.bf16.msra.mxu0 %v4432
          %4498 = vmatpush.bf16.msra.mxu0 %v4431
          %4499 = vmatpush.bf16.msra.mxu0 %v4430
          %4500 = vmatpush.bf16.msra.mxu0 %v4429
          %4501 = vmatmul.bf16.gmra.mxu0 %v4229
          %v4502 = vpop.f32.mrf.mxu0
          %v4503 = vadd.f32 %v4299, %v4502
          %v4504 = vpop.f32.mrf.mxu0
          %4505 = vdwg.mxu0
          %4506 = vmatpush.bf16.msra.mxu0 %v4444
          %4507 = vmatpush.bf16.msra.mxu0 %v4443
          %4508 = vmatpush.bf16.msra.mxu0 %v4442
          %4509 = vmatpush.bf16.msra.mxu0 %v4441
          %4510 = vmatpush.bf16.msra.mxu0 %v4440
          %4511 = vmatpush.bf16.msra.mxu0 %v4439
          %4512 = vmatpush.bf16.msra.mxu0 %v4438
          %4513 = vmatpush.bf16.msra.mxu0 %v4437
          %4514 = vmatmul.bf16.gmra.mxu0 %v4230
          %v4515 = vpop.f32.mrf.mxu0
          %v4516 = vadd.f32 %v4503, %v4515
          %v4517 = vpop.f32.mrf.mxu0
          %4518 = vdwg.mxu0
          %4519 = vmatpush.bf16.msra.mxu0 %v4452
          %4520 = vmatpush.bf16.msra.mxu0 %v4451
          %4521 = vmatpush.bf16.msra.mxu0 %v4450
          %4522 = vmatpush.bf16.msra.mxu0 %v4449
          %4523 = vmatpush.bf16.msra.mxu0 %v4448
          %4524 = vmatpush.bf16.msra.mxu0 %v4447
          %4525 = vmatpush.bf16.msra.mxu0 %v4446
          %4526 = vmatpush.bf16.msra.mxu0 %v4445
          %4527 = vmatmul.bf16.gmra.mxu0 %v4231
          %v4528 = vpop.f32.mrf.mxu0
          %v4529 = vadd.f32 %v4516, %v4528
          %v4530 = vpop.f32.mrf.mxu0
          %4531 = vdwg.mxu0
          %4532 = vmatpush.bf16.msra.mxu0 %v4460
          %4533 = vmatpush.bf16.msra.mxu0 %v4459
          %4534 = vmatpush.bf16.msra.mxu0 %v4458
          %4535 = vmatpush.bf16.msra.mxu0 %v4457
          %4536 = vmatpush.bf16.msra.mxu0 %v4456
          %4537 = vmatpush.bf16.msra.mxu0 %v4455
          %4538 = vmatpush.bf16.msra.mxu0 %v4454
          %4539 = vmatpush.bf16.msra.mxu0 %v4453
          %4540 = vmatmul.bf16.gmra.mxu0 %v4232
          %v4541 = vpop.f32.mrf.mxu0
          %v4542 = vadd.f32 %v4529, %v4541
          %v4543 = vpop.f32.mrf.mxu0
          %4544 = vdwg.mxu0
          %vm4545 = vcmask 74752
          %4546 = vst.msk [vmem:[#allocation3] sm:$0x3] %vm4545, %v4542
        $region48: #{cnn_forward.5} parent=39 // pred_fallthru
          _
        // Predicated region
        $region49: #{cnn_forward.5} parent=39 // pred_check
          %p4547 = pneg %p145
        $region50: #{cnn_forward.5} parent=39 // pred_check_branch
          %4549 = sbr.rel (%p4547) target = $region52
        $region51: #{cnn_forward.5} parent=39 // pred_region
          %4551 = vsyncadd [#allocation4], 0
          %s4553 = sshll.u32 [#allocation3], 4
          %s4554 = int_to_ptr.vmem [resolvable:$true] %s4553
          %s4555 = sshll.u32 %s5, 4
          %s4556 = int_to_ptr.hbm [resolvable:$true] %s4555
          %4558 = dma.vmem_to_hbm [thread:$0]  %s4554, 32, %s4556, [#allocation4]
        $region52: #{cnn_forward.5} parent=39 // pred_fallthru
          _
        // Predicated region
        $region53: #{cnn_forward.5} parent=39 // pred_check
          %p4559 = pneg %p145
        $region54: #{cnn_forward.5} parent=39 // pred_check_branch
          %4561 = sbr.rel (%p4559) target = $region56
        $region55: #{cnn_forward.5} parent=39 // pred_region
          %4563 = dma.done [#allocation4], 32
        $region56: #{cnn_forward.5} parent=39 // pred_fallthru
          _
      $region40: #{cnn_forward.5} parent=5 // pred_fallthru
        _
      %p4564 = scmp.le.s32.totalorder 2, %s12
      // Predicated region
      $region57: #{cnn_forward.5} parent=5 // pred_check
        %p4565 = pneg %p4564
      $region58: #{cnn_forward.5} parent=5 // pred_check_branch
        %4567 = sbr.rel (%p4565) target = $region60
      $region59: #{cnn_forward.5} parent=5 // pred_region
        %s4568 = ssub.s32 %s12, 2
      $region60: #{cnn_forward.5} parent=5 // pred_fallthru
        _
    $region6: #{cnn_forward.5} parent=1 // loop_footer
      %s16 = sadd.s32 1, %s12
    $region7: #{cnn_forward.5} parent=1 // loop_footer_branch
      %11 = sbr.rel target = $region3
    $region8: #{cnn_forward.5} parent=1 // loop_exit
      _
    %4569 = vsyncpa [#allocation4], 1
    %s4570 = scalar_lea.sflag [#allocation4], 1
    %4571 = vsyncpa %s4570, 1

</llo_original>
